<compile_context>
chip_gen: v7x
topology: tpu7x:2x2x1
jax: 0.10.0
libtpu: 0.0.40
codegen_flags: <defaults>
</compile_context>

<pallas_src>
import math
from functools import partial

import numpy as np
import jax
import jax.numpy as jnp
from jax.experimental import pallas as pl
from jax.experimental.pallas import tpu as pltpu


CPAD = 128  # every channel dimension is zero-padded to one full lane register

# Activations (torch defaults: LeakyReLU slope 0.01, Softplus beta=1).
# TODO(synk): nn.Softplus linearizes above threshold=20; this exact form differs
# only there (|diff| < 3e-9).
_ACTS = {
    "relu": lambda x: jnp.maximum(x, 0.0),
    "lrelu": lambda x: jnp.where(x >= 0.0, x, 0.01 * x),
    "softplus": lambda x: jnp.maximum(x, 0.0) + jnp.log1p(jnp.exp(-jnp.abs(x))),
}

_VMEM = pl.BlockSpec(memory_space=pltpu.MemorySpace.VMEM)


# ---------------------------------------------------------------------------
# fused Pallas kernel: conv->BN->act x n_layers, flatten, merged fc heads
# ---------------------------------------------------------------------------
def _encoder_kernel(*refs, act, n_layers, n_batch):
    """refs = [x, (sel, w, gamma, beta) * n_layers, wh, bh, out]."""
    x_ref = refs[0]
    wh_ref = refs[1 + 4 * n_layers]
    bh_ref = refs[2 + 4 * n_layers]
    out_ref = refs[3 + 4 * n_layers]

    h = x_ref[...]                                      # (M_in, CPAD)
    for layer in range(n_layers):
        s_ref, w_ref, g_ref, beta_ref = refs[1 + 4 * layer: 5 + 4 * layer]
        m_out = s_ref.shape[0] // 9

        # Conv (3x3, stride 2, pad 1, no bias):
        #   one stacked gather matmul   P = S_stack @ h      (9*M_out, CPAD)
        #   then 9 channel matmuls      y += P[t] @ W_t
        # All-zero rows of S_stack implement the zero padding.
        p = jnp.dot(s_ref[...], h, preferred_element_type=jnp.float32)
        y = jnp.dot(p[0:m_out], w_ref[0], preferred_element_type=jnp.float32)
        for t in range(1, 9):
            y = y + jnp.dot(p[t * m_out:(t + 1) * m_out], w_ref[t],
                            preferred_element_type=jnp.float32)

        # BatchNorm2d, training mode: per-channel batch mean + biased variance
        # over all N*Ho*Wo rows, single pass (E[y^2] - E[y]^2).
        mean = jnp.mean(y, axis=0, keepdims=True)
        var = jnp.mean(y * y, axis=0, keepdims=True) - mean * mean
        y = (y - mean) * jax.lax.rsqrt(var + 1e-5)
        h = act(y * g_ref[...] + beta_ref[...])
        # TODO(synk): BatchNorm2d running_mean/running_var buffer updates are a
        # training-time side effect and do not affect this forward's outputs.

    # Merged fc_mu / fc_var head.  The last conv layer's rows are ordered
    # (spatial, batch), so each spatial position is a contiguous row block and
    # the torch.flatten(NCHW) order is folded into wh's layout.  The head
    # output is padded to a full 128-lane register -> lane-dense store.
    n_spatial = wh_ref.shape[0]
    acc = bh_ref[...] + jnp.dot(h[0:n_batch, :], wh_ref[0],
                                preferred_element_type=jnp.float32)
    for s in range(1, n_spatial):
        acc = acc + jnp.dot(h[s * n_batch:(s + 1) * n_batch, :], wh_ref[s],
                            preferred_element_type=jnp.float32)
    out_ref[...] = acc                                  # (N, head_pad)


# ---------------------------------------------------------------------------
# host-side operand folding (done once per parameter set / batch size)
# ---------------------------------------------------------------------------
def _selection_matrix(n, hi, wi, spatial_major_out):
    """Stacked one-hot matrix (9*M_out, M_in) mapping input rows -> output rows
    for the 9 taps of a 3x3 / stride-2 / pad-1 conv.  All-zero rows implement
    the zero padding."""
    ho, wo = -(-hi // 2), -(-wi // 2)
    m_out, m_in = n * ho * wo, n * hi * wi
    sel = np.zeros((9 * m_out, m_in), np.float32)
    for b in range(n):
        for oh in range(ho):
            for ow in range(wo):
                if spatial_major_out:                  # last layer: (s, n) rows
                    orow = (oh * wo + ow) * n + b
                else:                                  # (n, s) rows
                    orow = b * ho * wo + oh * wo + ow
                for kh in range(3):
                    ih = 2 * oh + kh - 1
                    if not (0 <= ih < hi):
                        continue
                    for kw in range(3):
                        iw = 2 * ow + kw - 1
                        if not (0 <= iw < wi):
                            continue
                        t = kh * 3 + kw
                        sel[t * m_out + orow, b * hi * wi + ih * wi + iw] = 1.0
    return jnp.asarray(sel), ho, wo


def _fold_conv_weight(w):
    """(cout, cin, 3, 3) torch layout -> (9, CPAD, CPAD) per-tap slices."""
    cout, cin = w.shape[0], w.shape[1]
    wt = jnp.transpose(w, (2, 3, 1, 0)).reshape(9, cin, cout)   # [t, cin, cout]
    return jnp.pad(wt, ((0, 0), (0, CPAD - cin), (0, CPAD - cout)))


def _pad_vec(v):
    return jnp.pad(v.reshape(1, -1), ((0, 0), (0, CPAD - v.shape[0])))


def fold_params(params, batch, img_size):
    """Pre-fold torch-layout params into the fused-kernel operand layout.
    (Tied to `batch`; call once, reuse for every forward.)"""
    n_layers = len(params["convs"])
    layers = []
    hi = wi = img_size
    for l, (w, _b, gamma, beta) in enumerate(params["convs"]):
        # _b (conv bias) is dropped: exactly cancelled by the BN mean subtraction.
        sel, ho, wo = _selection_matrix(batch, hi, wi,
                                        spatial_major_out=(l == n_layers - 1))
        layers.append((sel, _fold_conv_weight(w), _pad_vec(gamma), _pad_vec(beta)))
        hi, wi = ho, wo

    cout_last = params["convs"][-1][0].shape[0]
    n_spatial = hi * wi
    latent = params["fc_mu_w"].shape[1]
    head_pad = -(-2 * latent // 128) * 128             # lane-dense head output
    # merge fc_mu / fc_var and fold torch.flatten(NCHW) order (f = c*S + s)
    # into a [spatial, channel(padded), 2*latent(padded)] layout.
    wh = jnp.concatenate([params["fc_mu_w"], params["fc_var_w"]], axis=1)
    wh = wh.reshape(cout_last, n_spatial, 2 * latent).transpose(1, 0, 2)
    wh = jnp.pad(wh, ((0, 0), (0, CPAD - cout_last), (0, head_pad - 2 * latent)))
    bh = jnp.concatenate([params["fc_mu_b"], params["fc_var_b"]]).reshape(1, -1)
    bh = jnp.pad(bh, ((0, 0), (0, head_pad - 2 * latent)))
    return {"layers": tuple(layers), "wh": wh, "bh": bh, "latent": latent}


# ---------------------------------------------------------------------------
# forward pass
# ---------------------------------------------------------------------------
@partial(jax.jit, static_argnames=("activation", "latent"))
def _fused_forward(x_nchw, layers, wh, bh, *, activation, latent):
    n, cin, hh, ww = x_nchw.shape
    # The only runtime glue left: NCHW -> (N*H*W, CPAD) rows of the tiny input.
    x0 = jnp.transpose(x_nchw, (0, 2, 3, 1)).reshape(n * hh * ww, cin)
    x0 = jnp.pad(x0.astype(jnp.float32), ((0, 0), (0, CPAD - cin)))

    operands = [x0]
    flops = 0
    for sel, w, g, beta in layers:
        operands += [sel, w, g, beta]
        m9, m_in = sel.shape
        m_out = m9 // 9
        flops += 2 * m9 * m_in * CPAD            # stacked gather matmul
        flops += 9 * 2 * m_out * CPAD * CPAD     # per-tap channel matmuls
    operands += [wh, bh]
    flops += 2 * wh.shape[0] * n * CPAD * wh.shape[2]
    bytes_accessed = sum(int(np.prod(o.shape)) * 4 for o in operands) \
        + n * wh.shape[2] * 4

    out = pl.pallas_call(
        partial(_encoder_kernel, act=_ACTS[activation],
                n_layers=len(layers), n_batch=n),
        out_shape=jax.ShapeDtypeStruct((n, wh.shape[2]), jnp.float32),
        in_specs=[_VMEM] * len(operands),
        out_specs=_VMEM,
        cost_estimate=pl.CostEstimate(flops=int(flops),
                                      transcendentals=len(layers) * CPAD,
                                      bytes_accessed=int(bytes_accessed)),
        compiler_params=pltpu.CompilerParams(vmem_limit_bytes=48 * 1024 * 1024),
    )(*operands)

    return out[:, :latent], out[:, latent:2 * latent]


def con_encoder_forward(x_nchw, folded, activation="relu"):
    return _fused_forward(x_nchw, folded["layers"], folded["wh"], folded["bh"],
                          activation=activation, latent=folded["latent"])


# ---------------------------------------------------------------------------
# parameter construction (deterministic, synthetic, torch-shaped)
# ---------------------------------------------------------------------------
def init_params(key, in_channels, latent_dim, img_size, n_channels):
    params = {"convs": []}
    c_in = in_channels
    for h_dim in n_channels:
        key, k_w, k_b = jax.random.split(key, 3)
        fan_in = c_in * 9
        w = jax.random.normal(k_w, (h_dim, c_in, 3, 3), jnp.float32) / math.sqrt(fan_in)
        b = 0.01 * jax.random.normal(k_b, (h_dim,), jnp.float32)   # cancelled by BN
        gamma = jnp.ones((h_dim,), jnp.float32)
        beta = jnp.zeros((h_dim,), jnp.float32)
        params["convs"].append((w, b, gamma, beta))
        c_in = h_dim
    last_layer_size = math.ceil(img_size / 2 ** len(n_channels)) ** 2
    feat = n_channels[-1] * last_layer_size
    key, k1, k2, k3, k4 = jax.random.split(key, 5)
    params["fc_mu_w"] = jax.random.normal(k1, (feat, latent_dim), jnp.float32) / math.sqrt(feat)
    params["fc_mu_b"] = 0.01 * jax.random.normal(k2, (latent_dim,), jnp.float32)
    params["fc_var_w"] = jax.random.normal(k3, (feat, latent_dim), jnp.float32) / math.sqrt(feat)
    params["fc_var_b"] = 0.01 * jax.random.normal(k4, (latent_dim,), jnp.float32)
    return params


# ---------------------------------------------------------------------------
# pure-JAX reference (mirrors the PyTorch module exactly) for validation
# ---------------------------------------------------------------------------
def _reference_forward(x_nchw, params, activation):
    act = _ACTS[activation]
    x = x_nchw.astype(jnp.float32)
    for (w, b, gamma, beta) in params["convs"]:
        y = jax.lax.conv_general_dilated(
            x, w, window_strides=(2, 2), padding=((1, 1), (1, 1)),
            dimension_numbers=("NCHW", "OIHW", "NCHW"),
            precision=jax.lax.Precision.HIGHEST)
        y = y + b.reshape(1, -1, 1, 1)
        mean = jnp.mean(y, axis=(0, 2, 3), keepdims=True)
        var = jnp.mean(jnp.square(y - mean), axis=(0, 2, 3), keepdims=True)
        y = (y - mean) * jax.lax.rsqrt(var + 1e-5)
        x = act(y * gamma.reshape(1, -1, 1, 1) + beta.reshape(1, -1, 1, 1))
    flat = x.reshape(x.shape[0], -1)
    mu = jnp.dot(flat, params["fc_mu_w"],
                 precision=jax.lax.Precision.HIGHEST) + params["fc_mu_b"]
    log_var = jnp.dot(flat, params["fc_var_w"],
                      precision=jax.lax.Precision.HIGHEST) + params["fc_var_b"]
    return mu, log_var


if __name__ == "__main__":
    key = jax.random.PRNGKey(0)

    # ConEncoder(in_channels=4, latent_dim=16, 'relu', img_size=16,
    #            n_channels=[32, 16, 8])
    in_channels, latent_dim, img_size = 4, 16, 16
    n_channels_arg = [32, 16, 8]
    n_channels = list(reversed(n_channels_arg))      # the module reverses the list
    activation = "relu"
    batch = 2

    key, k_param, k_x = jax.random.split(key, 3)
    params = init_params(k_param, in_channels, latent_dim, img_size, n_channels)
    x = jax.random.normal(k_x, (batch, in_channels, img_size, img_size), jnp.float32)

    folded = fold_params(params, batch, img_size)
    mu, log_var = con_encoder_forward(x, folded, activation)
    jax.block_until_ready((mu, log_var))
    assert mu.shape == (batch, latent_dim) and log_var.shape == (batch, latent_dim)

    # validate against the pure-JAX replica of the PyTorch forward
    mu_ref, lv_ref = _reference_forward(x, params, activation)
    err = max(float(jnp.max(jnp.abs(mu - mu_ref))),
              float(jnp.max(jnp.abs(log_var - lv_ref))))
    assert err < 1e-3, f"mismatch vs reference: {err}"

    print("KERNEL_OK")
</pallas_src>

<mosaic_0001>
module attributes {stable_mosaic.version = 11 : i64} {
  func.func @_encoder_kernel(%arg0: memref<512x128xf32, #tpu.memory_space<vmem>>, %arg1: memref<1152x512xf32, #tpu.memory_space<vmem>>, %arg2: memref<9x128x128xf32, #tpu.memory_space<vmem>>, %arg3: memref<1x128xf32, #tpu.memory_space<vmem>>, %arg4: memref<1x128xf32, #tpu.memory_space<vmem>>, %arg5: memref<288x128xf32, #tpu.memory_space<vmem>>, %arg6: memref<9x128x128xf32, #tpu.memory_space<vmem>>, %arg7: memref<1x128xf32, #tpu.memory_space<vmem>>, %arg8: memref<1x128xf32, #tpu.memory_space<vmem>>, %arg9: memref<72x32xf32, #tpu.memory_space<vmem>>, %arg10: memref<9x128x128xf32, #tpu.memory_space<vmem>>, %arg11: memref<1x128xf32, #tpu.memory_space<vmem>>, %arg12: memref<1x128xf32, #tpu.memory_space<vmem>>, %arg13: memref<4x128x128xf32, #tpu.memory_space<vmem>>, %arg14: memref<1x128xf32, #tpu.memory_space<vmem>>, %arg15: memref<2x128xf32, #tpu.memory_space<vmem>>) attributes {dimension_semantics = [], scalar_prefetch = 0 : i64, scratch_operands = 0 : i64, tpu.core_type = #tpu.core_type<tc>} {
    %c0 = arith.constant 0 : index
    %c0_0 = arith.constant 0 : index
    %0 = vector.load %arg0[%c0, %c0_0] : memref<512x128xf32, #tpu.memory_space<vmem>>, vector<512x128xf32>
    %c0_1 = arith.constant 0 : index
    %c0_2 = arith.constant 0 : index
    %1 = vector.load %arg1[%c0_1, %c0_2] : memref<1152x512xf32, #tpu.memory_space<vmem>>, vector<1152x512xf32>
    %cst = arith.constant dense<0.000000e+00> : vector<1152x128xf32>
    %2 = tpu.matmul %1, %0, %cst {dimension_numbers = #tpu.dot_dimension_numbers<[1], [0], [0], [1], [0, 0, 1, 1], [], []>} : vector<1152x512xf32>, vector<512x128xf32>, vector<1152x128xf32> -> vector<1152x128xf32>
    %3 = vector.extract_strided_slice %2 {offsets = [0, 0], sizes = [128, 128], strides = [1, 1]} : vector<1152x128xf32> to vector<128x128xf32>
    %c0_3 = arith.constant 0 : index
    %c0_4 = arith.constant 0 : index
    %c0_5 = arith.constant 0 : index
    %4 = vector.load %arg2[%c0_3, %c0_4, %c0_5] : memref<9x128x128xf32, #tpu.memory_space<vmem>>, vector<1x128x128xf32>
    %5 = vector.shape_cast %4 : vector<1x128x128xf32> to vector<128x128xf32>
    %cst_6 = arith.constant dense<0.000000e+00> : vector<128x128xf32>
    %6 = tpu.matmul %3, %5, %cst_6 {dimension_numbers = #tpu.dot_dimension_numbers<[1], [0], [0], [1], [0, 0, 1, 1], [], []>} : vector<128x128xf32>, vector<128x128xf32>, vector<128x128xf32> -> vector<128x128xf32>
    %7 = vector.extract_strided_slice %2 {offsets = [128, 0], sizes = [128, 128], strides = [1, 1]} : vector<1152x128xf32> to vector<128x128xf32>
    %c1 = arith.constant 1 : index
    %c0_7 = arith.constant 0 : index
    %c0_8 = arith.constant 0 : index
    %8 = vector.load %arg2[%c1, %c0_7, %c0_8] : memref<9x128x128xf32, #tpu.memory_space<vmem>>, vector<1x128x128xf32>
    %9 = vector.shape_cast %8 : vector<1x128x128xf32> to vector<128x128xf32>
    %cst_9 = arith.constant dense<0.000000e+00> : vector<128x128xf32>
    %10 = tpu.matmul %7, %9, %cst_9 {dimension_numbers = #tpu.dot_dimension_numbers<[1], [0], [0], [1], [0, 0, 1, 1], [], []>} : vector<128x128xf32>, vector<128x128xf32>, vector<128x128xf32> -> vector<128x128xf32>
    %11 = arith.addf %6, %10 : vector<128x128xf32>
    %12 = vector.extract_strided_slice %2 {offsets = [256, 0], sizes = [128, 128], strides = [1, 1]} : vector<1152x128xf32> to vector<128x128xf32>
    %c2 = arith.constant 2 : index
    %c0_10 = arith.constant 0 : index
    %c0_11 = arith.constant 0 : index
    %13 = vector.load %arg2[%c2, %c0_10, %c0_11] : memref<9x128x128xf32, #tpu.memory_space<vmem>>, vector<1x128x128xf32>
    %14 = vector.shape_cast %13 : vector<1x128x128xf32> to vector<128x128xf32>
    %cst_12 = arith.constant dense<0.000000e+00> : vector<128x128xf32>
    %15 = tpu.matmul %12, %14, %cst_12 {dimension_numbers = #tpu.dot_dimension_numbers<[1], [0], [0], [1], [0, 0, 1, 1], [], []>} : vector<128x128xf32>, vector<128x128xf32>, vector<128x128xf32> -> vector<128x128xf32>
    %16 = arith.addf %11, %15 : vector<128x128xf32>
    %17 = vector.extract_strided_slice %2 {offsets = [384, 0], sizes = [128, 128], strides = [1, 1]} : vector<1152x128xf32> to vector<128x128xf32>
    %c3 = arith.constant 3 : index
    %c0_13 = arith.constant 0 : index
    %c0_14 = arith.constant 0 : index
    %18 = vector.load %arg2[%c3, %c0_13, %c0_14] : memref<9x128x128xf32, #tpu.memory_space<vmem>>, vector<1x128x128xf32>
    %19 = vector.shape_cast %18 : vector<1x128x128xf32> to vector<128x128xf32>
    %cst_15 = arith.constant dense<0.000000e+00> : vector<128x128xf32>
    %20 = tpu.matmul %17, %19, %cst_15 {dimension_numbers = #tpu.dot_dimension_numbers<[1], [0], [0], [1], [0, 0, 1, 1], [], []>} : vector<128x128xf32>, vector<128x128xf32>, vector<128x128xf32> -> vector<128x128xf32>
    %21 = arith.addf %16, %20 : vector<128x128xf32>
    %22 = vector.extract_strided_slice %2 {offsets = [512, 0], sizes = [128, 128], strides = [1, 1]} : vector<1152x128xf32> to vector<128x128xf32>
    %c4 = arith.constant 4 : index
    %c0_16 = arith.constant 0 : index
    %c0_17 = arith.constant 0 : index
    %23 = vector.load %arg2[%c4, %c0_16, %c0_17] : memref<9x128x128xf32, #tpu.memory_space<vmem>>, vector<1x128x128xf32>
    %24 = vector.shape_cast %23 : vector<1x128x128xf32> to vector<128x128xf32>
    %cst_18 = arith.constant dense<0.000000e+00> : vector<128x128xf32>
    %25 = tpu.matmul %22, %24, %cst_18 {dimension_numbers = #tpu.dot_dimension_numbers<[1], [0], [0], [1], [0, 0, 1, 1], [], []>} : vector<128x128xf32>, vector<128x128xf32>, vector<128x128xf32> -> vector<128x128xf32>
    %26 = arith.addf %21, %25 : vector<128x128xf32>
    %27 = vector.extract_strided_slice %2 {offsets = [640, 0], sizes = [128, 128], strides = [1, 1]} : vector<1152x128xf32> to vector<128x128xf32>
    %c5 = arith.constant 5 : index
    %c0_19 = arith.constant 0 : index
    %c0_20 = arith.constant 0 : index
    %28 = vector.load %arg2[%c5, %c0_19, %c0_20] : memref<9x128x128xf32, #tpu.memory_space<vmem>>, vector<1x128x128xf32>
    %29 = vector.shape_cast %28 : vector<1x128x128xf32> to vector<128x128xf32>
    %cst_21 = arith.constant dense<0.000000e+00> : vector<128x128xf32>
    %30 = tpu.matmul %27, %29, %cst_21 {dimension_numbers = #tpu.dot_dimension_numbers<[1], [0], [0], [1], [0, 0, 1, 1], [], []>} : vector<128x128xf32>, vector<128x128xf32>, vector<128x128xf32> -> vector<128x128xf32>
    %31 = arith.addf %26, %30 : vector<128x128xf32>
    %32 = vector.extract_strided_slice %2 {offsets = [768, 0], sizes = [128, 128], strides = [1, 1]} : vector<1152x128xf32> to vector<128x128xf32>
    %c6 = arith.constant 6 : index
    %c0_22 = arith.constant 0 : index
    %c0_23 = arith.constant 0 : index
    %33 = vector.load %arg2[%c6, %c0_22, %c0_23] : memref<9x128x128xf32, #tpu.memory_space<vmem>>, vector<1x128x128xf32>
    %34 = vector.shape_cast %33 : vector<1x128x128xf32> to vector<128x128xf32>
    %cst_24 = arith.constant dense<0.000000e+00> : vector<128x128xf32>
    %35 = tpu.matmul %32, %34, %cst_24 {dimension_numbers = #tpu.dot_dimension_numbers<[1], [0], [0], [1], [0, 0, 1, 1], [], []>} : vector<128x128xf32>, vector<128x128xf32>, vector<128x128xf32> -> vector<128x128xf32>
    %36 = arith.addf %31, %35 : vector<128x128xf32>
    %37 = vector.extract_strided_slice %2 {offsets = [896, 0], sizes = [128, 128], strides = [1, 1]} : vector<1152x128xf32> to vector<128x128xf32>
    %c7 = arith.constant 7 : index
    %c0_25 = arith.constant 0 : index
    %c0_26 = arith.constant 0 : index
    %38 = vector.load %arg2[%c7, %c0_25, %c0_26] : memref<9x128x128xf32, #tpu.memory_space<vmem>>, vector<1x128x128xf32>
    %39 = vector.shape_cast %38 : vector<1x128x128xf32> to vector<128x128xf32>
    %cst_27 = arith.constant dense<0.000000e+00> : vector<128x128xf32>
    %40 = tpu.matmul %37, %39, %cst_27 {dimension_numbers = #tpu.dot_dimension_numbers<[1], [0], [0], [1], [0, 0, 1, 1], [], []>} : vector<128x128xf32>, vector<128x128xf32>, vector<128x128xf32> -> vector<128x128xf32>
    %41 = arith.addf %36, %40 : vector<128x128xf32>
    %42 = vector.extract_strided_slice %2 {offsets = [1024, 0], sizes = [128, 128], strides = [1, 1]} : vector<1152x128xf32> to vector<128x128xf32>
    %c8 = arith.constant 8 : index
    %c0_28 = arith.constant 0 : index
    %c0_29 = arith.constant 0 : index
    %43 = vector.load %arg2[%c8, %c0_28, %c0_29] : memref<9x128x128xf32, #tpu.memory_space<vmem>>, vector<1x128x128xf32>
    %44 = vector.shape_cast %43 : vector<1x128x128xf32> to vector<128x128xf32>
    %cst_30 = arith.constant dense<0.000000e+00> : vector<128x128xf32>
    %45 = tpu.matmul %42, %44, %cst_30 {dimension_numbers = #tpu.dot_dimension_numbers<[1], [0], [0], [1], [0, 0, 1, 1], [], []>} : vector<128x128xf32>, vector<128x128xf32>, vector<128x128xf32> -> vector<128x128xf32>
    %46 = arith.addf %41, %45 : vector<128x128xf32>
    %cst_31 = arith.constant dense<0.000000e+00> : vector<128xf32>
    %47 = vector.multi_reduction <add>, %46, %cst_31 [0] : vector<128x128xf32> to vector<128xf32>
    %48 = vector.shape_cast %47 : vector<128xf32> to vector<1x128xf32>
    %cst_32 = arith.constant 1.280000e+02 : f32
    %49 = vector.broadcast %cst_32 : f32 to vector<1x128xf32>
    %50 = arith.divf %48, %49 : vector<1x128xf32>
    %51 = arith.mulf %46, %46 : vector<128x128xf32>
    %cst_33 = arith.constant dense<0.000000e+00> : vector<128xf32>
    %52 = vector.multi_reduction <add>, %51, %cst_33 [0] : vector<128x128xf32> to vector<128xf32>
    %53 = vector.shape_cast %52 : vector<128xf32> to vector<1x128xf32>
    %cst_34 = arith.constant 1.280000e+02 : f32
    %54 = vector.broadcast %cst_34 : f32 to vector<1x128xf32>
    %55 = arith.divf %53, %54 : vector<1x128xf32>
    %56 = arith.mulf %50, %50 : vector<1x128xf32>
    %57 = arith.subf %55, %56 : vector<1x128xf32>
    %58 = vector.broadcast %50 : vector<1x128xf32> to vector<128x128xf32>
    %59 = arith.subf %46, %58 : vector<128x128xf32>
    %cst_35 = arith.constant 9.99999974E-6 : f32
    %60 = vector.broadcast %cst_35 : f32 to vector<1x128xf32>
    %61 = arith.addf %57, %60 : vector<1x128xf32>
    %62 = math.rsqrt %61 : vector<1x128xf32>
    %63 = vector.broadcast %62 : vector<1x128xf32> to vector<128x128xf32>
    %64 = arith.mulf %59, %63 : vector<128x128xf32>
    %c0_36 = arith.constant 0 : index
    %c0_37 = arith.constant 0 : index
    %65 = vector.load %arg3[%c0_36, %c0_37] : memref<1x128xf32, #tpu.memory_space<vmem>>, vector<1x128xf32>
    %66 = vector.broadcast %65 : vector<1x128xf32> to vector<128x128xf32>
    %67 = arith.mulf %64, %66 : vector<128x128xf32>
    %c0_38 = arith.constant 0 : index
    %c0_39 = arith.constant 0 : index
    %68 = vector.load %arg4[%c0_38, %c0_39] : memref<1x128xf32, #tpu.memory_space<vmem>>, vector<1x128xf32>
    %69 = vector.broadcast %68 : vector<1x128xf32> to vector<128x128xf32>
    %70 = arith.addf %67, %69 : vector<128x128xf32>
    %cst_40 = arith.constant 0.000000e+00 : f32
    %71 = vector.broadcast %cst_40 : f32 to vector<128x128xf32>
    %72 = arith.maximumf %70, %71 : vector<128x128xf32>
    %c0_41 = arith.constant 0 : index
    %c0_42 = arith.constant 0 : index
    %73 = vector.load %arg5[%c0_41, %c0_42] : memref<288x128xf32, #tpu.memory_space<vmem>>, vector<288x128xf32>
    %cst_43 = arith.constant dense<0.000000e+00> : vector<288x128xf32>
    %74 = tpu.matmul %73, %72, %cst_43 {dimension_numbers = #tpu.dot_dimension_numbers<[1], [0], [0], [1], [0, 0, 1, 1], [], []>} : vector<288x128xf32>, vector<128x128xf32>, vector<288x128xf32> -> vector<288x128xf32>
    %75 = vector.extract_strided_slice %74 {offsets = [0, 0], sizes = [32, 128], strides = [1, 1]} : vector<288x128xf32> to vector<32x128xf32>
    %c0_44 = arith.constant 0 : index
    %c0_45 = arith.constant 0 : index
    %c0_46 = arith.constant 0 : index
    %76 = vector.load %arg6[%c0_44, %c0_45, %c0_46] : memref<9x128x128xf32, #tpu.memory_space<vmem>>, vector<1x128x128xf32>
    %77 = vector.shape_cast %76 : vector<1x128x128xf32> to vector<128x128xf32>
    %cst_47 = arith.constant dense<0.000000e+00> : vector<32x128xf32>
    %78 = tpu.matmul %75, %77, %cst_47 {dimension_numbers = #tpu.dot_dimension_numbers<[1], [0], [0], [1], [0, 0, 1, 1], [], []>} : vector<32x128xf32>, vector<128x128xf32>, vector<32x128xf32> -> vector<32x128xf32>
    %79 = vector.extract_strided_slice %74 {offsets = [32, 0], sizes = [32, 128], strides = [1, 1]} : vector<288x128xf32> to vector<32x128xf32>
    %c1_48 = arith.constant 1 : index
    %c0_49 = arith.constant 0 : index
    %c0_50 = arith.constant 0 : index
    %80 = vector.load %arg6[%c1_48, %c0_49, %c0_50] : memref<9x128x128xf32, #tpu.memory_space<vmem>>, vector<1x128x128xf32>
    %81 = vector.shape_cast %80 : vector<1x128x128xf32> to vector<128x128xf32>
    %cst_51 = arith.constant dense<0.000000e+00> : vector<32x128xf32>
    %82 = tpu.matmul %79, %81, %cst_51 {dimension_numbers = #tpu.dot_dimension_numbers<[1], [0], [0], [1], [0, 0, 1, 1], [], []>} : vector<32x128xf32>, vector<128x128xf32>, vector<32x128xf32> -> vector<32x128xf32>
    %83 = arith.addf %78, %82 : vector<32x128xf32>
    %84 = vector.extract_strided_slice %74 {offsets = [64, 0], sizes = [32, 128], strides = [1, 1]} : vector<288x128xf32> to vector<32x128xf32>
    %c2_52 = arith.constant 2 : index
    %c0_53 = arith.constant 0 : index
    %c0_54 = arith.constant 0 : index
    %85 = vector.load %arg6[%c2_52, %c0_53, %c0_54] : memref<9x128x128xf32, #tpu.memory_space<vmem>>, vector<1x128x128xf32>
    %86 = vector.shape_cast %85 : vector<1x128x128xf32> to vector<128x128xf32>
    %cst_55 = arith.constant dense<0.000000e+00> : vector<32x128xf32>
    %87 = tpu.matmul %84, %86, %cst_55 {dimension_numbers = #tpu.dot_dimension_numbers<[1], [0], [0], [1], [0, 0, 1, 1], [], []>} : vector<32x128xf32>, vector<128x128xf32>, vector<32x128xf32> -> vector<32x128xf32>
    %88 = arith.addf %83, %87 : vector<32x128xf32>
    %89 = vector.extract_strided_slice %74 {offsets = [96, 0], sizes = [32, 128], strides = [1, 1]} : vector<288x128xf32> to vector<32x128xf32>
    %c3_56 = arith.constant 3 : index
    %c0_57 = arith.constant 0 : index
    %c0_58 = arith.constant 0 : index
    %90 = vector.load %arg6[%c3_56, %c0_57, %c0_58] : memref<9x128x128xf32, #tpu.memory_space<vmem>>, vector<1x128x128xf32>
    %91 = vector.shape_cast %90 : vector<1x128x128xf32> to vector<128x128xf32>
    %cst_59 = arith.constant dense<0.000000e+00> : vector<32x128xf32>
    %92 = tpu.matmul %89, %91, %cst_59 {dimension_numbers = #tpu.dot_dimension_numbers<[1], [0], [0], [1], [0, 0, 1, 1], [], []>} : vector<32x128xf32>, vector<128x128xf32>, vector<32x128xf32> -> vector<32x128xf32>
    %93 = arith.addf %88, %92 : vector<32x128xf32>
    %94 = vector.extract_strided_slice %74 {offsets = [128, 0], sizes = [32, 128], strides = [1, 1]} : vector<288x128xf32> to vector<32x128xf32>
    %c4_60 = arith.constant 4 : index
    %c0_61 = arith.constant 0 : index
    %c0_62 = arith.constant 0 : index
    %95 = vector.load %arg6[%c4_60, %c0_61, %c0_62] : memref<9x128x128xf32, #tpu.memory_space<vmem>>, vector<1x128x128xf32>
    %96 = vector.shape_cast %95 : vector<1x128x128xf32> to vector<128x128xf32>
    %cst_63 = arith.constant dense<0.000000e+00> : vector<32x128xf32>
    %97 = tpu.matmul %94, %96, %cst_63 {dimension_numbers = #tpu.dot_dimension_numbers<[1], [0], [0], [1], [0, 0, 1, 1], [], []>} : vector<32x128xf32>, vector<128x128xf32>, vector<32x128xf32> -> vector<32x128xf32>
    %98 = arith.addf %93, %97 : vector<32x128xf32>
    %99 = vector.extract_strided_slice %74 {offsets = [160, 0], sizes = [32, 128], strides = [1, 1]} : vector<288x128xf32> to vector<32x128xf32>
    %c5_64 = arith.constant 5 : index
    %c0_65 = arith.constant 0 : index
    %c0_66 = arith.constant 0 : index
    %100 = vector.load %arg6[%c5_64, %c0_65, %c0_66] : memref<9x128x128xf32, #tpu.memory_space<vmem>>, vector<1x128x128xf32>
    %101 = vector.shape_cast %100 : vector<1x128x128xf32> to vector<128x128xf32>
    %cst_67 = arith.constant dense<0.000000e+00> : vector<32x128xf32>
    %102 = tpu.matmul %99, %101, %cst_67 {dimension_numbers = #tpu.dot_dimension_numbers<[1], [0], [0], [1], [0, 0, 1, 1], [], []>} : vector<32x128xf32>, vector<128x128xf32>, vector<32x128xf32> -> vector<32x128xf32>
    %103 = arith.addf %98, %102 : vector<32x128xf32>
    %104 = vector.extract_strided_slice %74 {offsets = [192, 0], sizes = [32, 128], strides = [1, 1]} : vector<288x128xf32> to vector<32x128xf32>
    %c6_68 = arith.constant 6 : index
    %c0_69 = arith.constant 0 : index
    %c0_70 = arith.constant 0 : index
    %105 = vector.load %arg6[%c6_68, %c0_69, %c0_70] : memref<9x128x128xf32, #tpu.memory_space<vmem>>, vector<1x128x128xf32>
    %106 = vector.shape_cast %105 : vector<1x128x128xf32> to vector<128x128xf32>
    %cst_71 = arith.constant dense<0.000000e+00> : vector<32x128xf32>
    %107 = tpu.matmul %104, %106, %cst_71 {dimension_numbers = #tpu.dot_dimension_numbers<[1], [0], [0], [1], [0, 0, 1, 1], [], []>} : vector<32x128xf32>, vector<128x128xf32>, vector<32x128xf32> -> vector<32x128xf32>
    %108 = arith.addf %103, %107 : vector<32x128xf32>
    %109 = vector.extract_strided_slice %74 {offsets = [224, 0], sizes = [32, 128], strides = [1, 1]} : vector<288x128xf32> to vector<32x128xf32>
    %c7_72 = arith.constant 7 : index
    %c0_73 = arith.constant 0 : index
    %c0_74 = arith.constant 0 : index
    %110 = vector.load %arg6[%c7_72, %c0_73, %c0_74] : memref<9x128x128xf32, #tpu.memory_space<vmem>>, vector<1x128x128xf32>
    %111 = vector.shape_cast %110 : vector<1x128x128xf32> to vector<128x128xf32>
    %cst_75 = arith.constant dense<0.000000e+00> : vector<32x128xf32>
    %112 = tpu.matmul %109, %111, %cst_75 {dimension_numbers = #tpu.dot_dimension_numbers<[1], [0], [0], [1], [0, 0, 1, 1], [], []>} : vector<32x128xf32>, vector<128x128xf32>, vector<32x128xf32> -> vector<32x128xf32>
    %113 = arith.addf %108, %112 : vector<32x128xf32>
    %114 = vector.extract_strided_slice %74 {offsets = [256, 0], sizes = [32, 128], strides = [1, 1]} : vector<288x128xf32> to vector<32x128xf32>
    %c8_76 = arith.constant 8 : index
    %c0_77 = arith.constant 0 : index
    %c0_78 = arith.constant 0 : index
    %115 = vector.load %arg6[%c8_76, %c0_77, %c0_78] : memref<9x128x128xf32, #tpu.memory_space<vmem>>, vector<1x128x128xf32>
    %116 = vector.shape_cast %115 : vector<1x128x128xf32> to vector<128x128xf32>
    %cst_79 = arith.constant dense<0.000000e+00> : vector<32x128xf32>
    %117 = tpu.matmul %114, %116, %cst_79 {dimension_numbers = #tpu.dot_dimension_numbers<[1], [0], [0], [1], [0, 0, 1, 1], [], []>} : vector<32x128xf32>, vector<128x128xf32>, vector<32x128xf32> -> vector<32x128xf32>
    %118 = arith.addf %113, %117 : vector<32x128xf32>
    %cst_80 = arith.constant dense<0.000000e+00> : vector<128xf32>
    %119 = vector.multi_reduction <add>, %118, %cst_80 [0] : vector<32x128xf32> to vector<128xf32>
    %120 = vector.shape_cast %119 : vector<128xf32> to vector<1x128xf32>
    %cst_81 = arith.constant 3.200000e+01 : f32
    %121 = vector.broadcast %cst_81 : f32 to vector<1x128xf32>
    %122 = arith.divf %120, %121 : vector<1x128xf32>
    %123 = arith.mulf %118, %118 : vector<32x128xf32>
    %cst_82 = arith.constant dense<0.000000e+00> : vector<128xf32>
    %124 = vector.multi_reduction <add>, %123, %cst_82 [0] : vector<32x128xf32> to vector<128xf32>
    %125 = vector.shape_cast %124 : vector<128xf32> to vector<1x128xf32>
    %cst_83 = arith.constant 3.200000e+01 : f32
    %126 = vector.broadcast %cst_83 : f32 to vector<1x128xf32>
    %127 = arith.divf %125, %126 : vector<1x128xf32>
    %128 = arith.mulf %122, %122 : vector<1x128xf32>
    %129 = arith.subf %127, %128 : vector<1x128xf32>
    %130 = vector.broadcast %122 : vector<1x128xf32> to vector<32x128xf32>
    %131 = arith.subf %118, %130 : vector<32x128xf32>
    %cst_84 = arith.constant 9.99999974E-6 : f32
    %132 = vector.broadcast %cst_84 : f32 to vector<1x128xf32>
    %133 = arith.addf %129, %132 : vector<1x128xf32>
    %134 = math.rsqrt %133 : vector<1x128xf32>
    %135 = vector.broadcast %134 : vector<1x128xf32> to vector<32x128xf32>
    %136 = arith.mulf %131, %135 : vector<32x128xf32>
    %c0_85 = arith.constant 0 : index
    %c0_86 = arith.constant 0 : index
    %137 = vector.load %arg7[%c0_85, %c0_86] : memref<1x128xf32, #tpu.memory_space<vmem>>, vector<1x128xf32>
    %138 = vector.broadcast %137 : vector<1x128xf32> to vector<32x128xf32>
    %139 = arith.mulf %136, %138 : vector<32x128xf32>
    %c0_87 = arith.constant 0 : index
    %c0_88 = arith.constant 0 : index
    %140 = vector.load %arg8[%c0_87, %c0_88] : memref<1x128xf32, #tpu.memory_space<vmem>>, vector<1x128xf32>
    %141 = vector.broadcast %140 : vector<1x128xf32> to vector<32x128xf32>
    %142 = arith.addf %139, %141 : vector<32x128xf32>
    %cst_89 = arith.constant 0.000000e+00 : f32
    %143 = vector.broadcast %cst_89 : f32 to vector<32x128xf32>
    %144 = arith.maximumf %142, %143 : vector<32x128xf32>
    %c0_90 = arith.constant 0 : index
    %c0_91 = arith.constant 0 : index
    %145 = vector.load %arg9[%c0_90, %c0_91] : memref<72x32xf32, #tpu.memory_space<vmem>>, vector<72x32xf32>
    %cst_92 = arith.constant dense<0.000000e+00> : vector<72x128xf32>
    %146 = tpu.matmul %145, %144, %cst_92 {dimension_numbers = #tpu.dot_dimension_numbers<[1], [0], [0], [1], [0, 0, 1, 1], [], []>} : vector<72x32xf32>, vector<32x128xf32>, vector<72x128xf32> -> vector<72x128xf32>
    %147 = vector.extract_strided_slice %146 {offsets = [0, 0], sizes = [8, 128], strides = [1, 1]} : vector<72x128xf32> to vector<8x128xf32>
    %c0_93 = arith.constant 0 : index
    %c0_94 = arith.constant 0 : index
    %c0_95 = arith.constant 0 : index
    %148 = vector.load %arg10[%c0_93, %c0_94, %c0_95] : memref<9x128x128xf32, #tpu.memory_space<vmem>>, vector<1x128x128xf32>
    %149 = vector.shape_cast %148 : vector<1x128x128xf32> to vector<128x128xf32>
    %cst_96 = arith.constant dense<0.000000e+00> : vector<8x128xf32>
    %150 = tpu.matmul %147, %149, %cst_96 {dimension_numbers = #tpu.dot_dimension_numbers<[1], [0], [0], [1], [0, 0, 1, 1], [], []>} : vector<8x128xf32>, vector<128x128xf32>, vector<8x128xf32> -> vector<8x128xf32>
    %151 = vector.extract_strided_slice %146 {offsets = [8, 0], sizes = [8, 128], strides = [1, 1]} : vector<72x128xf32> to vector<8x128xf32>
    %c1_97 = arith.constant 1 : index
    %c0_98 = arith.constant 0 : index
    %c0_99 = arith.constant 0 : index
    %152 = vector.load %arg10[%c1_97, %c0_98, %c0_99] : memref<9x128x128xf32, #tpu.memory_space<vmem>>, vector<1x128x128xf32>
    %153 = vector.shape_cast %152 : vector<1x128x128xf32> to vector<128x128xf32>
    %cst_100 = arith.constant dense<0.000000e+00> : vector<8x128xf32>
    %154 = tpu.matmul %151, %153, %cst_100 {dimension_numbers = #tpu.dot_dimension_numbers<[1], [0], [0], [1], [0, 0, 1, 1], [], []>} : vector<8x128xf32>, vector<128x128xf32>, vector<8x128xf32> -> vector<8x128xf32>
    %155 = arith.addf %150, %154 : vector<8x128xf32>
    %156 = vector.extract_strided_slice %146 {offsets = [16, 0], sizes = [8, 128], strides = [1, 1]} : vector<72x128xf32> to vector<8x128xf32>
    %c2_101 = arith.constant 2 : index
    %c0_102 = arith.constant 0 : index
    %c0_103 = arith.constant 0 : index
    %157 = vector.load %arg10[%c2_101, %c0_102, %c0_103] : memref<9x128x128xf32, #tpu.memory_space<vmem>>, vector<1x128x128xf32>
    %158 = vector.shape_cast %157 : vector<1x128x128xf32> to vector<128x128xf32>
    %cst_104 = arith.constant dense<0.000000e+00> : vector<8x128xf32>
    %159 = tpu.matmul %156, %158, %cst_104 {dimension_numbers = #tpu.dot_dimension_numbers<[1], [0], [0], [1], [0, 0, 1, 1], [], []>} : vector<8x128xf32>, vector<128x128xf32>, vector<8x128xf32> -> vector<8x128xf32>
    %160 = arith.addf %155, %159 : vector<8x128xf32>
    %161 = vector.extract_strided_slice %146 {offsets = [24, 0], sizes = [8, 128], strides = [1, 1]} : vector<72x128xf32> to vector<8x128xf32>
    %c3_105 = arith.constant 3 : index
    %c0_106 = arith.constant 0 : index
    %c0_107 = arith.constant 0 : index
    %162 = vector.load %arg10[%c3_105, %c0_106, %c0_107] : memref<9x128x128xf32, #tpu.memory_space<vmem>>, vector<1x128x128xf32>
    %163 = vector.shape_cast %162 : vector<1x128x128xf32> to vector<128x128xf32>
    %cst_108 = arith.constant dense<0.000000e+00> : vector<8x128xf32>
    %164 = tpu.matmul %161, %163, %cst_108 {dimension_numbers = #tpu.dot_dimension_numbers<[1], [0], [0], [1], [0, 0, 1, 1], [], []>} : vector<8x128xf32>, vector<128x128xf32>, vector<8x128xf32> -> vector<8x128xf32>
    %165 = arith.addf %160, %164 : vector<8x128xf32>
    %166 = vector.extract_strided_slice %146 {offsets = [32, 0], sizes = [8, 128], strides = [1, 1]} : vector<72x128xf32> to vector<8x128xf32>
    %c4_109 = arith.constant 4 : index
    %c0_110 = arith.constant 0 : index
    %c0_111 = arith.constant 0 : index
    %167 = vector.load %arg10[%c4_109, %c0_110, %c0_111] : memref<9x128x128xf32, #tpu.memory_space<vmem>>, vector<1x128x128xf32>
    %168 = vector.shape_cast %167 : vector<1x128x128xf32> to vector<128x128xf32>
    %cst_112 = arith.constant dense<0.000000e+00> : vector<8x128xf32>
    %169 = tpu.matmul %166, %168, %cst_112 {dimension_numbers = #tpu.dot_dimension_numbers<[1], [0], [0], [1], [0, 0, 1, 1], [], []>} : vector<8x128xf32>, vector<128x128xf32>, vector<8x128xf32> -> vector<8x128xf32>
    %170 = arith.addf %165, %169 : vector<8x128xf32>
    %171 = vector.extract_strided_slice %146 {offsets = [40, 0], sizes = [8, 128], strides = [1, 1]} : vector<72x128xf32> to vector<8x128xf32>
    %c5_113 = arith.constant 5 : index
    %c0_114 = arith.constant 0 : index
    %c0_115 = arith.constant 0 : index
    %172 = vector.load %arg10[%c5_113, %c0_114, %c0_115] : memref<9x128x128xf32, #tpu.memory_space<vmem>>, vector<1x128x128xf32>
    %173 = vector.shape_cast %172 : vector<1x128x128xf32> to vector<128x128xf32>
    %cst_116 = arith.constant dense<0.000000e+00> : vector<8x128xf32>
    %174 = tpu.matmul %171, %173, %cst_116 {dimension_numbers = #tpu.dot_dimension_numbers<[1], [0], [0], [1], [0, 0, 1, 1], [], []>} : vector<8x128xf32>, vector<128x128xf32>, vector<8x128xf32> -> vector<8x128xf32>
    %175 = arith.addf %170, %174 : vector<8x128xf32>
    %176 = vector.extract_strided_slice %146 {offsets = [48, 0], sizes = [8, 128], strides = [1, 1]} : vector<72x128xf32> to vector<8x128xf32>
    %c6_117 = arith.constant 6 : index
    %c0_118 = arith.constant 0 : index
    %c0_119 = arith.constant 0 : index
    %177 = vector.load %arg10[%c6_117, %c0_118, %c0_119] : memref<9x128x128xf32, #tpu.memory_space<vmem>>, vector<1x128x128xf32>
    %178 = vector.shape_cast %177 : vector<1x128x128xf32> to vector<128x128xf32>
    %cst_120 = arith.constant dense<0.000000e+00> : vector<8x128xf32>
    %179 = tpu.matmul %176, %178, %cst_120 {dimension_numbers = #tpu.dot_dimension_numbers<[1], [0], [0], [1], [0, 0, 1, 1], [], []>} : vector<8x128xf32>, vector<128x128xf32>, vector<8x128xf32> -> vector<8x128xf32>
    %180 = arith.addf %175, %179 : vector<8x128xf32>
    %181 = vector.extract_strided_slice %146 {offsets = [56, 0], sizes = [8, 128], strides = [1, 1]} : vector<72x128xf32> to vector<8x128xf32>
    %c7_121 = arith.constant 7 : index
    %c0_122 = arith.constant 0 : index
    %c0_123 = arith.constant 0 : index
    %182 = vector.load %arg10[%c7_121, %c0_122, %c0_123] : memref<9x128x128xf32, #tpu.memory_space<vmem>>, vector<1x128x128xf32>
    %183 = vector.shape_cast %182 : vector<1x128x128xf32> to vector<128x128xf32>
    %cst_124 = arith.constant dense<0.000000e+00> : vector<8x128xf32>
    %184 = tpu.matmul %181, %183, %cst_124 {dimension_numbers = #tpu.dot_dimension_numbers<[1], [0], [0], [1], [0, 0, 1, 1], [], []>} : vector<8x128xf32>, vector<128x128xf32>, vector<8x128xf32> -> vector<8x128xf32>
    %185 = arith.addf %180, %184 : vector<8x128xf32>
    %186 = vector.extract_strided_slice %146 {offsets = [64, 0], sizes = [8, 128], strides = [1, 1]} : vector<72x128xf32> to vector<8x128xf32>
    %c8_125 = arith.constant 8 : index
    %c0_126 = arith.constant 0 : index
    %c0_127 = arith.constant 0 : index
    %187 = vector.load %arg10[%c8_125, %c0_126, %c0_127] : memref<9x128x128xf32, #tpu.memory_space<vmem>>, vector<1x128x128xf32>
    %188 = vector.shape_cast %187 : vector<1x128x128xf32> to vector<128x128xf32>
    %cst_128 = arith.constant dense<0.000000e+00> : vector<8x128xf32>
    %189 = tpu.matmul %186, %188, %cst_128 {dimension_numbers = #tpu.dot_dimension_numbers<[1], [0], [0], [1], [0, 0, 1, 1], [], []>} : vector<8x128xf32>, vector<128x128xf32>, vector<8x128xf32> -> vector<8x128xf32>
    %190 = arith.addf %185, %189 : vector<8x128xf32>
    %cst_129 = arith.constant dense<0.000000e+00> : vector<128xf32>
    %191 = vector.multi_reduction <add>, %190, %cst_129 [0] : vector<8x128xf32> to vector<128xf32>
    %192 = vector.shape_cast %191 : vector<128xf32> to vector<1x128xf32>
    %cst_130 = arith.constant 8.000000e+00 : f32
    %193 = vector.broadcast %cst_130 : f32 to vector<1x128xf32>
    %194 = arith.divf %192, %193 : vector<1x128xf32>
    %195 = arith.mulf %190, %190 : vector<8x128xf32>
    %cst_131 = arith.constant dense<0.000000e+00> : vector<128xf32>
    %196 = vector.multi_reduction <add>, %195, %cst_131 [0] : vector<8x128xf32> to vector<128xf32>
    %197 = vector.shape_cast %196 : vector<128xf32> to vector<1x128xf32>
    %cst_132 = arith.constant 8.000000e+00 : f32
    %198 = vector.broadcast %cst_132 : f32 to vector<1x128xf32>
    %199 = arith.divf %197, %198 : vector<1x128xf32>
    %200 = arith.mulf %194, %194 : vector<1x128xf32>
    %201 = arith.subf %199, %200 : vector<1x128xf32>
    %202 = vector.broadcast %194 : vector<1x128xf32> to vector<8x128xf32>
    %203 = arith.subf %190, %202 : vector<8x128xf32>
    %cst_133 = arith.constant 9.99999974E-6 : f32
    %204 = vector.broadcast %cst_133 : f32 to vector<1x128xf32>
    %205 = arith.addf %201, %204 : vector<1x128xf32>
    %206 = math.rsqrt %205 : vector<1x128xf32>
    %207 = vector.broadcast %206 : vector<1x128xf32> to vector<8x128xf32>
    %208 = arith.mulf %203, %207 : vector<8x128xf32>
    %c0_134 = arith.constant 0 : index
    %c0_135 = arith.constant 0 : index
    %209 = vector.load %arg11[%c0_134, %c0_135] : memref<1x128xf32, #tpu.memory_space<vmem>>, vector<1x128xf32>
    %210 = vector.broadcast %209 : vector<1x128xf32> to vector<8x128xf32>
    %211 = arith.mulf %208, %210 : vector<8x128xf32>
    %c0_136 = arith.constant 0 : index
    %c0_137 = arith.constant 0 : index
    %212 = vector.load %arg12[%c0_136, %c0_137] : memref<1x128xf32, #tpu.memory_space<vmem>>, vector<1x128xf32>
    %213 = vector.broadcast %212 : vector<1x128xf32> to vector<8x128xf32>
    %214 = arith.addf %211, %213 : vector<8x128xf32>
    %cst_138 = arith.constant 0.000000e+00 : f32
    %215 = vector.broadcast %cst_138 : f32 to vector<8x128xf32>
    %216 = arith.maximumf %214, %215 : vector<8x128xf32>
    %c0_139 = arith.constant 0 : index
    %c0_140 = arith.constant 0 : index
    %217 = vector.load %arg14[%c0_139, %c0_140] : memref<1x128xf32, #tpu.memory_space<vmem>>, vector<1x128xf32>
    %218 = vector.extract_strided_slice %216 {offsets = [0, 0], sizes = [2, 128], strides = [1, 1]} : vector<8x128xf32> to vector<2x128xf32>
    %c0_141 = arith.constant 0 : index
    %c0_142 = arith.constant 0 : index
    %c0_143 = arith.constant 0 : index
    %219 = vector.load %arg13[%c0_141, %c0_142, %c0_143] : memref<4x128x128xf32, #tpu.memory_space<vmem>>, vector<1x128x128xf32>
    %220 = vector.shape_cast %219 : vector<1x128x128xf32> to vector<128x128xf32>
    %cst_144 = arith.constant dense<0.000000e+00> : vector<2x128xf32>
    %221 = tpu.matmul %218, %220, %cst_144 {dimension_numbers = #tpu.dot_dimension_numbers<[1], [0], [0], [1], [0, 0, 1, 1], [], []>} : vector<2x128xf32>, vector<128x128xf32>, vector<2x128xf32> -> vector<2x128xf32>
    %222 = vector.broadcast %217 : vector<1x128xf32> to vector<2x128xf32>
    %223 = arith.addf %222, %221 : vector<2x128xf32>
    %224 = vector.extract_strided_slice %216 {offsets = [2, 0], sizes = [2, 128], strides = [1, 1]} : vector<8x128xf32> to vector<2x128xf32>
    %c1_145 = arith.constant 1 : index
    %c0_146 = arith.constant 0 : index
    %c0_147 = arith.constant 0 : index
    %225 = vector.load %arg13[%c1_145, %c0_146, %c0_147] : memref<4x128x128xf32, #tpu.memory_space<vmem>>, vector<1x128x128xf32>
    %226 = vector.shape_cast %225 : vector<1x128x128xf32> to vector<128x128xf32>
    %cst_148 = arith.constant dense<0.000000e+00> : vector<2x128xf32>
    %227 = tpu.matmul %224, %226, %cst_148 {dimension_numbers = #tpu.dot_dimension_numbers<[1], [0], [0], [1], [0, 0, 1, 1], [], []>} : vector<2x128xf32>, vector<128x128xf32>, vector<2x128xf32> -> vector<2x128xf32>
    %228 = arith.addf %223, %227 : vector<2x128xf32>
    %229 = vector.extract_strided_slice %216 {offsets = [4, 0], sizes = [2, 128], strides = [1, 1]} : vector<8x128xf32> to vector<2x128xf32>
    %c2_149 = arith.constant 2 : index
    %c0_150 = arith.constant 0 : index
    %c0_151 = arith.constant 0 : index
    %230 = vector.load %arg13[%c2_149, %c0_150, %c0_151] : memref<4x128x128xf32, #tpu.memory_space<vmem>>, vector<1x128x128xf32>
    %231 = vector.shape_cast %230 : vector<1x128x128xf32> to vector<128x128xf32>
    %cst_152 = arith.constant dense<0.000000e+00> : vector<2x128xf32>
    %232 = tpu.matmul %229, %231, %cst_152 {dimension_numbers = #tpu.dot_dimension_numbers<[1], [0], [0], [1], [0, 0, 1, 1], [], []>} : vector<2x128xf32>, vector<128x128xf32>, vector<2x128xf32> -> vector<2x128xf32>
    %233 = arith.addf %228, %232 : vector<2x128xf32>
    %234 = vector.extract_strided_slice %216 {offsets = [6, 0], sizes = [2, 128], strides = [1, 1]} : vector<8x128xf32> to vector<2x128xf32>
    %c3_153 = arith.constant 3 : index
    %c0_154 = arith.constant 0 : index
    %c0_155 = arith.constant 0 : index
    %235 = vector.load %arg13[%c3_153, %c0_154, %c0_155] : memref<4x128x128xf32, #tpu.memory_space<vmem>>, vector<1x128x128xf32>
    %236 = vector.shape_cast %235 : vector<1x128x128xf32> to vector<128x128xf32>
    %cst_156 = arith.constant dense<0.000000e+00> : vector<2x128xf32>
    %237 = tpu.matmul %234, %236, %cst_156 {dimension_numbers = #tpu.dot_dimension_numbers<[1], [0], [0], [1], [0, 0, 1, 1], [], []>} : vector<2x128xf32>, vector<128x128xf32>, vector<2x128xf32> -> vector<2x128xf32>
    %238 = arith.addf %233, %237 : vector<2x128xf32>
    %c0_157 = arith.constant 0 : index
    %c0_158 = arith.constant 0 : index
    %239 = vector.load %arg15[%c0_157, %c0_158] : memref<2x128xf32, #tpu.memory_space<vmem>>, vector<2x128xf32>
    tpu.vector_store %arg15[%c0_157, %c0_158], %238 {strides = array<i32>} : memref<2x128xf32, #tpu.memory_space<vmem>>, vector<2x128xf32>,
    return
  }
}

</mosaic_0001>

<llo_original>
// kernel: _fused_forward.1
$region0: #{_fused_forward.1}
  #allocation0 [shape = 'u32[]', space=smem, size = 0x4, offset = 0x4, fixed_abs, tag = 'smem constant byte address 0x4 - core index']
  #allocation1 [shape = 'u32[144,128]{1,0:T(1,128)}', space=vmem, size = 0x12000, scoped, tag = 'internal scratch']
  %s0 = inlined_call_operand.vmem [shape: f32[512,128], index: 0, kind: input, shape index: {}]
  %s1 = inlined_call_operand.hbm [shape: f32[1152,512], index: 1, kind: input, shape index: {}]
  %s2 = inlined_call_operand.hbm [shape: f32[9,128,128], index: 2, kind: input, shape index: {}]
  %s3 = inlined_call_operand.hbm [shape: f32[1,128], index: 3, kind: input, shape index: {}]
  %s4 = inlined_call_operand.hbm [shape: f32[1,128], index: 4, kind: input, shape index: {}]
  %s5 = inlined_call_operand.hbm [shape: f32[288,128], index: 5, kind: input, shape index: {}]
  %s6 = inlined_call_operand.hbm [shape: f32[9,128,128], index: 6, kind: input, shape index: {}]
  %s7 = inlined_call_operand.hbm [shape: f32[1,128], index: 7, kind: input, shape index: {}]
  %s8 = inlined_call_operand.hbm [shape: f32[1,128], index: 8, kind: input, shape index: {}]
  %s9 = inlined_call_operand.vmem [shape: f32[72,32], index: 9, kind: input, shape index: {}]
  %s10 = inlined_call_operand.hbm [shape: f32[9,128,128], index: 10, kind: input, shape index: {}]
  %s11 = inlined_call_operand.hbm [shape: f32[1,128], index: 11, kind: input, shape index: {}]
  %s12 = inlined_call_operand.hbm [shape: f32[1,128], index: 12, kind: input, shape index: {}]
  %s13 = inlined_call_operand.hbm [shape: f32[4,128,128], index: 13, kind: input, shape index: {}]
  %s14 = inlined_call_operand.hbm [shape: f32[1,128], index: 14, kind: input, shape index: {}]
  %s15 = inlined_call_operand.vmem [shape: f32[2,128], index: 15, kind: output, shape index: {}]
  %s16 = sld [smem:[#allocation0]]
  $region122: #{_fused_forward.1} parent=0
    _
  %s18 = ssub.s32 1, %s16
  %s19 = scalar_select 0, %s18, %s16
  $region1: #{_fused_forward.1} parent=0
    #allocation2 [shape = 'u8[2359296]{0}', space=vmem, size = 0x240000, scoped, tag = 'input window, operand 1, single buffered']
    #allocation3 [shape = 's32[1]{0}', space=sflag, size = 0x4, scoped, tag = 'scoped memory for _fused_forward.1']
    #allocation4 [shape = 'u8[589824]{0}', space=vmem, size = 0x90000, scoped, tag = 'input window, operand 2, single buffered']
    #allocation5 [shape = 's32[1]{0}', space=sflag, size = 0x4, scoped, tag = 'scoped memory for _fused_forward.1']
    #allocation6 [shape = 'u8[512]{0}', space=vmem, size = 0x400, scoped, tag = 'input window, operand 3, single buffered']
    #allocation7 [shape = 'u8[512]{0}', space=vmem, size = 0x400, scoped, tag = 'input window, operand 4, single buffered']
    #allocation8 [shape = 's32[1]{0}', space=sflag, size = 0x4, scoped, tag = 'scoped memory for _fused_forward.1']
    #allocation9 [shape = 'u8[147456]{0}', space=vmem, size = 0x24000, scoped, tag = 'input window, operand 5, single buffered']
    #allocation10 [shape = 'u8[589824]{0}', space=vmem, size = 0x90000, scoped, tag = 'input window, operand 6, single buffered']
    #allocation11 [shape = 's32[1]{0}', space=sflag, size = 0x4, scoped, tag = 'scoped memory for _fused_forward.1']
    #allocation12 [shape = 'u8[512]{0}', space=vmem, size = 0x400, scoped, tag = 'input window, operand 7, single buffered']
    #allocation13 [shape = 'u8[512]{0}', space=vmem, size = 0x400, scoped, tag = 'input window, operand 8, single buffered']
    #allocation14 [shape = 's32[1]{0}', space=sflag, size = 0x4, scoped, tag = 'scoped memory for _fused_forward.1']
    #allocation15 [shape = 'u8[589824]{0}', space=vmem, size = 0x90000, scoped, tag = 'input window, operand 10, single buffered']
    #allocation16 [shape = 'u8[512]{0}', space=vmem, size = 0x400, scoped, tag = 'input window, operand 11, single buffered']
    #allocation17 [shape = 's32[1]{0}', space=sflag, size = 0x4, scoped, tag = 'scoped memory for _fused_forward.1']
    #allocation18 [shape = 'u8[512]{0}', space=vmem, size = 0x400, scoped, tag = 'input window, operand 12, single buffered']
    #allocation19 [shape = 'u8[262144]{0}', space=vmem, size = 0x40000, scoped, tag = 'input window, operand 13, single buffered']
    #allocation20 [shape = 's32[1]{0}', space=sflag, size = 0x4, scoped, tag = 'scoped memory for _fused_forward.1']
    #allocation21 [shape = 'u8[512]{0}', space=vmem, size = 0x400, scoped, tag = 'input window, operand 14, single buffered']
    %20 = vsyncpa [#allocation3], 0
    %21 = vsyncpa [#allocation5], 0
    %22 = vsyncpa [#allocation8], 0
    %23 = vsyncpa [#allocation11], 0
    %24 = vsyncpa [#allocation14], 0
    %25 = vsyncpa [#allocation17], 0
    %26 = vsyncpa [#allocation20], 0
    // Predicated region
    $region2: #{_fused_forward.1} parent=1 // pred_check
      _
    $region3: #{_fused_forward.1} parent=1 // pred_check_branch
      %28 = sbr.rel (0) target = $region5
    $region4: #{_fused_forward.1} parent=1 // pred_region
      _
    $region5: #{_fused_forward.1} parent=1 // pred_fallthru
      _
    // Predicated region
    $region6: #{_fused_forward.1} parent=1 // pred_check
      _
    $region7: #{_fused_forward.1} parent=1 // pred_check_branch
      %30 = sbr.rel (0) target = $region9
    $region8: #{_fused_forward.1} parent=1 // pred_region
      %s32 = ssub.s32 73728, 73728
      %33 = vsyncadd [#allocation3], %s32
      %s34 = sshll.u32 [#allocation2], 4
      %s35 = int_to_ptr.vmem [resolvable:$true] %s34
      %40 = dma.hbm_to_vmem [thread:$0]  %s1, 73728, %s35, [#allocation3], 512, 512, 32
    $region9: #{_fused_forward.1} parent=1 // pred_fallthru
      _
    // Predicated region
    $region10: #{_fused_forward.1} parent=1 // pred_check
      _
    $region11: #{_fused_forward.1} parent=1 // pred_check_branch
      %42 = sbr.rel (0) target = $region13
    $region12: #{_fused_forward.1} parent=1 // pred_region
      %s44 = ssub.s32 18432, 18432
      %45 = vsyncadd [#allocation5], %s44
      %s46 = sshll.u32 [#allocation4], 4
      %s47 = int_to_ptr.vmem [resolvable:$true] %s46
      %52 = dma.hbm_to_vmem [thread:$0]  %s2, 18432, %s47, [#allocation5], 128, 128, 8
    $region13: #{_fused_forward.1} parent=1 // pred_fallthru
      _
    // Predicated region
    $region14: #{_fused_forward.1} parent=1 // pred_check
      _
    $region15: #{_fused_forward.1} parent=1 // pred_check_branch
      %54 = sbr.rel (0) target = $region17
    $region16: #{_fused_forward.1} parent=1 // pred_region
      %s56 = ssub.s32 16, 16
      %57 = vsyncadd [#allocation5], %s56
      %s59 = sshll.u32 [#allocation6], 4
      %s60 = int_to_ptr.vmem [resolvable:$true] %s59
      %62 = dma.hbm_to_vmem [thread:$0]  %s3, 16, %s60, [#allocation5]
    $region17: #{_fused_forward.1} parent=1 // pred_fallthru
      _
    // Predicated region
    $region18: #{_fused_forward.1} parent=1 // pred_check
      _
    $region19: #{_fused_forward.1} parent=1 // pred_check_branch
      %64 = sbr.rel (0) target = $region21
    $region20: #{_fused_forward.1} parent=1 // pred_region
      %s66 = ssub.s32 16, 16
      %67 = vsyncadd [#allocation8], %s66
      %s69 = sshll.u32 [#allocation7], 4
      %s70 = int_to_ptr.vmem [resolvable:$true] %s69
      %72 = dma.hbm_to_vmem [thread:$0]  %s4, 16, %s70, [#allocation8]
    $region21: #{_fused_forward.1} parent=1 // pred_fallthru
      _
    // Predicated region
    $region22: #{_fused_forward.1} parent=1 // pred_check
      _
    $region23: #{_fused_forward.1} parent=1 // pred_check_branch
      %74 = sbr.rel (0) target = $region25
    $region24: #{_fused_forward.1} parent=1 // pred_region
      %s76 = ssub.s32 4608, 4608
      %77 = vsyncadd [#allocation8], %s76
      %s78 = sshll.u32 [#allocation9], 4
      %s79 = int_to_ptr.vmem [resolvable:$true] %s78
      %84 = dma.hbm_to_vmem [thread:$0]  %s5, 4608, %s79, [#allocation8], 128, 128, 8
    $region25: #{_fused_forward.1} parent=1 // pred_fallthru
      _
    // Predicated region
    $region26: #{_fused_forward.1} parent=1 // pred_check
      _
    $region27: #{_fused_forward.1} parent=1 // pred_check_branch
      %86 = sbr.rel (0) target = $region29
    $region28: #{_fused_forward.1} parent=1 // pred_region
      %s88 = ssub.s32 18432, 18432
      %89 = vsyncadd [#allocation11], %s88
      %s90 = sshll.u32 [#allocation10], 4
      %s91 = int_to_ptr.vmem [resolvable:$true] %s90
      %96 = dma.hbm_to_vmem [thread:$0]  %s6, 18432, %s91, [#allocation11], 128, 128, 8
    $region29: #{_fused_forward.1} parent=1 // pred_fallthru
      _
    // Predicated region
    $region30: #{_fused_forward.1} parent=1 // pred_check
      _
    $region31: #{_fused_forward.1} parent=1 // pred_check_branch
      %98 = sbr.rel (0) target = $region33
    $region32: #{_fused_forward.1} parent=1 // pred_region
      %s100 = ssub.s32 16, 16
      %101 = vsyncadd [#allocation11], %s100
      %s103 = sshll.u32 [#allocation12], 4
      %s104 = int_to_ptr.vmem [resolvable:$true] %s103
      %106 = dma.hbm_to_vmem [thread:$0]  %s7, 16, %s104, [#allocation11]
    $region33: #{_fused_forward.1} parent=1 // pred_fallthru
      _
    // Predicated region
    $region34: #{_fused_forward.1} parent=1 // pred_check
      _
    $region35: #{_fused_forward.1} parent=1 // pred_check_branch
      %108 = sbr.rel (0) target = $region37
    $region36: #{_fused_forward.1} parent=1 // pred_region
      %s110 = ssub.s32 16, 16
      %111 = vsyncadd [#allocation14], %s110
      %s113 = sshll.u32 [#allocation13], 4
      %s114 = int_to_ptr.vmem [resolvable:$true] %s113
      %116 = dma.hbm_to_vmem [thread:$0]  %s8, 16, %s114, [#allocation14]
    $region37: #{_fused_forward.1} parent=1 // pred_fallthru
      _
    // Predicated region
    $region38: #{_fused_forward.1} parent=1 // pred_check
      _
    $region39: #{_fused_forward.1} parent=1 // pred_check_branch
      %118 = sbr.rel (0) target = $region41
    $region40: #{_fused_forward.1} parent=1 // pred_region
      _
    $region41: #{_fused_forward.1} parent=1 // pred_fallthru
      _
    // Predicated region
    $region42: #{_fused_forward.1} parent=1 // pred_check
      _
    $region43: #{_fused_forward.1} parent=1 // pred_check_branch
      %120 = sbr.rel (0) target = $region45
    $region44: #{_fused_forward.1} parent=1 // pred_region
      %s122 = ssub.s32 18432, 18432
      %123 = vsyncadd [#allocation14], %s122
      %s124 = sshll.u32 [#allocation15], 4
      %s125 = int_to_ptr.vmem [resolvable:$true] %s124
      %130 = dma.hbm_to_vmem [thread:$0]  %s10, 18432, %s125, [#allocation14], 128, 128, 8
    $region45: #{_fused_forward.1} parent=1 // pred_fallthru
      _
    // Predicated region
    $region46: #{_fused_forward.1} parent=1 // pred_check
      _
    $region47: #{_fused_forward.1} parent=1 // pred_check_branch
      %132 = sbr.rel (0) target = $region49
    $region48: #{_fused_forward.1} parent=1 // pred_region
      %s134 = ssub.s32 16, 16
      %135 = vsyncadd [#allocation17], %s134
      %s137 = sshll.u32 [#allocation16], 4
      %s138 = int_to_ptr.vmem [resolvable:$true] %s137
      %140 = dma.hbm_to_vmem [thread:$0]  %s11, 16, %s138, [#allocation17]
    $region49: #{_fused_forward.1} parent=1 // pred_fallthru
      _
    // Predicated region
    $region50: #{_fused_forward.1} parent=1 // pred_check
      _
    $region51: #{_fused_forward.1} parent=1 // pred_check_branch
      %142 = sbr.rel (0) target = $region53
    $region52: #{_fused_forward.1} parent=1 // pred_region
      %s144 = ssub.s32 16, 16
      %145 = vsyncadd [#allocation17], %s144
      %s147 = sshll.u32 [#allocation18], 4
      %s148 = int_to_ptr.vmem [resolvable:$true] %s147
      %150 = dma.hbm_to_vmem [thread:$0]  %s12, 16, %s148, [#allocation17]
    $region53: #{_fused_forward.1} parent=1 // pred_fallthru
      _
    // Predicated region
    $region54: #{_fused_forward.1} parent=1 // pred_check
      _
    $region55: #{_fused_forward.1} parent=1 // pred_check_branch
      %152 = sbr.rel (0) target = $region57
    $region56: #{_fused_forward.1} parent=1 // pred_region
      %s154 = ssub.s32 8192, 8192
      %155 = vsyncadd [#allocation20], %s154
      %s156 = sshll.u32 [#allocation19], 4
      %s157 = int_to_ptr.vmem [resolvable:$true] %s156
      %162 = dma.hbm_to_vmem [thread:$0]  %s13, 8192, %s157, [#allocation20], 128, 128, 8
    $region57: #{_fused_forward.1} parent=1 // pred_fallthru
      _
    // Predicated region
    $region58: #{_fused_forward.1} parent=1 // pred_check
      _
    $region59: #{_fused_forward.1} parent=1 // pred_check_branch
      %164 = sbr.rel (0) target = $region61
    $region60: #{_fused_forward.1} parent=1 // pred_region
      %s166 = ssub.s32 16, 16
      %167 = vsyncadd [#allocation20], %s166
      %s169 = sshll.u32 [#allocation21], 4
      %s170 = int_to_ptr.vmem [resolvable:$true] %s169
      %172 = dma.hbm_to_vmem [thread:$0]  %s14, 16, %s170, [#allocation20]
    $region61: #{_fused_forward.1} parent=1 // pred_fallthru
      _
    // Predicated region
    $region62: #{_fused_forward.1} parent=1 // pred_check
      _
    $region63: #{_fused_forward.1} parent=1 // pred_check_branch
      %174 = sbr.rel (0) target = $region65
    $region64: #{_fused_forward.1} parent=1 // pred_region
      %175 = dma.done [#allocation3], 73728
    $region65: #{_fused_forward.1} parent=1 // pred_fallthru
      _
    // Predicated region
    $region66: #{_fused_forward.1} parent=1 // pred_check
      _
    $region67: #{_fused_forward.1} parent=1 // pred_check_branch
      %177 = sbr.rel (0) target = $region69
    $region68: #{_fused_forward.1} parent=1 // pred_region
      %178 = dma.done [#allocation5], 18432
    $region69: #{_fused_forward.1} parent=1 // pred_fallthru
      _
    // Predicated region
    $region70: #{_fused_forward.1} parent=1 // pred_check
      _
    $region71: #{_fused_forward.1} parent=1 // pred_check_branch
      %180 = sbr.rel (0) target = $region73
    $region72: #{_fused_forward.1} parent=1 // pred_region
      %181 = dma.done [#allocation5], 16
    $region73: #{_fused_forward.1} parent=1 // pred_fallthru
      _
    // Predicated region
    $region74: #{_fused_forward.1} parent=1 // pred_check
      _
    $region75: #{_fused_forward.1} parent=1 // pred_check_branch
      %183 = sbr.rel (0) target = $region77
    $region76: #{_fused_forward.1} parent=1 // pred_region
      %184 = dma.done [#allocation8], 16
    $region77: #{_fused_forward.1} parent=1 // pred_fallthru
      _
    // Predicated region
    $region78: #{_fused_forward.1} parent=1 // pred_check
      _
    $region79: #{_fused_forward.1} parent=1 // pred_check_branch
      %186 = sbr.rel (0) target = $region81
    $region80: #{_fused_forward.1} parent=1 // pred_region
      %187 = dma.done [#allocation8], 4608
    $region81: #{_fused_forward.1} parent=1 // pred_fallthru
      _
    // Predicated region
    $region82: #{_fused_forward.1} parent=1 // pred_check
      _
    $region83: #{_fused_forward.1} parent=1 // pred_check_branch
      %189 = sbr.rel (0) target = $region85
    $region84: #{_fused_forward.1} parent=1 // pred_region
      %190 = dma.done [#allocation11], 18432
    $region85: #{_fused_forward.1} parent=1 // pred_fallthru
      _
    // Predicated region
    $region86: #{_fused_forward.1} parent=1 // pred_check
      _
    $region87: #{_fused_forward.1} parent=1 // pred_check_branch
      %192 = sbr.rel (0) target = $region89
    $region88: #{_fused_forward.1} parent=1 // pred_region
      %193 = dma.done [#allocation11], 16
    $region89: #{_fused_forward.1} parent=1 // pred_fallthru
      _
    // Predicated region
    $region90: #{_fused_forward.1} parent=1 // pred_check
      _
    $region91: #{_fused_forward.1} parent=1 // pred_check_branch
      %195 = sbr.rel (0) target = $region93
    $region92: #{_fused_forward.1} parent=1 // pred_region
      %196 = dma.done [#allocation14], 16
    $region93: #{_fused_forward.1} parent=1 // pred_fallthru
      _
    // Predicated region
    $region94: #{_fused_forward.1} parent=1 // pred_check
      _
    $region95: #{_fused_forward.1} parent=1 // pred_check_branch
      %198 = sbr.rel (0) target = $region97
    $region96: #{_fused_forward.1} parent=1 // pred_region
      %199 = dma.done [#allocation14], 18432
    $region97: #{_fused_forward.1} parent=1 // pred_fallthru
      _
    // Predicated region
    $region98: #{_fused_forward.1} parent=1 // pred_check
      _
    $region99: #{_fused_forward.1} parent=1 // pred_check_branch
      %201 = sbr.rel (0) target = $region101
    $region100: #{_fused_forward.1} parent=1 // pred_region
      %202 = dma.done [#allocation17], 16
    $region101: #{_fused_forward.1} parent=1 // pred_fallthru
      _
    // Predicated region
    $region102: #{_fused_forward.1} parent=1 // pred_check
      _
    $region103: #{_fused_forward.1} parent=1 // pred_check_branch
      %204 = sbr.rel (0) target = $region105
    $region104: #{_fused_forward.1} parent=1 // pred_region
      %205 = dma.done [#allocation17], 16
    $region105: #{_fused_forward.1} parent=1 // pred_fallthru
      _
    // Predicated region
    $region106: #{_fused_forward.1} parent=1 // pred_check
      _
    $region107: #{_fused_forward.1} parent=1 // pred_check_branch
      %207 = sbr.rel (0) target = $region109
    $region108: #{_fused_forward.1} parent=1 // pred_region
      %208 = dma.done [#allocation20], 8192
    $region109: #{_fused_forward.1} parent=1 // pred_fallthru
      _
    // Predicated region
    $region110: #{_fused_forward.1} parent=1 // pred_check
      _
    $region111: #{_fused_forward.1} parent=1 // pred_check_branch
      %210 = sbr.rel (0) target = $region113
    $region112: #{_fused_forward.1} parent=1 // pred_region
      %211 = dma.done [#allocation20], 16
    $region113: #{_fused_forward.1} parent=1 // pred_fallthru
      _
    %v212 = vld [vmem:[%s0] sm:$0xff]
    %v213 = vld [vmem:[%s0 + $0x8] sm:$0xff]
    %v214 = vld [vmem:[%s0 + $0x10] sm:$0xff]
    %v215 = vld [vmem:[%s0 + $0x18] sm:$0xff]
    %v216 = vld [vmem:[%s0 + $0x20] sm:$0xff]
    %v217 = vld [vmem:[%s0 + $0x28] sm:$0xff]
    %v218 = vld [vmem:[%s0 + $0x30] sm:$0xff]
    %v219 = vld [vmem:[%s0 + $0x38] sm:$0xff]
    %v220 = vld [vmem:[%s0 + $0x40] sm:$0xff]
    %v221 = vld [vmem:[%s0 + $0x48] sm:$0xff]
    %v222 = vld [vmem:[%s0 + $0x50] sm:$0xff]
    %v223 = vld [vmem:[%s0 + $0x58] sm:$0xff]
    %v224 = vld [vmem:[%s0 + $0x60] sm:$0xff]
    %v225 = vld [vmem:[%s0 + $0x68] sm:$0xff]
    %v226 = vld [vmem:[%s0 + $0x70] sm:$0xff]
    %v227 = vld [vmem:[%s0 + $0x78] sm:$0xff]
    %v228 = vld [vmem:[%s0 + $0x80] sm:$0xff]
    %v229 = vld [vmem:[%s0 + $0x88] sm:$0xff]
    %v230 = vld [vmem:[%s0 + $0x90] sm:$0xff]
    %v231 = vld [vmem:[%s0 + $0x98] sm:$0xff]
    %v232 = vld [vmem:[%s0 + $0xa0] sm:$0xff]
    %v233 = vld [vmem:[%s0 + $0xa8] sm:$0xff]
    %v234 = vld [vmem:[%s0 + $0xb0] sm:$0xff]
    %v235 = vld [vmem:[%s0 + $0xb8] sm:$0xff]
    %v236 = vld [vmem:[%s0 + $0xc0] sm:$0xff]
    %v237 = vld [vmem:[%s0 + $0xc8] sm:$0xff]
    %v238 = vld [vmem:[%s0 + $0xd0] sm:$0xff]
    %v239 = vld [vmem:[%s0 + $0xd8] sm:$0xff]
    %v240 = vld [vmem:[%s0 + $0xe0] sm:$0xff]
    %v241 = vld [vmem:[%s0 + $0xe8] sm:$0xff]
    %v242 = vld [vmem:[%s0 + $0xf0] sm:$0xff]
    %v243 = vld [vmem:[%s0 + $0xf8] sm:$0xff]
    %v244 = vld [vmem:[%s0 + $0x100] sm:$0xff]
    %v245 = vld [vmem:[%s0 + $0x108] sm:$0xff]
    %v246 = vld [vmem:[%s0 + $0x110] sm:$0xff]
    %v247 = vld [vmem:[%s0 + $0x118] sm:$0xff]
    %v248 = vld [vmem:[%s0 + $0x120] sm:$0xff]
    %v249 = vld [vmem:[%s0 + $0x128] sm:$0xff]
    %v250 = vld [vmem:[%s0 + $0x130] sm:$0xff]
    %v251 = vld [vmem:[%s0 + $0x138] sm:$0xff]
    %v252 = vld [vmem:[%s0 + $0x140] sm:$0xff]
    %v253 = vld [vmem:[%s0 + $0x148] sm:$0xff]
    %v254 = vld [vmem:[%s0 + $0x150] sm:$0xff]
    %v255 = vld [vmem:[%s0 + $0x158] sm:$0xff]
    %v256 = vld [vmem:[%s0 + $0x160] sm:$0xff]
    %v257 = vld [vmem:[%s0 + $0x168] sm:$0xff]
    %v258 = vld [vmem:[%s0 + $0x170] sm:$0xff]
    %v259 = vld [vmem:[%s0 + $0x178] sm:$0xff]
    %v260 = vld [vmem:[%s0 + $0x180] sm:$0xff]
    %v261 = vld [vmem:[%s0 + $0x188] sm:$0xff]
    %v262 = vld [vmem:[%s0 + $0x190] sm:$0xff]
    %v263 = vld [vmem:[%s0 + $0x198] sm:$0xff]
    %v264 = vld [vmem:[%s0 + $0x1a0] sm:$0xff]
    %v265 = vld [vmem:[%s0 + $0x1a8] sm:$0xff]
    %v266 = vld [vmem:[%s0 + $0x1b0] sm:$0xff]
    %v267 = vld [vmem:[%s0 + $0x1b8] sm:$0xff]
    %v268 = vld [vmem:[%s0 + $0x1c0] sm:$0xff]
    %v269 = vld [vmem:[%s0 + $0x1c8] sm:$0xff]
    %v270 = vld [vmem:[%s0 + $0x1d0] sm:$0xff]
    %v271 = vld [vmem:[%s0 + $0x1d8] sm:$0xff]
    %v272 = vld [vmem:[%s0 + $0x1e0] sm:$0xff]
    %v273 = vld [vmem:[%s0 + $0x1e8] sm:$0xff]
    %v274 = vld [vmem:[%s0 + $0x1f0] sm:$0xff]
    %v275 = vld [vmem:[%s0 + $0x1f8] sm:$0xff]
    %v276 = vld [vmem:[#allocation2] sm:$0xff]
    %v277 = vld [vmem:[#allocation2 + $0x8] sm:$0xff]
    %v278 = vld [vmem:[#allocation2 + $0x10] sm:$0xff]
    %v279 = vld [vmem:[#allocation2 + $0x18] sm:$0xff]
    %v280 = vld [vmem:[#allocation2 + $0x20] sm:$0xff]
    %v281 = vld [vmem:[#allocation2 + $0x28] sm:$0xff]
    %v282 = vld [vmem:[#allocation2 + $0x30] sm:$0xff]
    %v283 = vld [vmem:[#allocation2 + $0x38] sm:$0xff]
    %v284 = vld [vmem:[#allocation2 + $0x40] sm:$0xff]
    %v285 = vld [vmem:[#allocation2 + $0x48] sm:$0xff]
    %v286 = vld [vmem:[#allocation2 + $0x50] sm:$0xff]
    %v287 = vld [vmem:[#allocation2 + $0x58] sm:$0xff]
    %v288 = vld [vmem:[#allocation2 + $0x60] sm:$0xff]
    %v289 = vld [vmem:[#allocation2 + $0x68] sm:$0xff]
    %v290 = vld [vmem:[#allocation2 + $0x70] sm:$0xff]
    %v291 = vld [vmem:[#allocation2 + $0x78] sm:$0xff]
    %v292 = vld [vmem:[#allocation2 + $0x80] sm:$0xff]
    %v293 = vld [vmem:[#allocation2 + $0x88] sm:$0xff]
    %v294 = vld [vmem:[#allocation2 + $0x90] sm:$0xff]
    %v295 = vld [vmem:[#allocation2 + $0x98] sm:$0xff]
    %v296 = vld [vmem:[#allocation2 + $0xa0] sm:$0xff]
    %v297 = vld [vmem:[#allocation2 + $0xa8] sm:$0xff]
    %v298 = vld [vmem:[#allocation2 + $0xb0] sm:$0xff]
    %v299 = vld [vmem:[#allocation2 + $0xb8] sm:$0xff]
    %v300 = vld [vmem:[#allocation2 + $0xc0] sm:$0xff]
    %v301 = vld [vmem:[#allocation2 + $0xc8] sm:$0xff]
    %v302 = vld [vmem:[#allocation2 + $0xd0] sm:$0xff]
    %v303 = vld [vmem:[#allocation2 + $0xd8] sm:$0xff]
    %v304 = vld [vmem:[#allocation2 + $0xe0] sm:$0xff]
    %v305 = vld [vmem:[#allocation2 + $0xe8] sm:$0xff]
    %v306 = vld [vmem:[#allocation2 + $0xf0] sm:$0xff]
    %v307 = vld [vmem:[#allocation2 + $0xf8] sm:$0xff]
    %v308 = vld [vmem:[#allocation2 + $0x100] sm:$0xff]
    %v309 = vld [vmem:[#allocation2 + $0x108] sm:$0xff]
    %v310 = vld [vmem:[#allocation2 + $0x110] sm:$0xff]
    %v311 = vld [vmem:[#allocation2 + $0x118] sm:$0xff]
    %v312 = vld [vmem:[#allocation2 + $0x120] sm:$0xff]
    %v313 = vld [vmem:[#allocation2 + $0x128] sm:$0xff]
    %v314 = vld [vmem:[#allocation2 + $0x130] sm:$0xff]
    %v315 = vld [vmem:[#allocation2 + $0x138] sm:$0xff]
    %v316 = vld [vmem:[#allocation2 + $0x140] sm:$0xff]
    %v317 = vld [vmem:[#allocation2 + $0x148] sm:$0xff]
    %v318 = vld [vmem:[#allocation2 + $0x150] sm:$0xff]
    %v319 = vld [vmem:[#allocation2 + $0x158] sm:$0xff]
    %v320 = vld [vmem:[#allocation2 + $0x160] sm:$0xff]
    %v321 = vld [vmem:[#allocation2 + $0x168] sm:$0xff]
    %v322 = vld [vmem:[#allocation2 + $0x170] sm:$0xff]
    %v323 = vld [vmem:[#allocation2 + $0x178] sm:$0xff]
    %v324 = vld [vmem:[#allocation2 + $0x180] sm:$0xff]
    %v325 = vld [vmem:[#allocation2 + $0x188] sm:$0xff]
    %v326 = vld [vmem:[#allocation2 + $0x190] sm:$0xff]
    %v327 = vld [vmem:[#allocation2 + $0x198] sm:$0xff]
    %v328 = vld [vmem:[#allocation2 + $0x1a0] sm:$0xff]
    %v329 = vld [vmem:[#allocation2 + $0x1a8] sm:$0xff]
    %v330 = vld [vmem:[#allocation2 + $0x1b0] sm:$0xff]
    %v331 = vld [vmem:[#allocation2 + $0x1b8] sm:$0xff]
    %v332 = vld [vmem:[#allocation2 + $0x1c0] sm:$0xff]
    %v333 = vld [vmem:[#allocation2 + $0x1c8] sm:$0xff]
    %v334 = vld [vmem:[#allocation2 + $0x1d0] sm:$0xff]
    %v335 = vld [vmem:[#allocation2 + $0x1d8] sm:$0xff]
    %v336 = vld [vmem:[#allocation2 + $0x1e0] sm:$0xff]
    %v337 = vld [vmem:[#allocation2 + $0x1e8] sm:$0xff]
    %v338 = vld [vmem:[#allocation2 + $0x1f0] sm:$0xff]
    %v339 = vld [vmem:[#allocation2 + $0x1f8] sm:$0xff]
    %v340 = vld [vmem:[#allocation2 + $0x200] sm:$0xff]
    %v341 = vld [vmem:[#allocation2 + $0x208] sm:$0xff]
    %v342 = vld [vmem:[#allocation2 + $0x210] sm:$0xff]
    %v343 = vld [vmem:[#allocation2 + $0x218] sm:$0xff]
    %v344 = vld [vmem:[#allocation2 + $0x220] sm:$0xff]
    %v345 = vld [vmem:[#allocation2 + $0x228] sm:$0xff]
    %v346 = vld [vmem:[#allocation2 + $0x230] sm:$0xff]
    %v347 = vld [vmem:[#allocation2 + $0x238] sm:$0xff]
    %v348 = vld [vmem:[#allocation2 + $0x240] sm:$0xff]
    %v349 = vld [vmem:[#allocation2 + $0x248] sm:$0xff]
    %v350 = vld [vmem:[#allocation2 + $0x250] sm:$0xff]
    %v351 = vld [vmem:[#allocation2 + $0x258] sm:$0xff]
    %v352 = vld [vmem:[#allocation2 + $0x260] sm:$0xff]
    %v353 = vld [vmem:[#allocation2 + $0x268] sm:$0xff]
    %v354 = vld [vmem:[#allocation2 + $0x270] sm:$0xff]
    %v355 = vld [vmem:[#allocation2 + $0x278] sm:$0xff]
    %v356 = vld [vmem:[#allocation2 + $0x280] sm:$0xff]
    %v357 = vld [vmem:[#allocation2 + $0x288] sm:$0xff]
    %v358 = vld [vmem:[#allocation2 + $0x290] sm:$0xff]
    %v359 = vld [vmem:[#allocation2 + $0x298] sm:$0xff]
    %v360 = vld [vmem:[#allocation2 + $0x2a0] sm:$0xff]
    %v361 = vld [vmem:[#allocation2 + $0x2a8] sm:$0xff]
    %v362 = vld [vmem:[#allocation2 + $0x2b0] sm:$0xff]
    %v363 = vld [vmem:[#allocation2 + $0x2b8] sm:$0xff]
    %v364 = vld [vmem:[#allocation2 + $0x2c0] sm:$0xff]
    %v365 = vld [vmem:[#allocation2 + $0x2c8] sm:$0xff]
    %v366 = vld [vmem:[#allocation2 + $0x2d0] sm:$0xff]
    %v367 = vld [vmem:[#allocation2 + $0x2d8] sm:$0xff]
    %v368 = vld [vmem:[#allocation2 + $0x2e0] sm:$0xff]
    %v369 = vld [vmem:[#allocation2 + $0x2e8] sm:$0xff]
    %v370 = vld [vmem:[#allocation2 + $0x2f0] sm:$0xff]
    %v371 = vld [vmem:[#allocation2 + $0x2f8] sm:$0xff]
    %v372 = vld [vmem:[#allocation2 + $0x300] sm:$0xff]
    %v373 = vld [vmem:[#allocation2 + $0x308] sm:$0xff]
    %v374 = vld [vmem:[#allocation2 + $0x310] sm:$0xff]
    %v375 = vld [vmem:[#allocation2 + $0x318] sm:$0xff]
    %v376 = vld [vmem:[#allocation2 + $0x320] sm:$0xff]
    %v377 = vld [vmem:[#allocation2 + $0x328] sm:$0xff]
    %v378 = vld [vmem:[#allocation2 + $0x330] sm:$0xff]
    %v379 = vld [vmem:[#allocation2 + $0x338] sm:$0xff]
    %v380 = vld [vmem:[#allocation2 + $0x340] sm:$0xff]
    %v381 = vld [vmem:[#allocation2 + $0x348] sm:$0xff]
    %v382 = vld [vmem:[#allocation2 + $0x350] sm:$0xff]
    %v383 = vld [vmem:[#allocation2 + $0x358] sm:$0xff]
    %v384 = vld [vmem:[#allocation2 + $0x360] sm:$0xff]
    %v385 = vld [vmem:[#allocation2 + $0x368] sm:$0xff]
    %v386 = vld [vmem:[#allocation2 + $0x370] sm:$0xff]
    %v387 = vld [vmem:[#allocation2 + $0x378] sm:$0xff]
    %v388 = vld [vmem:[#allocation2 + $0x380] sm:$0xff]
    %v389 = vld [vmem:[#allocation2 + $0x388] sm:$0xff]
    %v390 = vld [vmem:[#allocation2 + $0x390] sm:$0xff]
    %v391 = vld [vmem:[#allocation2 + $0x398] sm:$0xff]
    %v392 = vld [vmem:[#allocation2 + $0x3a0] sm:$0xff]
    %v393 = vld [vmem:[#allocation2 + $0x3a8] sm:$0xff]
    %v394 = vld [vmem:[#allocation2 + $0x3b0] sm:$0xff]
    %v395 = vld [vmem:[#allocation2 + $0x3b8] sm:$0xff]
    %v396 = vld [vmem:[#allocation2 + $0x3c0] sm:$0xff]
    %v397 = vld [vmem:[#allocation2 + $0x3c8] sm:$0xff]
    %v398 = vld [vmem:[#allocation2 + $0x3d0] sm:$0xff]
    %v399 = vld [vmem:[#allocation2 + $0x3d8] sm:$0xff]
    %v400 = vld [vmem:[#allocation2 + $0x3e0] sm:$0xff]
    %v401 = vld [vmem:[#allocation2 + $0x3e8] sm:$0xff]
    %v402 = vld [vmem:[#allocation2 + $0x3f0] sm:$0xff]
    %v403 = vld [vmem:[#allocation2 + $0x3f8] sm:$0xff]
    %v404 = vld [vmem:[#allocation2 + $0x400] sm:$0xff]
    %v405 = vld [vmem:[#allocation2 + $0x408] sm:$0xff]
    %v406 = vld [vmem:[#allocation2 + $0x410] sm:$0xff]
    %v407 = vld [vmem:[#allocation2 + $0x418] sm:$0xff]
    %v408 = vld [vmem:[#allocation2 + $0x420] sm:$0xff]
    %v409 = vld [vmem:[#allocation2 + $0x428] sm:$0xff]
    %v410 = vld [vmem:[#allocation2 + $0x430] sm:$0xff]
    %v411 = vld [vmem:[#allocation2 + $0x438] sm:$0xff]
    %v412 = vld [vmem:[#allocation2 + $0x440] sm:$0xff]
    %v413 = vld [vmem:[#allocation2 + $0x448] sm:$0xff]
    %v414 = vld [vmem:[#allocation2 + $0x450] sm:$0xff]
    %v415 = vld [vmem:[#allocation2 + $0x458] sm:$0xff]
    %v416 = vld [vmem:[#allocation2 + $0x460] sm:$0xff]
    %v417 = vld [vmem:[#allocation2 + $0x468] sm:$0xff]
    %v418 = vld [vmem:[#allocation2 + $0x470] sm:$0xff]
    %v419 = vld [vmem:[#allocation2 + $0x478] sm:$0xff]
    %v420 = vld [vmem:[#allocation2 + $0x480] sm:$0xff]
    %v421 = vld [vmem:[#allocation2 + $0x488] sm:$0xff]
    %v422 = vld [vmem:[#allocation2 + $0x490] sm:$0xff]
    %v423 = vld [vmem:[#allocation2 + $0x498] sm:$0xff]
    %v424 = vld [vmem:[#allocation2 + $0x4a0] sm:$0xff]
    %v425 = vld [vmem:[#allocation2 + $0x4a8] sm:$0xff]
    %v426 = vld [vmem:[#allocation2 + $0x4b0] sm:$0xff]
    %v427 = vld [vmem:[#allocation2 + $0x4b8] sm:$0xff]
    %v428 = vld [vmem:[#allocation2 + $0x4c0] sm:$0xff]
    %v429 = vld [vmem:[#allocation2 + $0x4c8] sm:$0xff]
    %v430 = vld [vmem:[#allocation2 + $0x4d0] sm:$0xff]
    %v431 = vld [vmem:[#allocation2 + $0x4d8] sm:$0xff]
    %v432 = vld [vmem:[#allocation2 + $0x4e0] sm:$0xff]
    %v433 = vld [vmem:[#allocation2 + $0x4e8] sm:$0xff]
    %v434 = vld [vmem:[#allocation2 + $0x4f0] sm:$0xff]
    %v435 = vld [vmem:[#allocation2 + $0x4f8] sm:$0xff]
    %v436 = vld [vmem:[#allocation2 + $0x500] sm:$0xff]
    %v437 = vld [vmem:[#allocation2 + $0x508] sm:$0xff]
    %v438 = vld [vmem:[#allocation2 + $0x510] sm:$0xff]
    %v439 = vld [vmem:[#allocation2 + $0x518] sm:$0xff]
    %v440 = vld [vmem:[#allocation2 + $0x520] sm:$0xff]
    %v441 = vld [vmem:[#allocation2 + $0x528] sm:$0xff]
    %v442 = vld [vmem:[#allocation2 + $0x530] sm:$0xff]
    %v443 = vld [vmem:[#allocation2 + $0x538] sm:$0xff]
    %v444 = vld [vmem:[#allocation2 + $0x540] sm:$0xff]
    %v445 = vld [vmem:[#allocation2 + $0x548] sm:$0xff]
    %v446 = vld [vmem:[#allocation2 + $0x550] sm:$0xff]
    %v447 = vld [vmem:[#allocation2 + $0x558] sm:$0xff]
    %v448 = vld [vmem:[#allocation2 + $0x560] sm:$0xff]
    %v449 = vld [vmem:[#allocation2 + $0x568] sm:$0xff]
    %v450 = vld [vmem:[#allocation2 + $0x570] sm:$0xff]
    %v451 = vld [vmem:[#allocation2 + $0x578] sm:$0xff]
    %v452 = vld [vmem:[#allocation2 + $0x580] sm:$0xff]
    %v453 = vld [vmem:[#allocation2 + $0x588] sm:$0xff]
    %v454 = vld [vmem:[#allocation2 + $0x590] sm:$0xff]
    %v455 = vld [vmem:[#allocation2 + $0x598] sm:$0xff]
    %v456 = vld [vmem:[#allocation2 + $0x5a0] sm:$0xff]
    %v457 = vld [vmem:[#allocation2 + $0x5a8] sm:$0xff]
    %v458 = vld [vmem:[#allocation2 + $0x5b0] sm:$0xff]
    %v459 = vld [vmem:[#allocation2 + $0x5b8] sm:$0xff]
    %v460 = vld [vmem:[#allocation2 + $0x5c0] sm:$0xff]
    %v461 = vld [vmem:[#allocation2 + $0x5c8] sm:$0xff]
    %v462 = vld [vmem:[#allocation2 + $0x5d0] sm:$0xff]
    %v463 = vld [vmem:[#allocation2 + $0x5d8] sm:$0xff]
    %v464 = vld [vmem:[#allocation2 + $0x5e0] sm:$0xff]
    %v465 = vld [vmem:[#allocation2 + $0x5e8] sm:$0xff]
    %v466 = vld [vmem:[#allocation2 + $0x5f0] sm:$0xff]
    %v467 = vld [vmem:[#allocation2 + $0x5f8] sm:$0xff]
    %v468 = vld [vmem:[#allocation2 + $0x600] sm:$0xff]
    %v469 = vld [vmem:[#allocation2 + $0x608] sm:$0xff]
    %v470 = vld [vmem:[#allocation2 + $0x610] sm:$0xff]
    %v471 = vld [vmem:[#allocation2 + $0x618] sm:$0xff]
    %v472 = vld [vmem:[#allocation2 + $0x620] sm:$0xff]
    %v473 = vld [vmem:[#allocation2 + $0x628] sm:$0xff]
    %v474 = vld [vmem:[#allocation2 + $0x630] sm:$0xff]
    %v475 = vld [vmem:[#allocation2 + $0x638] sm:$0xff]
    %v476 = vld [vmem:[#allocation2 + $0x640] sm:$0xff]
    %v477 = vld [vmem:[#allocation2 + $0x648] sm:$0xff]
    %v478 = vld [vmem:[#allocation2 + $0x650] sm:$0xff]
    %v479 = vld [vmem:[#allocation2 + $0x658] sm:$0xff]
    %v480 = vld [vmem:[#allocation2 + $0x660] sm:$0xff]
    %v481 = vld [vmem:[#allocation2 + $0x668] sm:$0xff]
    %v482 = vld [vmem:[#allocation2 + $0x670] sm:$0xff]
    %v483 = vld [vmem:[#allocation2 + $0x678] sm:$0xff]
    %v484 = vld [vmem:[#allocation2 + $0x680] sm:$0xff]
    %v485 = vld [vmem:[#allocation2 + $0x688] sm:$0xff]
    %v486 = vld [vmem:[#allocation2 + $0x690] sm:$0xff]
    %v487 = vld [vmem:[#allocation2 + $0x698] sm:$0xff]
    %v488 = vld [vmem:[#allocation2 + $0x6a0] sm:$0xff]
    %v489 = vld [vmem:[#allocation2 + $0x6a8] sm:$0xff]
    %v490 = vld [vmem:[#allocation2 + $0x6b0] sm:$0xff]
    %v491 = vld [vmem:[#allocation2 + $0x6b8] sm:$0xff]
    %v492 = vld [vmem:[#allocation2 + $0x6c0] sm:$0xff]
    %v493 = vld [vmem:[#allocation2 + $0x6c8] sm:$0xff]
    %v494 = vld [vmem:[#allocation2 + $0x6d0] sm:$0xff]
    %v495 = vld [vmem:[#allocation2 + $0x6d8] sm:$0xff]
    %v496 = vld [vmem:[#allocation2 + $0x6e0] sm:$0xff]
    %v497 = vld [vmem:[#allocation2 + $0x6e8] sm:$0xff]
    %v498 = vld [vmem:[#allocation2 + $0x6f0] sm:$0xff]
    %v499 = vld [vmem:[#allocation2 + $0x6f8] sm:$0xff]
    %v500 = vld [vmem:[#allocation2 + $0x700] sm:$0xff]
    %v501 = vld [vmem:[#allocation2 + $0x708] sm:$0xff]
    %v502 = vld [vmem:[#allocation2 + $0x710] sm:$0xff]
    %v503 = vld [vmem:[#allocation2 + $0x718] sm:$0xff]
    %v504 = vld [vmem:[#allocation2 + $0x720] sm:$0xff]
    %v505 = vld [vmem:[#allocation2 + $0x728] sm:$0xff]
    %v506 = vld [vmem:[#allocation2 + $0x730] sm:$0xff]
    %v507 = vld [vmem:[#allocation2 + $0x738] sm:$0xff]
    %v508 = vld [vmem:[#allocation2 + $0x740] sm:$0xff]
    %v509 = vld [vmem:[#allocation2 + $0x748] sm:$0xff]
    %v510 = vld [vmem:[#allocation2 + $0x750] sm:$0xff]
    %v511 = vld [vmem:[#allocation2 + $0x758] sm:$0xff]
    %v512 = vld [vmem:[#allocation2 + $0x760] sm:$0xff]
    %v513 = vld [vmem:[#allocation2 + $0x768] sm:$0xff]
    %v514 = vld [vmem:[#allocation2 + $0x770] sm:$0xff]
    %v515 = vld [vmem:[#allocation2 + $0x778] sm:$0xff]
    %v516 = vld [vmem:[#allocation2 + $0x780] sm:$0xff]
    %v517 = vld [vmem:[#allocation2 + $0x788] sm:$0xff]
    %v518 = vld [vmem:[#allocation2 + $0x790] sm:$0xff]
    %v519 = vld [vmem:[#allocation2 + $0x798] sm:$0xff]
    %v520 = vld [vmem:[#allocation2 + $0x7a0] sm:$0xff]
    %v521 = vld [vmem:[#allocation2 + $0x7a8] sm:$0xff]
    %v522 = vld [vmem:[#allocation2 + $0x7b0] sm:$0xff]
    %v523 = vld [vmem:[#allocation2 + $0x7b8] sm:$0xff]
    %v524 = vld [vmem:[#allocation2 + $0x7c0] sm:$0xff]
    %v525 = vld [vmem:[#allocation2 + $0x7c8] sm:$0xff]
    %v526 = vld [vmem:[#allocation2 + $0x7d0] sm:$0xff]
    %v527 = vld [vmem:[#allocation2 + $0x7d8] sm:$0xff]
    %v528 = vld [vmem:[#allocation2 + $0x7e0] sm:$0xff]
    %v529 = vld [vmem:[#allocation2 + $0x7e8] sm:$0xff]
    %v530 = vld [vmem:[#allocation2 + $0x7f0] sm:$0xff]
    %v531 = vld [vmem:[#allocation2 + $0x7f8] sm:$0xff]
    %v532 = vld [vmem:[#allocation2 + $0x800] sm:$0xff]
    %v533 = vld [vmem:[#allocation2 + $0x808] sm:$0xff]
    %v534 = vld [vmem:[#allocation2 + $0x810] sm:$0xff]
    %v535 = vld [vmem:[#allocation2 + $0x818] sm:$0xff]
    %v536 = vld [vmem:[#allocation2 + $0x820] sm:$0xff]
    %v537 = vld [vmem:[#allocation2 + $0x828] sm:$0xff]
    %v538 = vld [vmem:[#allocation2 + $0x830] sm:$0xff]
    %v539 = vld [vmem:[#allocation2 + $0x838] sm:$0xff]
    %v540 = vld [vmem:[#allocation2 + $0x840] sm:$0xff]
    %v541 = vld [vmem:[#allocation2 + $0x848] sm:$0xff]
    %v542 = vld [vmem:[#allocation2 + $0x850] sm:$0xff]
    %v543 = vld [vmem:[#allocation2 + $0x858] sm:$0xff]
    %v544 = vld [vmem:[#allocation2 + $0x860] sm:$0xff]
    %v545 = vld [vmem:[#allocation2 + $0x868] sm:$0xff]
    %v546 = vld [vmem:[#allocation2 + $0x870] sm:$0xff]
    %v547 = vld [vmem:[#allocation2 + $0x878] sm:$0xff]
    %v548 = vld [vmem:[#allocation2 + $0x880] sm:$0xff]
    %v549 = vld [vmem:[#allocation2 + $0x888] sm:$0xff]
    %v550 = vld [vmem:[#allocation2 + $0x890] sm:$0xff]
    %v551 = vld [vmem:[#allocation2 + $0x898] sm:$0xff]
    %v552 = vld [vmem:[#allocation2 + $0x8a0] sm:$0xff]
    %v553 = vld [vmem:[#allocation2 + $0x8a8] sm:$0xff]
    %v554 = vld [vmem:[#allocation2 + $0x8b0] sm:$0xff]
    %v555 = vld [vmem:[#allocation2 + $0x8b8] sm:$0xff]
    %v556 = vld [vmem:[#allocation2 + $0x8c0] sm:$0xff]
    %v557 = vld [vmem:[#allocation2 + $0x8c8] sm:$0xff]
    %v558 = vld [vmem:[#allocation2 + $0x8d0] sm:$0xff]
    %v559 = vld [vmem:[#allocation2 + $0x8d8] sm:$0xff]
    %v560 = vld [vmem:[#allocation2 + $0x8e0] sm:$0xff]
    %v561 = vld [vmem:[#allocation2 + $0x8e8] sm:$0xff]
    %v562 = vld [vmem:[#allocation2 + $0x8f0] sm:$0xff]
    %v563 = vld [vmem:[#allocation2 + $0x8f8] sm:$0xff]
    %v564 = vld [vmem:[#allocation2 + $0x900] sm:$0xff]
    %v565 = vld [vmem:[#allocation2 + $0x908] sm:$0xff]
    %v566 = vld [vmem:[#allocation2 + $0x910] sm:$0xff]
    %v567 = vld [vmem:[#allocation2 + $0x918] sm:$0xff]
    %v568 = vld [vmem:[#allocation2 + $0x920] sm:$0xff]
    %v569 = vld [vmem:[#allocation2 + $0x928] sm:$0xff]
    %v570 = vld [vmem:[#allocation2 + $0x930] sm:$0xff]
    %v571 = vld [vmem:[#allocation2 + $0x938] sm:$0xff]
    %v572 = vld [vmem:[#allocation2 + $0x940] sm:$0xff]
    %v573 = vld [vmem:[#allocation2 + $0x948] sm:$0xff]
    %v574 = vld [vmem:[#allocation2 + $0x950] sm:$0xff]
    %v575 = vld [vmem:[#allocation2 + $0x958] sm:$0xff]
    %v576 = vld [vmem:[#allocation2 + $0x960] sm:$0xff]
    %v577 = vld [vmem:[#allocation2 + $0x968] sm:$0xff]
    %v578 = vld [vmem:[#allocation2 + $0x970] sm:$0xff]
    %v579 = vld [vmem:[#allocation2 + $0x978] sm:$0xff]
    %v580 = vld [vmem:[#allocation2 + $0x980] sm:$0xff]
    %v581 = vld [vmem:[#allocation2 + $0x988] sm:$0xff]
    %v582 = vld [vmem:[#allocation2 + $0x990] sm:$0xff]
    %v583 = vld [vmem:[#allocation2 + $0x998] sm:$0xff]
    %v584 = vld [vmem:[#allocation2 + $0x9a0] sm:$0xff]
    %v585 = vld [vmem:[#allocation2 + $0x9a8] sm:$0xff]
    %v586 = vld [vmem:[#allocation2 + $0x9b0] sm:$0xff]
    %v587 = vld [vmem:[#allocation2 + $0x9b8] sm:$0xff]
    %v588 = vld [vmem:[#allocation2 + $0x9c0] sm:$0xff]
    %v589 = vld [vmem:[#allocation2 + $0x9c8] sm:$0xff]
    %v590 = vld [vmem:[#allocation2 + $0x9d0] sm:$0xff]
    %v591 = vld [vmem:[#allocation2 + $0x9d8] sm:$0xff]
    %v592 = vld [vmem:[#allocation2 + $0x9e0] sm:$0xff]
    %v593 = vld [vmem:[#allocation2 + $0x9e8] sm:$0xff]
    %v594 = vld [vmem:[#allocation2 + $0x9f0] sm:$0xff]
    %v595 = vld [vmem:[#allocation2 + $0x9f8] sm:$0xff]
    %v596 = vld [vmem:[#allocation2 + $0xa00] sm:$0xff]
    %v597 = vld [vmem:[#allocation2 + $0xa08] sm:$0xff]
    %v598 = vld [vmem:[#allocation2 + $0xa10] sm:$0xff]
    %v599 = vld [vmem:[#allocation2 + $0xa18] sm:$0xff]
    %v600 = vld [vmem:[#allocation2 + $0xa20] sm:$0xff]
    %v601 = vld [vmem:[#allocation2 + $0xa28] sm:$0xff]
    %v602 = vld [vmem:[#allocation2 + $0xa30] sm:$0xff]
    %v603 = vld [vmem:[#allocation2 + $0xa38] sm:$0xff]
    %v604 = vld [vmem:[#allocation2 + $0xa40] sm:$0xff]
    %v605 = vld [vmem:[#allocation2 + $0xa48] sm:$0xff]
    %v606 = vld [vmem:[#allocation2 + $0xa50] sm:$0xff]
    %v607 = vld [vmem:[#allocation2 + $0xa58] sm:$0xff]
    %v608 = vld [vmem:[#allocation2 + $0xa60] sm:$0xff]
    %v609 = vld [vmem:[#allocation2 + $0xa68] sm:$0xff]
    %v610 = vld [vmem:[#allocation2 + $0xa70] sm:$0xff]
    %v611 = vld [vmem:[#allocation2 + $0xa78] sm:$0xff]
    %v612 = vld [vmem:[#allocation2 + $0xa80] sm:$0xff]
    %v613 = vld [vmem:[#allocation2 + $0xa88] sm:$0xff]
    %v614 = vld [vmem:[#allocation2 + $0xa90] sm:$0xff]
    %v615 = vld [vmem:[#allocation2 + $0xa98] sm:$0xff]
    %v616 = vld [vmem:[#allocation2 + $0xaa0] sm:$0xff]
    %v617 = vld [vmem:[#allocation2 + $0xaa8] sm:$0xff]
    %v618 = vld [vmem:[#allocation2 + $0xab0] sm:$0xff]
    %v619 = vld [vmem:[#allocation2 + $0xab8] sm:$0xff]
    %v620 = vld [vmem:[#allocation2 + $0xac0] sm:$0xff]
    %v621 = vld [vmem:[#allocation2 + $0xac8] sm:$0xff]
    %v622 = vld [vmem:[#allocation2 + $0xad0] sm:$0xff]
    %v623 = vld [vmem:[#allocation2 + $0xad8] sm:$0xff]
    %v624 = vld [vmem:[#allocation2 + $0xae0] sm:$0xff]
    %v625 = vld [vmem:[#allocation2 + $0xae8] sm:$0xff]
    %v626 = vld [vmem:[#allocation2 + $0xaf0] sm:$0xff]
    %v627 = vld [vmem:[#allocation2 + $0xaf8] sm:$0xff]
    %v628 = vld [vmem:[#allocation2 + $0xb00] sm:$0xff]
    %v629 = vld [vmem:[#allocation2 + $0xb08] sm:$0xff]
    %v630 = vld [vmem:[#allocation2 + $0xb10] sm:$0xff]
    %v631 = vld [vmem:[#allocation2 + $0xb18] sm:$0xff]
    %v632 = vld [vmem:[#allocation2 + $0xb20] sm:$0xff]
    %v633 = vld [vmem:[#allocation2 + $0xb28] sm:$0xff]
    %v634 = vld [vmem:[#allocation2 + $0xb30] sm:$0xff]
    %v635 = vld [vmem:[#allocation2 + $0xb38] sm:$0xff]
    %v636 = vld [vmem:[#allocation2 + $0xb40] sm:$0xff]
    %v637 = vld [vmem:[#allocation2 + $0xb48] sm:$0xff]
    %v638 = vld [vmem:[#allocation2 + $0xb50] sm:$0xff]
    %v639 = vld [vmem:[#allocation2 + $0xb58] sm:$0xff]
    %v640 = vld [vmem:[#allocation2 + $0xb60] sm:$0xff]
    %v641 = vld [vmem:[#allocation2 + $0xb68] sm:$0xff]
    %v642 = vld [vmem:[#allocation2 + $0xb70] sm:$0xff]
    %v643 = vld [vmem:[#allocation2 + $0xb78] sm:$0xff]
    %v644 = vld [vmem:[#allocation2 + $0xb80] sm:$0xff]
    %v645 = vld [vmem:[#allocation2 + $0xb88] sm:$0xff]
    %v646 = vld [vmem:[#allocation2 + $0xb90] sm:$0xff]
    %v647 = vld [vmem:[#allocation2 + $0xb98] sm:$0xff]
    %v648 = vld [vmem:[#allocation2 + $0xba0] sm:$0xff]
    %v649 = vld [vmem:[#allocation2 + $0xba8] sm:$0xff]
    %v650 = vld [vmem:[#allocation2 + $0xbb0] sm:$0xff]
    %v651 = vld [vmem:[#allocation2 + $0xbb8] sm:$0xff]
    %v652 = vld [vmem:[#allocation2 + $0xbc0] sm:$0xff]
    %v653 = vld [vmem:[#allocation2 + $0xbc8] sm:$0xff]
    %v654 = vld [vmem:[#allocation2 + $0xbd0] sm:$0xff]
    %v655 = vld [vmem:[#allocation2 + $0xbd8] sm:$0xff]
    %v656 = vld [vmem:[#allocation2 + $0xbe0] sm:$0xff]
    %v657 = vld [vmem:[#allocation2 + $0xbe8] sm:$0xff]
    %v658 = vld [vmem:[#allocation2 + $0xbf0] sm:$0xff]
    %v659 = vld [vmem:[#allocation2 + $0xbf8] sm:$0xff]
    %v660 = vld [vmem:[#allocation2 + $0xc00] sm:$0xff]
    %v661 = vld [vmem:[#allocation2 + $0xc08] sm:$0xff]
    %v662 = vld [vmem:[#allocation2 + $0xc10] sm:$0xff]
    %v663 = vld [vmem:[#allocation2 + $0xc18] sm:$0xff]
    %v664 = vld [vmem:[#allocation2 + $0xc20] sm:$0xff]
    %v665 = vld [vmem:[#allocation2 + $0xc28] sm:$0xff]
    %v666 = vld [vmem:[#allocation2 + $0xc30] sm:$0xff]
    %v667 = vld [vmem:[#allocation2 + $0xc38] sm:$0xff]
    %v668 = vld [vmem:[#allocation2 + $0xc40] sm:$0xff]
    %v669 = vld [vmem:[#allocation2 + $0xc48] sm:$0xff]
    %v670 = vld [vmem:[#allocation2 + $0xc50] sm:$0xff]
    %v671 = vld [vmem:[#allocation2 + $0xc58] sm:$0xff]
    %v672 = vld [vmem:[#allocation2 + $0xc60] sm:$0xff]
    %v673 = vld [vmem:[#allocation2 + $0xc68] sm:$0xff]
    %v674 = vld [vmem:[#allocation2 + $0xc70] sm:$0xff]
    %v675 = vld [vmem:[#allocation2 + $0xc78] sm:$0xff]
    %v676 = vld [vmem:[#allocation2 + $0xc80] sm:$0xff]
    %v677 = vld [vmem:[#allocation2 + $0xc88] sm:$0xff]
    %v678 = vld [vmem:[#allocation2 + $0xc90] sm:$0xff]
    %v679 = vld [vmem:[#allocation2 + $0xc98] sm:$0xff]
    %v680 = vld [vmem:[#allocation2 + $0xca0] sm:$0xff]
    %v681 = vld [vmem:[#allocation2 + $0xca8] sm:$0xff]
    %v682 = vld [vmem:[#allocation2 + $0xcb0] sm:$0xff]
    %v683 = vld [vmem:[#allocation2 + $0xcb8] sm:$0xff]
    %v684 = vld [vmem:[#allocation2 + $0xcc0] sm:$0xff]
    %v685 = vld [vmem:[#allocation2 + $0xcc8] sm:$0xff]
    %v686 = vld [vmem:[#allocation2 + $0xcd0] sm:$0xff]
    %v687 = vld [vmem:[#allocation2 + $0xcd8] sm:$0xff]
    %v688 = vld [vmem:[#allocation2 + $0xce0] sm:$0xff]
    %v689 = vld [vmem:[#allocation2 + $0xce8] sm:$0xff]
    %v690 = vld [vmem:[#allocation2 + $0xcf0] sm:$0xff]
    %v691 = vld [vmem:[#allocation2 + $0xcf8] sm:$0xff]
    %v692 = vld [vmem:[#allocation2 + $0xd00] sm:$0xff]
    %v693 = vld [vmem:[#allocation2 + $0xd08] sm:$0xff]
    %v694 = vld [vmem:[#allocation2 + $0xd10] sm:$0xff]
    %v695 = vld [vmem:[#allocation2 + $0xd18] sm:$0xff]
    %v696 = vld [vmem:[#allocation2 + $0xd20] sm:$0xff]
    %v697 = vld [vmem:[#allocation2 + $0xd28] sm:$0xff]
    %v698 = vld [vmem:[#allocation2 + $0xd30] sm:$0xff]
    %v699 = vld [vmem:[#allocation2 + $0xd38] sm:$0xff]
    %v700 = vld [vmem:[#allocation2 + $0xd40] sm:$0xff]
    %v701 = vld [vmem:[#allocation2 + $0xd48] sm:$0xff]
    %v702 = vld [vmem:[#allocation2 + $0xd50] sm:$0xff]
    %v703 = vld [vmem:[#allocation2 + $0xd58] sm:$0xff]
    %v704 = vld [vmem:[#allocation2 + $0xd60] sm:$0xff]
    %v705 = vld [vmem:[#allocation2 + $0xd68] sm:$0xff]
    %v706 = vld [vmem:[#allocation2 + $0xd70] sm:$0xff]
    %v707 = vld [vmem:[#allocation2 + $0xd78] sm:$0xff]
    %v708 = vld [vmem:[#allocation2 + $0xd80] sm:$0xff]
    %v709 = vld [vmem:[#allocation2 + $0xd88] sm:$0xff]
    %v710 = vld [vmem:[#allocation2 + $0xd90] sm:$0xff]
    %v711 = vld [vmem:[#allocation2 + $0xd98] sm:$0xff]
    %v712 = vld [vmem:[#allocation2 + $0xda0] sm:$0xff]
    %v713 = vld [vmem:[#allocation2 + $0xda8] sm:$0xff]
    %v714 = vld [vmem:[#allocation2 + $0xdb0] sm:$0xff]
    %v715 = vld [vmem:[#allocation2 + $0xdb8] sm:$0xff]
    %v716 = vld [vmem:[#allocation2 + $0xdc0] sm:$0xff]
    %v717 = vld [vmem:[#allocation2 + $0xdc8] sm:$0xff]
    %v718 = vld [vmem:[#allocation2 + $0xdd0] sm:$0xff]
    %v719 = vld [vmem:[#allocation2 + $0xdd8] sm:$0xff]
    %v720 = vld [vmem:[#allocation2 + $0xde0] sm:$0xff]
    %v721 = vld [vmem:[#allocation2 + $0xde8] sm:$0xff]
    %v722 = vld [vmem:[#allocation2 + $0xdf0] sm:$0xff]
    %v723 = vld [vmem:[#allocation2 + $0xdf8] sm:$0xff]
    %v724 = vld [vmem:[#allocation2 + $0xe00] sm:$0xff]
    %v725 = vld [vmem:[#allocation2 + $0xe08] sm:$0xff]
    %v726 = vld [vmem:[#allocation2 + $0xe10] sm:$0xff]
    %v727 = vld [vmem:[#allocation2 + $0xe18] sm:$0xff]
    %v728 = vld [vmem:[#allocation2 + $0xe20] sm:$0xff]
    %v729 = vld [vmem:[#allocation2 + $0xe28] sm:$0xff]
    %v730 = vld [vmem:[#allocation2 + $0xe30] sm:$0xff]
    %v731 = vld [vmem:[#allocation2 + $0xe38] sm:$0xff]
    %v732 = vld [vmem:[#allocation2 + $0xe40] sm:$0xff]
    %v733 = vld [vmem:[#allocation2 + $0xe48] sm:$0xff]
    %v734 = vld [vmem:[#allocation2 + $0xe50] sm:$0xff]
    %v735 = vld [vmem:[#allocation2 + $0xe58] sm:$0xff]
    %v736 = vld [vmem:[#allocation2 + $0xe60] sm:$0xff]
    %v737 = vld [vmem:[#allocation2 + $0xe68] sm:$0xff]
    %v738 = vld [vmem:[#allocation2 + $0xe70] sm:$0xff]
    %v739 = vld [vmem:[#allocation2 + $0xe78] sm:$0xff]
    %v740 = vld [vmem:[#allocation2 + $0xe80] sm:$0xff]
    %v741 = vld [vmem:[#allocation2 + $0xe88] sm:$0xff]
    %v742 = vld [vmem:[#allocation2 + $0xe90] sm:$0xff]
    %v743 = vld [vmem:[#allocation2 + $0xe98] sm:$0xff]
    %v744 = vld [vmem:[#allocation2 + $0xea0] sm:$0xff]
    %v745 = vld [vmem:[#allocation2 + $0xea8] sm:$0xff]
    %v746 = vld [vmem:[#allocation2 + $0xeb0] sm:$0xff]
    %v747 = vld [vmem:[#allocation2 + $0xeb8] sm:$0xff]
    %v748 = vld [vmem:[#allocation2 + $0xec0] sm:$0xff]
    %v749 = vld [vmem:[#allocation2 + $0xec8] sm:$0xff]
    %v750 = vld [vmem:[#allocation2 + $0xed0] sm:$0xff]
    %v751 = vld [vmem:[#allocation2 + $0xed8] sm:$0xff]
    %v752 = vld [vmem:[#allocation2 + $0xee0] sm:$0xff]
    %v753 = vld [vmem:[#allocation2 + $0xee8] sm:$0xff]
    %v754 = vld [vmem:[#allocation2 + $0xef0] sm:$0xff]
    %v755 = vld [vmem:[#allocation2 + $0xef8] sm:$0xff]
    %v756 = vld [vmem:[#allocation2 + $0xf00] sm:$0xff]
    %v757 = vld [vmem:[#allocation2 + $0xf08] sm:$0xff]
    %v758 = vld [vmem:[#allocation2 + $0xf10] sm:$0xff]
    %v759 = vld [vmem:[#allocation2 + $0xf18] sm:$0xff]
    %v760 = vld [vmem:[#allocation2 + $0xf20] sm:$0xff]
    %v761 = vld [vmem:[#allocation2 + $0xf28] sm:$0xff]
    %v762 = vld [vmem:[#allocation2 + $0xf30] sm:$0xff]
    %v763 = vld [vmem:[#allocation2 + $0xf38] sm:$0xff]
    %v764 = vld [vmem:[#allocation2 + $0xf40] sm:$0xff]
    %v765 = vld [vmem:[#allocation2 + $0xf48] sm:$0xff]
    %v766 = vld [vmem:[#allocation2 + $0xf50] sm:$0xff]
    %v767 = vld [vmem:[#allocation2 + $0xf58] sm:$0xff]
    %v768 = vld [vmem:[#allocation2 + $0xf60] sm:$0xff]
    %v769 = vld [vmem:[#allocation2 + $0xf68] sm:$0xff]
    %v770 = vld [vmem:[#allocation2 + $0xf70] sm:$0xff]
    %v771 = vld [vmem:[#allocation2 + $0xf78] sm:$0xff]
    %v772 = vld [vmem:[#allocation2 + $0xf80] sm:$0xff]
    %v773 = vld [vmem:[#allocation2 + $0xf88] sm:$0xff]
    %v774 = vld [vmem:[#allocation2 + $0xf90] sm:$0xff]
    %v775 = vld [vmem:[#allocation2 + $0xf98] sm:$0xff]
    %v776 = vld [vmem:[#allocation2 + $0xfa0] sm:$0xff]
    %v777 = vld [vmem:[#allocation2 + $0xfa8] sm:$0xff]
    %v778 = vld [vmem:[#allocation2 + $0xfb0] sm:$0xff]
    %v779 = vld [vmem:[#allocation2 + $0xfb8] sm:$0xff]
    %v780 = vld [vmem:[#allocation2 + $0xfc0] sm:$0xff]
    %v781 = vld [vmem:[#allocation2 + $0xfc8] sm:$0xff]
    %v782 = vld [vmem:[#allocation2 + $0xfd0] sm:$0xff]
    %v783 = vld [vmem:[#allocation2 + $0xfd8] sm:$0xff]
    %v784 = vld [vmem:[#allocation2 + $0xfe0] sm:$0xff]
    %v785 = vld [vmem:[#allocation2 + $0xfe8] sm:$0xff]
    %v786 = vld [vmem:[#allocation2 + $0xff0] sm:$0xff]
    %v787 = vld [vmem:[#allocation2 + $0xff8] sm:$0xff]
    %v788 = vld [vmem:[#allocation2 + $0x1000] sm:$0xff]
    %v789 = vld [vmem:[#allocation2 + $0x1008] sm:$0xff]
    %v790 = vld [vmem:[#allocation2 + $0x1010] sm:$0xff]
    %v791 = vld [vmem:[#allocation2 + $0x1018] sm:$0xff]
    %v792 = vld [vmem:[#allocation2 + $0x1020] sm:$0xff]
    %v793 = vld [vmem:[#allocation2 + $0x1028] sm:$0xff]
    %v794 = vld [vmem:[#allocation2 + $0x1030] sm:$0xff]
    %v795 = vld [vmem:[#allocation2 + $0x1038] sm:$0xff]
    %v796 = vld [vmem:[#allocation2 + $0x1040] sm:$0xff]
    %v797 = vld [vmem:[#allocation2 + $0x1048] sm:$0xff]
    %v798 = vld [vmem:[#allocation2 + $0x1050] sm:$0xff]
    %v799 = vld [vmem:[#allocation2 + $0x1058] sm:$0xff]
    %v800 = vld [vmem:[#allocation2 + $0x1060] sm:$0xff]
    %v801 = vld [vmem:[#allocation2 + $0x1068] sm:$0xff]
    %v802 = vld [vmem:[#allocation2 + $0x1070] sm:$0xff]
    %v803 = vld [vmem:[#allocation2 + $0x1078] sm:$0xff]
    %v804 = vld [vmem:[#allocation2 + $0x1080] sm:$0xff]
    %v805 = vld [vmem:[#allocation2 + $0x1088] sm:$0xff]
    %v806 = vld [vmem:[#allocation2 + $0x1090] sm:$0xff]
    %v807 = vld [vmem:[#allocation2 + $0x1098] sm:$0xff]
    %v808 = vld [vmem:[#allocation2 + $0x10a0] sm:$0xff]
    %v809 = vld [vmem:[#allocation2 + $0x10a8] sm:$0xff]
    %v810 = vld [vmem:[#allocation2 + $0x10b0] sm:$0xff]
    %v811 = vld [vmem:[#allocation2 + $0x10b8] sm:$0xff]
    %v812 = vld [vmem:[#allocation2 + $0x10c0] sm:$0xff]
    %v813 = vld [vmem:[#allocation2 + $0x10c8] sm:$0xff]
    %v814 = vld [vmem:[#allocation2 + $0x10d0] sm:$0xff]
    %v815 = vld [vmem:[#allocation2 + $0x10d8] sm:$0xff]
    %v816 = vld [vmem:[#allocation2 + $0x10e0] sm:$0xff]
    %v817 = vld [vmem:[#allocation2 + $0x10e8] sm:$0xff]
    %v818 = vld [vmem:[#allocation2 + $0x10f0] sm:$0xff]
    %v819 = vld [vmem:[#allocation2 + $0x10f8] sm:$0xff]
    %v820 = vld [vmem:[#allocation2 + $0x1100] sm:$0xff]
    %v821 = vld [vmem:[#allocation2 + $0x1108] sm:$0xff]
    %v822 = vld [vmem:[#allocation2 + $0x1110] sm:$0xff]
    %v823 = vld [vmem:[#allocation2 + $0x1118] sm:$0xff]
    %v824 = vld [vmem:[#allocation2 + $0x1120] sm:$0xff]
    %v825 = vld [vmem:[#allocation2 + $0x1128] sm:$0xff]
    %v826 = vld [vmem:[#allocation2 + $0x1130] sm:$0xff]
    %v827 = vld [vmem:[#allocation2 + $0x1138] sm:$0xff]
    %v828 = vld [vmem:[#allocation2 + $0x1140] sm:$0xff]
    %v829 = vld [vmem:[#allocation2 + $0x1148] sm:$0xff]
    %v830 = vld [vmem:[#allocation2 + $0x1150] sm:$0xff]
    %v831 = vld [vmem:[#allocation2 + $0x1158] sm:$0xff]
    %v832 = vld [vmem:[#allocation2 + $0x1160] sm:$0xff]
    %v833 = vld [vmem:[#allocation2 + $0x1168] sm:$0xff]
    %v834 = vld [vmem:[#allocation2 + $0x1170] sm:$0xff]
    %v835 = vld [vmem:[#allocation2 + $0x1178] sm:$0xff]
    %v836 = vld [vmem:[#allocation2 + $0x1180] sm:$0xff]
    %v837 = vld [vmem:[#allocation2 + $0x1188] sm:$0xff]
    %v838 = vld [vmem:[#allocation2 + $0x1190] sm:$0xff]
    %v839 = vld [vmem:[#allocation2 + $0x1198] sm:$0xff]
    %v840 = vld [vmem:[#allocation2 + $0x11a0] sm:$0xff]
    %v841 = vld [vmem:[#allocation2 + $0x11a8] sm:$0xff]
    %v842 = vld [vmem:[#allocation2 + $0x11b0] sm:$0xff]
    %v843 = vld [vmem:[#allocation2 + $0x11b8] sm:$0xff]
    %v844 = vld [vmem:[#allocation2 + $0x11c0] sm:$0xff]
    %v845 = vld [vmem:[#allocation2 + $0x11c8] sm:$0xff]
    %v846 = vld [vmem:[#allocation2 + $0x11d0] sm:$0xff]
    %v847 = vld [vmem:[#allocation2 + $0x11d8] sm:$0xff]
    %v848 = vld [vmem:[#allocation2 + $0x11e0] sm:$0xff]
    %v849 = vld [vmem:[#allocation2 + $0x11e8] sm:$0xff]
    %v850 = vld [vmem:[#allocation2 + $0x11f0] sm:$0xff]
    %v851 = vld [vmem:[#allocation2 + $0x11f8] sm:$0xff]
    %852 = vmatprep.subr.mxu0 0.0
    %853 = vmatpush1.msra.mxu0 %v212
    %854 = vmatprep.subr.mxu0 0.0
    %855 = vmatpush1.msra.mxu0 %v213
    %856 = vmatprep.subr.mxu0 0.0
    %857 = vmatpush1.msra.mxu0 %v214
    %858 = vmatprep.subr.mxu0 0.0
    %859 = vmatpush1.msra.mxu0 %v215
    %860 = vmatprep.subr.mxu0 0.0
    %861 = vmatpush1.msra.mxu0 %v216
    %862 = vmatprep.subr.mxu0 0.0
    %863 = vmatpush1.msra.mxu0 %v217
    %864 = vmatprep.subr.mxu0 0.0
    %865 = vmatpush1.msra.mxu0 %v218
    %866 = vmatprep.subr.mxu0 0.0
    %867 = vmatpush1.msra.mxu0 %v219
    %868 = vmatprep.subr.mxu0 0.0
    %869 = vmatpush1.msra.mxu0 %v220
    %870 = vmatprep.subr.mxu0 0.0
    %871 = vmatpush1.msra.mxu0 %v221
    %872 = vmatprep.subr.mxu0 0.0
    %873 = vmatpush1.msra.mxu0 %v222
    %874 = vmatprep.subr.mxu0 0.0
    %875 = vmatpush1.msra.mxu0 %v223
    %876 = vmatprep.subr.mxu0 0.0
    %877 = vmatpush1.msra.mxu0 %v224
    %878 = vmatprep.subr.mxu0 0.0
    %879 = vmatpush1.msra.mxu0 %v225
    %880 = vmatprep.subr.mxu0 0.0
    %881 = vmatpush1.msra.mxu0 %v226
    %882 = vmatprep.subr.mxu0 0.0
    %883 = vmatpush1.msra.mxu0 %v227
    %884 = vmatprep.subr.mxu0 0.0
    %885 = vmatpush1.msra.mxu0 %v228
    %886 = vmatprep.subr.mxu0 0.0
    %887 = vmatpush1.msra.mxu0 %v229
    %888 = vmatprep.subr.mxu0 0.0
    %889 = vmatpush1.msra.mxu0 %v230
    %890 = vmatprep.subr.mxu0 0.0
    %891 = vmatpush1.msra.mxu0 %v231
    %892 = vmatprep.subr.mxu0 0.0
    %893 = vmatpush1.msra.mxu0 %v232
    %894 = vmatprep.subr.mxu0 0.0
    %895 = vmatpush1.msra.mxu0 %v233
    %896 = vmatprep.subr.mxu0 0.0
    %897 = vmatpush1.msra.mxu0 %v234
    %898 = vmatprep.subr.mxu0 0.0
    %899 = vmatpush1.msra.mxu0 %v235
    %900 = vmatprep.subr.mxu0 0.0
    %901 = vmatpush1.msra.mxu0 %v236
    %902 = vmatprep.subr.mxu0 0.0
    %903 = vmatpush1.msra.mxu0 %v237
    %904 = vmatprep.subr.mxu0 0.0
    %905 = vmatpush1.msra.mxu0 %v238
    %906 = vmatprep.subr.mxu0 0.0
    %907 = vmatpush1.msra.mxu0 %v239
    %908 = vmatprep.subr.mxu0 0.0
    %909 = vmatpush1.msra.mxu0 %v240
    %910 = vmatprep.subr.mxu0 0.0
    %911 = vmatpush1.msra.mxu0 %v241
    %912 = vmatprep.subr.mxu0 0.0
    %913 = vmatpush1.msra.mxu0 %v242
    %914 = vmatprep.subr.mxu0 0.0
    %915 = vmatpush1.msra.mxu0 %v243
    %916 = vmatprep.mubr.f32.mxu0 %v277
    %917 = vmatmul.mubr.f32.gmra.mrb[0].mxu0 %v276
    %v918 = vpop.f32.mrb[0].mxu0
    %v919 = vadd.f32 0.0, %v918
    %v920 = vpop.f32.mrb[0].mxu0
    %921 = vmatprep.mubr.f32.mxu0 %v281
    %922 = vmatmul.mubr.f32.gmra.mrb[0].mxu0 %v280
    %v923 = vpop.f32.mrb[0].mxu0
    %v924 = vadd.f32 0.0, %v923
    %v925 = vpop.f32.mrb[0].mxu0
    %926 = vmatprep.mubr.f32.mxu0 %v285
    %927 = vmatmul.mubr.f32.gmra.mrb[0].mxu0 %v284
    %v928 = vpop.f32.mrb[0].mxu0
    %v929 = vadd.f32 0.0, %v928
    %v930 = vpop.f32.mrb[0].mxu0
    %931 = vmatprep.mubr.f32.mxu0 %v289
    %932 = vmatmul.mubr.f32.gmra.mrb[0].mxu0 %v288
    %v933 = vpop.f32.mrb[0].mxu0
    %v934 = vadd.f32 0.0, %v933
    %v935 = vpop.f32.mrb[0].mxu0
    %936 = vmatprep.mubr.f32.mxu0 %v293
    %937 = vmatmul.mubr.f32.gmra.mrb[0].mxu0 %v292
    %v938 = vpop.f32.mrb[0].mxu0
    %v939 = vadd.f32 0.0, %v938
    %v940 = vpop.f32.mrb[0].mxu0
    %941 = vmatprep.mubr.f32.mxu0 %v297
    %942 = vmatmul.mubr.f32.gmra.mrb[0].mxu0 %v296
    %v943 = vpop.f32.mrb[0].mxu0
    %v944 = vadd.f32 0.0, %v943
    %v945 = vpop.f32.mrb[0].mxu0
    %946 = vmatprep.mubr.f32.mxu0 %v301
    %947 = vmatmul.mubr.f32.gmra.mrb[0].mxu0 %v300
    %v948 = vpop.f32.mrb[0].mxu0
    %v949 = vadd.f32 0.0, %v948
    %v950 = vpop.f32.mrb[0].mxu0
    %951 = vmatprep.mubr.f32.mxu0 %v305
    %952 = vmatmul.mubr.f32.gmra.mrb[0].mxu0 %v304
    %v953 = vpop.f32.mrb[0].mxu0
    %v954 = vadd.f32 0.0, %v953
    %v955 = vpop.f32.mrb[0].mxu0
    %956 = vmatprep.mubr.f32.mxu0 %v309
    %957 = vmatmul.mubr.f32.gmra.mrb[0].mxu0 %v308
    %v958 = vpop.f32.mrb[0].mxu0
    %v959 = vadd.f32 0.0, %v958
    %v960 = vpop.f32.mrb[0].mxu0
    %961 = vmatprep.mubr.f32.mxu0 %v313
    %962 = vmatmul.mubr.f32.gmra.mrb[0].mxu0 %v312
    %v963 = vpop.f32.mrb[0].mxu0
    %v964 = vadd.f32 0.0, %v963
    %v965 = vpop.f32.mrb[0].mxu0
    %966 = vmatprep.mubr.f32.mxu0 %v317
    %967 = vmatmul.mubr.f32.gmra.mrb[0].mxu0 %v316
    %v968 = vpop.f32.mrb[0].mxu0
    %v969 = vadd.f32 0.0, %v968
    %v970 = vpop.f32.mrb[0].mxu0
    %971 = vmatprep.mubr.f32.mxu0 %v321
    %972 = vmatmul.mubr.f32.gmra.mrb[0].mxu0 %v320
    %v973 = vpop.f32.mrb[0].mxu0
    %v974 = vadd.f32 0.0, %v973
    %v975 = vpop.f32.mrb[0].mxu0
    %976 = vmatprep.mubr.f32.mxu0 %v325
    %977 = vmatmul.mubr.f32.gmra.mrb[0].mxu0 %v324
    %v978 = vpop.f32.mrb[0].mxu0
    %v979 = vadd.f32 0.0, %v978
    %v980 = vpop.f32.mrb[0].mxu0
    %981 = vmatprep.mubr.f32.mxu0 %v329
    %982 = vmatmul.mubr.f32.gmra.mrb[0].mxu0 %v328
    %v983 = vpop.f32.mrb[0].mxu0
    %v984 = vadd.f32 0.0, %v983
    %v985 = vpop.f32.mrb[0].mxu0
    %986 = vmatprep.mubr.f32.mxu0 %v333
    %987 = vmatmul.mubr.f32.gmra.mrb[0].mxu0 %v332
    %v988 = vpop.f32.mrb[0].mxu0
    %v989 = vadd.f32 0.0, %v988
    %v990 = vpop.f32.mrb[0].mxu0
    %991 = vmatprep.mubr.f32.mxu0 %v337
    %992 = vmatmul.mubr.f32.gmra.mrb[0].mxu0 %v336
    %v993 = vpop.f32.mrb[0].mxu0
    %v994 = vadd.f32 0.0, %v993
    %v995 = vpop.f32.mrb[0].mxu0
    %996 = vmatprep.mubr.f32.mxu0 %v341
    %997 = vmatmul.mubr.f32.gmra.mrb[0].mxu0 %v340
    %v998 = vpop.f32.mrb[0].mxu0
    %v999 = vadd.f32 0.0, %v998
    %v1000 = vpop.f32.mrb[0].mxu0
    %1001 = vmatprep.mubr.f32.mxu0 %v345
    %1002 = vmatmul.mubr.f32.gmra.mrb[0].mxu0 %v344
    %v1003 = vpop.f32.mrb[0].mxu0
    %v1004 = vadd.f32 0.0, %v1003
    %v1005 = vpop.f32.mrb[0].mxu0
    %1006 = vmatprep.mubr.f32.mxu0 %v349
    %1007 = vmatmul.mubr.f32.gmra.mrb[0].mxu0 %v348
    %v1008 = vpop.f32.mrb[0].mxu0
    %v1009 = vadd.f32 0.0, %v1008
    %v1010 = vpop.f32.mrb[0].mxu0
    %1011 = vmatprep.mubr.f32.mxu0 %v353
    %1012 = vmatmul.mubr.f32.gmra.mrb[0].mxu0 %v352
    %v1013 = vpop.f32.mrb[0].mxu0
    %v1014 = vadd.f32 0.0, %v1013
    %v1015 = vpop.f32.mrb[0].mxu0
    %1016 = vmatprep.mubr.f32.mxu0 %v357
    %1017 = vmatmul.mubr.f32.gmra.mrb[0].mxu0 %v356
    %v1018 = vpop.f32.mrb[0].mxu0
    %v1019 = vadd.f32 0.0, %v1018
    %v1020 = vpop.f32.mrb[0].mxu0
    %1021 = vmatprep.mubr.f32.mxu0 %v361
    %1022 = vmatmul.mubr.f32.gmra.mrb[0].mxu0 %v360
    %v1023 = vpop.f32.mrb[0].mxu0
    %v1024 = vadd.f32 0.0, %v1023
    %v1025 = vpop.f32.mrb[0].mxu0
    %1026 = vmatprep.mubr.f32.mxu0 %v365
    %1027 = vmatmul.mubr.f32.gmra.mrb[0].mxu0 %v364
    %v1028 = vpop.f32.mrb[0].mxu0
    %v1029 = vadd.f32 0.0, %v1028
    %v1030 = vpop.f32.mrb[0].mxu0
    %1031 = vmatprep.mubr.f32.mxu0 %v369
    %1032 = vmatmul.mubr.f32.gmra.mrb[0].mxu0 %v368
    %v1033 = vpop.f32.mrb[0].mxu0
    %v1034 = vadd.f32 0.0, %v1033
    %v1035 = vpop.f32.mrb[0].mxu0
    %1036 = vmatprep.mubr.f32.mxu0 %v373
    %1037 = vmatmul.mubr.f32.gmra.mrb[0].mxu0 %v372
    %v1038 = vpop.f32.mrb[0].mxu0
    %v1039 = vadd.f32 0.0, %v1038
    %v1040 = vpop.f32.mrb[0].mxu0
    %1041 = vmatprep.mubr.f32.mxu0 %v377
    %1042 = vmatmul.mubr.f32.gmra.mrb[0].mxu0 %v376
    %v1043 = vpop.f32.mrb[0].mxu0
    %v1044 = vadd.f32 0.0, %v1043
    %v1045 = vpop.f32.mrb[0].mxu0
    %1046 = vmatprep.mubr.f32.mxu0 %v381
    %1047 = vmatmul.mubr.f32.gmra.mrb[0].mxu0 %v380
    %v1048 = vpop.f32.mrb[0].mxu0
    %v1049 = vadd.f32 0.0, %v1048
    %v1050 = vpop.f32.mrb[0].mxu0
    %1051 = vmatprep.mubr.f32.mxu0 %v385
    %1052 = vmatmul.mubr.f32.gmra.mrb[0].mxu0 %v384
    %v1053 = vpop.f32.mrb[0].mxu0
    %v1054 = vadd.f32 0.0, %v1053
    %v1055 = vpop.f32.mrb[0].mxu0
    %1056 = vmatprep.mubr.f32.mxu0 %v389
    %1057 = vmatmul.mubr.f32.gmra.mrb[0].mxu0 %v388
    %v1058 = vpop.f32.mrb[0].mxu0
    %v1059 = vadd.f32 0.0, %v1058
    %v1060 = vpop.f32.mrb[0].mxu0
    %1061 = vmatprep.mubr.f32.mxu0 %v393
    %1062 = vmatmul.mubr.f32.gmra.mrb[0].mxu0 %v392
    %v1063 = vpop.f32.mrb[0].mxu0
    %v1064 = vadd.f32 0.0, %v1063
    %v1065 = vpop.f32.mrb[0].mxu0
    %1066 = vmatprep.mubr.f32.mxu0 %v397
    %1067 = vmatmul.mubr.f32.gmra.mrb[0].mxu0 %v396
    %v1068 = vpop.f32.mrb[0].mxu0
    %v1069 = vadd.f32 0.0, %v1068
    %v1070 = vpop.f32.mrb[0].mxu0
    %1071 = vmatprep.mubr.f32.mxu0 %v401
    %1072 = vmatmul.mubr.f32.gmra.mrb[0].mxu0 %v400
    %v1073 = vpop.f32.mrb[0].mxu0
    %v1074 = vadd.f32 0.0, %v1073
    %v1075 = vpop.f32.mrb[0].mxu0
    %1076 = vmatprep.mubr.f32.mxu0 %v405
    %1077 = vmatmul.mubr.f32.gmra.mrb[0].mxu0 %v404
    %v1078 = vpop.f32.mrb[0].mxu0
    %v1079 = vadd.f32 0.0, %v1078
    %v1080 = vpop.f32.mrb[0].mxu0
    %1081 = vmatprep.mubr.f32.mxu0 %v409
    %1082 = vmatmul.mubr.f32.gmra.mrb[0].mxu0 %v408
    %v1083 = vpop.f32.mrb[0].mxu0
    %v1084 = vadd.f32 0.0, %v1083
    %v1085 = vpop.f32.mrb[0].mxu0
    %1086 = vmatprep.mubr.f32.mxu0 %v413
    %1087 = vmatmul.mubr.f32.gmra.mrb[0].mxu0 %v412
    %v1088 = vpop.f32.mrb[0].mxu0
    %v1089 = vadd.f32 0.0, %v1088
    %v1090 = vpop.f32.mrb[0].mxu0
    %1091 = vmatprep.mubr.f32.mxu0 %v417
    %1092 = vmatmul.mubr.f32.gmra.mrb[0].mxu0 %v416
    %v1093 = vpop.f32.mrb[0].mxu0
    %v1094 = vadd.f32 0.0, %v1093
    %v1095 = vpop.f32.mrb[0].mxu0
    %1096 = vmatprep.mubr.f32.mxu0 %v421
    %1097 = vmatmul.mubr.f32.gmra.mrb[0].mxu0 %v420
    %v1098 = vpop.f32.mrb[0].mxu0
    %v1099 = vadd.f32 0.0, %v1098
    %v1100 = vpop.f32.mrb[0].mxu0
    %1101 = vmatprep.mubr.f32.mxu0 %v425
    %1102 = vmatmul.mubr.f32.gmra.mrb[0].mxu0 %v424
    %v1103 = vpop.f32.mrb[0].mxu0
    %v1104 = vadd.f32 0.0, %v1103
    %v1105 = vpop.f32.mrb[0].mxu0
    %1106 = vmatprep.mubr.f32.mxu0 %v429
    %1107 = vmatmul.mubr.f32.gmra.mrb[0].mxu0 %v428
    %v1108 = vpop.f32.mrb[0].mxu0
    %v1109 = vadd.f32 0.0, %v1108
    %v1110 = vpop.f32.mrb[0].mxu0
    %1111 = vmatprep.mubr.f32.mxu0 %v433
    %1112 = vmatmul.mubr.f32.gmra.mrb[0].mxu0 %v432
    %v1113 = vpop.f32.mrb[0].mxu0
    %v1114 = vadd.f32 0.0, %v1113
    %v1115 = vpop.f32.mrb[0].mxu0
    %1116 = vmatprep.mubr.f32.mxu0 %v437
    %1117 = vmatmul.mubr.f32.gmra.mrb[0].mxu0 %v436
    %v1118 = vpop.f32.mrb[0].mxu0
    %v1119 = vadd.f32 0.0, %v1118
    %v1120 = vpop.f32.mrb[0].mxu0
    %1121 = vmatprep.mubr.f32.mxu0 %v441
    %1122 = vmatmul.mubr.f32.gmra.mrb[0].mxu0 %v440
    %v1123 = vpop.f32.mrb[0].mxu0
    %v1124 = vadd.f32 0.0, %v1123
    %v1125 = vpop.f32.mrb[0].mxu0
    %1126 = vmatprep.mubr.f32.mxu0 %v445
    %1127 = vmatmul.mubr.f32.gmra.mrb[0].mxu0 %v444
    %v1128 = vpop.f32.mrb[0].mxu0
    %v1129 = vadd.f32 0.0, %v1128
    %v1130 = vpop.f32.mrb[0].mxu0
    %1131 = vmatprep.mubr.f32.mxu0 %v449
    %1132 = vmatmul.mubr.f32.gmra.mrb[0].mxu0 %v448
    %v1133 = vpop.f32.mrb[0].mxu0
    %v1134 = vadd.f32 0.0, %v1133
    %v1135 = vpop.f32.mrb[0].mxu0
    %1136 = vmatprep.mubr.f32.mxu0 %v453
    %1137 = vmatmul.mubr.f32.gmra.mrb[0].mxu0 %v452
    %v1138 = vpop.f32.mrb[0].mxu0
    %v1139 = vadd.f32 0.0, %v1138
    %v1140 = vpop.f32.mrb[0].mxu0
    %1141 = vmatprep.mubr.f32.mxu0 %v457
    %1142 = vmatmul.mubr.f32.gmra.mrb[0].mxu0 %v456
    %v1143 = vpop.f32.mrb[0].mxu0
    %v1144 = vadd.f32 0.0, %v1143
    %v1145 = vpop.f32.mrb[0].mxu0
    %1146 = vmatprep.mubr.f32.mxu0 %v461
    %1147 = vmatmul.mubr.f32.gmra.mrb[0].mxu0 %v460
    %v1148 = vpop.f32.mrb[0].mxu0
    %v1149 = vadd.f32 0.0, %v1148
    %v1150 = vpop.f32.mrb[0].mxu0
    %1151 = vmatprep.mubr.f32.mxu0 %v465
    %1152 = vmatmul.mubr.f32.gmra.mrb[0].mxu0 %v464
    %v1153 = vpop.f32.mrb[0].mxu0
    %v1154 = vadd.f32 0.0, %v1153
    %v1155 = vpop.f32.mrb[0].mxu0
    %1156 = vmatprep.mubr.f32.mxu0 %v469
    %1157 = vmatmul.mubr.f32.gmra.mrb[0].mxu0 %v468
    %v1158 = vpop.f32.mrb[0].mxu0
    %v1159 = vadd.f32 0.0, %v1158
    %v1160 = vpop.f32.mrb[0].mxu0
    %1161 = vmatprep.mubr.f32.mxu0 %v473
    %1162 = vmatmul.mubr.f32.gmra.mrb[0].mxu0 %v472
    %v1163 = vpop.f32.mrb[0].mxu0
    %v1164 = vadd.f32 0.0, %v1163
    %v1165 = vpop.f32.mrb[0].mxu0
    %1166 = vmatprep.mubr.f32.mxu0 %v477
    %1167 = vmatmul.mubr.f32.gmra.mrb[0].mxu0 %v476
    %v1168 = vpop.f32.mrb[0].mxu0
    %v1169 = vadd.f32 0.0, %v1168
    %v1170 = vpop.f32.mrb[0].mxu0
    %1171 = vmatprep.mubr.f32.mxu0 %v481
    %1172 = vmatmul.mubr.f32.gmra.mrb[0].mxu0 %v480
    %v1173 = vpop.f32.mrb[0].mxu0
    %v1174 = vadd.f32 0.0, %v1173
    %v1175 = vpop.f32.mrb[0].mxu0
    %1176 = vmatprep.mubr.f32.mxu0 %v485
    %1177 = vmatmul.mubr.f32.gmra.mrb[0].mxu0 %v484
    %v1178 = vpop.f32.mrb[0].mxu0
    %v1179 = vadd.f32 0.0, %v1178
    %v1180 = vpop.f32.mrb[0].mxu0
    %1181 = vmatprep.mubr.f32.mxu0 %v489
    %1182 = vmatmul.mubr.f32.gmra.mrb[0].mxu0 %v488
    %v1183 = vpop.f32.mrb[0].mxu0
    %v1184 = vadd.f32 0.0, %v1183
    %v1185 = vpop.f32.mrb[0].mxu0
    %1186 = vmatprep.mubr.f32.mxu0 %v493
    %1187 = vmatmul.mubr.f32.gmra.mrb[0].mxu0 %v492
    %v1188 = vpop.f32.mrb[0].mxu0
    %v1189 = vadd.f32 0.0, %v1188
    %v1190 = vpop.f32.mrb[0].mxu0
    %1191 = vmatprep.mubr.f32.mxu0 %v497
    %1192 = vmatmul.mubr.f32.gmra.mrb[0].mxu0 %v496
    %v1193 = vpop.f32.mrb[0].mxu0
    %v1194 = vadd.f32 0.0, %v1193
    %v1195 = vpop.f32.mrb[0].mxu0
    %1196 = vmatprep.mubr.f32.mxu0 %v501
    %1197 = vmatmul.mubr.f32.gmra.mrb[0].mxu0 %v500
    %v1198 = vpop.f32.mrb[0].mxu0
    %v1199 = vadd.f32 0.0, %v1198
    %v1200 = vpop.f32.mrb[0].mxu0
    %1201 = vmatprep.mubr.f32.mxu0 %v505
    %1202 = vmatmul.mubr.f32.gmra.mrb[0].mxu0 %v504
    %v1203 = vpop.f32.mrb[0].mxu0
    %v1204 = vadd.f32 0.0, %v1203
    %v1205 = vpop.f32.mrb[0].mxu0
    %1206 = vmatprep.mubr.f32.mxu0 %v509
    %1207 = vmatmul.mubr.f32.gmra.mrb[0].mxu0 %v508
    %v1208 = vpop.f32.mrb[0].mxu0
    %v1209 = vadd.f32 0.0, %v1208
    %v1210 = vpop.f32.mrb[0].mxu0
    %1211 = vmatprep.mubr.f32.mxu0 %v513
    %1212 = vmatmul.mubr.f32.gmra.mrb[0].mxu0 %v512
    %v1213 = vpop.f32.mrb[0].mxu0
    %v1214 = vadd.f32 0.0, %v1213
    %v1215 = vpop.f32.mrb[0].mxu0
    %1216 = vmatprep.mubr.f32.mxu0 %v517
    %1217 = vmatmul.mubr.f32.gmra.mrb[0].mxu0 %v516
    %v1218 = vpop.f32.mrb[0].mxu0
    %v1219 = vadd.f32 0.0, %v1218
    %v1220 = vpop.f32.mrb[0].mxu0
    %1221 = vmatprep.mubr.f32.mxu0 %v521
    %1222 = vmatmul.mubr.f32.gmra.mrb[0].mxu0 %v520
    %v1223 = vpop.f32.mrb[0].mxu0
    %v1224 = vadd.f32 0.0, %v1223
    %v1225 = vpop.f32.mrb[0].mxu0
    %1226 = vmatprep.mubr.f32.mxu0 %v525
    %1227 = vmatmul.mubr.f32.gmra.mrb[0].mxu0 %v524
    %v1228 = vpop.f32.mrb[0].mxu0
    %v1229 = vadd.f32 0.0, %v1228
    %v1230 = vpop.f32.mrb[0].mxu0
    %1231 = vmatprep.mubr.f32.mxu0 %v529
    %1232 = vmatmul.mubr.f32.gmra.mrb[0].mxu0 %v528
    %v1233 = vpop.f32.mrb[0].mxu0
    %v1234 = vadd.f32 0.0, %v1233
    %v1235 = vpop.f32.mrb[0].mxu0
    %1236 = vmatprep.mubr.f32.mxu0 %v533
    %1237 = vmatmul.mubr.f32.gmra.mrb[0].mxu0 %v532
    %v1238 = vpop.f32.mrb[0].mxu0
    %v1239 = vadd.f32 0.0, %v1238
    %v1240 = vpop.f32.mrb[0].mxu0
    %1241 = vmatprep.mubr.f32.mxu0 %v537
    %1242 = vmatmul.mubr.f32.gmra.mrb[0].mxu0 %v536
    %v1243 = vpop.f32.mrb[0].mxu0
    %v1244 = vadd.f32 0.0, %v1243
    %v1245 = vpop.f32.mrb[0].mxu0
    %1246 = vmatprep.mubr.f32.mxu0 %v541
    %1247 = vmatmul.mubr.f32.gmra.mrb[0].mxu0 %v540
    %v1248 = vpop.f32.mrb[0].mxu0
    %v1249 = vadd.f32 0.0, %v1248
    %v1250 = vpop.f32.mrb[0].mxu0
    %1251 = vmatprep.mubr.f32.mxu0 %v545
    %1252 = vmatmul.mubr.f32.gmra.mrb[0].mxu0 %v544
    %v1253 = vpop.f32.mrb[0].mxu0
    %v1254 = vadd.f32 0.0, %v1253
    %v1255 = vpop.f32.mrb[0].mxu0
    %1256 = vmatprep.mubr.f32.mxu0 %v549
    %1257 = vmatmul.mubr.f32.gmra.mrb[0].mxu0 %v548
    %v1258 = vpop.f32.mrb[0].mxu0
    %v1259 = vadd.f32 0.0, %v1258
    %v1260 = vpop.f32.mrb[0].mxu0
    %1261 = vmatprep.mubr.f32.mxu0 %v553
    %1262 = vmatmul.mubr.f32.gmra.mrb[0].mxu0 %v552
    %v1263 = vpop.f32.mrb[0].mxu0
    %v1264 = vadd.f32 0.0, %v1263
    %v1265 = vpop.f32.mrb[0].mxu0
    %1266 = vmatprep.mubr.f32.mxu0 %v557
    %1267 = vmatmul.mubr.f32.gmra.mrb[0].mxu0 %v556
    %v1268 = vpop.f32.mrb[0].mxu0
    %v1269 = vadd.f32 0.0, %v1268
    %v1270 = vpop.f32.mrb[0].mxu0
    %1271 = vmatprep.mubr.f32.mxu0 %v561
    %1272 = vmatmul.mubr.f32.gmra.mrb[0].mxu0 %v560
    %v1273 = vpop.f32.mrb[0].mxu0
    %v1274 = vadd.f32 0.0, %v1273
    %v1275 = vpop.f32.mrb[0].mxu0
    %1276 = vmatprep.mubr.f32.mxu0 %v565
    %1277 = vmatmul.mubr.f32.gmra.mrb[0].mxu0 %v564
    %v1278 = vpop.f32.mrb[0].mxu0
    %v1279 = vadd.f32 0.0, %v1278
    %v1280 = vpop.f32.mrb[0].mxu0
    %1281 = vmatprep.mubr.f32.mxu0 %v569
    %1282 = vmatmul.mubr.f32.gmra.mrb[0].mxu0 %v568
    %v1283 = vpop.f32.mrb[0].mxu0
    %v1284 = vadd.f32 0.0, %v1283
    %v1285 = vpop.f32.mrb[0].mxu0
    %1286 = vmatprep.mubr.f32.mxu0 %v573
    %1287 = vmatmul.mubr.f32.gmra.mrb[0].mxu0 %v572
    %v1288 = vpop.f32.mrb[0].mxu0
    %v1289 = vadd.f32 0.0, %v1288
    %v1290 = vpop.f32.mrb[0].mxu0
    %1291 = vmatprep.mubr.f32.mxu0 %v577
    %1292 = vmatmul.mubr.f32.gmra.mrb[0].mxu0 %v576
    %v1293 = vpop.f32.mrb[0].mxu0
    %v1294 = vadd.f32 0.0, %v1293
    %v1295 = vpop.f32.mrb[0].mxu0
    %1296 = vmatprep.mubr.f32.mxu0 %v581
    %1297 = vmatmul.mubr.f32.gmra.mrb[0].mxu0 %v580
    %v1298 = vpop.f32.mrb[0].mxu0
    %v1299 = vadd.f32 0.0, %v1298
    %v1300 = vpop.f32.mrb[0].mxu0
    %1301 = vmatprep.mubr.f32.mxu0 %v585
    %1302 = vmatmul.mubr.f32.gmra.mrb[0].mxu0 %v584
    %v1303 = vpop.f32.mrb[0].mxu0
    %v1304 = vadd.f32 0.0, %v1303
    %v1305 = vpop.f32.mrb[0].mxu0
    %1306 = vmatprep.mubr.f32.mxu0 %v589
    %1307 = vmatmul.mubr.f32.gmra.mrb[0].mxu0 %v588
    %v1308 = vpop.f32.mrb[0].mxu0
    %v1309 = vadd.f32 0.0, %v1308
    %v1310 = vpop.f32.mrb[0].mxu0
    %1311 = vmatprep.mubr.f32.mxu0 %v593
    %1312 = vmatmul.mubr.f32.gmra.mrb[0].mxu0 %v592
    %v1313 = vpop.f32.mrb[0].mxu0
    %v1314 = vadd.f32 0.0, %v1313
    %v1315 = vpop.f32.mrb[0].mxu0
    %1316 = vmatprep.mubr.f32.mxu0 %v597
    %1317 = vmatmul.mubr.f32.gmra.mrb[0].mxu0 %v596
    %v1318 = vpop.f32.mrb[0].mxu0
    %v1319 = vadd.f32 0.0, %v1318
    %v1320 = vpop.f32.mrb[0].mxu0
    %1321 = vmatprep.mubr.f32.mxu0 %v601
    %1322 = vmatmul.mubr.f32.gmra.mrb[0].mxu0 %v600
    %v1323 = vpop.f32.mrb[0].mxu0
    %v1324 = vadd.f32 0.0, %v1323
    %v1325 = vpop.f32.mrb[0].mxu0
    %1326 = vmatprep.mubr.f32.mxu0 %v605
    %1327 = vmatmul.mubr.f32.gmra.mrb[0].mxu0 %v604
    %v1328 = vpop.f32.mrb[0].mxu0
    %v1329 = vadd.f32 0.0, %v1328
    %v1330 = vpop.f32.mrb[0].mxu0
    %1331 = vmatprep.mubr.f32.mxu0 %v609
    %1332 = vmatmul.mubr.f32.gmra.mrb[0].mxu0 %v608
    %v1333 = vpop.f32.mrb[0].mxu0
    %v1334 = vadd.f32 0.0, %v1333
    %v1335 = vpop.f32.mrb[0].mxu0
    %1336 = vmatprep.mubr.f32.mxu0 %v613
    %1337 = vmatmul.mubr.f32.gmra.mrb[0].mxu0 %v612
    %v1338 = vpop.f32.mrb[0].mxu0
    %v1339 = vadd.f32 0.0, %v1338
    %v1340 = vpop.f32.mrb[0].mxu0
    %1341 = vmatprep.mubr.f32.mxu0 %v617
    %1342 = vmatmul.mubr.f32.gmra.mrb[0].mxu0 %v616
    %v1343 = vpop.f32.mrb[0].mxu0
    %v1344 = vadd.f32 0.0, %v1343
    %v1345 = vpop.f32.mrb[0].mxu0
    %1346 = vmatprep.mubr.f32.mxu0 %v621
    %1347 = vmatmul.mubr.f32.gmra.mrb[0].mxu0 %v620
    %v1348 = vpop.f32.mrb[0].mxu0
    %v1349 = vadd.f32 0.0, %v1348
    %v1350 = vpop.f32.mrb[0].mxu0
    %1351 = vmatprep.mubr.f32.mxu0 %v625
    %1352 = vmatmul.mubr.f32.gmra.mrb[0].mxu0 %v624
    %v1353 = vpop.f32.mrb[0].mxu0
    %v1354 = vadd.f32 0.0, %v1353
    %v1355 = vpop.f32.mrb[0].mxu0
    %1356 = vmatprep.mubr.f32.mxu0 %v629
    %1357 = vmatmul.mubr.f32.gmra.mrb[0].mxu0 %v628
    %v1358 = vpop.f32.mrb[0].mxu0
    %v1359 = vadd.f32 0.0, %v1358
    %v1360 = vpop.f32.mrb[0].mxu0
    %1361 = vmatprep.mubr.f32.mxu0 %v633
    %1362 = vmatmul.mubr.f32.gmra.mrb[0].mxu0 %v632
    %v1363 = vpop.f32.mrb[0].mxu0
    %v1364 = vadd.f32 0.0, %v1363
    %v1365 = vpop.f32.mrb[0].mxu0
    %1366 = vmatprep.mubr.f32.mxu0 %v637
    %1367 = vmatmul.mubr.f32.gmra.mrb[0].mxu0 %v636
    %v1368 = vpop.f32.mrb[0].mxu0
    %v1369 = vadd.f32 0.0, %v1368
    %v1370 = vpop.f32.mrb[0].mxu0
    %1371 = vmatprep.mubr.f32.mxu0 %v641
    %1372 = vmatmul.mubr.f32.gmra.mrb[0].mxu0 %v640
    %v1373 = vpop.f32.mrb[0].mxu0
    %v1374 = vadd.f32 0.0, %v1373
    %v1375 = vpop.f32.mrb[0].mxu0
    %1376 = vmatprep.mubr.f32.mxu0 %v645
    %1377 = vmatmul.mubr.f32.gmra.mrb[0].mxu0 %v644
    %v1378 = vpop.f32.mrb[0].mxu0
    %v1379 = vadd.f32 0.0, %v1378
    %v1380 = vpop.f32.mrb[0].mxu0
    %1381 = vmatprep.mubr.f32.mxu0 %v649
    %1382 = vmatmul.mubr.f32.gmra.mrb[0].mxu0 %v648
    %v1383 = vpop.f32.mrb[0].mxu0
    %v1384 = vadd.f32 0.0, %v1383
    %v1385 = vpop.f32.mrb[0].mxu0
    %1386 = vmatprep.mubr.f32.mxu0 %v653
    %1387 = vmatmul.mubr.f32.gmra.mrb[0].mxu0 %v652
    %v1388 = vpop.f32.mrb[0].mxu0
    %v1389 = vadd.f32 0.0, %v1388
    %v1390 = vpop.f32.mrb[0].mxu0
    %1391 = vmatprep.mubr.f32.mxu0 %v657
    %1392 = vmatmul.mubr.f32.gmra.mrb[0].mxu0 %v656
    %v1393 = vpop.f32.mrb[0].mxu0
    %v1394 = vadd.f32 0.0, %v1393
    %v1395 = vpop.f32.mrb[0].mxu0
    %1396 = vmatprep.mubr.f32.mxu0 %v661
    %1397 = vmatmul.mubr.f32.gmra.mrb[0].mxu0 %v660
    %v1398 = vpop.f32.mrb[0].mxu0
    %v1399 = vadd.f32 0.0, %v1398
    %v1400 = vpop.f32.mrb[0].mxu0
    %1401 = vmatprep.mubr.f32.mxu0 %v665
    %1402 = vmatmul.mubr.f32.gmra.mrb[0].mxu0 %v664
    %v1403 = vpop.f32.mrb[0].mxu0
    %v1404 = vadd.f32 0.0, %v1403
    %v1405 = vpop.f32.mrb[0].mxu0
    %1406 = vmatprep.mubr.f32.mxu0 %v669
    %1407 = vmatmul.mubr.f32.gmra.mrb[0].mxu0 %v668
    %v1408 = vpop.f32.mrb[0].mxu0
    %v1409 = vadd.f32 0.0, %v1408
    %v1410 = vpop.f32.mrb[0].mxu0
    %1411 = vmatprep.mubr.f32.mxu0 %v673
    %1412 = vmatmul.mubr.f32.gmra.mrb[0].mxu0 %v672
    %v1413 = vpop.f32.mrb[0].mxu0
    %v1414 = vadd.f32 0.0, %v1413
    %v1415 = vpop.f32.mrb[0].mxu0
    %1416 = vmatprep.mubr.f32.mxu0 %v677
    %1417 = vmatmul.mubr.f32.gmra.mrb[0].mxu0 %v676
    %v1418 = vpop.f32.mrb[0].mxu0
    %v1419 = vadd.f32 0.0, %v1418
    %v1420 = vpop.f32.mrb[0].mxu0
    %1421 = vmatprep.mubr.f32.mxu0 %v681
    %1422 = vmatmul.mubr.f32.gmra.mrb[0].mxu0 %v680
    %v1423 = vpop.f32.mrb[0].mxu0
    %v1424 = vadd.f32 0.0, %v1423
    %v1425 = vpop.f32.mrb[0].mxu0
    %1426 = vmatprep.mubr.f32.mxu0 %v685
    %1427 = vmatmul.mubr.f32.gmra.mrb[0].mxu0 %v684
    %v1428 = vpop.f32.mrb[0].mxu0
    %v1429 = vadd.f32 0.0, %v1428
    %v1430 = vpop.f32.mrb[0].mxu0
    %1431 = vmatprep.mubr.f32.mxu0 %v689
    %1432 = vmatmul.mubr.f32.gmra.mrb[0].mxu0 %v688
    %v1433 = vpop.f32.mrb[0].mxu0
    %v1434 = vadd.f32 0.0, %v1433
    %v1435 = vpop.f32.mrb[0].mxu0
    %1436 = vmatprep.mubr.f32.mxu0 %v693
    %1437 = vmatmul.mubr.f32.gmra.mrb[0].mxu0 %v692
    %v1438 = vpop.f32.mrb[0].mxu0
    %v1439 = vadd.f32 0.0, %v1438
    %v1440 = vpop.f32.mrb[0].mxu0
    %1441 = vmatprep.mubr.f32.mxu0 %v697
    %1442 = vmatmul.mubr.f32.gmra.mrb[0].mxu0 %v696
    %v1443 = vpop.f32.mrb[0].mxu0
    %v1444 = vadd.f32 0.0, %v1443
    %v1445 = vpop.f32.mrb[0].mxu0
    %1446 = vmatprep.mubr.f32.mxu0 %v701
    %1447 = vmatmul.mubr.f32.gmra.mrb[0].mxu0 %v700
    %v1448 = vpop.f32.mrb[0].mxu0
    %v1449 = vadd.f32 0.0, %v1448
    %v1450 = vpop.f32.mrb[0].mxu0
    %1451 = vmatprep.mubr.f32.mxu0 %v705
    %1452 = vmatmul.mubr.f32.gmra.mrb[0].mxu0 %v704
    %v1453 = vpop.f32.mrb[0].mxu0
    %v1454 = vadd.f32 0.0, %v1453
    %v1455 = vpop.f32.mrb[0].mxu0
    %1456 = vmatprep.mubr.f32.mxu0 %v709
    %1457 = vmatmul.mubr.f32.gmra.mrb[0].mxu0 %v708
    %v1458 = vpop.f32.mrb[0].mxu0
    %v1459 = vadd.f32 0.0, %v1458
    %v1460 = vpop.f32.mrb[0].mxu0
    %1461 = vmatprep.mubr.f32.mxu0 %v713
    %1462 = vmatmul.mubr.f32.gmra.mrb[0].mxu0 %v712
    %v1463 = vpop.f32.mrb[0].mxu0
    %v1464 = vadd.f32 0.0, %v1463
    %v1465 = vpop.f32.mrb[0].mxu0
    %1466 = vmatprep.mubr.f32.mxu0 %v717
    %1467 = vmatmul.mubr.f32.gmra.mrb[0].mxu0 %v716
    %v1468 = vpop.f32.mrb[0].mxu0
    %v1469 = vadd.f32 0.0, %v1468
    %v1470 = vpop.f32.mrb[0].mxu0
    %1471 = vmatprep.mubr.f32.mxu0 %v721
    %1472 = vmatmul.mubr.f32.gmra.mrb[0].mxu0 %v720
    %v1473 = vpop.f32.mrb[0].mxu0
    %v1474 = vadd.f32 0.0, %v1473
    %v1475 = vpop.f32.mrb[0].mxu0
    %1476 = vmatprep.mubr.f32.mxu0 %v725
    %1477 = vmatmul.mubr.f32.gmra.mrb[0].mxu0 %v724
    %v1478 = vpop.f32.mrb[0].mxu0
    %v1479 = vadd.f32 0.0, %v1478
    %v1480 = vpop.f32.mrb[0].mxu0
    %1481 = vmatprep.mubr.f32.mxu0 %v729
    %1482 = vmatmul.mubr.f32.gmra.mrb[0].mxu0 %v728
    %v1483 = vpop.f32.mrb[0].mxu0
    %v1484 = vadd.f32 0.0, %v1483
    %v1485 = vpop.f32.mrb[0].mxu0
    %1486 = vmatprep.mubr.f32.mxu0 %v733
    %1487 = vmatmul.mubr.f32.gmra.mrb[0].mxu0 %v732
    %v1488 = vpop.f32.mrb[0].mxu0
    %v1489 = vadd.f32 0.0, %v1488
    %v1490 = vpop.f32.mrb[0].mxu0
    %1491 = vmatprep.mubr.f32.mxu0 %v737
    %1492 = vmatmul.mubr.f32.gmra.mrb[0].mxu0 %v736
    %v1493 = vpop.f32.mrb[0].mxu0
    %v1494 = vadd.f32 0.0, %v1493
    %v1495 = vpop.f32.mrb[0].mxu0
    %1496 = vmatprep.mubr.f32.mxu0 %v741
    %1497 = vmatmul.mubr.f32.gmra.mrb[0].mxu0 %v740
    %v1498 = vpop.f32.mrb[0].mxu0
    %v1499 = vadd.f32 0.0, %v1498
    %v1500 = vpop.f32.mrb[0].mxu0
    %1501 = vmatprep.mubr.f32.mxu0 %v745
    %1502 = vmatmul.mubr.f32.gmra.mrb[0].mxu0 %v744
    %v1503 = vpop.f32.mrb[0].mxu0
    %v1504 = vadd.f32 0.0, %v1503
    %v1505 = vpop.f32.mrb[0].mxu0
    %1506 = vmatprep.mubr.f32.mxu0 %v749
    %1507 = vmatmul.mubr.f32.gmra.mrb[0].mxu0 %v748
    %v1508 = vpop.f32.mrb[0].mxu0
    %v1509 = vadd.f32 0.0, %v1508
    %v1510 = vpop.f32.mrb[0].mxu0
    %1511 = vmatprep.mubr.f32.mxu0 %v753
    %1512 = vmatmul.mubr.f32.gmra.mrb[0].mxu0 %v752
    %v1513 = vpop.f32.mrb[0].mxu0
    %v1514 = vadd.f32 0.0, %v1513
    %v1515 = vpop.f32.mrb[0].mxu0
    %1516 = vmatprep.mubr.f32.mxu0 %v757
    %1517 = vmatmul.mubr.f32.gmra.mrb[0].mxu0 %v756
    %v1518 = vpop.f32.mrb[0].mxu0
    %v1519 = vadd.f32 0.0, %v1518
    %v1520 = vpop.f32.mrb[0].mxu0
    %1521 = vmatprep.mubr.f32.mxu0 %v761
    %1522 = vmatmul.mubr.f32.gmra.mrb[0].mxu0 %v760
    %v1523 = vpop.f32.mrb[0].mxu0
    %v1524 = vadd.f32 0.0, %v1523
    %v1525 = vpop.f32.mrb[0].mxu0
    %1526 = vmatprep.mubr.f32.mxu0 %v765
    %1527 = vmatmul.mubr.f32.gmra.mrb[0].mxu0 %v764
    %v1528 = vpop.f32.mrb[0].mxu0
    %v1529 = vadd.f32 0.0, %v1528
    %v1530 = vpop.f32.mrb[0].mxu0
    %1531 = vmatprep.mubr.f32.mxu0 %v769
    %1532 = vmatmul.mubr.f32.gmra.mrb[0].mxu0 %v768
    %v1533 = vpop.f32.mrb[0].mxu0
    %v1534 = vadd.f32 0.0, %v1533
    %v1535 = vpop.f32.mrb[0].mxu0
    %1536 = vmatprep.mubr.f32.mxu0 %v773
    %1537 = vmatmul.mubr.f32.gmra.mrb[0].mxu0 %v772
    %v1538 = vpop.f32.mrb[0].mxu0
    %v1539 = vadd.f32 0.0, %v1538
    %v1540 = vpop.f32.mrb[0].mxu0
    %1541 = vmatprep.mubr.f32.mxu0 %v777
    %1542 = vmatmul.mubr.f32.gmra.mrb[0].mxu0 %v776
    %v1543 = vpop.f32.mrb[0].mxu0
    %v1544 = vadd.f32 0.0, %v1543
    %v1545 = vpop.f32.mrb[0].mxu0
    %1546 = vmatprep.mubr.f32.mxu0 %v781
    %1547 = vmatmul.mubr.f32.gmra.mrb[0].mxu0 %v780
    %v1548 = vpop.f32.mrb[0].mxu0
    %v1549 = vadd.f32 0.0, %v1548
    %v1550 = vpop.f32.mrb[0].mxu0
    %1551 = vmatprep.mubr.f32.mxu0 %v785
    %1552 = vmatmul.mubr.f32.gmra.mrb[0].mxu0 %v784
    %v1553 = vpop.f32.mrb[0].mxu0
    %v1554 = vadd.f32 0.0, %v1553
    %v1555 = vpop.f32.mrb[0].mxu0
    %1556 = vmatprep.mubr.f32.mxu0 %v789
    %1557 = vmatmul.mubr.f32.gmra.mrb[0].mxu0 %v788
    %v1558 = vpop.f32.mrb[0].mxu0
    %v1559 = vadd.f32 0.0, %v1558
    %v1560 = vpop.f32.mrb[0].mxu0
    %1561 = vmatprep.mubr.f32.mxu0 %v793
    %1562 = vmatmul.mubr.f32.gmra.mrb[0].mxu0 %v792
    %v1563 = vpop.f32.mrb[0].mxu0
    %v1564 = vadd.f32 0.0, %v1563
    %v1565 = vpop.f32.mrb[0].mxu0
    %1566 = vmatprep.mubr.f32.mxu0 %v797
    %1567 = vmatmul.mubr.f32.gmra.mrb[0].mxu0 %v796
    %v1568 = vpop.f32.mrb[0].mxu0
    %v1569 = vadd.f32 0.0, %v1568
    %v1570 = vpop.f32.mrb[0].mxu0
    %1571 = vmatprep.mubr.f32.mxu0 %v801
    %1572 = vmatmul.mubr.f32.gmra.mrb[0].mxu0 %v800
    %v1573 = vpop.f32.mrb[0].mxu0
    %v1574 = vadd.f32 0.0, %v1573
    %v1575 = vpop.f32.mrb[0].mxu0
    %1576 = vmatprep.mubr.f32.mxu0 %v805
    %1577 = vmatmul.mubr.f32.gmra.mrb[0].mxu0 %v804
    %v1578 = vpop.f32.mrb[0].mxu0
    %v1579 = vadd.f32 0.0, %v1578
    %v1580 = vpop.f32.mrb[0].mxu0
    %1581 = vmatprep.mubr.f32.mxu0 %v809
    %1582 = vmatmul.mubr.f32.gmra.mrb[0].mxu0 %v808
    %v1583 = vpop.f32.mrb[0].mxu0
    %v1584 = vadd.f32 0.0, %v1583
    %v1585 = vpop.f32.mrb[0].mxu0
    %1586 = vmatprep.mubr.f32.mxu0 %v813
    %1587 = vmatmul.mubr.f32.gmra.mrb[0].mxu0 %v812
    %v1588 = vpop.f32.mrb[0].mxu0
    %v1589 = vadd.f32 0.0, %v1588
    %v1590 = vpop.f32.mrb[0].mxu0
    %1591 = vmatprep.mubr.f32.mxu0 %v817
    %1592 = vmatmul.mubr.f32.gmra.mrb[0].mxu0 %v816
    %v1593 = vpop.f32.mrb[0].mxu0
    %v1594 = vadd.f32 0.0, %v1593
    %v1595 = vpop.f32.mrb[0].mxu0
    %1596 = vmatprep.mubr.f32.mxu0 %v821
    %1597 = vmatmul.mubr.f32.gmra.mrb[0].mxu0 %v820
    %v1598 = vpop.f32.mrb[0].mxu0
    %v1599 = vadd.f32 0.0, %v1598
    %v1600 = vpop.f32.mrb[0].mxu0
    %1601 = vmatprep.mubr.f32.mxu0 %v825
    %1602 = vmatmul.mubr.f32.gmra.mrb[0].mxu0 %v824
    %v1603 = vpop.f32.mrb[0].mxu0
    %v1604 = vadd.f32 0.0, %v1603
    %v1605 = vpop.f32.mrb[0].mxu0
    %1606 = vmatprep.mubr.f32.mxu0 %v829
    %1607 = vmatmul.mubr.f32.gmra.mrb[0].mxu0 %v828
    %v1608 = vpop.f32.mrb[0].mxu0
    %v1609 = vadd.f32 0.0, %v1608
    %v1610 = vpop.f32.mrb[0].mxu0
    %1611 = vmatprep.mubr.f32.mxu0 %v833
    %1612 = vmatmul.mubr.f32.gmra.mrb[0].mxu0 %v832
    %v1613 = vpop.f32.mrb[0].mxu0
    %v1614 = vadd.f32 0.0, %v1613
    %v1615 = vpop.f32.mrb[0].mxu0
    %1616 = vmatprep.mubr.f32.mxu0 %v837
    %1617 = vmatmul.mubr.f32.gmra.mrb[0].mxu0 %v836
    %v1618 = vpop.f32.mrb[0].mxu0
    %v1619 = vadd.f32 0.0, %v1618
    %v1620 = vpop.f32.mrb[0].mxu0
    %1621 = vmatprep.mubr.f32.mxu0 %v841
    %1622 = vmatmul.mubr.f32.gmra.mrb[0].mxu0 %v840
    %v1623 = vpop.f32.mrb[0].mxu0
    %v1624 = vadd.f32 0.0, %v1623
    %v1625 = vpop.f32.mrb[0].mxu0
    %1626 = vmatprep.mubr.f32.mxu0 %v845
    %1627 = vmatmul.mubr.f32.gmra.mrb[0].mxu0 %v844
    %v1628 = vpop.f32.mrb[0].mxu0
    %v1629 = vadd.f32 0.0, %v1628
    %v1630 = vpop.f32.mrb[0].mxu0
    %1631 = vmatprep.mubr.f32.mxu0 %v849
    %1632 = vmatmul.mubr.f32.gmra.mrb[0].mxu0 %v848
    %v1633 = vpop.f32.mrb[0].mxu0
    %v1634 = vadd.f32 0.0, %v1633
    %v1635 = vpop.f32.mrb[0].mxu0
    %1636 = vdwg.mxu0
    %1637 = vmatprep.subr.mxu0 0.0
    %1638 = vmatpush1.msra.mxu0 %v244
    %1639 = vmatprep.subr.mxu0 0.0
    %1640 = vmatpush1.msra.mxu0 %v245
    %1641 = vmatprep.subr.mxu0 0.0
    %1642 = vmatpush1.msra.mxu0 %v246
    %1643 = vmatprep.subr.mxu0 0.0
    %1644 = vmatpush1.msra.mxu0 %v247
    %1645 = vmatprep.subr.mxu0 0.0
    %1646 = vmatpush1.msra.mxu0 %v248
    %1647 = vmatprep.subr.mxu0 0.0
    %1648 = vmatpush1.msra.mxu0 %v249
    %1649 = vmatprep.subr.mxu0 0.0
    %1650 = vmatpush1.msra.mxu0 %v250
    %1651 = vmatprep.subr.mxu0 0.0
    %1652 = vmatpush1.msra.mxu0 %v251
    %1653 = vmatprep.subr.mxu0 0.0
    %1654 = vmatpush1.msra.mxu0 %v252
    %1655 = vmatprep.subr.mxu0 0.0
    %1656 = vmatpush1.msra.mxu0 %v253
    %1657 = vmatprep.subr.mxu0 0.0
    %1658 = vmatpush1.msra.mxu0 %v254
    %1659 = vmatprep.subr.mxu0 0.0
    %1660 = vmatpush1.msra.mxu0 %v255
    %1661 = vmatprep.subr.mxu0 0.0
    %1662 = vmatpush1.msra.mxu0 %v256
    %1663 = vmatprep.subr.mxu0 0.0
    %1664 = vmatpush1.msra.mxu0 %v257
    %1665 = vmatprep.subr.mxu0 0.0
    %1666 = vmatpush1.msra.mxu0 %v258
    %1667 = vmatprep.subr.mxu0 0.0
    %1668 = vmatpush1.msra.mxu0 %v259
    %1669 = vmatprep.subr.mxu0 0.0
    %1670 = vmatpush1.msra.mxu0 %v260
    %1671 = vmatprep.subr.mxu0 0.0
    %1672 = vmatpush1.msra.mxu0 %v261
    %1673 = vmatprep.subr.mxu0 0.0
    %1674 = vmatpush1.msra.mxu0 %v262
    %1675 = vmatprep.subr.mxu0 0.0
    %1676 = vmatpush1.msra.mxu0 %v263
    %1677 = vmatprep.subr.mxu0 0.0
    %1678 = vmatpush1.msra.mxu0 %v264
    %1679 = vmatprep.subr.mxu0 0.0
    %1680 = vmatpush1.msra.mxu0 %v265
    %1681 = vmatprep.subr.mxu0 0.0
    %1682 = vmatpush1.msra.mxu0 %v266
    %1683 = vmatprep.subr.mxu0 0.0
    %1684 = vmatpush1.msra.mxu0 %v267
    %1685 = vmatprep.subr.mxu0 0.0
    %1686 = vmatpush1.msra.mxu0 %v268
    %1687 = vmatprep.subr.mxu0 0.0
    %1688 = vmatpush1.msra.mxu0 %v269
    %1689 = vmatprep.subr.mxu0 0.0
    %1690 = vmatpush1.msra.mxu0 %v270
    %1691 = vmatprep.subr.mxu0 0.0
    %1692 = vmatpush1.msra.mxu0 %v271
    %1693 = vmatprep.subr.mxu0 0.0
    %1694 = vmatpush1.msra.mxu0 %v272
    %1695 = vmatprep.subr.mxu0 0.0
    %1696 = vmatpush1.msra.mxu0 %v273
    %1697 = vmatprep.subr.mxu0 0.0
    %1698 = vmatpush1.msra.mxu0 %v274
    %1699 = vmatprep.subr.mxu0 0.0
    %1700 = vmatpush1.msra.mxu0 %v275
    %1701 = vmatprep.mubr.f32.mxu0 %v279
    %1702 = vmatmul.mubr.f32.gmra.mrb[0].mxu0 %v278
    %v1703 = vpop.f32.mrb[0].mxu0
    %v1704 = vadd.f32 %v919, %v1703
    %v1705 = vpop.f32.mrb[0].mxu0
    %1706 = vmatprep.mubr.f32.mxu0 %v283
    %1707 = vmatmul.mubr.f32.gmra.mrb[0].mxu0 %v282
    %v1708 = vpop.f32.mrb[0].mxu0
    %v1709 = vadd.f32 %v924, %v1708
    %v1710 = vpop.f32.mrb[0].mxu0
    %1711 = vmatprep.mubr.f32.mxu0 %v287
    %1712 = vmatmul.mubr.f32.gmra.mrb[0].mxu0 %v286
    %v1713 = vpop.f32.mrb[0].mxu0
    %v1714 = vadd.f32 %v929, %v1713
    %v1715 = vpop.f32.mrb[0].mxu0
    %1716 = vmatprep.mubr.f32.mxu0 %v291
    %1717 = vmatmul.mubr.f32.gmra.mrb[0].mxu0 %v290
    %v1718 = vpop.f32.mrb[0].mxu0
    %v1719 = vadd.f32 %v934, %v1718
    %v1720 = vpop.f32.mrb[0].mxu0
    %1721 = vmatprep.mubr.f32.mxu0 %v295
    %1722 = vmatmul.mubr.f32.gmra.mrb[0].mxu0 %v294
    %v1723 = vpop.f32.mrb[0].mxu0
    %v1724 = vadd.f32 %v939, %v1723
    %v1725 = vpop.f32.mrb[0].mxu0
    %1726 = vmatprep.mubr.f32.mxu0 %v299
    %1727 = vmatmul.mubr.f32.gmra.mrb[0].mxu0 %v298
    %v1728 = vpop.f32.mrb[0].mxu0
    %v1729 = vadd.f32 %v944, %v1728
    %v1730 = vpop.f32.mrb[0].mxu0
    %1731 = vmatprep.mubr.f32.mxu0 %v303
    %1732 = vmatmul.mubr.f32.gmra.mrb[0].mxu0 %v302
    %v1733 = vpop.f32.mrb[0].mxu0
    %v1734 = vadd.f32 %v949, %v1733
    %v1735 = vpop.f32.mrb[0].mxu0
    %1736 = vmatprep.mubr.f32.mxu0 %v307
    %1737 = vmatmul.mubr.f32.gmra.mrb[0].mxu0 %v306
    %v1738 = vpop.f32.mrb[0].mxu0
    %v1739 = vadd.f32 %v954, %v1738
    %v1740 = vpop.f32.mrb[0].mxu0
    %1741 = vmatprep.mubr.f32.mxu0 %v311
    %1742 = vmatmul.mubr.f32.gmra.mrb[0].mxu0 %v310
    %v1743 = vpop.f32.mrb[0].mxu0
    %v1744 = vadd.f32 %v959, %v1743
    %v1745 = vpop.f32.mrb[0].mxu0
    %1746 = vmatprep.mubr.f32.mxu0 %v315
    %1747 = vmatmul.mubr.f32.gmra.mrb[0].mxu0 %v314
    %v1748 = vpop.f32.mrb[0].mxu0
    %v1749 = vadd.f32 %v964, %v1748
    %v1750 = vpop.f32.mrb[0].mxu0
    %1751 = vmatprep.mubr.f32.mxu0 %v319
    %1752 = vmatmul.mubr.f32.gmra.mrb[0].mxu0 %v318
    %v1753 = vpop.f32.mrb[0].mxu0
    %v1754 = vadd.f32 %v969, %v1753
    %v1755 = vpop.f32.mrb[0].mxu0
    %1756 = vmatprep.mubr.f32.mxu0 %v323
    %1757 = vmatmul.mubr.f32.gmra.mrb[0].mxu0 %v322
    %v1758 = vpop.f32.mrb[0].mxu0
    %v1759 = vadd.f32 %v974, %v1758
    %v1760 = vpop.f32.mrb[0].mxu0
    %1761 = vmatprep.mubr.f32.mxu0 %v327
    %1762 = vmatmul.mubr.f32.gmra.mrb[0].mxu0 %v326
    %v1763 = vpop.f32.mrb[0].mxu0
    %v1764 = vadd.f32 %v979, %v1763
    %v1765 = vpop.f32.mrb[0].mxu0
    %1766 = vmatprep.mubr.f32.mxu0 %v331
    %1767 = vmatmul.mubr.f32.gmra.mrb[0].mxu0 %v330
    %v1768 = vpop.f32.mrb[0].mxu0
    %v1769 = vadd.f32 %v984, %v1768
    %v1770 = vpop.f32.mrb[0].mxu0
    %1771 = vmatprep.mubr.f32.mxu0 %v335
    %1772 = vmatmul.mubr.f32.gmra.mrb[0].mxu0 %v334
    %v1773 = vpop.f32.mrb[0].mxu0
    %v1774 = vadd.f32 %v989, %v1773
    %v1775 = vpop.f32.mrb[0].mxu0
    %1776 = vmatprep.mubr.f32.mxu0 %v339
    %1777 = vmatmul.mubr.f32.gmra.mrb[0].mxu0 %v338
    %v1778 = vpop.f32.mrb[0].mxu0
    %v1779 = vadd.f32 %v994, %v1778
    %v1780 = vpop.f32.mrb[0].mxu0
    %1781 = vmatprep.mubr.f32.mxu0 %v343
    %1782 = vmatmul.mubr.f32.gmra.mrb[0].mxu0 %v342
    %v1783 = vpop.f32.mrb[0].mxu0
    %v1784 = vadd.f32 %v999, %v1783
    %v1785 = vpop.f32.mrb[0].mxu0
    %1786 = vmatprep.mubr.f32.mxu0 %v347
    %1787 = vmatmul.mubr.f32.gmra.mrb[0].mxu0 %v346
    %v1788 = vpop.f32.mrb[0].mxu0
    %v1789 = vadd.f32 %v1004, %v1788
    %v1790 = vpop.f32.mrb[0].mxu0
    %1791 = vmatprep.mubr.f32.mxu0 %v351
    %1792 = vmatmul.mubr.f32.gmra.mrb[0].mxu0 %v350
    %v1793 = vpop.f32.mrb[0].mxu0
    %v1794 = vadd.f32 %v1009, %v1793
    %v1795 = vpop.f32.mrb[0].mxu0
    %1796 = vmatprep.mubr.f32.mxu0 %v355
    %1797 = vmatmul.mubr.f32.gmra.mrb[0].mxu0 %v354
    %v1798 = vpop.f32.mrb[0].mxu0
    %v1799 = vadd.f32 %v1014, %v1798
    %v1800 = vpop.f32.mrb[0].mxu0
    %1801 = vmatprep.mubr.f32.mxu0 %v359
    %1802 = vmatmul.mubr.f32.gmra.mrb[0].mxu0 %v358
    %v1803 = vpop.f32.mrb[0].mxu0
    %v1804 = vadd.f32 %v1019, %v1803
    %v1805 = vpop.f32.mrb[0].mxu0
    %1806 = vmatprep.mubr.f32.mxu0 %v363
    %1807 = vmatmul.mubr.f32.gmra.mrb[0].mxu0 %v362
    %v1808 = vpop.f32.mrb[0].mxu0
    %v1809 = vadd.f32 %v1024, %v1808
    %v1810 = vpop.f32.mrb[0].mxu0
    %1811 = vmatprep.mubr.f32.mxu0 %v367
    %1812 = vmatmul.mubr.f32.gmra.mrb[0].mxu0 %v366
    %v1813 = vpop.f32.mrb[0].mxu0
    %v1814 = vadd.f32 %v1029, %v1813
    %v1815 = vpop.f32.mrb[0].mxu0
    %1816 = vmatprep.mubr.f32.mxu0 %v371
    %1817 = vmatmul.mubr.f32.gmra.mrb[0].mxu0 %v370
    %v1818 = vpop.f32.mrb[0].mxu0
    %v1819 = vadd.f32 %v1034, %v1818
    %v1820 = vpop.f32.mrb[0].mxu0
    %1821 = vmatprep.mubr.f32.mxu0 %v375
    %1822 = vmatmul.mubr.f32.gmra.mrb[0].mxu0 %v374
    %v1823 = vpop.f32.mrb[0].mxu0
    %v1824 = vadd.f32 %v1039, %v1823
    %v1825 = vpop.f32.mrb[0].mxu0
    %1826 = vmatprep.mubr.f32.mxu0 %v379
    %1827 = vmatmul.mubr.f32.gmra.mrb[0].mxu0 %v378
    %v1828 = vpop.f32.mrb[0].mxu0
    %v1829 = vadd.f32 %v1044, %v1828
    %v1830 = vpop.f32.mrb[0].mxu0
    %1831 = vmatprep.mubr.f32.mxu0 %v383
    %1832 = vmatmul.mubr.f32.gmra.mrb[0].mxu0 %v382
    %v1833 = vpop.f32.mrb[0].mxu0
    %v1834 = vadd.f32 %v1049, %v1833
    %v1835 = vpop.f32.mrb[0].mxu0
    %1836 = vmatprep.mubr.f32.mxu0 %v387
    %1837 = vmatmul.mubr.f32.gmra.mrb[0].mxu0 %v386
    %v1838 = vpop.f32.mrb[0].mxu0
    %v1839 = vadd.f32 %v1054, %v1838
    %v1840 = vpop.f32.mrb[0].mxu0
    %1841 = vmatprep.mubr.f32.mxu0 %v391
    %1842 = vmatmul.mubr.f32.gmra.mrb[0].mxu0 %v390
    %v1843 = vpop.f32.mrb[0].mxu0
    %v1844 = vadd.f32 %v1059, %v1843
    %v1845 = vpop.f32.mrb[0].mxu0
    %1846 = vmatprep.mubr.f32.mxu0 %v395
    %1847 = vmatmul.mubr.f32.gmra.mrb[0].mxu0 %v394
    %v1848 = vpop.f32.mrb[0].mxu0
    %v1849 = vadd.f32 %v1064, %v1848
    %v1850 = vpop.f32.mrb[0].mxu0
    %1851 = vmatprep.mubr.f32.mxu0 %v399
    %1852 = vmatmul.mubr.f32.gmra.mrb[0].mxu0 %v398
    %v1853 = vpop.f32.mrb[0].mxu0
    %v1854 = vadd.f32 %v1069, %v1853
    %v1855 = vpop.f32.mrb[0].mxu0
    %1856 = vmatprep.mubr.f32.mxu0 %v403
    %1857 = vmatmul.mubr.f32.gmra.mrb[0].mxu0 %v402
    %v1858 = vpop.f32.mrb[0].mxu0
    %v1859 = vadd.f32 %v1074, %v1858
    %v1860 = vpop.f32.mrb[0].mxu0
    %1861 = vmatprep.mubr.f32.mxu0 %v407
    %1862 = vmatmul.mubr.f32.gmra.mrb[0].mxu0 %v406
    %v1863 = vpop.f32.mrb[0].mxu0
    %v1864 = vadd.f32 %v1079, %v1863
    %v1865 = vpop.f32.mrb[0].mxu0
    %1866 = vmatprep.mubr.f32.mxu0 %v411
    %1867 = vmatmul.mubr.f32.gmra.mrb[0].mxu0 %v410
    %v1868 = vpop.f32.mrb[0].mxu0
    %v1869 = vadd.f32 %v1084, %v1868
    %v1870 = vpop.f32.mrb[0].mxu0
    %1871 = vmatprep.mubr.f32.mxu0 %v415
    %1872 = vmatmul.mubr.f32.gmra.mrb[0].mxu0 %v414
    %v1873 = vpop.f32.mrb[0].mxu0
    %v1874 = vadd.f32 %v1089, %v1873
    %v1875 = vpop.f32.mrb[0].mxu0
    %1876 = vmatprep.mubr.f32.mxu0 %v419
    %1877 = vmatmul.mubr.f32.gmra.mrb[0].mxu0 %v418
    %v1878 = vpop.f32.mrb[0].mxu0
    %v1879 = vadd.f32 %v1094, %v1878
    %v1880 = vpop.f32.mrb[0].mxu0
    %1881 = vmatprep.mubr.f32.mxu0 %v423
    %1882 = vmatmul.mubr.f32.gmra.mrb[0].mxu0 %v422
    %v1883 = vpop.f32.mrb[0].mxu0
    %v1884 = vadd.f32 %v1099, %v1883
    %v1885 = vpop.f32.mrb[0].mxu0
    %1886 = vmatprep.mubr.f32.mxu0 %v427
    %1887 = vmatmul.mubr.f32.gmra.mrb[0].mxu0 %v426
    %v1888 = vpop.f32.mrb[0].mxu0
    %v1889 = vadd.f32 %v1104, %v1888
    %v1890 = vpop.f32.mrb[0].mxu0
    %1891 = vmatprep.mubr.f32.mxu0 %v431
    %1892 = vmatmul.mubr.f32.gmra.mrb[0].mxu0 %v430
    %v1893 = vpop.f32.mrb[0].mxu0
    %v1894 = vadd.f32 %v1109, %v1893
    %v1895 = vpop.f32.mrb[0].mxu0
    %1896 = vmatprep.mubr.f32.mxu0 %v435
    %1897 = vmatmul.mubr.f32.gmra.mrb[0].mxu0 %v434
    %v1898 = vpop.f32.mrb[0].mxu0
    %v1899 = vadd.f32 %v1114, %v1898
    %v1900 = vpop.f32.mrb[0].mxu0
    %1901 = vmatprep.mubr.f32.mxu0 %v439
    %1902 = vmatmul.mubr.f32.gmra.mrb[0].mxu0 %v438
    %v1903 = vpop.f32.mrb[0].mxu0
    %v1904 = vadd.f32 %v1119, %v1903
    %v1905 = vpop.f32.mrb[0].mxu0
    %1906 = vmatprep.mubr.f32.mxu0 %v443
    %1907 = vmatmul.mubr.f32.gmra.mrb[0].mxu0 %v442
    %v1908 = vpop.f32.mrb[0].mxu0
    %v1909 = vadd.f32 %v1124, %v1908
    %v1910 = vpop.f32.mrb[0].mxu0
    %1911 = vmatprep.mubr.f32.mxu0 %v447
    %1912 = vmatmul.mubr.f32.gmra.mrb[0].mxu0 %v446
    %v1913 = vpop.f32.mrb[0].mxu0
    %v1914 = vadd.f32 %v1129, %v1913
    %v1915 = vpop.f32.mrb[0].mxu0
    %1916 = vmatprep.mubr.f32.mxu0 %v451
    %1917 = vmatmul.mubr.f32.gmra.mrb[0].mxu0 %v450
    %v1918 = vpop.f32.mrb[0].mxu0
    %v1919 = vadd.f32 %v1134, %v1918
    %v1920 = vpop.f32.mrb[0].mxu0
    %1921 = vmatprep.mubr.f32.mxu0 %v455
    %1922 = vmatmul.mubr.f32.gmra.mrb[0].mxu0 %v454
    %v1923 = vpop.f32.mrb[0].mxu0
    %v1924 = vadd.f32 %v1139, %v1923
    %v1925 = vpop.f32.mrb[0].mxu0
    %1926 = vmatprep.mubr.f32.mxu0 %v459
    %1927 = vmatmul.mubr.f32.gmra.mrb[0].mxu0 %v458
    %v1928 = vpop.f32.mrb[0].mxu0
    %v1929 = vadd.f32 %v1144, %v1928
    %v1930 = vpop.f32.mrb[0].mxu0
    %1931 = vmatprep.mubr.f32.mxu0 %v463
    %1932 = vmatmul.mubr.f32.gmra.mrb[0].mxu0 %v462
    %v1933 = vpop.f32.mrb[0].mxu0
    %v1934 = vadd.f32 %v1149, %v1933
    %v1935 = vpop.f32.mrb[0].mxu0
    %1936 = vmatprep.mubr.f32.mxu0 %v467
    %1937 = vmatmul.mubr.f32.gmra.mrb[0].mxu0 %v466
    %v1938 = vpop.f32.mrb[0].mxu0
    %v1939 = vadd.f32 %v1154, %v1938
    %v1940 = vpop.f32.mrb[0].mxu0
    %1941 = vmatprep.mubr.f32.mxu0 %v471
    %1942 = vmatmul.mubr.f32.gmra.mrb[0].mxu0 %v470
    %v1943 = vpop.f32.mrb[0].mxu0
    %v1944 = vadd.f32 %v1159, %v1943
    %v1945 = vpop.f32.mrb[0].mxu0
    %1946 = vmatprep.mubr.f32.mxu0 %v475
    %1947 = vmatmul.mubr.f32.gmra.mrb[0].mxu0 %v474
    %v1948 = vpop.f32.mrb[0].mxu0
    %v1949 = vadd.f32 %v1164, %v1948
    %v1950 = vpop.f32.mrb[0].mxu0
    %1951 = vmatprep.mubr.f32.mxu0 %v479
    %1952 = vmatmul.mubr.f32.gmra.mrb[0].mxu0 %v478
    %v1953 = vpop.f32.mrb[0].mxu0
    %v1954 = vadd.f32 %v1169, %v1953
    %v1955 = vpop.f32.mrb[0].mxu0
    %1956 = vmatprep.mubr.f32.mxu0 %v483
    %1957 = vmatmul.mubr.f32.gmra.mrb[0].mxu0 %v482
    %v1958 = vpop.f32.mrb[0].mxu0
    %v1959 = vadd.f32 %v1174, %v1958
    %v1960 = vpop.f32.mrb[0].mxu0
    %1961 = vmatprep.mubr.f32.mxu0 %v487
    %1962 = vmatmul.mubr.f32.gmra.mrb[0].mxu0 %v486
    %v1963 = vpop.f32.mrb[0].mxu0
    %v1964 = vadd.f32 %v1179, %v1963
    %v1965 = vpop.f32.mrb[0].mxu0
    %1966 = vmatprep.mubr.f32.mxu0 %v491
    %1967 = vmatmul.mubr.f32.gmra.mrb[0].mxu0 %v490
    %v1968 = vpop.f32.mrb[0].mxu0
    %v1969 = vadd.f32 %v1184, %v1968
    %v1970 = vpop.f32.mrb[0].mxu0
    %1971 = vmatprep.mubr.f32.mxu0 %v495
    %1972 = vmatmul.mubr.f32.gmra.mrb[0].mxu0 %v494
    %v1973 = vpop.f32.mrb[0].mxu0
    %v1974 = vadd.f32 %v1189, %v1973
    %v1975 = vpop.f32.mrb[0].mxu0
    %1976 = vmatprep.mubr.f32.mxu0 %v499
    %1977 = vmatmul.mubr.f32.gmra.mrb[0].mxu0 %v498
    %v1978 = vpop.f32.mrb[0].mxu0
    %v1979 = vadd.f32 %v1194, %v1978
    %v1980 = vpop.f32.mrb[0].mxu0
    %1981 = vmatprep.mubr.f32.mxu0 %v503
    %1982 = vmatmul.mubr.f32.gmra.mrb[0].mxu0 %v502
    %v1983 = vpop.f32.mrb[0].mxu0
    %v1984 = vadd.f32 %v1199, %v1983
    %v1985 = vpop.f32.mrb[0].mxu0
    %1986 = vmatprep.mubr.f32.mxu0 %v507
    %1987 = vmatmul.mubr.f32.gmra.mrb[0].mxu0 %v506
    %v1988 = vpop.f32.mrb[0].mxu0
    %v1989 = vadd.f32 %v1204, %v1988
    %v1990 = vpop.f32.mrb[0].mxu0
    %1991 = vmatprep.mubr.f32.mxu0 %v511
    %1992 = vmatmul.mubr.f32.gmra.mrb[0].mxu0 %v510
    %v1993 = vpop.f32.mrb[0].mxu0
    %v1994 = vadd.f32 %v1209, %v1993
    %v1995 = vpop.f32.mrb[0].mxu0
    %1996 = vmatprep.mubr.f32.mxu0 %v515
    %1997 = vmatmul.mubr.f32.gmra.mrb[0].mxu0 %v514
    %v1998 = vpop.f32.mrb[0].mxu0
    %v1999 = vadd.f32 %v1214, %v1998
    %v2000 = vpop.f32.mrb[0].mxu0
    %2001 = vmatprep.mubr.f32.mxu0 %v519
    %2002 = vmatmul.mubr.f32.gmra.mrb[0].mxu0 %v518
    %v2003 = vpop.f32.mrb[0].mxu0
    %v2004 = vadd.f32 %v1219, %v2003
    %v2005 = vpop.f32.mrb[0].mxu0
    %2006 = vmatprep.mubr.f32.mxu0 %v523
    %2007 = vmatmul.mubr.f32.gmra.mrb[0].mxu0 %v522
    %v2008 = vpop.f32.mrb[0].mxu0
    %v2009 = vadd.f32 %v1224, %v2008
    %v2010 = vpop.f32.mrb[0].mxu0
    %2011 = vmatprep.mubr.f32.mxu0 %v527
    %2012 = vmatmul.mubr.f32.gmra.mrb[0].mxu0 %v526
    %v2013 = vpop.f32.mrb[0].mxu0
    %v2014 = vadd.f32 %v1229, %v2013
    %v2015 = vpop.f32.mrb[0].mxu0
    %2016 = vmatprep.mubr.f32.mxu0 %v531
    %2017 = vmatmul.mubr.f32.gmra.mrb[0].mxu0 %v530
    %v2018 = vpop.f32.mrb[0].mxu0
    %v2019 = vadd.f32 %v1234, %v2018
    %v2020 = vpop.f32.mrb[0].mxu0
    %2021 = vmatprep.mubr.f32.mxu0 %v535
    %2022 = vmatmul.mubr.f32.gmra.mrb[0].mxu0 %v534
    %v2023 = vpop.f32.mrb[0].mxu0
    %v2024 = vadd.f32 %v1239, %v2023
    %v2025 = vpop.f32.mrb[0].mxu0
    %2026 = vmatprep.mubr.f32.mxu0 %v539
    %2027 = vmatmul.mubr.f32.gmra.mrb[0].mxu0 %v538
    %v2028 = vpop.f32.mrb[0].mxu0
    %v2029 = vadd.f32 %v1244, %v2028
    %v2030 = vpop.f32.mrb[0].mxu0
    %2031 = vmatprep.mubr.f32.mxu0 %v543
    %2032 = vmatmul.mubr.f32.gmra.mrb[0].mxu0 %v542
    %v2033 = vpop.f32.mrb[0].mxu0
    %v2034 = vadd.f32 %v1249, %v2033
    %v2035 = vpop.f32.mrb[0].mxu0
    %2036 = vmatprep.mubr.f32.mxu0 %v547
    %2037 = vmatmul.mubr.f32.gmra.mrb[0].mxu0 %v546
    %v2038 = vpop.f32.mrb[0].mxu0
    %v2039 = vadd.f32 %v1254, %v2038
    %v2040 = vpop.f32.mrb[0].mxu0
    %2041 = vmatprep.mubr.f32.mxu0 %v551
    %2042 = vmatmul.mubr.f32.gmra.mrb[0].mxu0 %v550
    %v2043 = vpop.f32.mrb[0].mxu0
    %v2044 = vadd.f32 %v1259, %v2043
    %v2045 = vpop.f32.mrb[0].mxu0
    %2046 = vmatprep.mubr.f32.mxu0 %v555
    %2047 = vmatmul.mubr.f32.gmra.mrb[0].mxu0 %v554
    %v2048 = vpop.f32.mrb[0].mxu0
    %v2049 = vadd.f32 %v1264, %v2048
    %v2050 = vpop.f32.mrb[0].mxu0
    %2051 = vmatprep.mubr.f32.mxu0 %v559
    %2052 = vmatmul.mubr.f32.gmra.mrb[0].mxu0 %v558
    %v2053 = vpop.f32.mrb[0].mxu0
    %v2054 = vadd.f32 %v1269, %v2053
    %v2055 = vpop.f32.mrb[0].mxu0
    %2056 = vmatprep.mubr.f32.mxu0 %v563
    %2057 = vmatmul.mubr.f32.gmra.mrb[0].mxu0 %v562
    %v2058 = vpop.f32.mrb[0].mxu0
    %v2059 = vadd.f32 %v1274, %v2058
    %v2060 = vpop.f32.mrb[0].mxu0
    %2061 = vmatprep.mubr.f32.mxu0 %v567
    %2062 = vmatmul.mubr.f32.gmra.mrb[0].mxu0 %v566
    %v2063 = vpop.f32.mrb[0].mxu0
    %v2064 = vadd.f32 %v1279, %v2063
    %v2065 = vpop.f32.mrb[0].mxu0
    %2066 = vmatprep.mubr.f32.mxu0 %v571
    %2067 = vmatmul.mubr.f32.gmra.mrb[0].mxu0 %v570
    %v2068 = vpop.f32.mrb[0].mxu0
    %v2069 = vadd.f32 %v1284, %v2068
    %v2070 = vpop.f32.mrb[0].mxu0
    %2071 = vmatprep.mubr.f32.mxu0 %v575
    %2072 = vmatmul.mubr.f32.gmra.mrb[0].mxu0 %v574
    %v2073 = vpop.f32.mrb[0].mxu0
    %v2074 = vadd.f32 %v1289, %v2073
    %v2075 = vpop.f32.mrb[0].mxu0
    %2076 = vmatprep.mubr.f32.mxu0 %v579
    %2077 = vmatmul.mubr.f32.gmra.mrb[0].mxu0 %v578
    %v2078 = vpop.f32.mrb[0].mxu0
    %v2079 = vadd.f32 %v1294, %v2078
    %v2080 = vpop.f32.mrb[0].mxu0
    %2081 = vmatprep.mubr.f32.mxu0 %v583
    %2082 = vmatmul.mubr.f32.gmra.mrb[0].mxu0 %v582
    %v2083 = vpop.f32.mrb[0].mxu0
    %v2084 = vadd.f32 %v1299, %v2083
    %v2085 = vpop.f32.mrb[0].mxu0
    %2086 = vmatprep.mubr.f32.mxu0 %v587
    %2087 = vmatmul.mubr.f32.gmra.mrb[0].mxu0 %v586
    %v2088 = vpop.f32.mrb[0].mxu0
    %v2089 = vadd.f32 %v1304, %v2088
    %v2090 = vpop.f32.mrb[0].mxu0
    %2091 = vmatprep.mubr.f32.mxu0 %v591
    %2092 = vmatmul.mubr.f32.gmra.mrb[0].mxu0 %v590
    %v2093 = vpop.f32.mrb[0].mxu0
    %v2094 = vadd.f32 %v1309, %v2093
    %v2095 = vpop.f32.mrb[0].mxu0
    %2096 = vmatprep.mubr.f32.mxu0 %v595
    %2097 = vmatmul.mubr.f32.gmra.mrb[0].mxu0 %v594
    %v2098 = vpop.f32.mrb[0].mxu0
    %v2099 = vadd.f32 %v1314, %v2098
    %v2100 = vpop.f32.mrb[0].mxu0
    %2101 = vmatprep.mubr.f32.mxu0 %v599
    %2102 = vmatmul.mubr.f32.gmra.mrb[0].mxu0 %v598
    %v2103 = vpop.f32.mrb[0].mxu0
    %v2104 = vadd.f32 %v1319, %v2103
    %v2105 = vpop.f32.mrb[0].mxu0
    %2106 = vmatprep.mubr.f32.mxu0 %v603
    %2107 = vmatmul.mubr.f32.gmra.mrb[0].mxu0 %v602
    %v2108 = vpop.f32.mrb[0].mxu0
    %v2109 = vadd.f32 %v1324, %v2108
    %v2110 = vpop.f32.mrb[0].mxu0
    %2111 = vmatprep.mubr.f32.mxu0 %v607
    %2112 = vmatmul.mubr.f32.gmra.mrb[0].mxu0 %v606
    %v2113 = vpop.f32.mrb[0].mxu0
    %v2114 = vadd.f32 %v1329, %v2113
    %v2115 = vpop.f32.mrb[0].mxu0
    %2116 = vmatprep.mubr.f32.mxu0 %v611
    %2117 = vmatmul.mubr.f32.gmra.mrb[0].mxu0 %v610
    %v2118 = vpop.f32.mrb[0].mxu0
    %v2119 = vadd.f32 %v1334, %v2118
    %v2120 = vpop.f32.mrb[0].mxu0
    %2121 = vmatprep.mubr.f32.mxu0 %v615
    %2122 = vmatmul.mubr.f32.gmra.mrb[0].mxu0 %v614
    %v2123 = vpop.f32.mrb[0].mxu0
    %v2124 = vadd.f32 %v1339, %v2123
    %v2125 = vpop.f32.mrb[0].mxu0
    %2126 = vmatprep.mubr.f32.mxu0 %v619
    %2127 = vmatmul.mubr.f32.gmra.mrb[0].mxu0 %v618
    %v2128 = vpop.f32.mrb[0].mxu0
    %v2129 = vadd.f32 %v1344, %v2128
    %v2130 = vpop.f32.mrb[0].mxu0
    %2131 = vmatprep.mubr.f32.mxu0 %v623
    %2132 = vmatmul.mubr.f32.gmra.mrb[0].mxu0 %v622
    %v2133 = vpop.f32.mrb[0].mxu0
    %v2134 = vadd.f32 %v1349, %v2133
    %v2135 = vpop.f32.mrb[0].mxu0
    %2136 = vmatprep.mubr.f32.mxu0 %v627
    %2137 = vmatmul.mubr.f32.gmra.mrb[0].mxu0 %v626
    %v2138 = vpop.f32.mrb[0].mxu0
    %v2139 = vadd.f32 %v1354, %v2138
    %v2140 = vpop.f32.mrb[0].mxu0
    %2141 = vmatprep.mubr.f32.mxu0 %v631
    %2142 = vmatmul.mubr.f32.gmra.mrb[0].mxu0 %v630
    %v2143 = vpop.f32.mrb[0].mxu0
    %v2144 = vadd.f32 %v1359, %v2143
    %v2145 = vpop.f32.mrb[0].mxu0
    %2146 = vmatprep.mubr.f32.mxu0 %v635
    %2147 = vmatmul.mubr.f32.gmra.mrb[0].mxu0 %v634
    %v2148 = vpop.f32.mrb[0].mxu0
    %v2149 = vadd.f32 %v1364, %v2148
    %v2150 = vpop.f32.mrb[0].mxu0
    %2151 = vmatprep.mubr.f32.mxu0 %v639
    %2152 = vmatmul.mubr.f32.gmra.mrb[0].mxu0 %v638
    %v2153 = vpop.f32.mrb[0].mxu0
    %v2154 = vadd.f32 %v1369, %v2153
    %v2155 = vpop.f32.mrb[0].mxu0
    %2156 = vmatprep.mubr.f32.mxu0 %v643
    %2157 = vmatmul.mubr.f32.gmra.mrb[0].mxu0 %v642
    %v2158 = vpop.f32.mrb[0].mxu0
    %v2159 = vadd.f32 %v1374, %v2158
    %v2160 = vpop.f32.mrb[0].mxu0
    %2161 = vmatprep.mubr.f32.mxu0 %v647
    %2162 = vmatmul.mubr.f32.gmra.mrb[0].mxu0 %v646
    %v2163 = vpop.f32.mrb[0].mxu0
    %v2164 = vadd.f32 %v1379, %v2163
    %v2165 = vpop.f32.mrb[0].mxu0
    %2166 = vmatprep.mubr.f32.mxu0 %v651
    %2167 = vmatmul.mubr.f32.gmra.mrb[0].mxu0 %v650
    %v2168 = vpop.f32.mrb[0].mxu0
    %v2169 = vadd.f32 %v1384, %v2168
    %v2170 = vpop.f32.mrb[0].mxu0
    %2171 = vmatprep.mubr.f32.mxu0 %v655
    %2172 = vmatmul.mubr.f32.gmra.mrb[0].mxu0 %v654
    %v2173 = vpop.f32.mrb[0].mxu0
    %v2174 = vadd.f32 %v1389, %v2173
    %v2175 = vpop.f32.mrb[0].mxu0
    %2176 = vmatprep.mubr.f32.mxu0 %v659
    %2177 = vmatmul.mubr.f32.gmra.mrb[0].mxu0 %v658
    %v2178 = vpop.f32.mrb[0].mxu0
    %v2179 = vadd.f32 %v1394, %v2178
    %v2180 = vpop.f32.mrb[0].mxu0
    %2181 = vmatprep.mubr.f32.mxu0 %v663
    %2182 = vmatmul.mubr.f32.gmra.mrb[0].mxu0 %v662
    %v2183 = vpop.f32.mrb[0].mxu0
    %v2184 = vadd.f32 %v1399, %v2183
    %v2185 = vpop.f32.mrb[0].mxu0
    %2186 = vmatprep.mubr.f32.mxu0 %v667
    %2187 = vmatmul.mubr.f32.gmra.mrb[0].mxu0 %v666
    %v2188 = vpop.f32.mrb[0].mxu0
    %v2189 = vadd.f32 %v1404, %v2188
    %v2190 = vpop.f32.mrb[0].mxu0
    %2191 = vmatprep.mubr.f32.mxu0 %v671
    %2192 = vmatmul.mubr.f32.gmra.mrb[0].mxu0 %v670
    %v2193 = vpop.f32.mrb[0].mxu0
    %v2194 = vadd.f32 %v1409, %v2193
    %v2195 = vpop.f32.mrb[0].mxu0
    %2196 = vmatprep.mubr.f32.mxu0 %v675
    %2197 = vmatmul.mubr.f32.gmra.mrb[0].mxu0 %v674
    %v2198 = vpop.f32.mrb[0].mxu0
    %v2199 = vadd.f32 %v1414, %v2198
    %v2200 = vpop.f32.mrb[0].mxu0
    %2201 = vmatprep.mubr.f32.mxu0 %v679
    %2202 = vmatmul.mubr.f32.gmra.mrb[0].mxu0 %v678
    %v2203 = vpop.f32.mrb[0].mxu0
    %v2204 = vadd.f32 %v1419, %v2203
    %v2205 = vpop.f32.mrb[0].mxu0
    %2206 = vmatprep.mubr.f32.mxu0 %v683
    %2207 = vmatmul.mubr.f32.gmra.mrb[0].mxu0 %v682
    %v2208 = vpop.f32.mrb[0].mxu0
    %v2209 = vadd.f32 %v1424, %v2208
    %v2210 = vpop.f32.mrb[0].mxu0
    %2211 = vmatprep.mubr.f32.mxu0 %v687
    %2212 = vmatmul.mubr.f32.gmra.mrb[0].mxu0 %v686
    %v2213 = vpop.f32.mrb[0].mxu0
    %v2214 = vadd.f32 %v1429, %v2213
    %v2215 = vpop.f32.mrb[0].mxu0
    %2216 = vmatprep.mubr.f32.mxu0 %v691
    %2217 = vmatmul.mubr.f32.gmra.mrb[0].mxu0 %v690
    %v2218 = vpop.f32.mrb[0].mxu0
    %v2219 = vadd.f32 %v1434, %v2218
    %v2220 = vpop.f32.mrb[0].mxu0
    %2221 = vmatprep.mubr.f32.mxu0 %v695
    %2222 = vmatmul.mubr.f32.gmra.mrb[0].mxu0 %v694
    %v2223 = vpop.f32.mrb[0].mxu0
    %v2224 = vadd.f32 %v1439, %v2223
    %v2225 = vpop.f32.mrb[0].mxu0
    %2226 = vmatprep.mubr.f32.mxu0 %v699
    %2227 = vmatmul.mubr.f32.gmra.mrb[0].mxu0 %v698
    %v2228 = vpop.f32.mrb[0].mxu0
    %v2229 = vadd.f32 %v1444, %v2228
    %v2230 = vpop.f32.mrb[0].mxu0
    %2231 = vmatprep.mubr.f32.mxu0 %v703
    %2232 = vmatmul.mubr.f32.gmra.mrb[0].mxu0 %v702
    %v2233 = vpop.f32.mrb[0].mxu0
    %v2234 = vadd.f32 %v1449, %v2233
    %v2235 = vpop.f32.mrb[0].mxu0
    %2236 = vmatprep.mubr.f32.mxu0 %v707
    %2237 = vmatmul.mubr.f32.gmra.mrb[0].mxu0 %v706
    %v2238 = vpop.f32.mrb[0].mxu0
    %v2239 = vadd.f32 %v1454, %v2238
    %v2240 = vpop.f32.mrb[0].mxu0
    %2241 = vmatprep.mubr.f32.mxu0 %v711
    %2242 = vmatmul.mubr.f32.gmra.mrb[0].mxu0 %v710
    %v2243 = vpop.f32.mrb[0].mxu0
    %v2244 = vadd.f32 %v1459, %v2243
    %v2245 = vpop.f32.mrb[0].mxu0
    %2246 = vmatprep.mubr.f32.mxu0 %v715
    %2247 = vmatmul.mubr.f32.gmra.mrb[0].mxu0 %v714
    %v2248 = vpop.f32.mrb[0].mxu0
    %v2249 = vadd.f32 %v1464, %v2248
    %v2250 = vpop.f32.mrb[0].mxu0
    %2251 = vmatprep.mubr.f32.mxu0 %v719
    %2252 = vmatmul.mubr.f32.gmra.mrb[0].mxu0 %v718
    %v2253 = vpop.f32.mrb[0].mxu0
    %v2254 = vadd.f32 %v1469, %v2253
    %v2255 = vpop.f32.mrb[0].mxu0
    %2256 = vmatprep.mubr.f32.mxu0 %v723
    %2257 = vmatmul.mubr.f32.gmra.mrb[0].mxu0 %v722
    %v2258 = vpop.f32.mrb[0].mxu0
    %v2259 = vadd.f32 %v1474, %v2258
    %v2260 = vpop.f32.mrb[0].mxu0
    %2261 = vmatprep.mubr.f32.mxu0 %v727
    %2262 = vmatmul.mubr.f32.gmra.mrb[0].mxu0 %v726
    %v2263 = vpop.f32.mrb[0].mxu0
    %v2264 = vadd.f32 %v1479, %v2263
    %v2265 = vpop.f32.mrb[0].mxu0
    %2266 = vmatprep.mubr.f32.mxu0 %v731
    %2267 = vmatmul.mubr.f32.gmra.mrb[0].mxu0 %v730
    %v2268 = vpop.f32.mrb[0].mxu0
    %v2269 = vadd.f32 %v1484, %v2268
    %v2270 = vpop.f32.mrb[0].mxu0
    %2271 = vmatprep.mubr.f32.mxu0 %v735
    %2272 = vmatmul.mubr.f32.gmra.mrb[0].mxu0 %v734
    %v2273 = vpop.f32.mrb[0].mxu0
    %v2274 = vadd.f32 %v1489, %v2273
    %v2275 = vpop.f32.mrb[0].mxu0
    %2276 = vmatprep.mubr.f32.mxu0 %v739
    %2277 = vmatmul.mubr.f32.gmra.mrb[0].mxu0 %v738
    %v2278 = vpop.f32.mrb[0].mxu0
    %v2279 = vadd.f32 %v1494, %v2278
    %v2280 = vpop.f32.mrb[0].mxu0
    %2281 = vmatprep.mubr.f32.mxu0 %v743
    %2282 = vmatmul.mubr.f32.gmra.mrb[0].mxu0 %v742
    %v2283 = vpop.f32.mrb[0].mxu0
    %v2284 = vadd.f32 %v1499, %v2283
    %v2285 = vpop.f32.mrb[0].mxu0
    %2286 = vmatprep.mubr.f32.mxu0 %v747
    %2287 = vmatmul.mubr.f32.gmra.mrb[0].mxu0 %v746
    %v2288 = vpop.f32.mrb[0].mxu0
    %v2289 = vadd.f32 %v1504, %v2288
    %v2290 = vpop.f32.mrb[0].mxu0
    %2291 = vmatprep.mubr.f32.mxu0 %v751
    %2292 = vmatmul.mubr.f32.gmra.mrb[0].mxu0 %v750
    %v2293 = vpop.f32.mrb[0].mxu0
    %v2294 = vadd.f32 %v1509, %v2293
    %v2295 = vpop.f32.mrb[0].mxu0
    %2296 = vmatprep.mubr.f32.mxu0 %v755
    %2297 = vmatmul.mubr.f32.gmra.mrb[0].mxu0 %v754
    %v2298 = vpop.f32.mrb[0].mxu0
    %v2299 = vadd.f32 %v1514, %v2298
    %v2300 = vpop.f32.mrb[0].mxu0
    %2301 = vmatprep.mubr.f32.mxu0 %v759
    %2302 = vmatmul.mubr.f32.gmra.mrb[0].mxu0 %v758
    %v2303 = vpop.f32.mrb[0].mxu0
    %v2304 = vadd.f32 %v1519, %v2303
    %v2305 = vpop.f32.mrb[0].mxu0
    %2306 = vmatprep.mubr.f32.mxu0 %v763
    %2307 = vmatmul.mubr.f32.gmra.mrb[0].mxu0 %v762
    %v2308 = vpop.f32.mrb[0].mxu0
    %v2309 = vadd.f32 %v1524, %v2308
    %v2310 = vpop.f32.mrb[0].mxu0
    %2311 = vmatprep.mubr.f32.mxu0 %v767
    %2312 = vmatmul.mubr.f32.gmra.mrb[0].mxu0 %v766
    %v2313 = vpop.f32.mrb[0].mxu0
    %v2314 = vadd.f32 %v1529, %v2313
    %v2315 = vpop.f32.mrb[0].mxu0
    %2316 = vmatprep.mubr.f32.mxu0 %v771
    %2317 = vmatmul.mubr.f32.gmra.mrb[0].mxu0 %v770
    %v2318 = vpop.f32.mrb[0].mxu0
    %v2319 = vadd.f32 %v1534, %v2318
    %v2320 = vpop.f32.mrb[0].mxu0
    %2321 = vmatprep.mubr.f32.mxu0 %v775
    %2322 = vmatmul.mubr.f32.gmra.mrb[0].mxu0 %v774
    %v2323 = vpop.f32.mrb[0].mxu0
    %v2324 = vadd.f32 %v1539, %v2323
    %v2325 = vpop.f32.mrb[0].mxu0
    %2326 = vmatprep.mubr.f32.mxu0 %v779
    %2327 = vmatmul.mubr.f32.gmra.mrb[0].mxu0 %v778
    %v2328 = vpop.f32.mrb[0].mxu0
    %v2329 = vadd.f32 %v1544, %v2328
    %v2330 = vpop.f32.mrb[0].mxu0
    %2331 = vmatprep.mubr.f32.mxu0 %v783
    %2332 = vmatmul.mubr.f32.gmra.mrb[0].mxu0 %v782
    %v2333 = vpop.f32.mrb[0].mxu0
    %v2334 = vadd.f32 %v1549, %v2333
    %v2335 = vpop.f32.mrb[0].mxu0
    %2336 = vmatprep.mubr.f32.mxu0 %v787
    %2337 = vmatmul.mubr.f32.gmra.mrb[0].mxu0 %v786
    %v2338 = vpop.f32.mrb[0].mxu0
    %v2339 = vadd.f32 %v1554, %v2338
    %v2340 = vpop.f32.mrb[0].mxu0
    %2341 = vmatprep.mubr.f32.mxu0 %v791
    %2342 = vmatmul.mubr.f32.gmra.mrb[0].mxu0 %v790
    %v2343 = vpop.f32.mrb[0].mxu0
    %v2344 = vadd.f32 %v1559, %v2343
    %v2345 = vpop.f32.mrb[0].mxu0
    %2346 = vmatprep.mubr.f32.mxu0 %v795
    %2347 = vmatmul.mubr.f32.gmra.mrb[0].mxu0 %v794
    %v2348 = vpop.f32.mrb[0].mxu0
    %v2349 = vadd.f32 %v1564, %v2348
    %v2350 = vpop.f32.mrb[0].mxu0
    %2351 = vmatprep.mubr.f32.mxu0 %v799
    %2352 = vmatmul.mubr.f32.gmra.mrb[0].mxu0 %v798
    %v2353 = vpop.f32.mrb[0].mxu0
    %v2354 = vadd.f32 %v1569, %v2353
    %v2355 = vpop.f32.mrb[0].mxu0
    %2356 = vmatprep.mubr.f32.mxu0 %v803
    %2357 = vmatmul.mubr.f32.gmra.mrb[0].mxu0 %v802
    %v2358 = vpop.f32.mrb[0].mxu0
    %v2359 = vadd.f32 %v1574, %v2358
    %v2360 = vpop.f32.mrb[0].mxu0
    %2361 = vmatprep.mubr.f32.mxu0 %v807
    %2362 = vmatmul.mubr.f32.gmra.mrb[0].mxu0 %v806
    %v2363 = vpop.f32.mrb[0].mxu0
    %v2364 = vadd.f32 %v1579, %v2363
    %v2365 = vpop.f32.mrb[0].mxu0
    %2366 = vmatprep.mubr.f32.mxu0 %v811
    %2367 = vmatmul.mubr.f32.gmra.mrb[0].mxu0 %v810
    %v2368 = vpop.f32.mrb[0].mxu0
    %v2369 = vadd.f32 %v1584, %v2368
    %v2370 = vpop.f32.mrb[0].mxu0
    %2371 = vmatprep.mubr.f32.mxu0 %v815
    %2372 = vmatmul.mubr.f32.gmra.mrb[0].mxu0 %v814
    %v2373 = vpop.f32.mrb[0].mxu0
    %v2374 = vadd.f32 %v1589, %v2373
    %v2375 = vpop.f32.mrb[0].mxu0
    %2376 = vmatprep.mubr.f32.mxu0 %v819
    %2377 = vmatmul.mubr.f32.gmra.mrb[0].mxu0 %v818
    %v2378 = vpop.f32.mrb[0].mxu0
    %v2379 = vadd.f32 %v1594, %v2378
    %v2380 = vpop.f32.mrb[0].mxu0
    %2381 = vmatprep.mubr.f32.mxu0 %v823
    %2382 = vmatmul.mubr.f32.gmra.mrb[0].mxu0 %v822
    %v2383 = vpop.f32.mrb[0].mxu0
    %v2384 = vadd.f32 %v1599, %v2383
    %v2385 = vpop.f32.mrb[0].mxu0
    %2386 = vmatprep.mubr.f32.mxu0 %v827
    %2387 = vmatmul.mubr.f32.gmra.mrb[0].mxu0 %v826
    %v2388 = vpop.f32.mrb[0].mxu0
    %v2389 = vadd.f32 %v1604, %v2388
    %v2390 = vpop.f32.mrb[0].mxu0
    %2391 = vmatprep.mubr.f32.mxu0 %v831
    %2392 = vmatmul.mubr.f32.gmra.mrb[0].mxu0 %v830
    %v2393 = vpop.f32.mrb[0].mxu0
    %v2394 = vadd.f32 %v1609, %v2393
    %v2395 = vpop.f32.mrb[0].mxu0
    %2396 = vmatprep.mubr.f32.mxu0 %v835
    %2397 = vmatmul.mubr.f32.gmra.mrb[0].mxu0 %v834
    %v2398 = vpop.f32.mrb[0].mxu0
    %v2399 = vadd.f32 %v1614, %v2398
    %v2400 = vpop.f32.mrb[0].mxu0
    %2401 = vmatprep.mubr.f32.mxu0 %v839
    %2402 = vmatmul.mubr.f32.gmra.mrb[0].mxu0 %v838
    %v2403 = vpop.f32.mrb[0].mxu0
    %v2404 = vadd.f32 %v1619, %v2403
    %v2405 = vpop.f32.mrb[0].mxu0
    %2406 = vmatprep.mubr.f32.mxu0 %v843
    %2407 = vmatmul.mubr.f32.gmra.mrb[0].mxu0 %v842
    %v2408 = vpop.f32.mrb[0].mxu0
    %v2409 = vadd.f32 %v1624, %v2408
    %v2410 = vpop.f32.mrb[0].mxu0
    %2411 = vmatprep.mubr.f32.mxu0 %v847
    %2412 = vmatmul.mubr.f32.gmra.mrb[0].mxu0 %v846
    %v2413 = vpop.f32.mrb[0].mxu0
    %v2414 = vadd.f32 %v1629, %v2413
    %v2415 = vpop.f32.mrb[0].mxu0
    %2416 = vmatprep.mubr.f32.mxu0 %v851
    %2417 = vmatmul.mubr.f32.gmra.mrb[0].mxu0 %v850
    %v2418 = vpop.f32.mrb[0].mxu0
    %v2419 = vadd.f32 %v1634, %v2418
    %v2420 = vpop.f32.mrb[0].mxu0
    %2421 = vdwg.mxu0
    %v2422 = vld [vmem:[#allocation4] sm:$0xff]
    %v2423 = vld [vmem:[#allocation4 + $0x8] sm:$0xff]
    %v2424 = vld [vmem:[#allocation4 + $0x10] sm:$0xff]
    %v2425 = vld [vmem:[#allocation4 + $0x18] sm:$0xff]
    %v2426 = vld [vmem:[#allocation4 + $0x20] sm:$0xff]
    %v2427 = vld [vmem:[#allocation4 + $0x28] sm:$0xff]
    %v2428 = vld [vmem:[#allocation4 + $0x30] sm:$0xff]
    %v2429 = vld [vmem:[#allocation4 + $0x38] sm:$0xff]
    %v2430 = vld [vmem:[#allocation4 + $0x40] sm:$0xff]
    %v2431 = vld [vmem:[#allocation4 + $0x48] sm:$0xff]
    %v2432 = vld [vmem:[#allocation4 + $0x50] sm:$0xff]
    %v2433 = vld [vmem:[#allocation4 + $0x58] sm:$0xff]
    %v2434 = vld [vmem:[#allocation4 + $0x60] sm:$0xff]
    %v2435 = vld [vmem:[#allocation4 + $0x68] sm:$0xff]
    %v2436 = vld [vmem:[#allocation4 + $0x70] sm:$0xff]
    %v2437 = vld [vmem:[#allocation4 + $0x78] sm:$0xff]
    %s2438 = scalar_lea.vmem [#allocation4], 128
    %v2439 = vld [vmem:[%s2438] sm:$0xff]
    %v2440 = vld [vmem:[%s2438 + $0x8] sm:$0xff]
    %v2441 = vld [vmem:[%s2438 + $0x10] sm:$0xff]
    %v2442 = vld [vmem:[%s2438 + $0x18] sm:$0xff]
    %v2443 = vld [vmem:[%s2438 + $0x20] sm:$0xff]
    %v2444 = vld [vmem:[%s2438 + $0x28] sm:$0xff]
    %v2445 = vld [vmem:[%s2438 + $0x30] sm:$0xff]
    %v2446 = vld [vmem:[%s2438 + $0x38] sm:$0xff]
    %v2447 = vld [vmem:[%s2438 + $0x40] sm:$0xff]
    %v2448 = vld [vmem:[%s2438 + $0x48] sm:$0xff]
    %v2449 = vld [vmem:[%s2438 + $0x50] sm:$0xff]
    %v2450 = vld [vmem:[%s2438 + $0x58] sm:$0xff]
    %v2451 = vld [vmem:[%s2438 + $0x60] sm:$0xff]
    %v2452 = vld [vmem:[%s2438 + $0x68] sm:$0xff]
    %v2453 = vld [vmem:[%s2438 + $0x70] sm:$0xff]
    %v2454 = vld [vmem:[%s2438 + $0x78] sm:$0xff]
    %2455 = vmatprep.subr.mxu0 0.0
    %2456 = vmatpush1.msra.mxu0 %v2439
    %2457 = vmatprep.subr.mxu0 0.0
    %2458 = vmatpush1.msra.mxu0 %v2440
    %2459 = vmatprep.subr.mxu0 0.0
    %2460 = vmatpush1.msra.mxu0 %v2441
    %2461 = vmatprep.subr.mxu0 0.0
    %2462 = vmatpush1.msra.mxu0 %v2442
    %2463 = vmatprep.subr.mxu0 0.0
    %2464 = vmatpush1.msra.mxu0 %v2443
    %2465 = vmatprep.subr.mxu0 0.0
    %2466 = vmatpush1.msra.mxu0 %v2444
    %2467 = vmatprep.subr.mxu0 0.0
    %2468 = vmatpush1.msra.mxu0 %v2445
    %2469 = vmatprep.subr.mxu0 0.0
    %2470 = vmatpush1.msra.mxu0 %v2446
    %2471 = vmatprep.subr.mxu0 0.0
    %2472 = vmatpush1.msra.mxu0 %v2447
    %2473 = vmatprep.subr.mxu0 0.0
    %2474 = vmatpush1.msra.mxu0 %v2448
    %2475 = vmatprep.subr.mxu0 0.0
    %2476 = vmatpush1.msra.mxu0 %v2449
    %2477 = vmatprep.subr.mxu0 0.0
    %2478 = vmatpush1.msra.mxu0 %v2450
    %2479 = vmatprep.subr.mxu0 0.0
    %2480 = vmatpush1.msra.mxu0 %v2451
    %2481 = vmatprep.subr.mxu0 0.0
    %2482 = vmatpush1.msra.mxu0 %v2452
    %2483 = vmatprep.subr.mxu0 0.0
    %2484 = vmatpush1.msra.mxu0 %v2453
    %2485 = vmatprep.subr.mxu0 0.0
    %2486 = vmatpush1.msra.mxu0 %v2454
    %2487 = vmatprep.subr.mxu0 0.0
    %2488 = vmatpush1.msra.mxu0 0.0
    %2489 = vmatprep.subr.mxu0 0.0
    %2490 = vmatpush1.msra.mxu0 0.0
    %2491 = vmatprep.subr.mxu0 0.0
    %2492 = vmatpush1.msra.mxu0 0.0
    %2493 = vmatprep.subr.mxu0 0.0
    %2494 = vmatpush1.msra.mxu0 0.0
    %2495 = vmatprep.subr.mxu0 0.0
    %2496 = vmatpush1.msra.mxu0 0.0
    %2497 = vmatprep.subr.mxu0 0.0
    %2498 = vmatpush1.msra.mxu0 0.0
    %2499 = vmatprep.subr.mxu0 0.0
    %2500 = vmatpush1.msra.mxu0 0.0
    %2501 = vmatprep.subr.mxu0 0.0
    %2502 = vmatpush1.msra.mxu0 0.0
    %2503 = vmatprep.subr.mxu0 0.0
    %2504 = vmatpush1.msra.mxu0 0.0
    %2505 = vmatprep.subr.mxu0 0.0
    %2506 = vmatpush1.msra.mxu0 0.0
    %2507 = vmatprep.subr.mxu0 0.0
    %2508 = vmatpush1.msra.mxu0 0.0
    %2509 = vmatprep.subr.mxu0 0.0
    %2510 = vmatpush1.msra.mxu0 0.0
    %2511 = vmatprep.subr.mxu0 0.0
    %2512 = vmatpush1.msra.mxu0 0.0
    %2513 = vmatprep.subr.mxu0 0.0
    %2514 = vmatpush1.msra.mxu0 0.0
    %2515 = vmatprep.subr.mxu0 0.0
    %2516 = vmatpush1.msra.mxu0 0.0
    %2517 = vmatprep.subr.mxu0 0.0
    %2518 = vmatpush1.msra.mxu0 0.0
    %2519 = vmatprep.mubr.f32.mxu0 0.0
    %2520 = vmatmul.mubr.f32.gmra.mrb[0].mxu0 %v1784
    %v2521 = vpop.f32.mrb[0].mxu0
    %v2522 = vadd.f32 0.0, %v2521
    %v2523 = vpop.f32.mrb[0].mxu0
    %2524 = vmatprep.mubr.f32.mxu0 0.0
    %2525 = vmatmul.mubr.f32.gmra.mrb[0].mxu0 %v1789
    %v2526 = vpop.f32.mrb[0].mxu0
    %v2527 = vadd.f32 0.0, %v2526
    %v2528 = vpop.f32.mrb[0].mxu0
    %2529 = vmatprep.mubr.f32.mxu0 0.0
    %2530 = vmatmul.mubr.f32.gmra.mrb[0].mxu0 %v1794
    %v2531 = vpop.f32.mrb[0].mxu0
    %v2532 = vadd.f32 0.0, %v2531
    %v2533 = vpop.f32.mrb[0].mxu0
    %2534 = vmatprep.mubr.f32.mxu0 0.0
    %2535 = vmatmul.mubr.f32.gmra.mrb[0].mxu0 %v1799
    %v2536 = vpop.f32.mrb[0].mxu0
    %v2537 = vadd.f32 0.0, %v2536
    %v2538 = vpop.f32.mrb[0].mxu0
    %2539 = vmatprep.mubr.f32.mxu0 0.0
    %2540 = vmatmul.mubr.f32.gmra.mrb[0].mxu0 %v1804
    %v2541 = vpop.f32.mrb[0].mxu0
    %v2542 = vadd.f32 0.0, %v2541
    %v2543 = vpop.f32.mrb[0].mxu0
    %2544 = vmatprep.mubr.f32.mxu0 0.0
    %2545 = vmatmul.mubr.f32.gmra.mrb[0].mxu0 %v1809
    %v2546 = vpop.f32.mrb[0].mxu0
    %v2547 = vadd.f32 0.0, %v2546
    %v2548 = vpop.f32.mrb[0].mxu0
    %2549 = vmatprep.mubr.f32.mxu0 0.0
    %2550 = vmatmul.mubr.f32.gmra.mrb[0].mxu0 %v1814
    %v2551 = vpop.f32.mrb[0].mxu0
    %v2552 = vadd.f32 0.0, %v2551
    %v2553 = vpop.f32.mrb[0].mxu0
    %2554 = vmatprep.mubr.f32.mxu0 0.0
    %2555 = vmatmul.mubr.f32.gmra.mrb[0].mxu0 %v1819
    %v2556 = vpop.f32.mrb[0].mxu0
    %v2557 = vadd.f32 0.0, %v2556
    %v2558 = vpop.f32.mrb[0].mxu0
    %2559 = vmatprep.mubr.f32.mxu0 0.0
    %2560 = vmatmul.mubr.f32.gmra.mrb[0].mxu0 %v1824
    %v2561 = vpop.f32.mrb[0].mxu0
    %v2562 = vadd.f32 0.0, %v2561
    %v2563 = vpop.f32.mrb[0].mxu0
    %2564 = vmatprep.mubr.f32.mxu0 0.0
    %2565 = vmatmul.mubr.f32.gmra.mrb[0].mxu0 %v1829
    %v2566 = vpop.f32.mrb[0].mxu0
    %v2567 = vadd.f32 0.0, %v2566
    %v2568 = vpop.f32.mrb[0].mxu0
    %2569 = vmatprep.mubr.f32.mxu0 0.0
    %2570 = vmatmul.mubr.f32.gmra.mrb[0].mxu0 %v1834
    %v2571 = vpop.f32.mrb[0].mxu0
    %v2572 = vadd.f32 0.0, %v2571
    %v2573 = vpop.f32.mrb[0].mxu0
    %2574 = vmatprep.mubr.f32.mxu0 0.0
    %2575 = vmatmul.mubr.f32.gmra.mrb[0].mxu0 %v1839
    %v2576 = vpop.f32.mrb[0].mxu0
    %v2577 = vadd.f32 0.0, %v2576
    %v2578 = vpop.f32.mrb[0].mxu0
    %2579 = vmatprep.mubr.f32.mxu0 0.0
    %2580 = vmatmul.mubr.f32.gmra.mrb[0].mxu0 %v1844
    %v2581 = vpop.f32.mrb[0].mxu0
    %v2582 = vadd.f32 0.0, %v2581
    %v2583 = vpop.f32.mrb[0].mxu0
    %2584 = vmatprep.mubr.f32.mxu0 0.0
    %2585 = vmatmul.mubr.f32.gmra.mrb[0].mxu0 %v1849
    %v2586 = vpop.f32.mrb[0].mxu0
    %v2587 = vadd.f32 0.0, %v2586
    %v2588 = vpop.f32.mrb[0].mxu0
    %2589 = vmatprep.mubr.f32.mxu0 0.0
    %2590 = vmatmul.mubr.f32.gmra.mrb[0].mxu0 %v1854
    %v2591 = vpop.f32.mrb[0].mxu0
    %v2592 = vadd.f32 0.0, %v2591
    %v2593 = vpop.f32.mrb[0].mxu0
    %2594 = vmatprep.mubr.f32.mxu0 0.0
    %2595 = vmatmul.mubr.f32.gmra.mrb[0].mxu0 %v1859
    %v2596 = vpop.f32.mrb[0].mxu0
    %v2597 = vadd.f32 0.0, %v2596
    %v2598 = vpop.f32.mrb[0].mxu0
    %2599 = vdwg.mxu0
    %2600 = vmatprep.subr.mxu0 0.0
    %2601 = vmatpush1.msra.mxu0 %v2422
    %2602 = vmatprep.subr.mxu0 0.0
    %2603 = vmatpush1.msra.mxu0 %v2423
    %2604 = vmatprep.subr.mxu0 0.0
    %2605 = vmatpush1.msra.mxu0 %v2424
    %2606 = vmatprep.subr.mxu0 0.0
    %2607 = vmatpush1.msra.mxu0 %v2425
    %2608 = vmatprep.subr.mxu0 0.0
    %2609 = vmatpush1.msra.mxu0 %v2426
    %2610 = vmatprep.subr.mxu0 0.0
    %2611 = vmatpush1.msra.mxu0 %v2427
    %2612 = vmatprep.subr.mxu0 0.0
    %2613 = vmatpush1.msra.mxu0 %v2428
    %2614 = vmatprep.subr.mxu0 0.0
    %2615 = vmatpush1.msra.mxu0 %v2429
    %2616 = vmatprep.subr.mxu0 0.0
    %2617 = vmatpush1.msra.mxu0 %v2430
    %2618 = vmatprep.subr.mxu0 0.0
    %2619 = vmatpush1.msra.mxu0 %v2431
    %2620 = vmatprep.subr.mxu0 0.0
    %2621 = vmatpush1.msra.mxu0 %v2432
    %2622 = vmatprep.subr.mxu0 0.0
    %2623 = vmatpush1.msra.mxu0 %v2433
    %2624 = vmatprep.subr.mxu0 0.0
    %2625 = vmatpush1.msra.mxu0 %v2434
    %2626 = vmatprep.subr.mxu0 0.0
    %2627 = vmatpush1.msra.mxu0 %v2435
    %2628 = vmatprep.subr.mxu0 0.0
    %2629 = vmatpush1.msra.mxu0 %v2436
    %2630 = vmatprep.subr.mxu0 0.0
    %2631 = vmatpush1.msra.mxu0 %v2437
    %2632 = vmatprep.subr.mxu0 0.0
    %2633 = vmatpush1.msra.mxu0 0.0
    %2634 = vmatprep.subr.mxu0 0.0
    %2635 = vmatpush1.msra.mxu0 0.0
    %2636 = vmatprep.subr.mxu0 0.0
    %2637 = vmatpush1.msra.mxu0 0.0
    %2638 = vmatprep.subr.mxu0 0.0
    %2639 = vmatpush1.msra.mxu0 0.0
    %2640 = vmatprep.subr.mxu0 0.0
    %2641 = vmatpush1.msra.mxu0 0.0
    %2642 = vmatprep.subr.mxu0 0.0
    %2643 = vmatpush1.msra.mxu0 0.0
    %2644 = vmatprep.subr.mxu0 0.0
    %2645 = vmatpush1.msra.mxu0 0.0
    %2646 = vmatprep.subr.mxu0 0.0
    %2647 = vmatpush1.msra.mxu0 0.0
    %2648 = vmatprep.subr.mxu0 0.0
    %2649 = vmatpush1.msra.mxu0 0.0
    %2650 = vmatprep.subr.mxu0 0.0
    %2651 = vmatpush1.msra.mxu0 0.0
    %2652 = vmatprep.subr.mxu0 0.0
    %2653 = vmatpush1.msra.mxu0 0.0
    %2654 = vmatprep.subr.mxu0 0.0
    %2655 = vmatpush1.msra.mxu0 0.0
    %2656 = vmatprep.subr.mxu0 0.0
    %2657 = vmatpush1.msra.mxu0 0.0
    %2658 = vmatprep.subr.mxu0 0.0
    %2659 = vmatpush1.msra.mxu0 0.0
    %2660 = vmatprep.subr.mxu0 0.0
    %2661 = vmatpush1.msra.mxu0 0.0
    %2662 = vmatprep.subr.mxu0 0.0
    %2663 = vmatpush1.msra.mxu0 0.0
    %2664 = vmatprep.mubr.f32.mxu0 0.0
    %2665 = vmatmul.mubr.f32.gmra.mrb[0].mxu0 %v1704
    %v2666 = vpop.f32.mrb[0].mxu0
    %v2667 = vadd.f32 %v2522, %v2666
    %v2668 = vpop.f32.mrb[0].mxu0
    %2669 = vmatprep.mubr.f32.mxu0 0.0
    %2670 = vmatmul.mubr.f32.gmra.mrb[0].mxu0 %v1709
    %v2671 = vpop.f32.mrb[0].mxu0
    %v2672 = vadd.f32 %v2527, %v2671
    %v2673 = vpop.f32.mrb[0].mxu0
    %2674 = vmatprep.mubr.f32.mxu0 0.0
    %2675 = vmatmul.mubr.f32.gmra.mrb[0].mxu0 %v1714
    %v2676 = vpop.f32.mrb[0].mxu0
    %v2677 = vadd.f32 %v2532, %v2676
    %v2678 = vpop.f32.mrb[0].mxu0
    %2679 = vmatprep.mubr.f32.mxu0 0.0
    %2680 = vmatmul.mubr.f32.gmra.mrb[0].mxu0 %v1719
    %v2681 = vpop.f32.mrb[0].mxu0
    %v2682 = vadd.f32 %v2537, %v2681
    %v2683 = vpop.f32.mrb[0].mxu0
    %2684 = vmatprep.mubr.f32.mxu0 0.0
    %2685 = vmatmul.mubr.f32.gmra.mrb[0].mxu0 %v1724
    %v2686 = vpop.f32.mrb[0].mxu0
    %v2687 = vadd.f32 %v2542, %v2686
    %v2688 = vpop.f32.mrb[0].mxu0
    %2689 = vmatprep.mubr.f32.mxu0 0.0
    %2690 = vmatmul.mubr.f32.gmra.mrb[0].mxu0 %v1729
    %v2691 = vpop.f32.mrb[0].mxu0
    %v2692 = vadd.f32 %v2547, %v2691
    %v2693 = vpop.f32.mrb[0].mxu0
    %2694 = vmatprep.mubr.f32.mxu0 0.0
    %2695 = vmatmul.mubr.f32.gmra.mrb[0].mxu0 %v1734
    %v2696 = vpop.f32.mrb[0].mxu0
    %v2697 = vadd.f32 %v2552, %v2696
    %v2698 = vpop.f32.mrb[0].mxu0
    %2699 = vmatprep.mubr.f32.mxu0 0.0
    %2700 = vmatmul.mubr.f32.gmra.mrb[0].mxu0 %v1739
    %v2701 = vpop.f32.mrb[0].mxu0
    %v2702 = vadd.f32 %v2557, %v2701
    %v2703 = vpop.f32.mrb[0].mxu0
    %2704 = vmatprep.mubr.f32.mxu0 0.0
    %2705 = vmatmul.mubr.f32.gmra.mrb[0].mxu0 %v1744
    %v2706 = vpop.f32.mrb[0].mxu0
    %v2707 = vadd.f32 %v2562, %v2706
    %v2708 = vpop.f32.mrb[0].mxu0
    %2709 = vmatprep.mubr.f32.mxu0 0.0
    %2710 = vmatmul.mubr.f32.gmra.mrb[0].mxu0 %v1749
    %v2711 = vpop.f32.mrb[0].mxu0
    %v2712 = vadd.f32 %v2567, %v2711
    %v2713 = vpop.f32.mrb[0].mxu0
    %2714 = vmatprep.mubr.f32.mxu0 0.0
    %2715 = vmatmul.mubr.f32.gmra.mrb[0].mxu0 %v1754
    %v2716 = vpop.f32.mrb[0].mxu0
    %v2717 = vadd.f32 %v2572, %v2716
    %v2718 = vpop.f32.mrb[0].mxu0
    %2719 = vmatprep.mubr.f32.mxu0 0.0
    %2720 = vmatmul.mubr.f32.gmra.mrb[0].mxu0 %v1759
    %v2721 = vpop.f32.mrb[0].mxu0
    %v2722 = vadd.f32 %v2577, %v2721
    %v2723 = vpop.f32.mrb[0].mxu0
    %2724 = vmatprep.mubr.f32.mxu0 0.0
    %2725 = vmatmul.mubr.f32.gmra.mrb[0].mxu0 %v1764
    %v2726 = vpop.f32.mrb[0].mxu0
    %v2727 = vadd.f32 %v2582, %v2726
    %v2728 = vpop.f32.mrb[0].mxu0
    %2729 = vmatprep.mubr.f32.mxu0 0.0
    %2730 = vmatmul.mubr.f32.gmra.mrb[0].mxu0 %v1769
    %v2731 = vpop.f32.mrb[0].mxu0
    %v2732 = vadd.f32 %v2587, %v2731
    %v2733 = vpop.f32.mrb[0].mxu0
    %2734 = vmatprep.mubr.f32.mxu0 0.0
    %2735 = vmatmul.mubr.f32.gmra.mrb[0].mxu0 %v1774
    %v2736 = vpop.f32.mrb[0].mxu0
    %v2737 = vadd.f32 %v2592, %v2736
    %v2738 = vpop.f32.mrb[0].mxu0
    %2739 = vmatprep.mubr.f32.mxu0 0.0
    %2740 = vmatmul.mubr.f32.gmra.mrb[0].mxu0 %v1779
    %v2741 = vpop.f32.mrb[0].mxu0
    %v2742 = vadd.f32 %v2597, %v2741
    %v2743 = vpop.f32.mrb[0].mxu0
    %2744 = vdwg.mxu0
    %s2745 = scalar_lea.vmem [#allocation4], 256
    %v2746 = vld [vmem:[%s2745] sm:$0xff]
    %v2747 = vld [vmem:[%s2745 + $0x8] sm:$0xff]
    %v2748 = vld [vmem:[%s2745 + $0x10] sm:$0xff]
    %v2749 = vld [vmem:[%s2745 + $0x18] sm:$0xff]
    %v2750 = vld [vmem:[%s2745 + $0x20] sm:$0xff]
    %v2751 = vld [vmem:[%s2745 + $0x28] sm:$0xff]
    %v2752 = vld [vmem:[%s2745 + $0x30] sm:$0xff]
    %v2753 = vld [vmem:[%s2745 + $0x38] sm:$0xff]
    %v2754 = vld [vmem:[%s2745 + $0x40] sm:$0xff]
    %v2755 = vld [vmem:[%s2745 + $0x48] sm:$0xff]
    %v2756 = vld [vmem:[%s2745 + $0x50] sm:$0xff]
    %v2757 = vld [vmem:[%s2745 + $0x58] sm:$0xff]
    %v2758 = vld [vmem:[%s2745 + $0x60] sm:$0xff]
    %v2759 = vld [vmem:[%s2745 + $0x68] sm:$0xff]
    %v2760 = vld [vmem:[%s2745 + $0x70] sm:$0xff]
    %v2761 = vld [vmem:[%s2745 + $0x78] sm:$0xff]
    %2762 = vmatprep.subr.mxu0 0.0
    %2763 = vmatpush1.msra.mxu0 %v2746
    %2764 = vmatprep.subr.mxu0 0.0
    %2765 = vmatpush1.msra.mxu0 %v2747
    %2766 = vmatprep.subr.mxu0 0.0
    %2767 = vmatpush1.msra.mxu0 %v2748
    %2768 = vmatprep.subr.mxu0 0.0
    %2769 = vmatpush1.msra.mxu0 %v2749
    %2770 = vmatprep.subr.mxu0 0.0
    %2771 = vmatpush1.msra.mxu0 %v2750
    %2772 = vmatprep.subr.mxu0 0.0
    %2773 = vmatpush1.msra.mxu0 %v2751
    %2774 = vmatprep.subr.mxu0 0.0
    %2775 = vmatpush1.msra.mxu0 %v2752
    %2776 = vmatprep.subr.mxu0 0.0
    %2777 = vmatpush1.msra.mxu0 %v2753
    %2778 = vmatprep.subr.mxu0 0.0
    %2779 = vmatpush1.msra.mxu0 %v2754
    %2780 = vmatprep.subr.mxu0 0.0
    %2781 = vmatpush1.msra.mxu0 %v2755
    %2782 = vmatprep.subr.mxu0 0.0
    %2783 = vmatpush1.msra.mxu0 %v2756
    %2784 = vmatprep.subr.mxu0 0.0
    %2785 = vmatpush1.msra.mxu0 %v2757
    %2786 = vmatprep.subr.mxu0 0.0
    %2787 = vmatpush1.msra.mxu0 %v2758
    %2788 = vmatprep.subr.mxu0 0.0
    %2789 = vmatpush1.msra.mxu0 %v2759
    %2790 = vmatprep.subr.mxu0 0.0
    %2791 = vmatpush1.msra.mxu0 %v2760
    %2792 = vmatprep.subr.mxu0 0.0
    %2793 = vmatpush1.msra.mxu0 %v2761
    %2794 = vmatprep.subr.mxu0 0.0
    %2795 = vmatpush1.msra.mxu0 0.0
    %2796 = vmatprep.subr.mxu0 0.0
    %2797 = vmatpush1.msra.mxu0 0.0
    %2798 = vmatprep.subr.mxu0 0.0
    %2799 = vmatpush1.msra.mxu0 0.0
    %2800 = vmatprep.subr.mxu0 0.0
    %2801 = vmatpush1.msra.mxu0 0.0
    %2802 = vmatprep.subr.mxu0 0.0
    %2803 = vmatpush1.msra.mxu0 0.0
    %2804 = vmatprep.subr.mxu0 0.0
    %2805 = vmatpush1.msra.mxu0 0.0
    %2806 = vmatprep.subr.mxu0 0.0
    %2807 = vmatpush1.msra.mxu0 0.0
    %2808 = vmatprep.subr.mxu0 0.0
    %2809 = vmatpush1.msra.mxu0 0.0
    %2810 = vmatprep.subr.mxu0 0.0
    %2811 = vmatpush1.msra.mxu0 0.0
    %2812 = vmatprep.subr.mxu0 0.0
    %2813 = vmatpush1.msra.mxu0 0.0
    %2814 = vmatprep.subr.mxu0 0.0
    %2815 = vmatpush1.msra.mxu0 0.0
    %2816 = vmatprep.subr.mxu0 0.0
    %2817 = vmatpush1.msra.mxu0 0.0
    %2818 = vmatprep.subr.mxu0 0.0
    %2819 = vmatpush1.msra.mxu0 0.0
    %2820 = vmatprep.subr.mxu0 0.0
    %2821 = vmatpush1.msra.mxu0 0.0
    %2822 = vmatprep.subr.mxu0 0.0
    %2823 = vmatpush1.msra.mxu0 0.0
    %2824 = vmatprep.subr.mxu0 0.0
    %2825 = vmatpush1.msra.mxu0 0.0
    %2826 = vmatprep.mubr.f32.mxu0 0.0
    %2827 = vmatmul.mubr.f32.gmra.mrb[0].mxu0 %v1864
    %v2828 = vpop.f32.mrb[0].mxu0
    %v2829 = vadd.f32 0.0, %v2828
    %v2830 = vpop.f32.mrb[0].mxu0
    %2831 = vmatprep.mubr.f32.mxu0 0.0
    %2832 = vmatmul.mubr.f32.gmra.mrb[0].mxu0 %v1869
    %v2833 = vpop.f32.mrb[0].mxu0
    %v2834 = vadd.f32 0.0, %v2833
    %v2835 = vpop.f32.mrb[0].mxu0
    %2836 = vmatprep.mubr.f32.mxu0 0.0
    %2837 = vmatmul.mubr.f32.gmra.mrb[0].mxu0 %v1874
    %v2838 = vpop.f32.mrb[0].mxu0
    %v2839 = vadd.f32 0.0, %v2838
    %v2840 = vpop.f32.mrb[0].mxu0
    %2841 = vmatprep.mubr.f32.mxu0 0.0
    %2842 = vmatmul.mubr.f32.gmra.mrb[0].mxu0 %v1879
    %v2843 = vpop.f32.mrb[0].mxu0
    %v2844 = vadd.f32 0.0, %v2843
    %v2845 = vpop.f32.mrb[0].mxu0
    %2846 = vmatprep.mubr.f32.mxu0 0.0
    %2847 = vmatmul.mubr.f32.gmra.mrb[0].mxu0 %v1884
    %v2848 = vpop.f32.mrb[0].mxu0
    %v2849 = vadd.f32 0.0, %v2848
    %v2850 = vpop.f32.mrb[0].mxu0
    %2851 = vmatprep.mubr.f32.mxu0 0.0
    %2852 = vmatmul.mubr.f32.gmra.mrb[0].mxu0 %v1889
    %v2853 = vpop.f32.mrb[0].mxu0
    %v2854 = vadd.f32 0.0, %v2853
    %v2855 = vpop.f32.mrb[0].mxu0
    %2856 = vmatprep.mubr.f32.mxu0 0.0
    %2857 = vmatmul.mubr.f32.gmra.mrb[0].mxu0 %v1894
    %v2858 = vpop.f32.mrb[0].mxu0
    %v2859 = vadd.f32 0.0, %v2858
    %v2860 = vpop.f32.mrb[0].mxu0
    %2861 = vmatprep.mubr.f32.mxu0 0.0
    %2862 = vmatmul.mubr.f32.gmra.mrb[0].mxu0 %v1899
    %v2863 = vpop.f32.mrb[0].mxu0
    %v2864 = vadd.f32 0.0, %v2863
    %v2865 = vpop.f32.mrb[0].mxu0
    %2866 = vmatprep.mubr.f32.mxu0 0.0
    %2867 = vmatmul.mubr.f32.gmra.mrb[0].mxu0 %v1904
    %v2868 = vpop.f32.mrb[0].mxu0
    %v2869 = vadd.f32 0.0, %v2868
    %v2870 = vpop.f32.mrb[0].mxu0
    %2871 = vmatprep.mubr.f32.mxu0 0.0
    %2872 = vmatmul.mubr.f32.gmra.mrb[0].mxu0 %v1909
    %v2873 = vpop.f32.mrb[0].mxu0
    %v2874 = vadd.f32 0.0, %v2873
    %v2875 = vpop.f32.mrb[0].mxu0
    %2876 = vmatprep.mubr.f32.mxu0 0.0
    %2877 = vmatmul.mubr.f32.gmra.mrb[0].mxu0 %v1914
    %v2878 = vpop.f32.mrb[0].mxu0
    %v2879 = vadd.f32 0.0, %v2878
    %v2880 = vpop.f32.mrb[0].mxu0
    %2881 = vmatprep.mubr.f32.mxu0 0.0
    %2882 = vmatmul.mubr.f32.gmra.mrb[0].mxu0 %v1919
    %v2883 = vpop.f32.mrb[0].mxu0
    %v2884 = vadd.f32 0.0, %v2883
    %v2885 = vpop.f32.mrb[0].mxu0
    %2886 = vmatprep.mubr.f32.mxu0 0.0
    %2887 = vmatmul.mubr.f32.gmra.mrb[0].mxu0 %v1924
    %v2888 = vpop.f32.mrb[0].mxu0
    %v2889 = vadd.f32 0.0, %v2888
    %v2890 = vpop.f32.mrb[0].mxu0
    %2891 = vmatprep.mubr.f32.mxu0 0.0
    %2892 = vmatmul.mubr.f32.gmra.mrb[0].mxu0 %v1929
    %v2893 = vpop.f32.mrb[0].mxu0
    %v2894 = vadd.f32 0.0, %v2893
    %v2895 = vpop.f32.mrb[0].mxu0
    %2896 = vmatprep.mubr.f32.mxu0 0.0
    %2897 = vmatmul.mubr.f32.gmra.mrb[0].mxu0 %v1934
    %v2898 = vpop.f32.mrb[0].mxu0
    %v2899 = vadd.f32 0.0, %v2898
    %v2900 = vpop.f32.mrb[0].mxu0
    %2901 = vmatprep.mubr.f32.mxu0 0.0
    %2902 = vmatmul.mubr.f32.gmra.mrb[0].mxu0 %v1939
    %v2903 = vpop.f32.mrb[0].mxu0
    %v2904 = vadd.f32 0.0, %v2903
    %v2905 = vpop.f32.mrb[0].mxu0
    %2906 = vdwg.mxu0
    %v2907 = vadd.f32 %v2667, %v2829
    %v2908 = vadd.f32 %v2672, %v2834
    %v2909 = vadd.f32 %v2677, %v2839
    %v2910 = vadd.f32 %v2682, %v2844
    %v2911 = vadd.f32 %v2687, %v2849
    %v2912 = vadd.f32 %v2692, %v2854
    %v2913 = vadd.f32 %v2697, %v2859
    %v2914 = vadd.f32 %v2702, %v2864
    %v2915 = vadd.f32 %v2707, %v2869
    %v2916 = vadd.f32 %v2712, %v2874
    %v2917 = vadd.f32 %v2717, %v2879
    %v2918 = vadd.f32 %v2722, %v2884
    %v2919 = vadd.f32 %v2727, %v2889
    %v2920 = vadd.f32 %v2732, %v2894
    %v2921 = vadd.f32 %v2737, %v2899
    %v2922 = vadd.f32 %v2742, %v2904
    %s2923 = scalar_lea.vmem [#allocation4], 384
    %v2924 = vld [vmem:[%s2923] sm:$0xff]
    %v2925 = vld [vmem:[%s2923 + $0x8] sm:$0xff]
    %v2926 = vld [vmem:[%s2923 + $0x10] sm:$0xff]
    %v2927 = vld [vmem:[%s2923 + $0x18] sm:$0xff]
    %v2928 = vld [vmem:[%s2923 + $0x20] sm:$0xff]
    %v2929 = vld [vmem:[%s2923 + $0x28] sm:$0xff]
    %v2930 = vld [vmem:[%s2923 + $0x30] sm:$0xff]
    %v2931 = vld [vmem:[%s2923 + $0x38] sm:$0xff]
    %v2932 = vld [vmem:[%s2923 + $0x40] sm:$0xff]
    %v2933 = vld [vmem:[%s2923 + $0x48] sm:$0xff]
    %v2934 = vld [vmem:[%s2923 + $0x50] sm:$0xff]
    %v2935 = vld [vmem:[%s2923 + $0x58] sm:$0xff]
    %v2936 = vld [vmem:[%s2923 + $0x60] sm:$0xff]
    %v2937 = vld [vmem:[%s2923 + $0x68] sm:$0xff]
    %v2938 = vld [vmem:[%s2923 + $0x70] sm:$0xff]
    %v2939 = vld [vmem:[%s2923 + $0x78] sm:$0xff]
    %2940 = vmatprep.subr.mxu0 0.0
    %2941 = vmatpush1.msra.mxu0 %v2924
    %2942 = vmatprep.subr.mxu0 0.0
    %2943 = vmatpush1.msra.mxu0 %v2925
    %2944 = vmatprep.subr.mxu0 0.0
    %2945 = vmatpush1.msra.mxu0 %v2926
    %2946 = vmatprep.subr.mxu0 0.0
    %2947 = vmatpush1.msra.mxu0 %v2927
    %2948 = vmatprep.subr.mxu0 0.0
    %2949 = vmatpush1.msra.mxu0 %v2928
    %2950 = vmatprep.subr.mxu0 0.0
    %2951 = vmatpush1.msra.mxu0 %v2929
    %2952 = vmatprep.subr.mxu0 0.0
    %2953 = vmatpush1.msra.mxu0 %v2930
    %2954 = vmatprep.subr.mxu0 0.0
    %2955 = vmatpush1.msra.mxu0 %v2931
    %2956 = vmatprep.subr.mxu0 0.0
    %2957 = vmatpush1.msra.mxu0 %v2932
    %2958 = vmatprep.subr.mxu0 0.0
    %2959 = vmatpush1.msra.mxu0 %v2933
    %2960 = vmatprep.subr.mxu0 0.0
    %2961 = vmatpush1.msra.mxu0 %v2934
    %2962 = vmatprep.subr.mxu0 0.0
    %2963 = vmatpush1.msra.mxu0 %v2935
    %2964 = vmatprep.subr.mxu0 0.0
    %2965 = vmatpush1.msra.mxu0 %v2936
    %2966 = vmatprep.subr.mxu0 0.0
    %2967 = vmatpush1.msra.mxu0 %v2937
    %2968 = vmatprep.subr.mxu0 0.0
    %2969 = vmatpush1.msra.mxu0 %v2938
    %2970 = vmatprep.subr.mxu0 0.0
    %2971 = vmatpush1.msra.mxu0 %v2939
    %2972 = vmatprep.subr.mxu0 0.0
    %2973 = vmatpush1.msra.mxu0 0.0
    %2974 = vmatprep.subr.mxu0 0.0
    %2975 = vmatpush1.msra.mxu0 0.0
    %2976 = vmatprep.subr.mxu0 0.0
    %2977 = vmatpush1.msra.mxu0 0.0
    %2978 = vmatprep.subr.mxu0 0.0
    %2979 = vmatpush1.msra.mxu0 0.0
    %2980 = vmatprep.subr.mxu0 0.0
    %2981 = vmatpush1.msra.mxu0 0.0
    %2982 = vmatprep.subr.mxu0 0.0
    %2983 = vmatpush1.msra.mxu0 0.0
    %2984 = vmatprep.subr.mxu0 0.0
    %2985 = vmatpush1.msra.mxu0 0.0
    %2986 = vmatprep.subr.mxu0 0.0
    %2987 = vmatpush1.msra.mxu0 0.0
    %2988 = vmatprep.subr.mxu0 0.0
    %2989 = vmatpush1.msra.mxu0 0.0
    %2990 = vmatprep.subr.mxu0 0.0
    %2991 = vmatpush1.msra.mxu0 0.0
    %2992 = vmatprep.subr.mxu0 0.0
    %2993 = vmatpush1.msra.mxu0 0.0
    %2994 = vmatprep.subr.mxu0 0.0
    %2995 = vmatpush1.msra.mxu0 0.0
    %2996 = vmatprep.subr.mxu0 0.0
    %2997 = vmatpush1.msra.mxu0 0.0
    %2998 = vmatprep.subr.mxu0 0.0
    %2999 = vmatpush1.msra.mxu0 0.0
    %3000 = vmatprep.subr.mxu0 0.0
    %3001 = vmatpush1.msra.mxu0 0.0
    %3002 = vmatprep.subr.mxu0 0.0
    %3003 = vmatpush1.msra.mxu0 0.0
    %3004 = vmatprep.mubr.f32.mxu0 0.0
    %3005 = vmatmul.mubr.f32.gmra.mrb[0].mxu0 %v1944
    %v3006 = vpop.f32.mrb[0].mxu0
    %v3007 = vadd.f32 0.0, %v3006
    %v3008 = vpop.f32.mrb[0].mxu0
    %3009 = vmatprep.mubr.f32.mxu0 0.0
    %3010 = vmatmul.mubr.f32.gmra.mrb[0].mxu0 %v1949
    %v3011 = vpop.f32.mrb[0].mxu0
    %v3012 = vadd.f32 0.0, %v3011
    %v3013 = vpop.f32.mrb[0].mxu0
    %3014 = vmatprep.mubr.f32.mxu0 0.0
    %3015 = vmatmul.mubr.f32.gmra.mrb[0].mxu0 %v1954
    %v3016 = vpop.f32.mrb[0].mxu0
    %v3017 = vadd.f32 0.0, %v3016
    %v3018 = vpop.f32.mrb[0].mxu0
    %3019 = vmatprep.mubr.f32.mxu0 0.0
    %3020 = vmatmul.mubr.f32.gmra.mrb[0].mxu0 %v1959
    %v3021 = vpop.f32.mrb[0].mxu0
    %v3022 = vadd.f32 0.0, %v3021
    %v3023 = vpop.f32.mrb[0].mxu0
    %3024 = vmatprep.mubr.f32.mxu0 0.0
    %3025 = vmatmul.mubr.f32.gmra.mrb[0].mxu0 %v1964
    %v3026 = vpop.f32.mrb[0].mxu0
    %v3027 = vadd.f32 0.0, %v3026
    %v3028 = vpop.f32.mrb[0].mxu0
    %3029 = vmatprep.mubr.f32.mxu0 0.0
    %3030 = vmatmul.mubr.f32.gmra.mrb[0].mxu0 %v1969
    %v3031 = vpop.f32.mrb[0].mxu0
    %v3032 = vadd.f32 0.0, %v3031
    %v3033 = vpop.f32.mrb[0].mxu0
    %3034 = vmatprep.mubr.f32.mxu0 0.0
    %3035 = vmatmul.mubr.f32.gmra.mrb[0].mxu0 %v1974
    %v3036 = vpop.f32.mrb[0].mxu0
    %v3037 = vadd.f32 0.0, %v3036
    %v3038 = vpop.f32.mrb[0].mxu0
    %3039 = vmatprep.mubr.f32.mxu0 0.0
    %3040 = vmatmul.mubr.f32.gmra.mrb[0].mxu0 %v1979
    %v3041 = vpop.f32.mrb[0].mxu0
    %v3042 = vadd.f32 0.0, %v3041
    %v3043 = vpop.f32.mrb[0].mxu0
    %3044 = vmatprep.mubr.f32.mxu0 0.0
    %3045 = vmatmul.mubr.f32.gmra.mrb[0].mxu0 %v1984
    %v3046 = vpop.f32.mrb[0].mxu0
    %v3047 = vadd.f32 0.0, %v3046
    %v3048 = vpop.f32.mrb[0].mxu0
    %3049 = vmatprep.mubr.f32.mxu0 0.0
    %3050 = vmatmul.mubr.f32.gmra.mrb[0].mxu0 %v1989
    %v3051 = vpop.f32.mrb[0].mxu0
    %v3052 = vadd.f32 0.0, %v3051
    %v3053 = vpop.f32.mrb[0].mxu0
    %3054 = vmatprep.mubr.f32.mxu0 0.0
    %3055 = vmatmul.mubr.f32.gmra.mrb[0].mxu0 %v1994
    %v3056 = vpop.f32.mrb[0].mxu0
    %v3057 = vadd.f32 0.0, %v3056
    %v3058 = vpop.f32.mrb[0].mxu0
    %3059 = vmatprep.mubr.f32.mxu0 0.0
    %3060 = vmatmul.mubr.f32.gmra.mrb[0].mxu0 %v1999
    %v3061 = vpop.f32.mrb[0].mxu0
    %v3062 = vadd.f32 0.0, %v3061
    %v3063 = vpop.f32.mrb[0].mxu0
    %3064 = vmatprep.mubr.f32.mxu0 0.0
    %3065 = vmatmul.mubr.f32.gmra.mrb[0].mxu0 %v2004
    %v3066 = vpop.f32.mrb[0].mxu0
    %v3067 = vadd.f32 0.0, %v3066
    %v3068 = vpop.f32.mrb[0].mxu0
    %3069 = vmatprep.mubr.f32.mxu0 0.0
    %3070 = vmatmul.mubr.f32.gmra.mrb[0].mxu0 %v2009
    %v3071 = vpop.f32.mrb[0].mxu0
    %v3072 = vadd.f32 0.0, %v3071
    %v3073 = vpop.f32.mrb[0].mxu0
    %3074 = vmatprep.mubr.f32.mxu0 0.0
    %3075 = vmatmul.mubr.f32.gmra.mrb[0].mxu0 %v2014
    %v3076 = vpop.f32.mrb[0].mxu0
    %v3077 = vadd.f32 0.0, %v3076
    %v3078 = vpop.f32.mrb[0].mxu0
    %3079 = vmatprep.mubr.f32.mxu0 0.0
    %3080 = vmatmul.mubr.f32.gmra.mrb[0].mxu0 %v2019
    %v3081 = vpop.f32.mrb[0].mxu0
    %v3082 = vadd.f32 0.0, %v3081
    %v3083 = vpop.f32.mrb[0].mxu0
    %3084 = vdwg.mxu0
    %v3085 = vadd.f32 %v2907, %v3007
    %v3086 = vadd.f32 %v2908, %v3012
    %v3087 = vadd.f32 %v2909, %v3017
    %v3088 = vadd.f32 %v2910, %v3022
    %v3089 = vadd.f32 %v2911, %v3027
    %v3090 = vadd.f32 %v2912, %v3032
    %v3091 = vadd.f32 %v2913, %v3037
    %v3092 = vadd.f32 %v2914, %v3042
    %v3093 = vadd.f32 %v2915, %v3047
    %v3094 = vadd.f32 %v2916, %v3052
    %v3095 = vadd.f32 %v2917, %v3057
    %v3096 = vadd.f32 %v2918, %v3062
    %v3097 = vadd.f32 %v2919, %v3067
    %v3098 = vadd.f32 %v2920, %v3072
    %v3099 = vadd.f32 %v2921, %v3077
    %v3100 = vadd.f32 %v2922, %v3082
    %s3101 = scalar_lea.vmem [#allocation4], 512
    %v3102 = vld [vmem:[%s3101] sm:$0xff]
    %v3103 = vld [vmem:[%s3101 + $0x8] sm:$0xff]
    %v3104 = vld [vmem:[%s3101 + $0x10] sm:$0xff]
    %v3105 = vld [vmem:[%s3101 + $0x18] sm:$0xff]
    %v3106 = vld [vmem:[%s3101 + $0x20] sm:$0xff]
    %v3107 = vld [vmem:[%s3101 + $0x28] sm:$0xff]
    %v3108 = vld [vmem:[%s3101 + $0x30] sm:$0xff]
    %v3109 = vld [vmem:[%s3101 + $0x38] sm:$0xff]
    %v3110 = vld [vmem:[%s3101 + $0x40] sm:$0xff]
    %v3111 = vld [vmem:[%s3101 + $0x48] sm:$0xff]
    %v3112 = vld [vmem:[%s3101 + $0x50] sm:$0xff]
    %v3113 = vld [vmem:[%s3101 + $0x58] sm:$0xff]
    %v3114 = vld [vmem:[%s3101 + $0x60] sm:$0xff]
    %v3115 = vld [vmem:[%s3101 + $0x68] sm:$0xff]
    %v3116 = vld [vmem:[%s3101 + $0x70] sm:$0xff]
    %v3117 = vld [vmem:[%s3101 + $0x78] sm:$0xff]
    %3118 = vmatprep.subr.mxu0 0.0
    %3119 = vmatpush1.msra.mxu0 %v3102
    %3120 = vmatprep.subr.mxu0 0.0
    %3121 = vmatpush1.msra.mxu0 %v3103
    %3122 = vmatprep.subr.mxu0 0.0
    %3123 = vmatpush1.msra.mxu0 %v3104
    %3124 = vmatprep.subr.mxu0 0.0
    %3125 = vmatpush1.msra.mxu0 %v3105
    %3126 = vmatprep.subr.mxu0 0.0
    %3127 = vmatpush1.msra.mxu0 %v3106
    %3128 = vmatprep.subr.mxu0 0.0
    %3129 = vmatpush1.msra.mxu0 %v3107
    %3130 = vmatprep.subr.mxu0 0.0
    %3131 = vmatpush1.msra.mxu0 %v3108
    %3132 = vmatprep.subr.mxu0 0.0
    %3133 = vmatpush1.msra.mxu0 %v3109
    %3134 = vmatprep.subr.mxu0 0.0
    %3135 = vmatpush1.msra.mxu0 %v3110
    %3136 = vmatprep.subr.mxu0 0.0
    %3137 = vmatpush1.msra.mxu0 %v3111
    %3138 = vmatprep.subr.mxu0 0.0
    %3139 = vmatpush1.msra.mxu0 %v3112
    %3140 = vmatprep.subr.mxu0 0.0
    %3141 = vmatpush1.msra.mxu0 %v3113
    %3142 = vmatprep.subr.mxu0 0.0
    %3143 = vmatpush1.msra.mxu0 %v3114
    %3144 = vmatprep.subr.mxu0 0.0
    %3145 = vmatpush1.msra.mxu0 %v3115
    %3146 = vmatprep.subr.mxu0 0.0
    %3147 = vmatpush1.msra.mxu0 %v3116
    %3148 = vmatprep.subr.mxu0 0.0
    %3149 = vmatpush1.msra.mxu0 %v3117
    %3150 = vmatprep.subr.mxu0 0.0
    %3151 = vmatpush1.msra.mxu0 0.0
    %3152 = vmatprep.subr.mxu0 0.0
    %3153 = vmatpush1.msra.mxu0 0.0
    %3154 = vmatprep.subr.mxu0 0.0
    %3155 = vmatpush1.msra.mxu0 0.0
    %3156 = vmatprep.subr.mxu0 0.0
    %3157 = vmatpush1.msra.mxu0 0.0
    %3158 = vmatprep.subr.mxu0 0.0
    %3159 = vmatpush1.msra.mxu0 0.0
    %3160 = vmatprep.subr.mxu0 0.0
    %3161 = vmatpush1.msra.mxu0 0.0
    %3162 = vmatprep.subr.mxu0 0.0
    %3163 = vmatpush1.msra.mxu0 0.0
    %3164 = vmatprep.subr.mxu0 0.0
    %3165 = vmatpush1.msra.mxu0 0.0
    %3166 = vmatprep.subr.mxu0 0.0
    %3167 = vmatpush1.msra.mxu0 0.0
    %3168 = vmatprep.subr.mxu0 0.0
    %3169 = vmatpush1.msra.mxu0 0.0
    %3170 = vmatprep.subr.mxu0 0.0
    %3171 = vmatpush1.msra.mxu0 0.0
    %3172 = vmatprep.subr.mxu0 0.0
    %3173 = vmatpush1.msra.mxu0 0.0
    %3174 = vmatprep.subr.mxu0 0.0
    %3175 = vmatpush1.msra.mxu0 0.0
    %3176 = vmatprep.subr.mxu0 0.0
    %3177 = vmatpush1.msra.mxu0 0.0
    %3178 = vmatprep.subr.mxu0 0.0
    %3179 = vmatpush1.msra.mxu0 0.0
    %3180 = vmatprep.subr.mxu0 0.0
    %3181 = vmatpush1.msra.mxu0 0.0
    %3182 = vmatprep.mubr.f32.mxu0 0.0
    %3183 = vmatmul.mubr.f32.gmra.mrb[0].mxu0 %v2024
    %v3184 = vpop.f32.mrb[0].mxu0
    %v3185 = vadd.f32 0.0, %v3184
    %v3186 = vpop.f32.mrb[0].mxu0
    %3187 = vmatprep.mubr.f32.mxu0 0.0
    %3188 = vmatmul.mubr.f32.gmra.mrb[0].mxu0 %v2029
    %v3189 = vpop.f32.mrb[0].mxu0
    %v3190 = vadd.f32 0.0, %v3189
    %v3191 = vpop.f32.mrb[0].mxu0
    %3192 = vmatprep.mubr.f32.mxu0 0.0
    %3193 = vmatmul.mubr.f32.gmra.mrb[0].mxu0 %v2034
    %v3194 = vpop.f32.mrb[0].mxu0
    %v3195 = vadd.f32 0.0, %v3194
    %v3196 = vpop.f32.mrb[0].mxu0
    %3197 = vmatprep.mubr.f32.mxu0 0.0
    %3198 = vmatmul.mubr.f32.gmra.mrb[0].mxu0 %v2039
    %v3199 = vpop.f32.mrb[0].mxu0
    %v3200 = vadd.f32 0.0, %v3199
    %v3201 = vpop.f32.mrb[0].mxu0
    %3202 = vmatprep.mubr.f32.mxu0 0.0
    %3203 = vmatmul.mubr.f32.gmra.mrb[0].mxu0 %v2044
    %v3204 = vpop.f32.mrb[0].mxu0
    %v3205 = vadd.f32 0.0, %v3204
    %v3206 = vpop.f32.mrb[0].mxu0
    %3207 = vmatprep.mubr.f32.mxu0 0.0
    %3208 = vmatmul.mubr.f32.gmra.mrb[0].mxu0 %v2049
    %v3209 = vpop.f32.mrb[0].mxu0
    %v3210 = vadd.f32 0.0, %v3209
    %v3211 = vpop.f32.mrb[0].mxu0
    %3212 = vmatprep.mubr.f32.mxu0 0.0
    %3213 = vmatmul.mubr.f32.gmra.mrb[0].mxu0 %v2054
    %v3214 = vpop.f32.mrb[0].mxu0
    %v3215 = vadd.f32 0.0, %v3214
    %v3216 = vpop.f32.mrb[0].mxu0
    %3217 = vmatprep.mubr.f32.mxu0 0.0
    %3218 = vmatmul.mubr.f32.gmra.mrb[0].mxu0 %v2059
    %v3219 = vpop.f32.mrb[0].mxu0
    %v3220 = vadd.f32 0.0, %v3219
    %v3221 = vpop.f32.mrb[0].mxu0
    %3222 = vmatprep.mubr.f32.mxu0 0.0
    %3223 = vmatmul.mubr.f32.gmra.mrb[0].mxu0 %v2064
    %v3224 = vpop.f32.mrb[0].mxu0
    %v3225 = vadd.f32 0.0, %v3224
    %v3226 = vpop.f32.mrb[0].mxu0
    %3227 = vmatprep.mubr.f32.mxu0 0.0
    %3228 = vmatmul.mubr.f32.gmra.mrb[0].mxu0 %v2069
    %v3229 = vpop.f32.mrb[0].mxu0
    %v3230 = vadd.f32 0.0, %v3229
    %v3231 = vpop.f32.mrb[0].mxu0
    %3232 = vmatprep.mubr.f32.mxu0 0.0
    %3233 = vmatmul.mubr.f32.gmra.mrb[0].mxu0 %v2074
    %v3234 = vpop.f32.mrb[0].mxu0
    %v3235 = vadd.f32 0.0, %v3234
    %v3236 = vpop.f32.mrb[0].mxu0
    %3237 = vmatprep.mubr.f32.mxu0 0.0
    %3238 = vmatmul.mubr.f32.gmra.mrb[0].mxu0 %v2079
    %v3239 = vpop.f32.mrb[0].mxu0
    %v3240 = vadd.f32 0.0, %v3239
    %v3241 = vpop.f32.mrb[0].mxu0
    %3242 = vmatprep.mubr.f32.mxu0 0.0
    %3243 = vmatmul.mubr.f32.gmra.mrb[0].mxu0 %v2084
    %v3244 = vpop.f32.mrb[0].mxu0
    %v3245 = vadd.f32 0.0, %v3244
    %v3246 = vpop.f32.mrb[0].mxu0
    %3247 = vmatprep.mubr.f32.mxu0 0.0
    %3248 = vmatmul.mubr.f32.gmra.mrb[0].mxu0 %v2089
    %v3249 = vpop.f32.mrb[0].mxu0
    %v3250 = vadd.f32 0.0, %v3249
    %v3251 = vpop.f32.mrb[0].mxu0
    %3252 = vmatprep.mubr.f32.mxu0 0.0
    %3253 = vmatmul.mubr.f32.gmra.mrb[0].mxu0 %v2094
    %v3254 = vpop.f32.mrb[0].mxu0
    %v3255 = vadd.f32 0.0, %v3254
    %v3256 = vpop.f32.mrb[0].mxu0
    %3257 = vmatprep.mubr.f32.mxu0 0.0
    %3258 = vmatmul.mubr.f32.gmra.mrb[0].mxu0 %v2099
    %v3259 = vpop.f32.mrb[0].mxu0
    %v3260 = vadd.f32 0.0, %v3259
    %v3261 = vpop.f32.mrb[0].mxu0
    %3262 = vdwg.mxu0
    %v3263 = vadd.f32 %v3085, %v3185
    %v3264 = vadd.f32 %v3086, %v3190
    %v3265 = vadd.f32 %v3087, %v3195
    %v3266 = vadd.f32 %v3088, %v3200
    %v3267 = vadd.f32 %v3089, %v3205
    %v3268 = vadd.f32 %v3090, %v3210
    %v3269 = vadd.f32 %v3091, %v3215
    %v3270 = vadd.f32 %v3092, %v3220
    %v3271 = vadd.f32 %v3093, %v3225
    %v3272 = vadd.f32 %v3094, %v3230
    %v3273 = vadd.f32 %v3095, %v3235
    %v3274 = vadd.f32 %v3096, %v3240
    %v3275 = vadd.f32 %v3097, %v3245
    %v3276 = vadd.f32 %v3098, %v3250
    %v3277 = vadd.f32 %v3099, %v3255
    %v3278 = vadd.f32 %v3100, %v3260
    %s3279 = scalar_lea.vmem [#allocation4], 640
    %v3280 = vld [vmem:[%s3279] sm:$0xff]
    %v3281 = vld [vmem:[%s3279 + $0x8] sm:$0xff]
    %v3282 = vld [vmem:[%s3279 + $0x10] sm:$0xff]
    %v3283 = vld [vmem:[%s3279 + $0x18] sm:$0xff]
    %v3284 = vld [vmem:[%s3279 + $0x20] sm:$0xff]
    %v3285 = vld [vmem:[%s3279 + $0x28] sm:$0xff]
    %v3286 = vld [vmem:[%s3279 + $0x30] sm:$0xff]
    %v3287 = vld [vmem:[%s3279 + $0x38] sm:$0xff]
    %v3288 = vld [vmem:[%s3279 + $0x40] sm:$0xff]
    %v3289 = vld [vmem:[%s3279 + $0x48] sm:$0xff]
    %v3290 = vld [vmem:[%s3279 + $0x50] sm:$0xff]
    %v3291 = vld [vmem:[%s3279 + $0x58] sm:$0xff]
    %v3292 = vld [vmem:[%s3279 + $0x60] sm:$0xff]
    %v3293 = vld [vmem:[%s3279 + $0x68] sm:$0xff]
    %v3294 = vld [vmem:[%s3279 + $0x70] sm:$0xff]
    %v3295 = vld [vmem:[%s3279 + $0x78] sm:$0xff]
    %3296 = vmatprep.subr.mxu0 0.0
    %3297 = vmatpush1.msra.mxu0 %v3280
    %3298 = vmatprep.subr.mxu0 0.0
    %3299 = vmatpush1.msra.mxu0 %v3281
    %3300 = vmatprep.subr.mxu0 0.0
    %3301 = vmatpush1.msra.mxu0 %v3282
    %3302 = vmatprep.subr.mxu0 0.0
    %3303 = vmatpush1.msra.mxu0 %v3283
    %3304 = vmatprep.subr.mxu0 0.0
    %3305 = vmatpush1.msra.mxu0 %v3284
    %3306 = vmatprep.subr.mxu0 0.0
    %3307 = vmatpush1.msra.mxu0 %v3285
    %3308 = vmatprep.subr.mxu0 0.0
    %3309 = vmatpush1.msra.mxu0 %v3286
    %3310 = vmatprep.subr.mxu0 0.0
    %3311 = vmatpush1.msra.mxu0 %v3287
    %3312 = vmatprep.subr.mxu0 0.0
    %3313 = vmatpush1.msra.mxu0 %v3288
    %3314 = vmatprep.subr.mxu0 0.0
    %3315 = vmatpush1.msra.mxu0 %v3289
    %3316 = vmatprep.subr.mxu0 0.0
    %3317 = vmatpush1.msra.mxu0 %v3290
    %3318 = vmatprep.subr.mxu0 0.0
    %3319 = vmatpush1.msra.mxu0 %v3291
    %3320 = vmatprep.subr.mxu0 0.0
    %3321 = vmatpush1.msra.mxu0 %v3292
    %3322 = vmatprep.subr.mxu0 0.0
    %3323 = vmatpush1.msra.mxu0 %v3293
    %3324 = vmatprep.subr.mxu0 0.0
    %3325 = vmatpush1.msra.mxu0 %v3294
    %3326 = vmatprep.subr.mxu0 0.0
    %3327 = vmatpush1.msra.mxu0 %v3295
    %3328 = vmatprep.subr.mxu0 0.0
    %3329 = vmatpush1.msra.mxu0 0.0
    %3330 = vmatprep.subr.mxu0 0.0
    %3331 = vmatpush1.msra.mxu0 0.0
    %3332 = vmatprep.subr.mxu0 0.0
    %3333 = vmatpush1.msra.mxu0 0.0
    %3334 = vmatprep.subr.mxu0 0.0
    %3335 = vmatpush1.msra.mxu0 0.0
    %3336 = vmatprep.subr.mxu0 0.0
    %3337 = vmatpush1.msra.mxu0 0.0
    %3338 = vmatprep.subr.mxu0 0.0
    %3339 = vmatpush1.msra.mxu0 0.0
    %3340 = vmatprep.subr.mxu0 0.0
    %3341 = vmatpush1.msra.mxu0 0.0
    %3342 = vmatprep.subr.mxu0 0.0
    %3343 = vmatpush1.msra.mxu0 0.0
    %3344 = vmatprep.subr.mxu0 0.0
    %3345 = vmatpush1.msra.mxu0 0.0
    %3346 = vmatprep.subr.mxu0 0.0
    %3347 = vmatpush1.msra.mxu0 0.0
    %3348 = vmatprep.subr.mxu0 0.0
    %3349 = vmatpush1.msra.mxu0 0.0
    %3350 = vmatprep.subr.mxu0 0.0
    %3351 = vmatpush1.msra.mxu0 0.0
    %3352 = vmatprep.subr.mxu0 0.0
    %3353 = vmatpush1.msra.mxu0 0.0
    %3354 = vmatprep.subr.mxu0 0.0
    %3355 = vmatpush1.msra.mxu0 0.0
    %3356 = vmatprep.subr.mxu0 0.0
    %3357 = vmatpush1.msra.mxu0 0.0
    %3358 = vmatprep.subr.mxu0 0.0
    %3359 = vmatpush1.msra.mxu0 0.0
    %3360 = vmatprep.mubr.f32.mxu0 0.0
    %3361 = vmatmul.mubr.f32.gmra.mrb[0].mxu0 %v2104
    %v3362 = vpop.f32.mrb[0].mxu0
    %v3363 = vadd.f32 0.0, %v3362
    %v3364 = vpop.f32.mrb[0].mxu0
    %3365 = vmatprep.mubr.f32.mxu0 0.0
    %3366 = vmatmul.mubr.f32.gmra.mrb[0].mxu0 %v2109
    %v3367 = vpop.f32.mrb[0].mxu0
    %v3368 = vadd.f32 0.0, %v3367
    %v3369 = vpop.f32.mrb[0].mxu0
    %3370 = vmatprep.mubr.f32.mxu0 0.0
    %3371 = vmatmul.mubr.f32.gmra.mrb[0].mxu0 %v2114
    %v3372 = vpop.f32.mrb[0].mxu0
    %v3373 = vadd.f32 0.0, %v3372
    %v3374 = vpop.f32.mrb[0].mxu0
    %3375 = vmatprep.mubr.f32.mxu0 0.0
    %3376 = vmatmul.mubr.f32.gmra.mrb[0].mxu0 %v2119
    %v3377 = vpop.f32.mrb[0].mxu0
    %v3378 = vadd.f32 0.0, %v3377
    %v3379 = vpop.f32.mrb[0].mxu0
    %3380 = vmatprep.mubr.f32.mxu0 0.0
    %3381 = vmatmul.mubr.f32.gmra.mrb[0].mxu0 %v2124
    %v3382 = vpop.f32.mrb[0].mxu0
    %v3383 = vadd.f32 0.0, %v3382
    %v3384 = vpop.f32.mrb[0].mxu0
    %3385 = vmatprep.mubr.f32.mxu0 0.0
    %3386 = vmatmul.mubr.f32.gmra.mrb[0].mxu0 %v2129
    %v3387 = vpop.f32.mrb[0].mxu0
    %v3388 = vadd.f32 0.0, %v3387
    %v3389 = vpop.f32.mrb[0].mxu0
    %3390 = vmatprep.mubr.f32.mxu0 0.0
    %3391 = vmatmul.mubr.f32.gmra.mrb[0].mxu0 %v2134
    %v3392 = vpop.f32.mrb[0].mxu0
    %v3393 = vadd.f32 0.0, %v3392
    %v3394 = vpop.f32.mrb[0].mxu0
    %3395 = vmatprep.mubr.f32.mxu0 0.0
    %3396 = vmatmul.mubr.f32.gmra.mrb[0].mxu0 %v2139
    %v3397 = vpop.f32.mrb[0].mxu0
    %v3398 = vadd.f32 0.0, %v3397
    %v3399 = vpop.f32.mrb[0].mxu0
    %3400 = vmatprep.mubr.f32.mxu0 0.0
    %3401 = vmatmul.mubr.f32.gmra.mrb[0].mxu0 %v2144
    %v3402 = vpop.f32.mrb[0].mxu0
    %v3403 = vadd.f32 0.0, %v3402
    %v3404 = vpop.f32.mrb[0].mxu0
    %3405 = vmatprep.mubr.f32.mxu0 0.0
    %3406 = vmatmul.mubr.f32.gmra.mrb[0].mxu0 %v2149
    %v3407 = vpop.f32.mrb[0].mxu0
    %v3408 = vadd.f32 0.0, %v3407
    %v3409 = vpop.f32.mrb[0].mxu0
    %3410 = vmatprep.mubr.f32.mxu0 0.0
    %3411 = vmatmul.mubr.f32.gmra.mrb[0].mxu0 %v2154
    %v3412 = vpop.f32.mrb[0].mxu0
    %v3413 = vadd.f32 0.0, %v3412
    %v3414 = vpop.f32.mrb[0].mxu0
    %3415 = vmatprep.mubr.f32.mxu0 0.0
    %3416 = vmatmul.mubr.f32.gmra.mrb[0].mxu0 %v2159
    %v3417 = vpop.f32.mrb[0].mxu0
    %v3418 = vadd.f32 0.0, %v3417
    %v3419 = vpop.f32.mrb[0].mxu0
    %3420 = vmatprep.mubr.f32.mxu0 0.0
    %3421 = vmatmul.mubr.f32.gmra.mrb[0].mxu0 %v2164
    %v3422 = vpop.f32.mrb[0].mxu0
    %v3423 = vadd.f32 0.0, %v3422
    %v3424 = vpop.f32.mrb[0].mxu0
    %3425 = vmatprep.mubr.f32.mxu0 0.0
    %3426 = vmatmul.mubr.f32.gmra.mrb[0].mxu0 %v2169
    %v3427 = vpop.f32.mrb[0].mxu0
    %v3428 = vadd.f32 0.0, %v3427
    %v3429 = vpop.f32.mrb[0].mxu0
    %3430 = vmatprep.mubr.f32.mxu0 0.0
    %3431 = vmatmul.mubr.f32.gmra.mrb[0].mxu0 %v2174
    %v3432 = vpop.f32.mrb[0].mxu0
    %v3433 = vadd.f32 0.0, %v3432
    %v3434 = vpop.f32.mrb[0].mxu0
    %3435 = vmatprep.mubr.f32.mxu0 0.0
    %3436 = vmatmul.mubr.f32.gmra.mrb[0].mxu0 %v2179
    %v3437 = vpop.f32.mrb[0].mxu0
    %v3438 = vadd.f32 0.0, %v3437
    %v3439 = vpop.f32.mrb[0].mxu0
    %3440 = vdwg.mxu0
    %v3441 = vadd.f32 %v3263, %v3363
    %v3442 = vadd.f32 %v3264, %v3368
    %v3443 = vadd.f32 %v3265, %v3373
    %v3444 = vadd.f32 %v3266, %v3378
    %v3445 = vadd.f32 %v3267, %v3383
    %v3446 = vadd.f32 %v3268, %v3388
    %v3447 = vadd.f32 %v3269, %v3393
    %v3448 = vadd.f32 %v3270, %v3398
    %v3449 = vadd.f32 %v3271, %v3403
    %v3450 = vadd.f32 %v3272, %v3408
    %v3451 = vadd.f32 %v3273, %v3413
    %v3452 = vadd.f32 %v3274, %v3418
    %v3453 = vadd.f32 %v3275, %v3423
    %v3454 = vadd.f32 %v3276, %v3428
    %v3455 = vadd.f32 %v3277, %v3433
    %v3456 = vadd.f32 %v3278, %v3438
    %s3457 = scalar_lea.vmem [#allocation4], 768
    %v3458 = vld [vmem:[%s3457] sm:$0xff]
    %v3459 = vld [vmem:[%s3457 + $0x8] sm:$0xff]
    %v3460 = vld [vmem:[%s3457 + $0x10] sm:$0xff]
    %v3461 = vld [vmem:[%s3457 + $0x18] sm:$0xff]
    %v3462 = vld [vmem:[%s3457 + $0x20] sm:$0xff]
    %v3463 = vld [vmem:[%s3457 + $0x28] sm:$0xff]
    %v3464 = vld [vmem:[%s3457 + $0x30] sm:$0xff]
    %v3465 = vld [vmem:[%s3457 + $0x38] sm:$0xff]
    %v3466 = vld [vmem:[%s3457 + $0x40] sm:$0xff]
    %v3467 = vld [vmem:[%s3457 + $0x48] sm:$0xff]
    %v3468 = vld [vmem:[%s3457 + $0x50] sm:$0xff]
    %v3469 = vld [vmem:[%s3457 + $0x58] sm:$0xff]
    %v3470 = vld [vmem:[%s3457 + $0x60] sm:$0xff]
    %v3471 = vld [vmem:[%s3457 + $0x68] sm:$0xff]
    %v3472 = vld [vmem:[%s3457 + $0x70] sm:$0xff]
    %v3473 = vld [vmem:[%s3457 + $0x78] sm:$0xff]
    %3474 = vmatprep.subr.mxu0 0.0
    %3475 = vmatpush1.msra.mxu0 %v3458
    %3476 = vmatprep.subr.mxu0 0.0
    %3477 = vmatpush1.msra.mxu0 %v3459
    %3478 = vmatprep.subr.mxu0 0.0
    %3479 = vmatpush1.msra.mxu0 %v3460
    %3480 = vmatprep.subr.mxu0 0.0
    %3481 = vmatpush1.msra.mxu0 %v3461
    %3482 = vmatprep.subr.mxu0 0.0
    %3483 = vmatpush1.msra.mxu0 %v3462
    %3484 = vmatprep.subr.mxu0 0.0
    %3485 = vmatpush1.msra.mxu0 %v3463
    %3486 = vmatprep.subr.mxu0 0.0
    %3487 = vmatpush1.msra.mxu0 %v3464
    %3488 = vmatprep.subr.mxu0 0.0
    %3489 = vmatpush1.msra.mxu0 %v3465
    %3490 = vmatprep.subr.mxu0 0.0
    %3491 = vmatpush1.msra.mxu0 %v3466
    %3492 = vmatprep.subr.mxu0 0.0
    %3493 = vmatpush1.msra.mxu0 %v3467
    %3494 = vmatprep.subr.mxu0 0.0
    %3495 = vmatpush1.msra.mxu0 %v3468
    %3496 = vmatprep.subr.mxu0 0.0
    %3497 = vmatpush1.msra.mxu0 %v3469
    %3498 = vmatprep.subr.mxu0 0.0
    %3499 = vmatpush1.msra.mxu0 %v3470
    %3500 = vmatprep.subr.mxu0 0.0
    %3501 = vmatpush1.msra.mxu0 %v3471
    %3502 = vmatprep.subr.mxu0 0.0
    %3503 = vmatpush1.msra.mxu0 %v3472
    %3504 = vmatprep.subr.mxu0 0.0
    %3505 = vmatpush1.msra.mxu0 %v3473
    %3506 = vmatprep.subr.mxu0 0.0
    %3507 = vmatpush1.msra.mxu0 0.0
    %3508 = vmatprep.subr.mxu0 0.0
    %3509 = vmatpush1.msra.mxu0 0.0
    %3510 = vmatprep.subr.mxu0 0.0
    %3511 = vmatpush1.msra.mxu0 0.0
    %3512 = vmatprep.subr.mxu0 0.0
    %3513 = vmatpush1.msra.mxu0 0.0
    %3514 = vmatprep.subr.mxu0 0.0
    %3515 = vmatpush1.msra.mxu0 0.0
    %3516 = vmatprep.subr.mxu0 0.0
    %3517 = vmatpush1.msra.mxu0 0.0
    %3518 = vmatprep.subr.mxu0 0.0
    %3519 = vmatpush1.msra.mxu0 0.0
    %3520 = vmatprep.subr.mxu0 0.0
    %3521 = vmatpush1.msra.mxu0 0.0
    %3522 = vmatprep.subr.mxu0 0.0
    %3523 = vmatpush1.msra.mxu0 0.0
    %3524 = vmatprep.subr.mxu0 0.0
    %3525 = vmatpush1.msra.mxu0 0.0
    %3526 = vmatprep.subr.mxu0 0.0
    %3527 = vmatpush1.msra.mxu0 0.0
    %3528 = vmatprep.subr.mxu0 0.0
    %3529 = vmatpush1.msra.mxu0 0.0
    %3530 = vmatprep.subr.mxu0 0.0
    %3531 = vmatpush1.msra.mxu0 0.0
    %3532 = vmatprep.subr.mxu0 0.0
    %3533 = vmatpush1.msra.mxu0 0.0
    %3534 = vmatprep.subr.mxu0 0.0
    %3535 = vmatpush1.msra.mxu0 0.0
    %3536 = vmatprep.subr.mxu0 0.0
    %3537 = vmatpush1.msra.mxu0 0.0
    %3538 = vmatprep.mubr.f32.mxu0 0.0
    %3539 = vmatmul.mubr.f32.gmra.mrb[0].mxu0 %v2184
    %v3540 = vpop.f32.mrb[0].mxu0
    %v3541 = vadd.f32 0.0, %v3540
    %v3542 = vpop.f32.mrb[0].mxu0
    %3543 = vmatprep.mubr.f32.mxu0 0.0
    %3544 = vmatmul.mubr.f32.gmra.mrb[0].mxu0 %v2189
    %v3545 = vpop.f32.mrb[0].mxu0
    %v3546 = vadd.f32 0.0, %v3545
    %v3547 = vpop.f32.mrb[0].mxu0
    %3548 = vmatprep.mubr.f32.mxu0 0.0
    %3549 = vmatmul.mubr.f32.gmra.mrb[0].mxu0 %v2194
    %v3550 = vpop.f32.mrb[0].mxu0
    %v3551 = vadd.f32 0.0, %v3550
    %v3552 = vpop.f32.mrb[0].mxu0
    %3553 = vmatprep.mubr.f32.mxu0 0.0
    %3554 = vmatmul.mubr.f32.gmra.mrb[0].mxu0 %v2199
    %v3555 = vpop.f32.mrb[0].mxu0
    %v3556 = vadd.f32 0.0, %v3555
    %v3557 = vpop.f32.mrb[0].mxu0
    %3558 = vmatprep.mubr.f32.mxu0 0.0
    %3559 = vmatmul.mubr.f32.gmra.mrb[0].mxu0 %v2204
    %v3560 = vpop.f32.mrb[0].mxu0
    %v3561 = vadd.f32 0.0, %v3560
    %v3562 = vpop.f32.mrb[0].mxu0
    %3563 = vmatprep.mubr.f32.mxu0 0.0
    %3564 = vmatmul.mubr.f32.gmra.mrb[0].mxu0 %v2209
    %v3565 = vpop.f32.mrb[0].mxu0
    %v3566 = vadd.f32 0.0, %v3565
    %v3567 = vpop.f32.mrb[0].mxu0
    %3568 = vmatprep.mubr.f32.mxu0 0.0
    %3569 = vmatmul.mubr.f32.gmra.mrb[0].mxu0 %v2214
    %v3570 = vpop.f32.mrb[0].mxu0
    %v3571 = vadd.f32 0.0, %v3570
    %v3572 = vpop.f32.mrb[0].mxu0
    %3573 = vmatprep.mubr.f32.mxu0 0.0
    %3574 = vmatmul.mubr.f32.gmra.mrb[0].mxu0 %v2219
    %v3575 = vpop.f32.mrb[0].mxu0
    %v3576 = vadd.f32 0.0, %v3575
    %v3577 = vpop.f32.mrb[0].mxu0
    %3578 = vmatprep.mubr.f32.mxu0 0.0
    %3579 = vmatmul.mubr.f32.gmra.mrb[0].mxu0 %v2224
    %v3580 = vpop.f32.mrb[0].mxu0
    %v3581 = vadd.f32 0.0, %v3580
    %v3582 = vpop.f32.mrb[0].mxu0
    %3583 = vmatprep.mubr.f32.mxu0 0.0
    %3584 = vmatmul.mubr.f32.gmra.mrb[0].mxu0 %v2229
    %v3585 = vpop.f32.mrb[0].mxu0
    %v3586 = vadd.f32 0.0, %v3585
    %v3587 = vpop.f32.mrb[0].mxu0
    %3588 = vmatprep.mubr.f32.mxu0 0.0
    %3589 = vmatmul.mubr.f32.gmra.mrb[0].mxu0 %v2234
    %v3590 = vpop.f32.mrb[0].mxu0
    %v3591 = vadd.f32 0.0, %v3590
    %v3592 = vpop.f32.mrb[0].mxu0
    %3593 = vmatprep.mubr.f32.mxu0 0.0
    %3594 = vmatmul.mubr.f32.gmra.mrb[0].mxu0 %v2239
    %v3595 = vpop.f32.mrb[0].mxu0
    %v3596 = vadd.f32 0.0, %v3595
    %v3597 = vpop.f32.mrb[0].mxu0
    %3598 = vmatprep.mubr.f32.mxu0 0.0
    %3599 = vmatmul.mubr.f32.gmra.mrb[0].mxu0 %v2244
    %v3600 = vpop.f32.mrb[0].mxu0
    %v3601 = vadd.f32 0.0, %v3600
    %v3602 = vpop.f32.mrb[0].mxu0
    %3603 = vmatprep.mubr.f32.mxu0 0.0
    %3604 = vmatmul.mubr.f32.gmra.mrb[0].mxu0 %v2249
    %v3605 = vpop.f32.mrb[0].mxu0
    %v3606 = vadd.f32 0.0, %v3605
    %v3607 = vpop.f32.mrb[0].mxu0
    %3608 = vmatprep.mubr.f32.mxu0 0.0
    %3609 = vmatmul.mubr.f32.gmra.mrb[0].mxu0 %v2254
    %v3610 = vpop.f32.mrb[0].mxu0
    %v3611 = vadd.f32 0.0, %v3610
    %v3612 = vpop.f32.mrb[0].mxu0
    %3613 = vmatprep.mubr.f32.mxu0 0.0
    %3614 = vmatmul.mubr.f32.gmra.mrb[0].mxu0 %v2259
    %v3615 = vpop.f32.mrb[0].mxu0
    %v3616 = vadd.f32 0.0, %v3615
    %v3617 = vpop.f32.mrb[0].mxu0
    %3618 = vdwg.mxu0
    %v3619 = vadd.f32 %v3441, %v3541
    %v3620 = vadd.f32 %v3442, %v3546
    %v3621 = vadd.f32 %v3443, %v3551
    %v3622 = vadd.f32 %v3444, %v3556
    %v3623 = vadd.f32 %v3445, %v3561
    %v3624 = vadd.f32 %v3446, %v3566
    %v3625 = vadd.f32 %v3447, %v3571
    %v3626 = vadd.f32 %v3448, %v3576
    %v3627 = vadd.f32 %v3449, %v3581
    %v3628 = vadd.f32 %v3450, %v3586
    %v3629 = vadd.f32 %v3451, %v3591
    %v3630 = vadd.f32 %v3452, %v3596
    %v3631 = vadd.f32 %v3453, %v3601
    %v3632 = vadd.f32 %v3454, %v3606
    %v3633 = vadd.f32 %v3455, %v3611
    %v3634 = vadd.f32 %v3456, %v3616
    %s3635 = scalar_lea.vmem [#allocation4], 896
    %v3636 = vld [vmem:[%s3635] sm:$0xff]
    %v3637 = vld [vmem:[%s3635 + $0x8] sm:$0xff]
    %v3638 = vld [vmem:[%s3635 + $0x10] sm:$0xff]
    %v3639 = vld [vmem:[%s3635 + $0x18] sm:$0xff]
    %v3640 = vld [vmem:[%s3635 + $0x20] sm:$0xff]
    %v3641 = vld [vmem:[%s3635 + $0x28] sm:$0xff]
    %v3642 = vld [vmem:[%s3635 + $0x30] sm:$0xff]
    %v3643 = vld [vmem:[%s3635 + $0x38] sm:$0xff]
    %v3644 = vld [vmem:[%s3635 + $0x40] sm:$0xff]
    %v3645 = vld [vmem:[%s3635 + $0x48] sm:$0xff]
    %v3646 = vld [vmem:[%s3635 + $0x50] sm:$0xff]
    %v3647 = vld [vmem:[%s3635 + $0x58] sm:$0xff]
    %v3648 = vld [vmem:[%s3635 + $0x60] sm:$0xff]
    %v3649 = vld [vmem:[%s3635 + $0x68] sm:$0xff]
    %v3650 = vld [vmem:[%s3635 + $0x70] sm:$0xff]
    %v3651 = vld [vmem:[%s3635 + $0x78] sm:$0xff]
    %3652 = vmatprep.subr.mxu0 0.0
    %3653 = vmatpush1.msra.mxu0 %v3636
    %3654 = vmatprep.subr.mxu0 0.0
    %3655 = vmatpush1.msra.mxu0 %v3637
    %3656 = vmatprep.subr.mxu0 0.0
    %3657 = vmatpush1.msra.mxu0 %v3638
    %3658 = vmatprep.subr.mxu0 0.0
    %3659 = vmatpush1.msra.mxu0 %v3639
    %3660 = vmatprep.subr.mxu0 0.0
    %3661 = vmatpush1.msra.mxu0 %v3640
    %3662 = vmatprep.subr.mxu0 0.0
    %3663 = vmatpush1.msra.mxu0 %v3641
    %3664 = vmatprep.subr.mxu0 0.0
    %3665 = vmatpush1.msra.mxu0 %v3642
    %3666 = vmatprep.subr.mxu0 0.0
    %3667 = vmatpush1.msra.mxu0 %v3643
    %3668 = vmatprep.subr.mxu0 0.0
    %3669 = vmatpush1.msra.mxu0 %v3644
    %3670 = vmatprep.subr.mxu0 0.0
    %3671 = vmatpush1.msra.mxu0 %v3645
    %3672 = vmatprep.subr.mxu0 0.0
    %3673 = vmatpush1.msra.mxu0 %v3646
    %3674 = vmatprep.subr.mxu0 0.0
    %3675 = vmatpush1.msra.mxu0 %v3647
    %3676 = vmatprep.subr.mxu0 0.0
    %3677 = vmatpush1.msra.mxu0 %v3648
    %3678 = vmatprep.subr.mxu0 0.0
    %3679 = vmatpush1.msra.mxu0 %v3649
    %3680 = vmatprep.subr.mxu0 0.0
    %3681 = vmatpush1.msra.mxu0 %v3650
    %3682 = vmatprep.subr.mxu0 0.0
    %3683 = vmatpush1.msra.mxu0 %v3651
    %3684 = vmatprep.subr.mxu0 0.0
    %3685 = vmatpush1.msra.mxu0 0.0
    %3686 = vmatprep.subr.mxu0 0.0
    %3687 = vmatpush1.msra.mxu0 0.0
    %3688 = vmatprep.subr.mxu0 0.0
    %3689 = vmatpush1.msra.mxu0 0.0
    %3690 = vmatprep.subr.mxu0 0.0
    %3691 = vmatpush1.msra.mxu0 0.0
    %3692 = vmatprep.subr.mxu0 0.0
    %3693 = vmatpush1.msra.mxu0 0.0
    %3694 = vmatprep.subr.mxu0 0.0
    %3695 = vmatpush1.msra.mxu0 0.0
    %3696 = vmatprep.subr.mxu0 0.0
    %3697 = vmatpush1.msra.mxu0 0.0
    %3698 = vmatprep.subr.mxu0 0.0
    %3699 = vmatpush1.msra.mxu0 0.0
    %3700 = vmatprep.subr.mxu0 0.0
    %3701 = vmatpush1.msra.mxu0 0.0
    %3702 = vmatprep.subr.mxu0 0.0
    %3703 = vmatpush1.msra.mxu0 0.0
    %3704 = vmatprep.subr.mxu0 0.0
    %3705 = vmatpush1.msra.mxu0 0.0
    %3706 = vmatprep.subr.mxu0 0.0
    %3707 = vmatpush1.msra.mxu0 0.0
    %3708 = vmatprep.subr.mxu0 0.0
    %3709 = vmatpush1.msra.mxu0 0.0
    %3710 = vmatprep.subr.mxu0 0.0
    %3711 = vmatpush1.msra.mxu0 0.0
    %3712 = vmatprep.subr.mxu0 0.0
    %3713 = vmatpush1.msra.mxu0 0.0
    %3714 = vmatprep.subr.mxu0 0.0
    %3715 = vmatpush1.msra.mxu0 0.0
    %3716 = vmatprep.mubr.f32.mxu0 0.0
    %3717 = vmatmul.mubr.f32.gmra.mrb[0].mxu0 %v2264
    %v3718 = vpop.f32.mrb[0].mxu0
    %v3719 = vadd.f32 0.0, %v3718
    %v3720 = vpop.f32.mrb[0].mxu0
    %3721 = vmatprep.mubr.f32.mxu0 0.0
    %3722 = vmatmul.mubr.f32.gmra.mrb[0].mxu0 %v2269
    %v3723 = vpop.f32.mrb[0].mxu0
    %v3724 = vadd.f32 0.0, %v3723
    %v3725 = vpop.f32.mrb[0].mxu0
    %3726 = vmatprep.mubr.f32.mxu0 0.0
    %3727 = vmatmul.mubr.f32.gmra.mrb[0].mxu0 %v2274
    %v3728 = vpop.f32.mrb[0].mxu0
    %v3729 = vadd.f32 0.0, %v3728
    %v3730 = vpop.f32.mrb[0].mxu0
    %3731 = vmatprep.mubr.f32.mxu0 0.0
    %3732 = vmatmul.mubr.f32.gmra.mrb[0].mxu0 %v2279
    %v3733 = vpop.f32.mrb[0].mxu0
    %v3734 = vadd.f32 0.0, %v3733
    %v3735 = vpop.f32.mrb[0].mxu0
    %3736 = vmatprep.mubr.f32.mxu0 0.0
    %3737 = vmatmul.mubr.f32.gmra.mrb[0].mxu0 %v2284
    %v3738 = vpop.f32.mrb[0].mxu0
    %v3739 = vadd.f32 0.0, %v3738
    %v3740 = vpop.f32.mrb[0].mxu0
    %3741 = vmatprep.mubr.f32.mxu0 0.0
    %3742 = vmatmul.mubr.f32.gmra.mrb[0].mxu0 %v2289
    %v3743 = vpop.f32.mrb[0].mxu0
    %v3744 = vadd.f32 0.0, %v3743
    %v3745 = vpop.f32.mrb[0].mxu0
    %3746 = vmatprep.mubr.f32.mxu0 0.0
    %3747 = vmatmul.mubr.f32.gmra.mrb[0].mxu0 %v2294
    %v3748 = vpop.f32.mrb[0].mxu0
    %v3749 = vadd.f32 0.0, %v3748
    %v3750 = vpop.f32.mrb[0].mxu0
    %3751 = vmatprep.mubr.f32.mxu0 0.0
    %3752 = vmatmul.mubr.f32.gmra.mrb[0].mxu0 %v2299
    %v3753 = vpop.f32.mrb[0].mxu0
    %v3754 = vadd.f32 0.0, %v3753
    %v3755 = vpop.f32.mrb[0].mxu0
    %3756 = vmatprep.mubr.f32.mxu0 0.0
    %3757 = vmatmul.mubr.f32.gmra.mrb[0].mxu0 %v2304
    %v3758 = vpop.f32.mrb[0].mxu0
    %v3759 = vadd.f32 0.0, %v3758
    %v3760 = vpop.f32.mrb[0].mxu0
    %3761 = vmatprep.mubr.f32.mxu0 0.0
    %3762 = vmatmul.mubr.f32.gmra.mrb[0].mxu0 %v2309
    %v3763 = vpop.f32.mrb[0].mxu0
    %v3764 = vadd.f32 0.0, %v3763
    %v3765 = vpop.f32.mrb[0].mxu0
    %3766 = vmatprep.mubr.f32.mxu0 0.0
    %3767 = vmatmul.mubr.f32.gmra.mrb[0].mxu0 %v2314
    %v3768 = vpop.f32.mrb[0].mxu0
    %v3769 = vadd.f32 0.0, %v3768
    %v3770 = vpop.f32.mrb[0].mxu0
    %3771 = vmatprep.mubr.f32.mxu0 0.0
    %3772 = vmatmul.mubr.f32.gmra.mrb[0].mxu0 %v2319
    %v3773 = vpop.f32.mrb[0].mxu0
    %v3774 = vadd.f32 0.0, %v3773
    %v3775 = vpop.f32.mrb[0].mxu0
    %3776 = vmatprep.mubr.f32.mxu0 0.0
    %3777 = vmatmul.mubr.f32.gmra.mrb[0].mxu0 %v2324
    %v3778 = vpop.f32.mrb[0].mxu0
    %v3779 = vadd.f32 0.0, %v3778
    %v3780 = vpop.f32.mrb[0].mxu0
    %3781 = vmatprep.mubr.f32.mxu0 0.0
    %3782 = vmatmul.mubr.f32.gmra.mrb[0].mxu0 %v2329
    %v3783 = vpop.f32.mrb[0].mxu0
    %v3784 = vadd.f32 0.0, %v3783
    %v3785 = vpop.f32.mrb[0].mxu0
    %3786 = vmatprep.mubr.f32.mxu0 0.0
    %3787 = vmatmul.mubr.f32.gmra.mrb[0].mxu0 %v2334
    %v3788 = vpop.f32.mrb[0].mxu0
    %v3789 = vadd.f32 0.0, %v3788
    %v3790 = vpop.f32.mrb[0].mxu0
    %3791 = vmatprep.mubr.f32.mxu0 0.0
    %3792 = vmatmul.mubr.f32.gmra.mrb[0].mxu0 %v2339
    %v3793 = vpop.f32.mrb[0].mxu0
    %v3794 = vadd.f32 0.0, %v3793
    %v3795 = vpop.f32.mrb[0].mxu0
    %3796 = vdwg.mxu0
    %v3797 = vadd.f32 %v3619, %v3719
    %v3798 = vadd.f32 %v3620, %v3724
    %v3799 = vadd.f32 %v3621, %v3729
    %v3800 = vadd.f32 %v3622, %v3734
    %v3801 = vadd.f32 %v3623, %v3739
    %v3802 = vadd.f32 %v3624, %v3744
    %v3803 = vadd.f32 %v3625, %v3749
    %v3804 = vadd.f32 %v3626, %v3754
    %v3805 = vadd.f32 %v3627, %v3759
    %v3806 = vadd.f32 %v3628, %v3764
    %v3807 = vadd.f32 %v3629, %v3769
    %v3808 = vadd.f32 %v3630, %v3774
    %v3809 = vadd.f32 %v3631, %v3779
    %v3810 = vadd.f32 %v3632, %v3784
    %v3811 = vadd.f32 %v3633, %v3789
    %v3812 = vadd.f32 %v3634, %v3794
    %s3813 = scalar_lea.vmem [#allocation4], 1024
    %v3814 = vld [vmem:[%s3813] sm:$0xff]
    %v3815 = vld [vmem:[%s3813 + $0x8] sm:$0xff]
    %v3816 = vld [vmem:[%s3813 + $0x10] sm:$0xff]
    %v3817 = vld [vmem:[%s3813 + $0x18] sm:$0xff]
    %v3818 = vld [vmem:[%s3813 + $0x20] sm:$0xff]
    %v3819 = vld [vmem:[%s3813 + $0x28] sm:$0xff]
    %v3820 = vld [vmem:[%s3813 + $0x30] sm:$0xff]
    %v3821 = vld [vmem:[%s3813 + $0x38] sm:$0xff]
    %v3822 = vld [vmem:[%s3813 + $0x40] sm:$0xff]
    %v3823 = vld [vmem:[%s3813 + $0x48] sm:$0xff]
    %v3824 = vld [vmem:[%s3813 + $0x50] sm:$0xff]
    %v3825 = vld [vmem:[%s3813 + $0x58] sm:$0xff]
    %v3826 = vld [vmem:[%s3813 + $0x60] sm:$0xff]
    %v3827 = vld [vmem:[%s3813 + $0x68] sm:$0xff]
    %v3828 = vld [vmem:[%s3813 + $0x70] sm:$0xff]
    %v3829 = vld [vmem:[%s3813 + $0x78] sm:$0xff]
    %3830 = vmatprep.subr.mxu0 0.0
    %3831 = vmatpush1.msra.mxu0 %v3814
    %3832 = vmatprep.subr.mxu0 0.0
    %3833 = vmatpush1.msra.mxu0 %v3815
    %3834 = vmatprep.subr.mxu0 0.0
    %3835 = vmatpush1.msra.mxu0 %v3816
    %3836 = vmatprep.subr.mxu0 0.0
    %3837 = vmatpush1.msra.mxu0 %v3817
    %3838 = vmatprep.subr.mxu0 0.0
    %3839 = vmatpush1.msra.mxu0 %v3818
    %3840 = vmatprep.subr.mxu0 0.0
    %3841 = vmatpush1.msra.mxu0 %v3819
    %3842 = vmatprep.subr.mxu0 0.0
    %3843 = vmatpush1.msra.mxu0 %v3820
    %3844 = vmatprep.subr.mxu0 0.0
    %3845 = vmatpush1.msra.mxu0 %v3821
    %3846 = vmatprep.subr.mxu0 0.0
    %3847 = vmatpush1.msra.mxu0 %v3822
    %3848 = vmatprep.subr.mxu0 0.0
    %3849 = vmatpush1.msra.mxu0 %v3823
    %3850 = vmatprep.subr.mxu0 0.0
    %3851 = vmatpush1.msra.mxu0 %v3824
    %3852 = vmatprep.subr.mxu0 0.0
    %3853 = vmatpush1.msra.mxu0 %v3825
    %3854 = vmatprep.subr.mxu0 0.0
    %3855 = vmatpush1.msra.mxu0 %v3826
    %3856 = vmatprep.subr.mxu0 0.0
    %3857 = vmatpush1.msra.mxu0 %v3827
    %3858 = vmatprep.subr.mxu0 0.0
    %3859 = vmatpush1.msra.mxu0 %v3828
    %3860 = vmatprep.subr.mxu0 0.0
    %3861 = vmatpush1.msra.mxu0 %v3829
    %3862 = vmatprep.subr.mxu0 0.0
    %3863 = vmatpush1.msra.mxu0 0.0
    %3864 = vmatprep.subr.mxu0 0.0
    %3865 = vmatpush1.msra.mxu0 0.0
    %3866 = vmatprep.subr.mxu0 0.0
    %3867 = vmatpush1.msra.mxu0 0.0
    %3868 = vmatprep.subr.mxu0 0.0
    %3869 = vmatpush1.msra.mxu0 0.0
    %3870 = vmatprep.subr.mxu0 0.0
    %3871 = vmatpush1.msra.mxu0 0.0
    %3872 = vmatprep.subr.mxu0 0.0
    %3873 = vmatpush1.msra.mxu0 0.0
    %3874 = vmatprep.subr.mxu0 0.0
    %3875 = vmatpush1.msra.mxu0 0.0
    %3876 = vmatprep.subr.mxu0 0.0
    %3877 = vmatpush1.msra.mxu0 0.0
    %3878 = vmatprep.subr.mxu0 0.0
    %3879 = vmatpush1.msra.mxu0 0.0
    %3880 = vmatprep.subr.mxu0 0.0
    %3881 = vmatpush1.msra.mxu0 0.0
    %3882 = vmatprep.subr.mxu0 0.0
    %3883 = vmatpush1.msra.mxu0 0.0
    %3884 = vmatprep.subr.mxu0 0.0
    %3885 = vmatpush1.msra.mxu0 0.0
    %3886 = vmatprep.subr.mxu0 0.0
    %3887 = vmatpush1.msra.mxu0 0.0
    %3888 = vmatprep.subr.mxu0 0.0
    %3889 = vmatpush1.msra.mxu0 0.0
    %3890 = vmatprep.subr.mxu0 0.0
    %3891 = vmatpush1.msra.mxu0 0.0
    %3892 = vmatprep.subr.mxu0 0.0
    %3893 = vmatpush1.msra.mxu0 0.0
    %3894 = vmatprep.mubr.f32.mxu0 0.0
    %3895 = vmatmul.mubr.f32.gmra.mrb[0].mxu0 %v2344
    %v3896 = vpop.f32.mrb[0].mxu0
    %v3897 = vadd.f32 0.0, %v3896
    %v3898 = vpop.f32.mrb[0].mxu0
    %3899 = vmatprep.mubr.f32.mxu0 0.0
    %3900 = vmatmul.mubr.f32.gmra.mrb[0].mxu0 %v2349
    %v3901 = vpop.f32.mrb[0].mxu0
    %v3902 = vadd.f32 0.0, %v3901
    %v3903 = vpop.f32.mrb[0].mxu0
    %3904 = vmatprep.mubr.f32.mxu0 0.0
    %3905 = vmatmul.mubr.f32.gmra.mrb[0].mxu0 %v2354
    %v3906 = vpop.f32.mrb[0].mxu0
    %v3907 = vadd.f32 0.0, %v3906
    %v3908 = vpop.f32.mrb[0].mxu0
    %3909 = vmatprep.mubr.f32.mxu0 0.0
    %3910 = vmatmul.mubr.f32.gmra.mrb[0].mxu0 %v2359
    %v3911 = vpop.f32.mrb[0].mxu0
    %v3912 = vadd.f32 0.0, %v3911
    %v3913 = vpop.f32.mrb[0].mxu0
    %3914 = vmatprep.mubr.f32.mxu0 0.0
    %3915 = vmatmul.mubr.f32.gmra.mrb[0].mxu0 %v2364
    %v3916 = vpop.f32.mrb[0].mxu0
    %v3917 = vadd.f32 0.0, %v3916
    %v3918 = vpop.f32.mrb[0].mxu0
    %3919 = vmatprep.mubr.f32.mxu0 0.0
    %3920 = vmatmul.mubr.f32.gmra.mrb[0].mxu0 %v2369
    %v3921 = vpop.f32.mrb[0].mxu0
    %v3922 = vadd.f32 0.0, %v3921
    %v3923 = vpop.f32.mrb[0].mxu0
    %3924 = vmatprep.mubr.f32.mxu0 0.0
    %3925 = vmatmul.mubr.f32.gmra.mrb[0].mxu0 %v2374
    %v3926 = vpop.f32.mrb[0].mxu0
    %v3927 = vadd.f32 0.0, %v3926
    %v3928 = vpop.f32.mrb[0].mxu0
    %3929 = vmatprep.mubr.f32.mxu0 0.0
    %3930 = vmatmul.mubr.f32.gmra.mrb[0].mxu0 %v2379
    %v3931 = vpop.f32.mrb[0].mxu0
    %v3932 = vadd.f32 0.0, %v3931
    %v3933 = vpop.f32.mrb[0].mxu0
    %3934 = vmatprep.mubr.f32.mxu0 0.0
    %3935 = vmatmul.mubr.f32.gmra.mrb[0].mxu0 %v2384
    %v3936 = vpop.f32.mrb[0].mxu0
    %v3937 = vadd.f32 0.0, %v3936
    %v3938 = vpop.f32.mrb[0].mxu0
    %3939 = vmatprep.mubr.f32.mxu0 0.0
    %3940 = vmatmul.mubr.f32.gmra.mrb[0].mxu0 %v2389
    %v3941 = vpop.f32.mrb[0].mxu0
    %v3942 = vadd.f32 0.0, %v3941
    %v3943 = vpop.f32.mrb[0].mxu0
    %3944 = vmatprep.mubr.f32.mxu0 0.0
    %3945 = vmatmul.mubr.f32.gmra.mrb[0].mxu0 %v2394
    %v3946 = vpop.f32.mrb[0].mxu0
    %v3947 = vadd.f32 0.0, %v3946
    %v3948 = vpop.f32.mrb[0].mxu0
    %3949 = vmatprep.mubr.f32.mxu0 0.0
    %3950 = vmatmul.mubr.f32.gmra.mrb[0].mxu0 %v2399
    %v3951 = vpop.f32.mrb[0].mxu0
    %v3952 = vadd.f32 0.0, %v3951
    %v3953 = vpop.f32.mrb[0].mxu0
    %3954 = vmatprep.mubr.f32.mxu0 0.0
    %3955 = vmatmul.mubr.f32.gmra.mrb[0].mxu0 %v2404
    %v3956 = vpop.f32.mrb[0].mxu0
    %v3957 = vadd.f32 0.0, %v3956
    %v3958 = vpop.f32.mrb[0].mxu0
    %3959 = vmatprep.mubr.f32.mxu0 0.0
    %3960 = vmatmul.mubr.f32.gmra.mrb[0].mxu0 %v2409
    %v3961 = vpop.f32.mrb[0].mxu0
    %v3962 = vadd.f32 0.0, %v3961
    %v3963 = vpop.f32.mrb[0].mxu0
    %3964 = vmatprep.mubr.f32.mxu0 0.0
    %3965 = vmatmul.mubr.f32.gmra.mrb[0].mxu0 %v2414
    %v3966 = vpop.f32.mrb[0].mxu0
    %v3967 = vadd.f32 0.0, %v3966
    %v3968 = vpop.f32.mrb[0].mxu0
    %3969 = vmatprep.mubr.f32.mxu0 0.0
    %3970 = vmatmul.mubr.f32.gmra.mrb[0].mxu0 %v2419
    %v3971 = vpop.f32.mrb[0].mxu0
    %v3972 = vadd.f32 0.0, %v3971
    %v3973 = vpop.f32.mrb[0].mxu0
    %3974 = vdwg.mxu0
    %v3975 = vadd.f32 %v3797, %v3897
    %v3976 = vadd.f32 %v3798, %v3902
    %v3977 = vadd.f32 %v3799, %v3907
    %v3978 = vadd.f32 %v3800, %v3912
    %v3979 = vadd.f32 %v3801, %v3917
    %v3980 = vadd.f32 %v3802, %v3922
    %v3981 = vadd.f32 %v3803, %v3927
    %v3982 = vadd.f32 %v3804, %v3932
    %v3983 = vadd.f32 %v3805, %v3937
    %v3984 = vadd.f32 %v3806, %v3942
    %v3985 = vadd.f32 %v3807, %v3947
    %v3986 = vadd.f32 %v3808, %v3952
    %v3987 = vadd.f32 %v3809, %v3957
    %v3988 = vadd.f32 %v3810, %v3962
    %v3989 = vadd.f32 %v3811, %v3967
    %v3990 = vadd.f32 %v3812, %v3972
    %v3991 = vadd.f32 %v3975, %v3976
    %v3992 = vadd.f32 %v3991, %v3977
    %v3993 = vadd.f32 %v3992, %v3978
    %v3994 = vadd.f32 %v3993, %v3979
    %v3995 = vadd.f32 %v3994, %v3980
    %v3996 = vadd.f32 %v3995, %v3981
    %v3997 = vadd.f32 %v3996, %v3982
    %v3998 = vadd.f32 %v3997, %v3983
    %v3999 = vadd.f32 %v3998, %v3984
    %v4000 = vadd.f32 %v3999, %v3985
    %v4001 = vadd.f32 %v4000, %v3986
    %v4002 = vadd.f32 %v4001, %v3987
    %v4003 = vadd.f32 %v4002, %v3988
    %v4004 = vadd.f32 %v4003, %v3989
    %v4005 = vadd.f32 %v4004, %v3990
    %v4006 = vrot.slane %v4005, 4
    %v4007 = vadd.f32 %v4005, %v4006
    %v4008 = vrot.slane %v4007, 2
    %v4009 = vadd.f32 %v4007, %v4008
    %v4010 = vrot.slane %v4009, 1
    %v4011 = vadd.f32 %v4009, %v4010
    %v4012 = vrcp.pop 128.0
    %v4013 = vmul.f32 %v4011, %v4012
    %v4014 = vmul.f32 %v3975, %v3975
    %v4015 = vmul.f32 %v3976, %v3976
    %v4016 = vmul.f32 %v3977, %v3977
    %v4017 = vmul.f32 %v3978, %v3978
    %v4018 = vmul.f32 %v3979, %v3979
    %v4019 = vmul.f32 %v3980, %v3980
    %v4020 = vmul.f32 %v3981, %v3981
    %v4021 = vmul.f32 %v3982, %v3982
    %v4022 = vmul.f32 %v3983, %v3983
    %v4023 = vmul.f32 %v3984, %v3984
    %v4024 = vmul.f32 %v3985, %v3985
    %v4025 = vmul.f32 %v3986, %v3986
    %v4026 = vmul.f32 %v3987, %v3987
    %v4027 = vmul.f32 %v3988, %v3988
    %v4028 = vmul.f32 %v3989, %v3989
    %v4029 = vmul.f32 %v3990, %v3990
    %v4030 = vadd.f32 %v4014, %v4015
    %v4031 = vadd.f32 %v4030, %v4016
    %v4032 = vadd.f32 %v4031, %v4017
    %v4033 = vadd.f32 %v4032, %v4018
    %v4034 = vadd.f32 %v4033, %v4019
    %v4035 = vadd.f32 %v4034, %v4020
    %v4036 = vadd.f32 %v4035, %v4021
    %v4037 = vadd.f32 %v4036, %v4022
    %v4038 = vadd.f32 %v4037, %v4023
    %v4039 = vadd.f32 %v4038, %v4024
    %v4040 = vadd.f32 %v4039, %v4025
    %v4041 = vadd.f32 %v4040, %v4026
    %v4042 = vadd.f32 %v4041, %v4027
    %v4043 = vadd.f32 %v4042, %v4028
    %v4044 = vadd.f32 %v4043, %v4029
    %v4045 = vrot.slane %v4044, 4
    %v4046 = vadd.f32 %v4044, %v4045
    %v4047 = vrot.slane %v4046, 2
    %v4048 = vadd.f32 %v4046, %v4047
    %v4049 = vrot.slane %v4048, 1
    %v4050 = vadd.f32 %v4048, %v4049
    %v4051 = vmul.f32 %v4050, %v4012
    %v4052 = vmul.f32 %v4013, %v4013
    %v4053 = vsub.f32 %v4051, %v4052
    %v4054 = vsub.f32 %v3975, %v4013
    %v4055 = vsub.f32 %v3976, %v4013
    %v4056 = vsub.f32 %v3977, %v4013
    %v4057 = vsub.f32 %v3978, %v4013
    %v4058 = vsub.f32 %v3979, %v4013
    %v4059 = vsub.f32 %v3980, %v4013
    %v4060 = vsub.f32 %v3981, %v4013
    %v4061 = vsub.f32 %v3982, %v4013
    %v4062 = vsub.f32 %v3983, %v4013
    %v4063 = vsub.f32 %v3984, %v4013
    %v4064 = vsub.f32 %v3985, %v4013
    %v4065 = vsub.f32 %v3986, %v4013
    %v4066 = vsub.f32 %v3987, %v4013
    %v4067 = vsub.f32 %v3988, %v4013
    %v4068 = vsub.f32 %v3989, %v4013
    %v4069 = vsub.f32 %v3990, %v4013
    %v4070 = vadd.f32 %v4053, 1e-05
    %v4071 = vrsqrt.pop %v4070
    %v4072 = vmul.f32 %v4054, %v4071
    %v4073 = vmul.f32 %v4055, %v4071
    %v4074 = vmul.f32 %v4056, %v4071
    %v4075 = vmul.f32 %v4057, %v4071
    %v4076 = vmul.f32 %v4058, %v4071
    %v4077 = vmul.f32 %v4059, %v4071
    %v4078 = vmul.f32 %v4060, %v4071
    %v4079 = vmul.f32 %v4061, %v4071
    %v4080 = vmul.f32 %v4062, %v4071
    %v4081 = vmul.f32 %v4063, %v4071
    %v4082 = vmul.f32 %v4064, %v4071
    %v4083 = vmul.f32 %v4065, %v4071
    %v4084 = vmul.f32 %v4066, %v4071
    %v4085 = vmul.f32 %v4067, %v4071
    %v4086 = vmul.f32 %v4068, %v4071
    %v4087 = vmul.f32 %v4069, %v4071
    %v4088 = vld [vmem:[#allocation6] sm:$0x1]
    %v4090 = vlaneseq
    %v4091 = vshrl.u32 %v4090, 7
    %v4092 = vsub.s32 0, %v4091
    %v4093 = vrot.slane %v4088, %v4092
    %v4095 = vmul.f32 %v4072, %v4093
    %v4096 = vmul.f32 %v4073, %v4093
    %v4097 = vmul.f32 %v4074, %v4093
    %v4098 = vmul.f32 %v4075, %v4093
    %v4099 = vmul.f32 %v4076, %v4093
    %v4100 = vmul.f32 %v4077, %v4093
    %v4101 = vmul.f32 %v4078, %v4093
    %v4102 = vmul.f32 %v4079, %v4093
    %v4103 = vmul.f32 %v4080, %v4093
    %v4104 = vmul.f32 %v4081, %v4093
    %v4105 = vmul.f32 %v4082, %v4093
    %v4106 = vmul.f32 %v4083, %v4093
    %v4107 = vmul.f32 %v4084, %v4093
    %v4108 = vmul.f32 %v4085, %v4093
    %v4109 = vmul.f32 %v4086, %v4093
    %v4110 = vmul.f32 %v4087, %v4093
    %v4111 = vld [vmem:[#allocation7] sm:$0x1]
    %v4113 = vlaneseq
    %v4114 = vshrl.u32 %v4113, 7
    %v4115 = vsub.s32 0, %v4114
    %v4116 = vrot.slane %v4111, %v4115
    %v4118 = vadd.f32 %v4095, %v4116
    %v4119 = vadd.f32 %v4096, %v4116
    %v4120 = vadd.f32 %v4097, %v4116
    %v4121 = vadd.f32 %v4098, %v4116
    %v4122 = vadd.f32 %v4099, %v4116
    %v4123 = vadd.f32 %v4100, %v4116
    %v4124 = vadd.f32 %v4101, %v4116
    %v4125 = vadd.f32 %v4102, %v4116
    %v4126 = vadd.f32 %v4103, %v4116
    %v4127 = vadd.f32 %v4104, %v4116
    %v4128 = vadd.f32 %v4105, %v4116
    %v4129 = vadd.f32 %v4106, %v4116
    %v4130 = vadd.f32 %v4107, %v4116
    %v4131 = vadd.f32 %v4108, %v4116
    %v4132 = vadd.f32 %v4109, %v4116
    %v4133 = vadd.f32 %v4110, %v4116
    %v4134 = vmax.f32 %v4118, 0.0
    %v4135 = vmax.f32 %v4119, 0.0
    %v4136 = vmax.f32 %v4120, 0.0
    %v4137 = vmax.f32 %v4121, 0.0
    %v4138 = vmax.f32 %v4122, 0.0
    %v4139 = vmax.f32 %v4123, 0.0
    %v4140 = vmax.f32 %v4124, 0.0
    %v4141 = vmax.f32 %v4125, 0.0
    %v4142 = vmax.f32 %v4126, 0.0
    %v4143 = vmax.f32 %v4127, 0.0
    %v4144 = vmax.f32 %v4128, 0.0
    %v4145 = vmax.f32 %v4129, 0.0
    %v4146 = vmax.f32 %v4130, 0.0
    %v4147 = vmax.f32 %v4131, 0.0
    %v4148 = vmax.f32 %v4132, 0.0
    %v4149 = vmax.f32 %v4133, 0.0
    %v4150 = vld [vmem:[#allocation9] sm:$0xff]
    %v4151 = vld [vmem:[#allocation9 + $0x8] sm:$0xff]
    %v4152 = vld [vmem:[#allocation9 + $0x10] sm:$0xff]
    %v4153 = vld [vmem:[#allocation9 + $0x18] sm:$0xff]
    %v4154 = vld [vmem:[#allocation9 + $0x20] sm:$0xff]
    %v4155 = vld [vmem:[#allocation9 + $0x28] sm:$0xff]
    %v4156 = vld [vmem:[#allocation9 + $0x30] sm:$0xff]
    %v4157 = vld [vmem:[#allocation9 + $0x38] sm:$0xff]
    %v4158 = vld [vmem:[#allocation9 + $0x40] sm:$0xff]
    %v4159 = vld [vmem:[#allocation9 + $0x48] sm:$0xff]
    %v4160 = vld [vmem:[#allocation9 + $0x50] sm:$0xff]
    %v4161 = vld [vmem:[#allocation9 + $0x58] sm:$0xff]
    %v4162 = vld [vmem:[#allocation9 + $0x60] sm:$0xff]
    %v4163 = vld [vmem:[#allocation9 + $0x68] sm:$0xff]
    %v4164 = vld [vmem:[#allocation9 + $0x70] sm:$0xff]
    %v4165 = vld [vmem:[#allocation9 + $0x78] sm:$0xff]
    %v4166 = vld [vmem:[#allocation9 + $0x80] sm:$0xff]
    %v4167 = vld [vmem:[#allocation9 + $0x88] sm:$0xff]
    %v4168 = vld [vmem:[#allocation9 + $0x90] sm:$0xff]
    %v4169 = vld [vmem:[#allocation9 + $0x98] sm:$0xff]
    %v4170 = vld [vmem:[#allocation9 + $0xa0] sm:$0xff]
    %v4171 = vld [vmem:[#allocation9 + $0xa8] sm:$0xff]
    %v4172 = vld [vmem:[#allocation9 + $0xb0] sm:$0xff]
    %v4173 = vld [vmem:[#allocation9 + $0xb8] sm:$0xff]
    %v4174 = vld [vmem:[#allocation9 + $0xc0] sm:$0xff]
    %v4175 = vld [vmem:[#allocation9 + $0xc8] sm:$0xff]
    %v4176 = vld [vmem:[#allocation9 + $0xd0] sm:$0xff]
    %v4177 = vld [vmem:[#allocation9 + $0xd8] sm:$0xff]
    %v4178 = vld [vmem:[#allocation9 + $0xe0] sm:$0xff]
    %v4179 = vld [vmem:[#allocation9 + $0xe8] sm:$0xff]
    %v4180 = vld [vmem:[#allocation9 + $0xf0] sm:$0xff]
    %v4181 = vld [vmem:[#allocation9 + $0xf8] sm:$0xff]
    %v4182 = vld [vmem:[#allocation9 + $0x100] sm:$0xff]
    %v4183 = vld [vmem:[#allocation9 + $0x108] sm:$0xff]
    %v4184 = vld [vmem:[#allocation9 + $0x110] sm:$0xff]
    %v4185 = vld [vmem:[#allocation9 + $0x118] sm:$0xff]
    %4186 = vmatprep.subr.mxu0 0.0
    %4187 = vmatpush1.msra.mxu0 %v4134
    %4188 = vmatprep.subr.mxu0 0.0
    %4189 = vmatpush1.msra.mxu0 %v4135
    %4190 = vmatprep.subr.mxu0 0.0
    %4191 = vmatpush1.msra.mxu0 %v4136
    %4192 = vmatprep.subr.mxu0 0.0
    %4193 = vmatpush1.msra.mxu0 %v4137
    %4194 = vmatprep.subr.mxu0 0.0
    %4195 = vmatpush1.msra.mxu0 %v4138
    %4196 = vmatprep.subr.mxu0 0.0
    %4197 = vmatpush1.msra.mxu0 %v4139
    %4198 = vmatprep.subr.mxu0 0.0
    %4199 = vmatpush1.msra.mxu0 %v4140
    %4200 = vmatprep.subr.mxu0 0.0
    %4201 = vmatpush1.msra.mxu0 %v4141
    %4202 = vmatprep.subr.mxu0 0.0
    %4203 = vmatpush1.msra.mxu0 %v4142
    %4204 = vmatprep.subr.mxu0 0.0
    %4205 = vmatpush1.msra.mxu0 %v4143
    %4206 = vmatprep.subr.mxu0 0.0
    %4207 = vmatpush1.msra.mxu0 %v4144
    %4208 = vmatprep.subr.mxu0 0.0
    %4209 = vmatpush1.msra.mxu0 %v4145
    %4210 = vmatprep.subr.mxu0 0.0
    %4211 = vmatpush1.msra.mxu0 %v4146
    %4212 = vmatprep.subr.mxu0 0.0
    %4213 = vmatpush1.msra.mxu0 %v4147
    %4214 = vmatprep.subr.mxu0 0.0
    %4215 = vmatpush1.msra.mxu0 %v4148
    %4216 = vmatprep.subr.mxu0 0.0
    %4217 = vmatpush1.msra.mxu0 %v4149
    %4218 = vmatprep.subr.mxu0 0.0
    %4219 = vmatpush1.msra.mxu0 0.0
    %4220 = vmatprep.subr.mxu0 0.0
    %4221 = vmatpush1.msra.mxu0 0.0
    %4222 = vmatprep.subr.mxu0 0.0
    %4223 = vmatpush1.msra.mxu0 0.0
    %4224 = vmatprep.subr.mxu0 0.0
    %4225 = vmatpush1.msra.mxu0 0.0
    %4226 = vmatprep.subr.mxu0 0.0
    %4227 = vmatpush1.msra.mxu0 0.0
    %4228 = vmatprep.subr.mxu0 0.0
    %4229 = vmatpush1.msra.mxu0 0.0
    %4230 = vmatprep.subr.mxu0 0.0
    %4231 = vmatpush1.msra.mxu0 0.0
    %4232 = vmatprep.subr.mxu0 0.0
    %4233 = vmatpush1.msra.mxu0 0.0
    %4234 = vmatprep.subr.mxu0 0.0
    %4235 = vmatpush1.msra.mxu0 0.0
    %4236 = vmatprep.subr.mxu0 0.0
    %4237 = vmatpush1.msra.mxu0 0.0
    %4238 = vmatprep.subr.mxu0 0.0
    %4239 = vmatpush1.msra.mxu0 0.0
    %4240 = vmatprep.subr.mxu0 0.0
    %4241 = vmatpush1.msra.mxu0 0.0
    %4242 = vmatprep.subr.mxu0 0.0
    %4243 = vmatpush1.msra.mxu0 0.0
    %4244 = vmatprep.subr.mxu0 0.0
    %4245 = vmatpush1.msra.mxu0 0.0
    %4246 = vmatprep.subr.mxu0 0.0
    %4247 = vmatpush1.msra.mxu0 0.0
    %4248 = vmatprep.subr.mxu0 0.0
    %4249 = vmatpush1.msra.mxu0 0.0
    %4250 = vmatprep.mubr.f32.mxu0 0.0
    %4251 = vmatmul.mubr.f32.gmra.mrb[0].mxu0 %v4150
    %v4252 = vpop.f32.mrb[0].mxu0
    %v4253 = vadd.f32 0.0, %v4252
    %v4254 = vpop.f32.mrb[0].mxu0
    %4255 = vmatprep.mubr.f32.mxu0 0.0
    %4256 = vmatmul.mubr.f32.gmra.mrb[0].mxu0 %v4151
    %v4257 = vpop.f32.mrb[0].mxu0
    %v4258 = vadd.f32 0.0, %v4257
    %v4259 = vpop.f32.mrb[0].mxu0
    %4260 = vmatprep.mubr.f32.mxu0 0.0
    %4261 = vmatmul.mubr.f32.gmra.mrb[0].mxu0 %v4152
    %v4262 = vpop.f32.mrb[0].mxu0
    %v4263 = vadd.f32 0.0, %v4262
    %v4264 = vpop.f32.mrb[0].mxu0
    %4265 = vmatprep.mubr.f32.mxu0 0.0
    %4266 = vmatmul.mubr.f32.gmra.mrb[0].mxu0 %v4153
    %v4267 = vpop.f32.mrb[0].mxu0
    %v4268 = vadd.f32 0.0, %v4267
    %v4269 = vpop.f32.mrb[0].mxu0
    %4270 = vmatprep.mubr.f32.mxu0 0.0
    %4271 = vmatmul.mubr.f32.gmra.mrb[0].mxu0 %v4154
    %v4272 = vpop.f32.mrb[0].mxu0
    %v4273 = vadd.f32 0.0, %v4272
    %v4274 = vpop.f32.mrb[0].mxu0
    %4275 = vmatprep.mubr.f32.mxu0 0.0
    %4276 = vmatmul.mubr.f32.gmra.mrb[0].mxu0 %v4155
    %v4277 = vpop.f32.mrb[0].mxu0
    %v4278 = vadd.f32 0.0, %v4277
    %v4279 = vpop.f32.mrb[0].mxu0
    %4280 = vmatprep.mubr.f32.mxu0 0.0
    %4281 = vmatmul.mubr.f32.gmra.mrb[0].mxu0 %v4156
    %v4282 = vpop.f32.mrb[0].mxu0
    %v4283 = vadd.f32 0.0, %v4282
    %v4284 = vpop.f32.mrb[0].mxu0
    %4285 = vmatprep.mubr.f32.mxu0 0.0
    %4286 = vmatmul.mubr.f32.gmra.mrb[0].mxu0 %v4157
    %v4287 = vpop.f32.mrb[0].mxu0
    %v4288 = vadd.f32 0.0, %v4287
    %v4289 = vpop.f32.mrb[0].mxu0
    %4290 = vmatprep.mubr.f32.mxu0 0.0
    %4291 = vmatmul.mubr.f32.gmra.mrb[0].mxu0 %v4158
    %v4292 = vpop.f32.mrb[0].mxu0
    %v4293 = vadd.f32 0.0, %v4292
    %v4294 = vpop.f32.mrb[0].mxu0
    %4295 = vmatprep.mubr.f32.mxu0 0.0
    %4296 = vmatmul.mubr.f32.gmra.mrb[0].mxu0 %v4159
    %v4297 = vpop.f32.mrb[0].mxu0
    %v4298 = vadd.f32 0.0, %v4297
    %v4299 = vpop.f32.mrb[0].mxu0
    %4300 = vmatprep.mubr.f32.mxu0 0.0
    %4301 = vmatmul.mubr.f32.gmra.mrb[0].mxu0 %v4160
    %v4302 = vpop.f32.mrb[0].mxu0
    %v4303 = vadd.f32 0.0, %v4302
    %v4304 = vpop.f32.mrb[0].mxu0
    %4305 = vmatprep.mubr.f32.mxu0 0.0
    %4306 = vmatmul.mubr.f32.gmra.mrb[0].mxu0 %v4161
    %v4307 = vpop.f32.mrb[0].mxu0
    %v4308 = vadd.f32 0.0, %v4307
    %v4309 = vpop.f32.mrb[0].mxu0
    %4310 = vmatprep.mubr.f32.mxu0 0.0
    %4311 = vmatmul.mubr.f32.gmra.mrb[0].mxu0 %v4162
    %v4312 = vpop.f32.mrb[0].mxu0
    %v4313 = vadd.f32 0.0, %v4312
    %v4314 = vpop.f32.mrb[0].mxu0
    %4315 = vmatprep.mubr.f32.mxu0 0.0
    %4316 = vmatmul.mubr.f32.gmra.mrb[0].mxu0 %v4163
    %v4317 = vpop.f32.mrb[0].mxu0
    %v4318 = vadd.f32 0.0, %v4317
    %v4319 = vpop.f32.mrb[0].mxu0
    %4320 = vmatprep.mubr.f32.mxu0 0.0
    %4321 = vmatmul.mubr.f32.gmra.mrb[0].mxu0 %v4164
    %v4322 = vpop.f32.mrb[0].mxu0
    %v4323 = vadd.f32 0.0, %v4322
    %v4324 = vpop.f32.mrb[0].mxu0
    %4325 = vmatprep.mubr.f32.mxu0 0.0
    %4326 = vmatmul.mubr.f32.gmra.mrb[0].mxu0 %v4165
    %v4327 = vpop.f32.mrb[0].mxu0
    %v4328 = vadd.f32 0.0, %v4327
    %v4329 = vpop.f32.mrb[0].mxu0
    %4330 = vmatprep.mubr.f32.mxu0 0.0
    %4331 = vmatmul.mubr.f32.gmra.mrb[0].mxu0 %v4166
    %v4332 = vpop.f32.mrb[0].mxu0
    %v4333 = vadd.f32 0.0, %v4332
    %v4334 = vpop.f32.mrb[0].mxu0
    %4335 = vmatprep.mubr.f32.mxu0 0.0
    %4336 = vmatmul.mubr.f32.gmra.mrb[0].mxu0 %v4167
    %v4337 = vpop.f32.mrb[0].mxu0
    %v4338 = vadd.f32 0.0, %v4337
    %v4339 = vpop.f32.mrb[0].mxu0
    %4340 = vmatprep.mubr.f32.mxu0 0.0
    %4341 = vmatmul.mubr.f32.gmra.mrb[0].mxu0 %v4168
    %v4342 = vpop.f32.mrb[0].mxu0
    %v4343 = vadd.f32 0.0, %v4342
    %v4344 = vpop.f32.mrb[0].mxu0
    %4345 = vmatprep.mubr.f32.mxu0 0.0
    %4346 = vmatmul.mubr.f32.gmra.mrb[0].mxu0 %v4169
    %v4347 = vpop.f32.mrb[0].mxu0
    %v4348 = vadd.f32 0.0, %v4347
    %v4349 = vpop.f32.mrb[0].mxu0
    %4350 = vmatprep.mubr.f32.mxu0 0.0
    %4351 = vmatmul.mubr.f32.gmra.mrb[0].mxu0 %v4170
    %v4352 = vpop.f32.mrb[0].mxu0
    %v4353 = vadd.f32 0.0, %v4352
    %v4354 = vpop.f32.mrb[0].mxu0
    %4355 = vmatprep.mubr.f32.mxu0 0.0
    %4356 = vmatmul.mubr.f32.gmra.mrb[0].mxu0 %v4171
    %v4357 = vpop.f32.mrb[0].mxu0
    %v4358 = vadd.f32 0.0, %v4357
    %v4359 = vpop.f32.mrb[0].mxu0
    %4360 = vmatprep.mubr.f32.mxu0 0.0
    %4361 = vmatmul.mubr.f32.gmra.mrb[0].mxu0 %v4172
    %v4362 = vpop.f32.mrb[0].mxu0
    %v4363 = vadd.f32 0.0, %v4362
    %v4364 = vpop.f32.mrb[0].mxu0
    %4365 = vmatprep.mubr.f32.mxu0 0.0
    %4366 = vmatmul.mubr.f32.gmra.mrb[0].mxu0 %v4173
    %v4367 = vpop.f32.mrb[0].mxu0
    %v4368 = vadd.f32 0.0, %v4367
    %v4369 = vpop.f32.mrb[0].mxu0
    %4370 = vmatprep.mubr.f32.mxu0 0.0
    %4371 = vmatmul.mubr.f32.gmra.mrb[0].mxu0 %v4174
    %v4372 = vpop.f32.mrb[0].mxu0
    %v4373 = vadd.f32 0.0, %v4372
    %v4374 = vpop.f32.mrb[0].mxu0
    %4375 = vmatprep.mubr.f32.mxu0 0.0
    %4376 = vmatmul.mubr.f32.gmra.mrb[0].mxu0 %v4175
    %v4377 = vpop.f32.mrb[0].mxu0
    %v4378 = vadd.f32 0.0, %v4377
    %v4379 = vpop.f32.mrb[0].mxu0
    %4380 = vmatprep.mubr.f32.mxu0 0.0
    %4381 = vmatmul.mubr.f32.gmra.mrb[0].mxu0 %v4176
    %v4382 = vpop.f32.mrb[0].mxu0
    %v4383 = vadd.f32 0.0, %v4382
    %v4384 = vpop.f32.mrb[0].mxu0
    %4385 = vmatprep.mubr.f32.mxu0 0.0
    %4386 = vmatmul.mubr.f32.gmra.mrb[0].mxu0 %v4177
    %v4387 = vpop.f32.mrb[0].mxu0
    %v4388 = vadd.f32 0.0, %v4387
    %v4389 = vpop.f32.mrb[0].mxu0
    %4390 = vmatprep.mubr.f32.mxu0 0.0
    %4391 = vmatmul.mubr.f32.gmra.mrb[0].mxu0 %v4178
    %v4392 = vpop.f32.mrb[0].mxu0
    %v4393 = vadd.f32 0.0, %v4392
    %v4394 = vpop.f32.mrb[0].mxu0
    %4395 = vmatprep.mubr.f32.mxu0 0.0
    %4396 = vmatmul.mubr.f32.gmra.mrb[0].mxu0 %v4179
    %v4397 = vpop.f32.mrb[0].mxu0
    %v4398 = vadd.f32 0.0, %v4397
    %v4399 = vpop.f32.mrb[0].mxu0
    %4400 = vmatprep.mubr.f32.mxu0 0.0
    %4401 = vmatmul.mubr.f32.gmra.mrb[0].mxu0 %v4180
    %v4402 = vpop.f32.mrb[0].mxu0
    %v4403 = vadd.f32 0.0, %v4402
    %v4404 = vpop.f32.mrb[0].mxu0
    %4405 = vmatprep.mubr.f32.mxu0 0.0
    %4406 = vmatmul.mubr.f32.gmra.mrb[0].mxu0 %v4181
    %v4407 = vpop.f32.mrb[0].mxu0
    %v4408 = vadd.f32 0.0, %v4407
    %v4409 = vpop.f32.mrb[0].mxu0
    %4410 = vmatprep.mubr.f32.mxu0 0.0
    %4411 = vmatmul.mubr.f32.gmra.mrb[0].mxu0 %v4182
    %v4412 = vpop.f32.mrb[0].mxu0
    %v4413 = vadd.f32 0.0, %v4412
    %v4414 = vpop.f32.mrb[0].mxu0
    %4415 = vmatprep.mubr.f32.mxu0 0.0
    %4416 = vmatmul.mubr.f32.gmra.mrb[0].mxu0 %v4183
    %v4417 = vpop.f32.mrb[0].mxu0
    %v4418 = vadd.f32 0.0, %v4417
    %v4419 = vpop.f32.mrb[0].mxu0
    %4420 = vmatprep.mubr.f32.mxu0 0.0
    %4421 = vmatmul.mubr.f32.gmra.mrb[0].mxu0 %v4184
    %v4422 = vpop.f32.mrb[0].mxu0
    %v4423 = vadd.f32 0.0, %v4422
    %v4424 = vpop.f32.mrb[0].mxu0
    %4425 = vmatprep.mubr.f32.mxu0 0.0
    %4426 = vmatmul.mubr.f32.gmra.mrb[0].mxu0 %v4185
    %v4427 = vpop.f32.mrb[0].mxu0
    %v4428 = vadd.f32 0.0, %v4427
    %v4429 = vpop.f32.mrb[0].mxu0
    %4430 = vdwg.mxu0
    %v4431 = vld [vmem:[#allocation10] sm:$0xff]
    %v4432 = vld [vmem:[#allocation10 + $0x8] sm:$0xff]
    %v4433 = vld [vmem:[#allocation10 + $0x10] sm:$0xff]
    %v4434 = vld [vmem:[#allocation10 + $0x18] sm:$0xff]
    %v4435 = vld [vmem:[#allocation10 + $0x20] sm:$0xff]
    %v4436 = vld [vmem:[#allocation10 + $0x28] sm:$0xff]
    %v4437 = vld [vmem:[#allocation10 + $0x30] sm:$0xff]
    %v4438 = vld [vmem:[#allocation10 + $0x38] sm:$0xff]
    %v4439 = vld [vmem:[#allocation10 + $0x40] sm:$0xff]
    %v4440 = vld [vmem:[#allocation10 + $0x48] sm:$0xff]
    %v4441 = vld [vmem:[#allocation10 + $0x50] sm:$0xff]
    %v4442 = vld [vmem:[#allocation10 + $0x58] sm:$0xff]
    %v4443 = vld [vmem:[#allocation10 + $0x60] sm:$0xff]
    %v4444 = vld [vmem:[#allocation10 + $0x68] sm:$0xff]
    %v4445 = vld [vmem:[#allocation10 + $0x70] sm:$0xff]
    %v4446 = vld [vmem:[#allocation10 + $0x78] sm:$0xff]
    %s4447 = scalar_lea.vmem [#allocation10], 128
    %v4448 = vld [vmem:[%s4447] sm:$0xff]
    %v4449 = vld [vmem:[%s4447 + $0x8] sm:$0xff]
    %v4450 = vld [vmem:[%s4447 + $0x10] sm:$0xff]
    %v4451 = vld [vmem:[%s4447 + $0x18] sm:$0xff]
    %v4452 = vld [vmem:[%s4447 + $0x20] sm:$0xff]
    %v4453 = vld [vmem:[%s4447 + $0x28] sm:$0xff]
    %v4454 = vld [vmem:[%s4447 + $0x30] sm:$0xff]
    %v4455 = vld [vmem:[%s4447 + $0x38] sm:$0xff]
    %v4456 = vld [vmem:[%s4447 + $0x40] sm:$0xff]
    %v4457 = vld [vmem:[%s4447 + $0x48] sm:$0xff]
    %v4458 = vld [vmem:[%s4447 + $0x50] sm:$0xff]
    %v4459 = vld [vmem:[%s4447 + $0x58] sm:$0xff]
    %v4460 = vld [vmem:[%s4447 + $0x60] sm:$0xff]
    %v4461 = vld [vmem:[%s4447 + $0x68] sm:$0xff]
    %v4462 = vld [vmem:[%s4447 + $0x70] sm:$0xff]
    %v4463 = vld [vmem:[%s4447 + $0x78] sm:$0xff]
    %4464 = vmatprep.subr.mxu0 0.0
    %4465 = vmatpush1.msra.mxu0 %v4448
    %4466 = vmatprep.subr.mxu0 0.0
    %4467 = vmatpush1.msra.mxu0 %v4449
    %4468 = vmatprep.subr.mxu0 0.0
    %4469 = vmatpush1.msra.mxu0 %v4450
    %4470 = vmatprep.subr.mxu0 0.0
    %4471 = vmatpush1.msra.mxu0 %v4451
    %4472 = vmatprep.subr.mxu0 0.0
    %4473 = vmatpush1.msra.mxu0 %v4452
    %4474 = vmatprep.subr.mxu0 0.0
    %4475 = vmatpush1.msra.mxu0 %v4453
    %4476 = vmatprep.subr.mxu0 0.0
    %4477 = vmatpush1.msra.mxu0 %v4454
    %4478 = vmatprep.subr.mxu0 0.0
    %4479 = vmatpush1.msra.mxu0 %v4455
    %4480 = vmatprep.subr.mxu0 0.0
    %4481 = vmatpush1.msra.mxu0 %v4456
    %4482 = vmatprep.subr.mxu0 0.0
    %4483 = vmatpush1.msra.mxu0 %v4457
    %4484 = vmatprep.subr.mxu0 0.0
    %4485 = vmatpush1.msra.mxu0 %v4458
    %4486 = vmatprep.subr.mxu0 0.0
    %4487 = vmatpush1.msra.mxu0 %v4459
    %4488 = vmatprep.subr.mxu0 0.0
    %4489 = vmatpush1.msra.mxu0 %v4460
    %4490 = vmatprep.subr.mxu0 0.0
    %4491 = vmatpush1.msra.mxu0 %v4461
    %4492 = vmatprep.subr.mxu0 0.0
    %4493 = vmatpush1.msra.mxu0 %v4462
    %4494 = vmatprep.subr.mxu0 0.0
    %4495 = vmatpush1.msra.mxu0 %v4463
    %4496 = vmatprep.subr.mxu0 0.0
    %4497 = vmatpush1.msra.mxu0 0.0
    %4498 = vmatprep.subr.mxu0 0.0
    %4499 = vmatpush1.msra.mxu0 0.0
    %4500 = vmatprep.subr.mxu0 0.0
    %4501 = vmatpush1.msra.mxu0 0.0
    %4502 = vmatprep.subr.mxu0 0.0
    %4503 = vmatpush1.msra.mxu0 0.0
    %4504 = vmatprep.subr.mxu0 0.0
    %4505 = vmatpush1.msra.mxu0 0.0
    %4506 = vmatprep.subr.mxu0 0.0
    %4507 = vmatpush1.msra.mxu0 0.0
    %4508 = vmatprep.subr.mxu0 0.0
    %4509 = vmatpush1.msra.mxu0 0.0
    %4510 = vmatprep.subr.mxu0 0.0
    %4511 = vmatpush1.msra.mxu0 0.0
    %4512 = vmatprep.subr.mxu0 0.0
    %4513 = vmatpush1.msra.mxu0 0.0
    %4514 = vmatprep.subr.mxu0 0.0
    %4515 = vmatpush1.msra.mxu0 0.0
    %4516 = vmatprep.subr.mxu0 0.0
    %4517 = vmatpush1.msra.mxu0 0.0
    %4518 = vmatprep.subr.mxu0 0.0
    %4519 = vmatpush1.msra.mxu0 0.0
    %4520 = vmatprep.subr.mxu0 0.0
    %4521 = vmatpush1.msra.mxu0 0.0
    %4522 = vmatprep.subr.mxu0 0.0
    %4523 = vmatpush1.msra.mxu0 0.0
    %4524 = vmatprep.subr.mxu0 0.0
    %4525 = vmatpush1.msra.mxu0 0.0
    %4526 = vmatprep.subr.mxu0 0.0
    %4527 = vmatpush1.msra.mxu0 0.0
    %4528 = vmatprep.mubr.f32.mxu0 0.0
    %4529 = vmatmul.mubr.f32.gmra.mrb[0].mxu0 %v4273
    %v4530 = vpop.f32.mrb[0].mxu0
    %v4531 = vadd.f32 0.0, %v4530
    %v4532 = vpop.f32.mrb[0].mxu0
    %4533 = vmatprep.mubr.f32.mxu0 0.0
    %4534 = vmatmul.mubr.f32.gmra.mrb[0].mxu0 %v4278
    %v4535 = vpop.f32.mrb[0].mxu0
    %v4536 = vadd.f32 0.0, %v4535
    %v4537 = vpop.f32.mrb[0].mxu0
    %4538 = vmatprep.mubr.f32.mxu0 0.0
    %4539 = vmatmul.mubr.f32.gmra.mrb[0].mxu0 %v4283
    %v4540 = vpop.f32.mrb[0].mxu0
    %v4541 = vadd.f32 0.0, %v4540
    %v4542 = vpop.f32.mrb[0].mxu0
    %4543 = vmatprep.mubr.f32.mxu0 0.0
    %4544 = vmatmul.mubr.f32.gmra.mrb[0].mxu0 %v4288
    %v4545 = vpop.f32.mrb[0].mxu0
    %v4546 = vadd.f32 0.0, %v4545
    %v4547 = vpop.f32.mrb[0].mxu0
    %4548 = vdwg.mxu0
    %4549 = vmatprep.subr.mxu0 0.0
    %4550 = vmatpush1.msra.mxu0 %v4431
    %4551 = vmatprep.subr.mxu0 0.0
    %4552 = vmatpush1.msra.mxu0 %v4432
    %4553 = vmatprep.subr.mxu0 0.0
    %4554 = vmatpush1.msra.mxu0 %v4433
    %4555 = vmatprep.subr.mxu0 0.0
    %4556 = vmatpush1.msra.mxu0 %v4434
    %4557 = vmatprep.subr.mxu0 0.0
    %4558 = vmatpush1.msra.mxu0 %v4435
    %4559 = vmatprep.subr.mxu0 0.0
    %4560 = vmatpush1.msra.mxu0 %v4436
    %4561 = vmatprep.subr.mxu0 0.0
    %4562 = vmatpush1.msra.mxu0 %v4437
    %4563 = vmatprep.subr.mxu0 0.0
    %4564 = vmatpush1.msra.mxu0 %v4438
    %4565 = vmatprep.subr.mxu0 0.0
    %4566 = vmatpush1.msra.mxu0 %v4439
    %4567 = vmatprep.subr.mxu0 0.0
    %4568 = vmatpush1.msra.mxu0 %v4440
    %4569 = vmatprep.subr.mxu0 0.0
    %4570 = vmatpush1.msra.mxu0 %v4441
    %4571 = vmatprep.subr.mxu0 0.0
    %4572 = vmatpush1.msra.mxu0 %v4442
    %4573 = vmatprep.subr.mxu0 0.0
    %4574 = vmatpush1.msra.mxu0 %v4443
    %4575 = vmatprep.subr.mxu0 0.0
    %4576 = vmatpush1.msra.mxu0 %v4444
    %4577 = vmatprep.subr.mxu0 0.0
    %4578 = vmatpush1.msra.mxu0 %v4445
    %4579 = vmatprep.subr.mxu0 0.0
    %4580 = vmatpush1.msra.mxu0 %v4446
    %4581 = vmatprep.subr.mxu0 0.0
    %4582 = vmatpush1.msra.mxu0 0.0
    %4583 = vmatprep.subr.mxu0 0.0
    %4584 = vmatpush1.msra.mxu0 0.0
    %4585 = vmatprep.subr.mxu0 0.0
    %4586 = vmatpush1.msra.mxu0 0.0
    %4587 = vmatprep.subr.mxu0 0.0
    %4588 = vmatpush1.msra.mxu0 0.0
    %4589 = vmatprep.subr.mxu0 0.0
    %4590 = vmatpush1.msra.mxu0 0.0
    %4591 = vmatprep.subr.mxu0 0.0
    %4592 = vmatpush1.msra.mxu0 0.0
    %4593 = vmatprep.subr.mxu0 0.0
    %4594 = vmatpush1.msra.mxu0 0.0
    %4595 = vmatprep.subr.mxu0 0.0
    %4596 = vmatpush1.msra.mxu0 0.0
    %4597 = vmatprep.subr.mxu0 0.0
    %4598 = vmatpush1.msra.mxu0 0.0
    %4599 = vmatprep.subr.mxu0 0.0
    %4600 = vmatpush1.msra.mxu0 0.0
    %4601 = vmatprep.subr.mxu0 0.0
    %4602 = vmatpush1.msra.mxu0 0.0
    %4603 = vmatprep.subr.mxu0 0.0
    %4604 = vmatpush1.msra.mxu0 0.0
    %4605 = vmatprep.subr.mxu0 0.0
    %4606 = vmatpush1.msra.mxu0 0.0
    %4607 = vmatprep.subr.mxu0 0.0
    %4608 = vmatpush1.msra.mxu0 0.0
    %4609 = vmatprep.subr.mxu0 0.0
    %4610 = vmatpush1.msra.mxu0 0.0
    %4611 = vmatprep.subr.mxu0 0.0
    %4612 = vmatpush1.msra.mxu0 0.0
    %4613 = vmatprep.mubr.f32.mxu0 0.0
    %4614 = vmatmul.mubr.f32.gmra.mrb[0].mxu0 %v4253
    %v4615 = vpop.f32.mrb[0].mxu0
    %v4616 = vadd.f32 %v4531, %v4615
    %v4617 = vpop.f32.mrb[0].mxu0
    %4618 = vmatprep.mubr.f32.mxu0 0.0
    %4619 = vmatmul.mubr.f32.gmra.mrb[0].mxu0 %v4258
    %v4620 = vpop.f32.mrb[0].mxu0
    %v4621 = vadd.f32 %v4536, %v4620
    %v4622 = vpop.f32.mrb[0].mxu0
    %4623 = vmatprep.mubr.f32.mxu0 0.0
    %4624 = vmatmul.mubr.f32.gmra.mrb[0].mxu0 %v4263
    %v4625 = vpop.f32.mrb[0].mxu0
    %v4626 = vadd.f32 %v4541, %v4625
    %v4627 = vpop.f32.mrb[0].mxu0
    %4628 = vmatprep.mubr.f32.mxu0 0.0
    %4629 = vmatmul.mubr.f32.gmra.mrb[0].mxu0 %v4268
    %v4630 = vpop.f32.mrb[0].mxu0
    %v4631 = vadd.f32 %v4546, %v4630
    %v4632 = vpop.f32.mrb[0].mxu0
    %4633 = vdwg.mxu0
    %s4634 = scalar_lea.vmem [#allocation10], 256
    %v4635 = vld [vmem:[%s4634] sm:$0xff]
    %v4636 = vld [vmem:[%s4634 + $0x8] sm:$0xff]
    %v4637 = vld [vmem:[%s4634 + $0x10] sm:$0xff]
    %v4638 = vld [vmem:[%s4634 + $0x18] sm:$0xff]
    %v4639 = vld [vmem:[%s4634 + $0x20] sm:$0xff]
    %v4640 = vld [vmem:[%s4634 + $0x28] sm:$0xff]
    %v4641 = vld [vmem:[%s4634 + $0x30] sm:$0xff]
    %v4642 = vld [vmem:[%s4634 + $0x38] sm:$0xff]
    %v4643 = vld [vmem:[%s4634 + $0x40] sm:$0xff]
    %v4644 = vld [vmem:[%s4634 + $0x48] sm:$0xff]
    %v4645 = vld [vmem:[%s4634 + $0x50] sm:$0xff]
    %v4646 = vld [vmem:[%s4634 + $0x58] sm:$0xff]
    %v4647 = vld [vmem:[%s4634 + $0x60] sm:$0xff]
    %v4648 = vld [vmem:[%s4634 + $0x68] sm:$0xff]
    %v4649 = vld [vmem:[%s4634 + $0x70] sm:$0xff]
    %v4650 = vld [vmem:[%s4634 + $0x78] sm:$0xff]
    %4651 = vmatprep.subr.mxu0 0.0
    %4652 = vmatpush1.msra.mxu0 %v4635
    %4653 = vmatprep.subr.mxu0 0.0
    %4654 = vmatpush1.msra.mxu0 %v4636
    %4655 = vmatprep.subr.mxu0 0.0
    %4656 = vmatpush1.msra.mxu0 %v4637
    %4657 = vmatprep.subr.mxu0 0.0
    %4658 = vmatpush1.msra.mxu0 %v4638
    %4659 = vmatprep.subr.mxu0 0.0
    %4660 = vmatpush1.msra.mxu0 %v4639
    %4661 = vmatprep.subr.mxu0 0.0
    %4662 = vmatpush1.msra.mxu0 %v4640
    %4663 = vmatprep.subr.mxu0 0.0
    %4664 = vmatpush1.msra.mxu0 %v4641
    %4665 = vmatprep.subr.mxu0 0.0
    %4666 = vmatpush1.msra.mxu0 %v4642
    %4667 = vmatprep.subr.mxu0 0.0
    %4668 = vmatpush1.msra.mxu0 %v4643
    %4669 = vmatprep.subr.mxu0 0.0
    %4670 = vmatpush1.msra.mxu0 %v4644
    %4671 = vmatprep.subr.mxu0 0.0
    %4672 = vmatpush1.msra.mxu0 %v4645
    %4673 = vmatprep.subr.mxu0 0.0
    %4674 = vmatpush1.msra.mxu0 %v4646
    %4675 = vmatprep.subr.mxu0 0.0
    %4676 = vmatpush1.msra.mxu0 %v4647
    %4677 = vmatprep.subr.mxu0 0.0
    %4678 = vmatpush1.msra.mxu0 %v4648
    %4679 = vmatprep.subr.mxu0 0.0
    %4680 = vmatpush1.msra.mxu0 %v4649
    %4681 = vmatprep.subr.mxu0 0.0
    %4682 = vmatpush1.msra.mxu0 %v4650
    %4683 = vmatprep.subr.mxu0 0.0
    %4684 = vmatpush1.msra.mxu0 0.0
    %4685 = vmatprep.subr.mxu0 0.0
    %4686 = vmatpush1.msra.mxu0 0.0
    %4687 = vmatprep.subr.mxu0 0.0
    %4688 = vmatpush1.msra.mxu0 0.0
    %4689 = vmatprep.subr.mxu0 0.0
    %4690 = vmatpush1.msra.mxu0 0.0
    %4691 = vmatprep.subr.mxu0 0.0
    %4692 = vmatpush1.msra.mxu0 0.0
    %4693 = vmatprep.subr.mxu0 0.0
    %4694 = vmatpush1.msra.mxu0 0.0
    %4695 = vmatprep.subr.mxu0 0.0
    %4696 = vmatpush1.msra.mxu0 0.0
    %4697 = vmatprep.subr.mxu0 0.0
    %4698 = vmatpush1.msra.mxu0 0.0
    %4699 = vmatprep.subr.mxu0 0.0
    %4700 = vmatpush1.msra.mxu0 0.0
    %4701 = vmatprep.subr.mxu0 0.0
    %4702 = vmatpush1.msra.mxu0 0.0
    %4703 = vmatprep.subr.mxu0 0.0
    %4704 = vmatpush1.msra.mxu0 0.0
    %4705 = vmatprep.subr.mxu0 0.0
    %4706 = vmatpush1.msra.mxu0 0.0
    %4707 = vmatprep.subr.mxu0 0.0
    %4708 = vmatpush1.msra.mxu0 0.0
    %4709 = vmatprep.subr.mxu0 0.0
    %4710 = vmatpush1.msra.mxu0 0.0
    %4711 = vmatprep.subr.mxu0 0.0
    %4712 = vmatpush1.msra.mxu0 0.0
    %4713 = vmatprep.subr.mxu0 0.0
    %4714 = vmatpush1.msra.mxu0 0.0
    %4715 = vmatprep.mubr.f32.mxu0 0.0
    %4716 = vmatmul.mubr.f32.gmra.mrb[0].mxu0 %v4293
    %v4717 = vpop.f32.mrb[0].mxu0
    %v4718 = vadd.f32 0.0, %v4717
    %v4719 = vpop.f32.mrb[0].mxu0
    %4720 = vmatprep.mubr.f32.mxu0 0.0
    %4721 = vmatmul.mubr.f32.gmra.mrb[0].mxu0 %v4298
    %v4722 = vpop.f32.mrb[0].mxu0
    %v4723 = vadd.f32 0.0, %v4722
    %v4724 = vpop.f32.mrb[0].mxu0
    %4725 = vmatprep.mubr.f32.mxu0 0.0
    %4726 = vmatmul.mubr.f32.gmra.mrb[0].mxu0 %v4303
    %v4727 = vpop.f32.mrb[0].mxu0
    %v4728 = vadd.f32 0.0, %v4727
    %v4729 = vpop.f32.mrb[0].mxu0
    %4730 = vmatprep.mubr.f32.mxu0 0.0
    %4731 = vmatmul.mubr.f32.gmra.mrb[0].mxu0 %v4308
    %v4732 = vpop.f32.mrb[0].mxu0
    %v4733 = vadd.f32 0.0, %v4732
    %v4734 = vpop.f32.mrb[0].mxu0
    %4735 = vdwg.mxu0
    %v4736 = vadd.f32 %v4616, %v4718
    %v4737 = vadd.f32 %v4621, %v4723
    %v4738 = vadd.f32 %v4626, %v4728
    %v4739 = vadd.f32 %v4631, %v4733
    %s4740 = scalar_lea.vmem [#allocation10], 384
    %v4741 = vld [vmem:[%s4740] sm:$0xff]
    %v4742 = vld [vmem:[%s4740 + $0x8] sm:$0xff]
    %v4743 = vld [vmem:[%s4740 + $0x10] sm:$0xff]
    %v4744 = vld [vmem:[%s4740 + $0x18] sm:$0xff]
    %v4745 = vld [vmem:[%s4740 + $0x20] sm:$0xff]
    %v4746 = vld [vmem:[%s4740 + $0x28] sm:$0xff]
    %v4747 = vld [vmem:[%s4740 + $0x30] sm:$0xff]
    %v4748 = vld [vmem:[%s4740 + $0x38] sm:$0xff]
    %v4749 = vld [vmem:[%s4740 + $0x40] sm:$0xff]
    %v4750 = vld [vmem:[%s4740 + $0x48] sm:$0xff]
    %v4751 = vld [vmem:[%s4740 + $0x50] sm:$0xff]
    %v4752 = vld [vmem:[%s4740 + $0x58] sm:$0xff]
    %v4753 = vld [vmem:[%s4740 + $0x60] sm:$0xff]
    %v4754 = vld [vmem:[%s4740 + $0x68] sm:$0xff]
    %v4755 = vld [vmem:[%s4740 + $0x70] sm:$0xff]
    %v4756 = vld [vmem:[%s4740 + $0x78] sm:$0xff]
    %4757 = vmatprep.subr.mxu0 0.0
    %4758 = vmatpush1.msra.mxu0 %v4741
    %4759 = vmatprep.subr.mxu0 0.0
    %4760 = vmatpush1.msra.mxu0 %v4742
    %4761 = vmatprep.subr.mxu0 0.0
    %4762 = vmatpush1.msra.mxu0 %v4743
    %4763 = vmatprep.subr.mxu0 0.0
    %4764 = vmatpush1.msra.mxu0 %v4744
    %4765 = vmatprep.subr.mxu0 0.0
    %4766 = vmatpush1.msra.mxu0 %v4745
    %4767 = vmatprep.subr.mxu0 0.0
    %4768 = vmatpush1.msra.mxu0 %v4746
    %4769 = vmatprep.subr.mxu0 0.0
    %4770 = vmatpush1.msra.mxu0 %v4747
    %4771 = vmatprep.subr.mxu0 0.0
    %4772 = vmatpush1.msra.mxu0 %v4748
    %4773 = vmatprep.subr.mxu0 0.0
    %4774 = vmatpush1.msra.mxu0 %v4749
    %4775 = vmatprep.subr.mxu0 0.0
    %4776 = vmatpush1.msra.mxu0 %v4750
    %4777 = vmatprep.subr.mxu0 0.0
    %4778 = vmatpush1.msra.mxu0 %v4751
    %4779 = vmatprep.subr.mxu0 0.0
    %4780 = vmatpush1.msra.mxu0 %v4752
    %4781 = vmatprep.subr.mxu0 0.0
    %4782 = vmatpush1.msra.mxu0 %v4753
    %4783 = vmatprep.subr.mxu0 0.0
    %4784 = vmatpush1.msra.mxu0 %v4754
    %4785 = vmatprep.subr.mxu0 0.0
    %4786 = vmatpush1.msra.mxu0 %v4755
    %4787 = vmatprep.subr.mxu0 0.0
    %4788 = vmatpush1.msra.mxu0 %v4756
    %4789 = vmatprep.subr.mxu0 0.0
    %4790 = vmatpush1.msra.mxu0 0.0
    %4791 = vmatprep.subr.mxu0 0.0
    %4792 = vmatpush1.msra.mxu0 0.0
    %4793 = vmatprep.subr.mxu0 0.0
    %4794 = vmatpush1.msra.mxu0 0.0
    %4795 = vmatprep.subr.mxu0 0.0
    %4796 = vmatpush1.msra.mxu0 0.0
    %4797 = vmatprep.subr.mxu0 0.0
    %4798 = vmatpush1.msra.mxu0 0.0
    %4799 = vmatprep.subr.mxu0 0.0
    %4800 = vmatpush1.msra.mxu0 0.0
    %4801 = vmatprep.subr.mxu0 0.0
    %4802 = vmatpush1.msra.mxu0 0.0
    %4803 = vmatprep.subr.mxu0 0.0
    %4804 = vmatpush1.msra.mxu0 0.0
    %4805 = vmatprep.subr.mxu0 0.0
    %4806 = vmatpush1.msra.mxu0 0.0
    %4807 = vmatprep.subr.mxu0 0.0
    %4808 = vmatpush1.msra.mxu0 0.0
    %4809 = vmatprep.subr.mxu0 0.0
    %4810 = vmatpush1.msra.mxu0 0.0
    %4811 = vmatprep.subr.mxu0 0.0
    %4812 = vmatpush1.msra.mxu0 0.0
    %4813 = vmatprep.subr.mxu0 0.0
    %4814 = vmatpush1.msra.mxu0 0.0
    %4815 = vmatprep.subr.mxu0 0.0
    %4816 = vmatpush1.msra.mxu0 0.0
    %4817 = vmatprep.subr.mxu0 0.0
    %4818 = vmatpush1.msra.mxu0 0.0
    %4819 = vmatprep.subr.mxu0 0.0
    %4820 = vmatpush1.msra.mxu0 0.0
    %4821 = vmatprep.mubr.f32.mxu0 0.0
    %4822 = vmatmul.mubr.f32.gmra.mrb[0].mxu0 %v4313
    %v4823 = vpop.f32.mrb[0].mxu0
    %v4824 = vadd.f32 0.0, %v4823
    %v4825 = vpop.f32.mrb[0].mxu0
    %4826 = vmatprep.mubr.f32.mxu0 0.0
    %4827 = vmatmul.mubr.f32.gmra.mrb[0].mxu0 %v4318
    %v4828 = vpop.f32.mrb[0].mxu0
    %v4829 = vadd.f32 0.0, %v4828
    %v4830 = vpop.f32.mrb[0].mxu0
    %4831 = vmatprep.mubr.f32.mxu0 0.0
    %4832 = vmatmul.mubr.f32.gmra.mrb[0].mxu0 %v4323
    %v4833 = vpop.f32.mrb[0].mxu0
    %v4834 = vadd.f32 0.0, %v4833
    %v4835 = vpop.f32.mrb[0].mxu0
    %4836 = vmatprep.mubr.f32.mxu0 0.0
    %4837 = vmatmul.mubr.f32.gmra.mrb[0].mxu0 %v4328
    %v4838 = vpop.f32.mrb[0].mxu0
    %v4839 = vadd.f32 0.0, %v4838
    %v4840 = vpop.f32.mrb[0].mxu0
    %4841 = vdwg.mxu0
    %v4842 = vadd.f32 %v4736, %v4824
    %v4843 = vadd.f32 %v4737, %v4829
    %v4844 = vadd.f32 %v4738, %v4834
    %v4845 = vadd.f32 %v4739, %v4839
    %s4846 = scalar_lea.vmem [#allocation10], 512
    %v4847 = vld [vmem:[%s4846] sm:$0xff]
    %v4848 = vld [vmem:[%s4846 + $0x8] sm:$0xff]
    %v4849 = vld [vmem:[%s4846 + $0x10] sm:$0xff]
    %v4850 = vld [vmem:[%s4846 + $0x18] sm:$0xff]
    %v4851 = vld [vmem:[%s4846 + $0x20] sm:$0xff]
    %v4852 = vld [vmem:[%s4846 + $0x28] sm:$0xff]
    %v4853 = vld [vmem:[%s4846 + $0x30] sm:$0xff]
    %v4854 = vld [vmem:[%s4846 + $0x38] sm:$0xff]
    %v4855 = vld [vmem:[%s4846 + $0x40] sm:$0xff]
    %v4856 = vld [vmem:[%s4846 + $0x48] sm:$0xff]
    %v4857 = vld [vmem:[%s4846 + $0x50] sm:$0xff]
    %v4858 = vld [vmem:[%s4846 + $0x58] sm:$0xff]
    %v4859 = vld [vmem:[%s4846 + $0x60] sm:$0xff]
    %v4860 = vld [vmem:[%s4846 + $0x68] sm:$0xff]
    %v4861 = vld [vmem:[%s4846 + $0x70] sm:$0xff]
    %v4862 = vld [vmem:[%s4846 + $0x78] sm:$0xff]
    %4863 = vmatprep.subr.mxu0 0.0
    %4864 = vmatpush1.msra.mxu0 %v4847
    %4865 = vmatprep.subr.mxu0 0.0
    %4866 = vmatpush1.msra.mxu0 %v4848
    %4867 = vmatprep.subr.mxu0 0.0
    %4868 = vmatpush1.msra.mxu0 %v4849
    %4869 = vmatprep.subr.mxu0 0.0
    %4870 = vmatpush1.msra.mxu0 %v4850
    %4871 = vmatprep.subr.mxu0 0.0
    %4872 = vmatpush1.msra.mxu0 %v4851
    %4873 = vmatprep.subr.mxu0 0.0
    %4874 = vmatpush1.msra.mxu0 %v4852
    %4875 = vmatprep.subr.mxu0 0.0
    %4876 = vmatpush1.msra.mxu0 %v4853
    %4877 = vmatprep.subr.mxu0 0.0
    %4878 = vmatpush1.msra.mxu0 %v4854
    %4879 = vmatprep.subr.mxu0 0.0
    %4880 = vmatpush1.msra.mxu0 %v4855
    %4881 = vmatprep.subr.mxu0 0.0
    %4882 = vmatpush1.msra.mxu0 %v4856
    %4883 = vmatprep.subr.mxu0 0.0
    %4884 = vmatpush1.msra.mxu0 %v4857
    %4885 = vmatprep.subr.mxu0 0.0
    %4886 = vmatpush1.msra.mxu0 %v4858
    %4887 = vmatprep.subr.mxu0 0.0
    %4888 = vmatpush1.msra.mxu0 %v4859
    %4889 = vmatprep.subr.mxu0 0.0
    %4890 = vmatpush1.msra.mxu0 %v4860
    %4891 = vmatprep.subr.mxu0 0.0
    %4892 = vmatpush1.msra.mxu0 %v4861
    %4893 = vmatprep.subr.mxu0 0.0
    %4894 = vmatpush1.msra.mxu0 %v4862
    %4895 = vmatprep.subr.mxu0 0.0
    %4896 = vmatpush1.msra.mxu0 0.0
    %4897 = vmatprep.subr.mxu0 0.0
    %4898 = vmatpush1.msra.mxu0 0.0
    %4899 = vmatprep.subr.mxu0 0.0
    %4900 = vmatpush1.msra.mxu0 0.0
    %4901 = vmatprep.subr.mxu0 0.0
    %4902 = vmatpush1.msra.mxu0 0.0
    %4903 = vmatprep.subr.mxu0 0.0
    %4904 = vmatpush1.msra.mxu0 0.0
    %4905 = vmatprep.subr.mxu0 0.0
    %4906 = vmatpush1.msra.mxu0 0.0
    %4907 = vmatprep.subr.mxu0 0.0
    %4908 = vmatpush1.msra.mxu0 0.0
    %4909 = vmatprep.subr.mxu0 0.0
    %4910 = vmatpush1.msra.mxu0 0.0
    %4911 = vmatprep.subr.mxu0 0.0
    %4912 = vmatpush1.msra.mxu0 0.0
    %4913 = vmatprep.subr.mxu0 0.0
    %4914 = vmatpush1.msra.mxu0 0.0
    %4915 = vmatprep.subr.mxu0 0.0
    %4916 = vmatpush1.msra.mxu0 0.0
    %4917 = vmatprep.subr.mxu0 0.0
    %4918 = vmatpush1.msra.mxu0 0.0
    %4919 = vmatprep.subr.mxu0 0.0
    %4920 = vmatpush1.msra.mxu0 0.0
    %4921 = vmatprep.subr.mxu0 0.0
    %4922 = vmatpush1.msra.mxu0 0.0
    %4923 = vmatprep.subr.mxu0 0.0
    %4924 = vmatpush1.msra.mxu0 0.0
    %4925 = vmatprep.subr.mxu0 0.0
    %4926 = vmatpush1.msra.mxu0 0.0
    %4927 = vmatprep.mubr.f32.mxu0 0.0
    %4928 = vmatmul.mubr.f32.gmra.mrb[0].mxu0 %v4333
    %v4929 = vpop.f32.mrb[0].mxu0
    %v4930 = vadd.f32 0.0, %v4929
    %v4931 = vpop.f32.mrb[0].mxu0
    %4932 = vmatprep.mubr.f32.mxu0 0.0
    %4933 = vmatmul.mubr.f32.gmra.mrb[0].mxu0 %v4338
    %v4934 = vpop.f32.mrb[0].mxu0
    %v4935 = vadd.f32 0.0, %v4934
    %v4936 = vpop.f32.mrb[0].mxu0
    %4937 = vmatprep.mubr.f32.mxu0 0.0
    %4938 = vmatmul.mubr.f32.gmra.mrb[0].mxu0 %v4343
    %v4939 = vpop.f32.mrb[0].mxu0
    %v4940 = vadd.f32 0.0, %v4939
    %v4941 = vpop.f32.mrb[0].mxu0
    %4942 = vmatprep.mubr.f32.mxu0 0.0
    %4943 = vmatmul.mubr.f32.gmra.mrb[0].mxu0 %v4348
    %v4944 = vpop.f32.mrb[0].mxu0
    %v4945 = vadd.f32 0.0, %v4944
    %v4946 = vpop.f32.mrb[0].mxu0
    %4947 = vdwg.mxu0
    %v4948 = vadd.f32 %v4842, %v4930
    %v4949 = vadd.f32 %v4843, %v4935
    %v4950 = vadd.f32 %v4844, %v4940
    %v4951 = vadd.f32 %v4845, %v4945
    %s4952 = scalar_lea.vmem [#allocation10], 640
    %v4953 = vld [vmem:[%s4952] sm:$0xff]
    %v4954 = vld [vmem:[%s4952 + $0x8] sm:$0xff]
    %v4955 = vld [vmem:[%s4952 + $0x10] sm:$0xff]
    %v4956 = vld [vmem:[%s4952 + $0x18] sm:$0xff]
    %v4957 = vld [vmem:[%s4952 + $0x20] sm:$0xff]
    %v4958 = vld [vmem:[%s4952 + $0x28] sm:$0xff]
    %v4959 = vld [vmem:[%s4952 + $0x30] sm:$0xff]
    %v4960 = vld [vmem:[%s4952 + $0x38] sm:$0xff]
    %v4961 = vld [vmem:[%s4952 + $0x40] sm:$0xff]
    %v4962 = vld [vmem:[%s4952 + $0x48] sm:$0xff]
    %v4963 = vld [vmem:[%s4952 + $0x50] sm:$0xff]
    %v4964 = vld [vmem:[%s4952 + $0x58] sm:$0xff]
    %v4965 = vld [vmem:[%s4952 + $0x60] sm:$0xff]
    %v4966 = vld [vmem:[%s4952 + $0x68] sm:$0xff]
    %v4967 = vld [vmem:[%s4952 + $0x70] sm:$0xff]
    %v4968 = vld [vmem:[%s4952 + $0x78] sm:$0xff]
    %4969 = vmatprep.subr.mxu0 0.0
    %4970 = vmatpush1.msra.mxu0 %v4953
    %4971 = vmatprep.subr.mxu0 0.0
    %4972 = vmatpush1.msra.mxu0 %v4954
    %4973 = vmatprep.subr.mxu0 0.0
    %4974 = vmatpush1.msra.mxu0 %v4955
    %4975 = vmatprep.subr.mxu0 0.0
    %4976 = vmatpush1.msra.mxu0 %v4956
    %4977 = vmatprep.subr.mxu0 0.0
    %4978 = vmatpush1.msra.mxu0 %v4957
    %4979 = vmatprep.subr.mxu0 0.0
    %4980 = vmatpush1.msra.mxu0 %v4958
    %4981 = vmatprep.subr.mxu0 0.0
    %4982 = vmatpush1.msra.mxu0 %v4959
    %4983 = vmatprep.subr.mxu0 0.0
    %4984 = vmatpush1.msra.mxu0 %v4960
    %4985 = vmatprep.subr.mxu0 0.0
    %4986 = vmatpush1.msra.mxu0 %v4961
    %4987 = vmatprep.subr.mxu0 0.0
    %4988 = vmatpush1.msra.mxu0 %v4962
    %4989 = vmatprep.subr.mxu0 0.0
    %4990 = vmatpush1.msra.mxu0 %v4963
    %4991 = vmatprep.subr.mxu0 0.0
    %4992 = vmatpush1.msra.mxu0 %v4964
    %4993 = vmatprep.subr.mxu0 0.0
    %4994 = vmatpush1.msra.mxu0 %v4965
    %4995 = vmatprep.subr.mxu0 0.0
    %4996 = vmatpush1.msra.mxu0 %v4966
    %4997 = vmatprep.subr.mxu0 0.0
    %4998 = vmatpush1.msra.mxu0 %v4967
    %4999 = vmatprep.subr.mxu0 0.0
    %5000 = vmatpush1.msra.mxu0 %v4968
    %5001 = vmatprep.subr.mxu0 0.0
    %5002 = vmatpush1.msra.mxu0 0.0
    %5003 = vmatprep.subr.mxu0 0.0
    %5004 = vmatpush1.msra.mxu0 0.0
    %5005 = vmatprep.subr.mxu0 0.0
    %5006 = vmatpush1.msra.mxu0 0.0
    %5007 = vmatprep.subr.mxu0 0.0
    %5008 = vmatpush1.msra.mxu0 0.0
    %5009 = vmatprep.subr.mxu0 0.0
    %5010 = vmatpush1.msra.mxu0 0.0
    %5011 = vmatprep.subr.mxu0 0.0
    %5012 = vmatpush1.msra.mxu0 0.0
    %5013 = vmatprep.subr.mxu0 0.0
    %5014 = vmatpush1.msra.mxu0 0.0
    %5015 = vmatprep.subr.mxu0 0.0
    %5016 = vmatpush1.msra.mxu0 0.0
    %5017 = vmatprep.subr.mxu0 0.0
    %5018 = vmatpush1.msra.mxu0 0.0
    %5019 = vmatprep.subr.mxu0 0.0
    %5020 = vmatpush1.msra.mxu0 0.0
    %5021 = vmatprep.subr.mxu0 0.0
    %5022 = vmatpush1.msra.mxu0 0.0
    %5023 = vmatprep.subr.mxu0 0.0
    %5024 = vmatpush1.msra.mxu0 0.0
    %5025 = vmatprep.subr.mxu0 0.0
    %5026 = vmatpush1.msra.mxu0 0.0
    %5027 = vmatprep.subr.mxu0 0.0
    %5028 = vmatpush1.msra.mxu0 0.0
    %5029 = vmatprep.subr.mxu0 0.0
    %5030 = vmatpush1.msra.mxu0 0.0
    %5031 = vmatprep.subr.mxu0 0.0
    %5032 = vmatpush1.msra.mxu0 0.0
    %5033 = vmatprep.mubr.f32.mxu0 0.0
    %5034 = vmatmul.mubr.f32.gmra.mrb[0].mxu0 %v4353
    %v5035 = vpop.f32.mrb[0].mxu0
    %v5036 = vadd.f32 0.0, %v5035
    %v5037 = vpop.f32.mrb[0].mxu0
    %5038 = vmatprep.mubr.f32.mxu0 0.0
    %5039 = vmatmul.mubr.f32.gmra.mrb[0].mxu0 %v4358
    %v5040 = vpop.f32.mrb[0].mxu0
    %v5041 = vadd.f32 0.0, %v5040
    %v5042 = vpop.f32.mrb[0].mxu0
    %5043 = vmatprep.mubr.f32.mxu0 0.0
    %5044 = vmatmul.mubr.f32.gmra.mrb[0].mxu0 %v4363
    %v5045 = vpop.f32.mrb[0].mxu0
    %v5046 = vadd.f32 0.0, %v5045
    %v5047 = vpop.f32.mrb[0].mxu0
    %5048 = vmatprep.mubr.f32.mxu0 0.0
    %5049 = vmatmul.mubr.f32.gmra.mrb[0].mxu0 %v4368
    %v5050 = vpop.f32.mrb[0].mxu0
    %v5051 = vadd.f32 0.0, %v5050
    %v5052 = vpop.f32.mrb[0].mxu0
    %5053 = vdwg.mxu0
    %v5054 = vadd.f32 %v4948, %v5036
    %v5055 = vadd.f32 %v4949, %v5041
    %v5056 = vadd.f32 %v4950, %v5046
    %v5057 = vadd.f32 %v4951, %v5051
    %s5058 = scalar_lea.vmem [#allocation10], 768
    %v5059 = vld [vmem:[%s5058] sm:$0xff]
    %v5060 = vld [vmem:[%s5058 + $0x8] sm:$0xff]
    %v5061 = vld [vmem:[%s5058 + $0x10] sm:$0xff]
    %v5062 = vld [vmem:[%s5058 + $0x18] sm:$0xff]
    %v5063 = vld [vmem:[%s5058 + $0x20] sm:$0xff]
    %v5064 = vld [vmem:[%s5058 + $0x28] sm:$0xff]
    %v5065 = vld [vmem:[%s5058 + $0x30] sm:$0xff]
    %v5066 = vld [vmem:[%s5058 + $0x38] sm:$0xff]
    %v5067 = vld [vmem:[%s5058 + $0x40] sm:$0xff]
    %v5068 = vld [vmem:[%s5058 + $0x48] sm:$0xff]
    %v5069 = vld [vmem:[%s5058 + $0x50] sm:$0xff]
    %v5070 = vld [vmem:[%s5058 + $0x58] sm:$0xff]
    %v5071 = vld [vmem:[%s5058 + $0x60] sm:$0xff]
    %v5072 = vld [vmem:[%s5058 + $0x68] sm:$0xff]
    %v5073 = vld [vmem:[%s5058 + $0x70] sm:$0xff]
    %v5074 = vld [vmem:[%s5058 + $0x78] sm:$0xff]
    %5075 = vmatprep.subr.mxu0 0.0
    %5076 = vmatpush1.msra.mxu0 %v5059
    %5077 = vmatprep.subr.mxu0 0.0
    %5078 = vmatpush1.msra.mxu0 %v5060
    %5079 = vmatprep.subr.mxu0 0.0
    %5080 = vmatpush1.msra.mxu0 %v5061
    %5081 = vmatprep.subr.mxu0 0.0
    %5082 = vmatpush1.msra.mxu0 %v5062
    %5083 = vmatprep.subr.mxu0 0.0
    %5084 = vmatpush1.msra.mxu0 %v5063
    %5085 = vmatprep.subr.mxu0 0.0
    %5086 = vmatpush1.msra.mxu0 %v5064
    %5087 = vmatprep.subr.mxu0 0.0
    %5088 = vmatpush1.msra.mxu0 %v5065
    %5089 = vmatprep.subr.mxu0 0.0
    %5090 = vmatpush1.msra.mxu0 %v5066
    %5091 = vmatprep.subr.mxu0 0.0
    %5092 = vmatpush1.msra.mxu0 %v5067
    %5093 = vmatprep.subr.mxu0 0.0
    %5094 = vmatpush1.msra.mxu0 %v5068
    %5095 = vmatprep.subr.mxu0 0.0
    %5096 = vmatpush1.msra.mxu0 %v5069
    %5097 = vmatprep.subr.mxu0 0.0
    %5098 = vmatpush1.msra.mxu0 %v5070
    %5099 = vmatprep.subr.mxu0 0.0
    %5100 = vmatpush1.msra.mxu0 %v5071
    %5101 = vmatprep.subr.mxu0 0.0
    %5102 = vmatpush1.msra.mxu0 %v5072
    %5103 = vmatprep.subr.mxu0 0.0
    %5104 = vmatpush1.msra.mxu0 %v5073
    %5105 = vmatprep.subr.mxu0 0.0
    %5106 = vmatpush1.msra.mxu0 %v5074
    %5107 = vmatprep.subr.mxu0 0.0
    %5108 = vmatpush1.msra.mxu0 0.0
    %5109 = vmatprep.subr.mxu0 0.0
    %5110 = vmatpush1.msra.mxu0 0.0
    %5111 = vmatprep.subr.mxu0 0.0
    %5112 = vmatpush1.msra.mxu0 0.0
    %5113 = vmatprep.subr.mxu0 0.0
    %5114 = vmatpush1.msra.mxu0 0.0
    %5115 = vmatprep.subr.mxu0 0.0
    %5116 = vmatpush1.msra.mxu0 0.0
    %5117 = vmatprep.subr.mxu0 0.0
    %5118 = vmatpush1.msra.mxu0 0.0
    %5119 = vmatprep.subr.mxu0 0.0
    %5120 = vmatpush1.msra.mxu0 0.0
    %5121 = vmatprep.subr.mxu0 0.0
    %5122 = vmatpush1.msra.mxu0 0.0
    %5123 = vmatprep.subr.mxu0 0.0
    %5124 = vmatpush1.msra.mxu0 0.0
    %5125 = vmatprep.subr.mxu0 0.0
    %5126 = vmatpush1.msra.mxu0 0.0
    %5127 = vmatprep.subr.mxu0 0.0
    %5128 = vmatpush1.msra.mxu0 0.0
    %5129 = vmatprep.subr.mxu0 0.0
    %5130 = vmatpush1.msra.mxu0 0.0
    %5131 = vmatprep.subr.mxu0 0.0
    %5132 = vmatpush1.msra.mxu0 0.0
    %5133 = vmatprep.subr.mxu0 0.0
    %5134 = vmatpush1.msra.mxu0 0.0
    %5135 = vmatprep.subr.mxu0 0.0
    %5136 = vmatpush1.msra.mxu0 0.0
    %5137 = vmatprep.subr.mxu0 0.0
    %5138 = vmatpush1.msra.mxu0 0.0
    %5139 = vmatprep.mubr.f32.mxu0 0.0
    %5140 = vmatmul.mubr.f32.gmra.mrb[0].mxu0 %v4373
    %v5141 = vpop.f32.mrb[0].mxu0
    %v5142 = vadd.f32 0.0, %v5141
    %v5143 = vpop.f32.mrb[0].mxu0
    %5144 = vmatprep.mubr.f32.mxu0 0.0
    %5145 = vmatmul.mubr.f32.gmra.mrb[0].mxu0 %v4378
    %v5146 = vpop.f32.mrb[0].mxu0
    %v5147 = vadd.f32 0.0, %v5146
    %v5148 = vpop.f32.mrb[0].mxu0
    %5149 = vmatprep.mubr.f32.mxu0 0.0
    %5150 = vmatmul.mubr.f32.gmra.mrb[0].mxu0 %v4383
    %v5151 = vpop.f32.mrb[0].mxu0
    %v5152 = vadd.f32 0.0, %v5151
    %v5153 = vpop.f32.mrb[0].mxu0
    %5154 = vmatprep.mubr.f32.mxu0 0.0
    %5155 = vmatmul.mubr.f32.gmra.mrb[0].mxu0 %v4388
    %v5156 = vpop.f32.mrb[0].mxu0
    %v5157 = vadd.f32 0.0, %v5156
    %v5158 = vpop.f32.mrb[0].mxu0
    %5159 = vdwg.mxu0
    %v5160 = vadd.f32 %v5054, %v5142
    %v5161 = vadd.f32 %v5055, %v5147
    %v5162 = vadd.f32 %v5056, %v5152
    %v5163 = vadd.f32 %v5057, %v5157
    %s5164 = scalar_lea.vmem [#allocation10], 896
    %v5165 = vld [vmem:[%s5164] sm:$0xff]
    %v5166 = vld [vmem:[%s5164 + $0x8] sm:$0xff]
    %v5167 = vld [vmem:[%s5164 + $0x10] sm:$0xff]
    %v5168 = vld [vmem:[%s5164 + $0x18] sm:$0xff]
    %v5169 = vld [vmem:[%s5164 + $0x20] sm:$0xff]
    %v5170 = vld [vmem:[%s5164 + $0x28] sm:$0xff]
    %v5171 = vld [vmem:[%s5164 + $0x30] sm:$0xff]
    %v5172 = vld [vmem:[%s5164 + $0x38] sm:$0xff]
    %v5173 = vld [vmem:[%s5164 + $0x40] sm:$0xff]
    %v5174 = vld [vmem:[%s5164 + $0x48] sm:$0xff]
    %v5175 = vld [vmem:[%s5164 + $0x50] sm:$0xff]
    %v5176 = vld [vmem:[%s5164 + $0x58] sm:$0xff]
    %v5177 = vld [vmem:[%s5164 + $0x60] sm:$0xff]
    %v5178 = vld [vmem:[%s5164 + $0x68] sm:$0xff]
    %v5179 = vld [vmem:[%s5164 + $0x70] sm:$0xff]
    %v5180 = vld [vmem:[%s5164 + $0x78] sm:$0xff]
    %5181 = vmatprep.subr.mxu0 0.0
    %5182 = vmatpush1.msra.mxu0 %v5165
    %5183 = vmatprep.subr.mxu0 0.0
    %5184 = vmatpush1.msra.mxu0 %v5166
    %5185 = vmatprep.subr.mxu0 0.0
    %5186 = vmatpush1.msra.mxu0 %v5167
    %5187 = vmatprep.subr.mxu0 0.0
    %5188 = vmatpush1.msra.mxu0 %v5168
    %5189 = vmatprep.subr.mxu0 0.0
    %5190 = vmatpush1.msra.mxu0 %v5169
    %5191 = vmatprep.subr.mxu0 0.0
    %5192 = vmatpush1.msra.mxu0 %v5170
    %5193 = vmatprep.subr.mxu0 0.0
    %5194 = vmatpush1.msra.mxu0 %v5171
    %5195 = vmatprep.subr.mxu0 0.0
    %5196 = vmatpush1.msra.mxu0 %v5172
    %5197 = vmatprep.subr.mxu0 0.0
    %5198 = vmatpush1.msra.mxu0 %v5173
    %5199 = vmatprep.subr.mxu0 0.0
    %5200 = vmatpush1.msra.mxu0 %v5174
    %5201 = vmatprep.subr.mxu0 0.0
    %5202 = vmatpush1.msra.mxu0 %v5175
    %5203 = vmatprep.subr.mxu0 0.0
    %5204 = vmatpush1.msra.mxu0 %v5176
    %5205 = vmatprep.subr.mxu0 0.0
    %5206 = vmatpush1.msra.mxu0 %v5177
    %5207 = vmatprep.subr.mxu0 0.0
    %5208 = vmatpush1.msra.mxu0 %v5178
    %5209 = vmatprep.subr.mxu0 0.0
    %5210 = vmatpush1.msra.mxu0 %v5179
    %5211 = vmatprep.subr.mxu0 0.0
    %5212 = vmatpush1.msra.mxu0 %v5180
    %5213 = vmatprep.subr.mxu0 0.0
    %5214 = vmatpush1.msra.mxu0 0.0
    %5215 = vmatprep.subr.mxu0 0.0
    %5216 = vmatpush1.msra.mxu0 0.0
    %5217 = vmatprep.subr.mxu0 0.0
    %5218 = vmatpush1.msra.mxu0 0.0
    %5219 = vmatprep.subr.mxu0 0.0
    %5220 = vmatpush1.msra.mxu0 0.0
    %5221 = vmatprep.subr.mxu0 0.0
    %5222 = vmatpush1.msra.mxu0 0.0
    %5223 = vmatprep.subr.mxu0 0.0
    %5224 = vmatpush1.msra.mxu0 0.0
    %5225 = vmatprep.subr.mxu0 0.0
    %5226 = vmatpush1.msra.mxu0 0.0
    %5227 = vmatprep.subr.mxu0 0.0
    %5228 = vmatpush1.msra.mxu0 0.0
    %5229 = vmatprep.subr.mxu0 0.0
    %5230 = vmatpush1.msra.mxu0 0.0
    %5231 = vmatprep.subr.mxu0 0.0
    %5232 = vmatpush1.msra.mxu0 0.0
    %5233 = vmatprep.subr.mxu0 0.0
    %5234 = vmatpush1.msra.mxu0 0.0
    %5235 = vmatprep.subr.mxu0 0.0
    %5236 = vmatpush1.msra.mxu0 0.0
    %5237 = vmatprep.subr.mxu0 0.0
    %5238 = vmatpush1.msra.mxu0 0.0
    %5239 = vmatprep.subr.mxu0 0.0
    %5240 = vmatpush1.msra.mxu0 0.0
    %5241 = vmatprep.subr.mxu0 0.0
    %5242 = vmatpush1.msra.mxu0 0.0
    %5243 = vmatprep.subr.mxu0 0.0
    %5244 = vmatpush1.msra.mxu0 0.0
    %5245 = vmatprep.mubr.f32.mxu0 0.0
    %5246 = vmatmul.mubr.f32.gmra.mrb[0].mxu0 %v4393
    %v5247 = vpop.f32.mrb[0].mxu0
    %v5248 = vadd.f32 0.0, %v5247
    %v5249 = vpop.f32.mrb[0].mxu0
    %5250 = vmatprep.mubr.f32.mxu0 0.0
    %5251 = vmatmul.mubr.f32.gmra.mrb[0].mxu0 %v4398
    %v5252 = vpop.f32.mrb[0].mxu0
    %v5253 = vadd.f32 0.0, %v5252
    %v5254 = vpop.f32.mrb[0].mxu0
    %5255 = vmatprep.mubr.f32.mxu0 0.0
    %5256 = vmatmul.mubr.f32.gmra.mrb[0].mxu0 %v4403
    %v5257 = vpop.f32.mrb[0].mxu0
    %v5258 = vadd.f32 0.0, %v5257
    %v5259 = vpop.f32.mrb[0].mxu0
    %5260 = vmatprep.mubr.f32.mxu0 0.0
    %5261 = vmatmul.mubr.f32.gmra.mrb[0].mxu0 %v4408
    %v5262 = vpop.f32.mrb[0].mxu0
    %v5263 = vadd.f32 0.0, %v5262
    %v5264 = vpop.f32.mrb[0].mxu0
    %5265 = vdwg.mxu0
    %v5266 = vadd.f32 %v5160, %v5248
    %v5267 = vadd.f32 %v5161, %v5253
    %v5268 = vadd.f32 %v5162, %v5258
    %v5269 = vadd.f32 %v5163, %v5263
    %s5270 = scalar_lea.vmem [#allocation10], 1024
    %v5271 = vld [vmem:[%s5270] sm:$0xff]
    %v5272 = vld [vmem:[%s5270 + $0x8] sm:$0xff]
    %v5273 = vld [vmem:[%s5270 + $0x10] sm:$0xff]
    %v5274 = vld [vmem:[%s5270 + $0x18] sm:$0xff]
    %v5275 = vld [vmem:[%s5270 + $0x20] sm:$0xff]
    %v5276 = vld [vmem:[%s5270 + $0x28] sm:$0xff]
    %v5277 = vld [vmem:[%s5270 + $0x30] sm:$0xff]
    %v5278 = vld [vmem:[%s5270 + $0x38] sm:$0xff]
    %v5279 = vld [vmem:[%s5270 + $0x40] sm:$0xff]
    %v5280 = vld [vmem:[%s5270 + $0x48] sm:$0xff]
    %v5281 = vld [vmem:[%s5270 + $0x50] sm:$0xff]
    %v5282 = vld [vmem:[%s5270 + $0x58] sm:$0xff]
    %v5283 = vld [vmem:[%s5270 + $0x60] sm:$0xff]
    %v5284 = vld [vmem:[%s5270 + $0x68] sm:$0xff]
    %v5285 = vld [vmem:[%s5270 + $0x70] sm:$0xff]
    %v5286 = vld [vmem:[%s5270 + $0x78] sm:$0xff]
    %5287 = vmatprep.subr.mxu0 0.0
    %5288 = vmatpush1.msra.mxu0 %v5271
    %5289 = vmatprep.subr.mxu0 0.0
    %5290 = vmatpush1.msra.mxu0 %v5272
    %5291 = vmatprep.subr.mxu0 0.0
    %5292 = vmatpush1.msra.mxu0 %v5273
    %5293 = vmatprep.subr.mxu0 0.0
    %5294 = vmatpush1.msra.mxu0 %v5274
    %5295 = vmatprep.subr.mxu0 0.0
    %5296 = vmatpush1.msra.mxu0 %v5275
    %5297 = vmatprep.subr.mxu0 0.0
    %5298 = vmatpush1.msra.mxu0 %v5276
    %5299 = vmatprep.subr.mxu0 0.0
    %5300 = vmatpush1.msra.mxu0 %v5277
    %5301 = vmatprep.subr.mxu0 0.0
    %5302 = vmatpush1.msra.mxu0 %v5278
    %5303 = vmatprep.subr.mxu0 0.0
    %5304 = vmatpush1.msra.mxu0 %v5279
    %5305 = vmatprep.subr.mxu0 0.0
    %5306 = vmatpush1.msra.mxu0 %v5280
    %5307 = vmatprep.subr.mxu0 0.0
    %5308 = vmatpush1.msra.mxu0 %v5281
    %5309 = vmatprep.subr.mxu0 0.0
    %5310 = vmatpush1.msra.mxu0 %v5282
    %5311 = vmatprep.subr.mxu0 0.0
    %5312 = vmatpush1.msra.mxu0 %v5283
    %5313 = vmatprep.subr.mxu0 0.0
    %5314 = vmatpush1.msra.mxu0 %v5284
    %5315 = vmatprep.subr.mxu0 0.0
    %5316 = vmatpush1.msra.mxu0 %v5285
    %5317 = vmatprep.subr.mxu0 0.0
    %5318 = vmatpush1.msra.mxu0 %v5286
    %5319 = vmatprep.subr.mxu0 0.0
    %5320 = vmatpush1.msra.mxu0 0.0
    %5321 = vmatprep.subr.mxu0 0.0
    %5322 = vmatpush1.msra.mxu0 0.0
    %5323 = vmatprep.subr.mxu0 0.0
    %5324 = vmatpush1.msra.mxu0 0.0
    %5325 = vmatprep.subr.mxu0 0.0
    %5326 = vmatpush1.msra.mxu0 0.0
    %5327 = vmatprep.subr.mxu0 0.0
    %5328 = vmatpush1.msra.mxu0 0.0
    %5329 = vmatprep.subr.mxu0 0.0
    %5330 = vmatpush1.msra.mxu0 0.0
    %5331 = vmatprep.subr.mxu0 0.0
    %5332 = vmatpush1.msra.mxu0 0.0
    %5333 = vmatprep.subr.mxu0 0.0
    %5334 = vmatpush1.msra.mxu0 0.0
    %5335 = vmatprep.subr.mxu0 0.0
    %5336 = vmatpush1.msra.mxu0 0.0
    %5337 = vmatprep.subr.mxu0 0.0
    %5338 = vmatpush1.msra.mxu0 0.0
    %5339 = vmatprep.subr.mxu0 0.0
    %5340 = vmatpush1.msra.mxu0 0.0
    %5341 = vmatprep.subr.mxu0 0.0
    %5342 = vmatpush1.msra.mxu0 0.0
    %5343 = vmatprep.subr.mxu0 0.0
    %5344 = vmatpush1.msra.mxu0 0.0
    %5345 = vmatprep.subr.mxu0 0.0
    %5346 = vmatpush1.msra.mxu0 0.0
    %5347 = vmatprep.subr.mxu0 0.0
    %5348 = vmatpush1.msra.mxu0 0.0
    %5349 = vmatprep.subr.mxu0 0.0
    %5350 = vmatpush1.msra.mxu0 0.0
    %5351 = vmatprep.mubr.f32.mxu0 0.0
    %5352 = vmatmul.mubr.f32.gmra.mrb[0].mxu0 %v4413
    %v5353 = vpop.f32.mrb[0].mxu0
    %v5354 = vadd.f32 0.0, %v5353
    %v5355 = vpop.f32.mrb[0].mxu0
    %5356 = vmatprep.mubr.f32.mxu0 0.0
    %5357 = vmatmul.mubr.f32.gmra.mrb[0].mxu0 %v4418
    %v5358 = vpop.f32.mrb[0].mxu0
    %v5359 = vadd.f32 0.0, %v5358
    %v5360 = vpop.f32.mrb[0].mxu0
    %5361 = vmatprep.mubr.f32.mxu0 0.0
    %5362 = vmatmul.mubr.f32.gmra.mrb[0].mxu0 %v4423
    %v5363 = vpop.f32.mrb[0].mxu0
    %v5364 = vadd.f32 0.0, %v5363
    %v5365 = vpop.f32.mrb[0].mxu0
    %5366 = vmatprep.mubr.f32.mxu0 0.0
    %5367 = vmatmul.mubr.f32.gmra.mrb[0].mxu0 %v4428
    %v5368 = vpop.f32.mrb[0].mxu0
    %v5369 = vadd.f32 0.0, %v5368
    %v5370 = vpop.f32.mrb[0].mxu0
    %5371 = vdwg.mxu0
    %v5372 = vadd.f32 %v5266, %v5354
    %v5373 = vadd.f32 %v5267, %v5359
    %v5374 = vadd.f32 %v5268, %v5364
    %v5375 = vadd.f32 %v5269, %v5369
    %v5376 = vadd.f32 %v5372, %v5373
    %v5377 = vadd.f32 %v5376, %v5374
    %v5378 = vadd.f32 %v5377, %v5375
    %v5379 = vrot.slane %v5378, 4
    %v5380 = vadd.f32 %v5378, %v5379
    %v5381 = vrot.slane %v5380, 2
    %v5382 = vadd.f32 %v5380, %v5381
    %v5383 = vrot.slane %v5382, 1
    %v5384 = vadd.f32 %v5382, %v5383
    %v5385 = vrcp.pop 32.0
    %v5386 = vmul.f32 %v5384, %v5385
    %v5387 = vmul.f32 %v5372, %v5372
    %v5388 = vmul.f32 %v5373, %v5373
    %v5389 = vmul.f32 %v5374, %v5374
    %v5390 = vmul.f32 %v5375, %v5375
    %v5391 = vadd.f32 %v5387, %v5388
    %v5392 = vadd.f32 %v5391, %v5389
    %v5393 = vadd.f32 %v5392, %v5390
    %v5394 = vrot.slane %v5393, 4
    %v5395 = vadd.f32 %v5393, %v5394
    %v5396 = vrot.slane %v5395, 2
    %v5397 = vadd.f32 %v5395, %v5396
    %v5398 = vrot.slane %v5397, 1
    %v5399 = vadd.f32 %v5397, %v5398
    %v5400 = vmul.f32 %v5399, %v5385
    %v5401 = vmul.f32 %v5386, %v5386
    %v5402 = vsub.f32 %v5400, %v5401
    %v5403 = vsub.f32 %v5372, %v5386
    %v5404 = vsub.f32 %v5373, %v5386
    %v5405 = vsub.f32 %v5374, %v5386
    %v5406 = vsub.f32 %v5375, %v5386
    %v5407 = vadd.f32 %v5402, 1e-05
    %v5408 = vrsqrt.pop %v5407
    %v5409 = vmul.f32 %v5403, %v5408
    %v5410 = vmul.f32 %v5404, %v5408
    %v5411 = vmul.f32 %v5405, %v5408
    %v5412 = vmul.f32 %v5406, %v5408
    %v5413 = vld [vmem:[#allocation12] sm:$0x1]
    %v5415 = vlaneseq
    %v5416 = vshrl.u32 %v5415, 7
    %v5417 = vsub.s32 0, %v5416
    %v5418 = vrot.slane %v5413, %v5417
    %v5420 = vmul.f32 %v5409, %v5418
    %v5421 = vmul.f32 %v5410, %v5418
    %v5422 = vmul.f32 %v5411, %v5418
    %v5423 = vmul.f32 %v5412, %v5418
    %v5424 = vld [vmem:[#allocation13] sm:$0x1]
    %v5426 = vlaneseq
    %v5427 = vshrl.u32 %v5426, 7
    %v5428 = vsub.s32 0, %v5427
    %v5429 = vrot.slane %v5424, %v5428
    %v5431 = vadd.f32 %v5420, %v5429
    %v5432 = vadd.f32 %v5421, %v5429
    %v5433 = vadd.f32 %v5422, %v5429
    %v5434 = vadd.f32 %v5423, %v5429
    %v5435 = vmax.f32 %v5431, 0.0
    %v5436 = vmax.f32 %v5432, 0.0
    %v5437 = vmax.f32 %v5433, 0.0
    %v5438 = vmax.f32 %v5434, 0.0
    %v5439 = vld [vmem:[%s9] sm:$0xff]
    %v5440 = vld [vmem:[%s9 + $0x8] sm:$0xff]
    %v5441 = vld [vmem:[%s9 + $0x10] sm:$0xff]
    %v5442 = vld [vmem:[%s9 + $0x18] sm:$0xff]
    %v5443 = vld [vmem:[%s9 + $0x20] sm:$0xff]
    %v5444 = vld [vmem:[%s9 + $0x28] sm:$0xff]
    %v5445 = vld [vmem:[%s9 + $0x30] sm:$0xff]
    %v5446 = vld [vmem:[%s9 + $0x38] sm:$0xff]
    %v5447 = vld [vmem:[%s9 + $0x40] sm:$0xff]
    %vm5448 = vcmask 261120
    %v5450 = vsel %vm5448, %v5439, 0
    %v5453 = vsel %vm5448, %v5440, 0
    %v5456 = vsel %vm5448, %v5441, 0
    %v5459 = vsel %vm5448, %v5442, 0
    %v5462 = vsel %vm5448, %v5443, 0
    %v5465 = vsel %vm5448, %v5444, 0
    %v5468 = vsel %vm5448, %v5445, 0
    %v5471 = vsel %vm5448, %v5446, 0
    %v5474 = vsel %vm5448, %v5447, 0
    %5476 = vmatprep.subr.mxu0 0.0
    %5477 = vmatpush1.msra.mxu0 %v5435
    %5478 = vmatprep.subr.mxu0 0.0
    %5479 = vmatpush1.msra.mxu0 %v5436
    %5480 = vmatprep.subr.mxu0 0.0
    %5481 = vmatpush1.msra.mxu0 %v5437
    %5482 = vmatprep.subr.mxu0 0.0
    %5483 = vmatpush1.msra.mxu0 %v5438
    %5484 = vmatprep.subr.mxu0 0.0
    %5485 = vmatpush1.msra.mxu0 0.0
    %5486 = vmatprep.subr.mxu0 0.0
    %5487 = vmatpush1.msra.mxu0 0.0
    %5488 = vmatprep.subr.mxu0 0.0
    %5489 = vmatpush1.msra.mxu0 0.0
    %5490 = vmatprep.subr.mxu0 0.0
    %5491 = vmatpush1.msra.mxu0 0.0
    %5492 = vmatprep.subr.mxu0 0.0
    %5493 = vmatpush1.msra.mxu0 0.0
    %5494 = vmatprep.subr.mxu0 0.0
    %5495 = vmatpush1.msra.mxu0 0.0
    %5496 = vmatprep.subr.mxu0 0.0
    %5497 = vmatpush1.msra.mxu0 0.0
    %5498 = vmatprep.subr.mxu0 0.0
    %5499 = vmatpush1.msra.mxu0 0.0
    %5500 = vmatprep.subr.mxu0 0.0
    %5501 = vmatpush1.msra.mxu0 0.0
    %5502 = vmatprep.subr.mxu0 0.0
    %5503 = vmatpush1.msra.mxu0 0.0
    %5504 = vmatprep.subr.mxu0 0.0
    %5505 = vmatpush1.msra.mxu0 0.0
    %5506 = vmatprep.subr.mxu0 0.0
    %5507 = vmatpush1.msra.mxu0 0.0
    %5508 = vmatprep.subr.mxu0 0.0
    %5509 = vmatpush1.msra.mxu0 0.0
    %5510 = vmatprep.subr.mxu0 0.0
    %5511 = vmatpush1.msra.mxu0 0.0
    %5512 = vmatprep.subr.mxu0 0.0
    %5513 = vmatpush1.msra.mxu0 0.0
    %5514 = vmatprep.subr.mxu0 0.0
    %5515 = vmatpush1.msra.mxu0 0.0
    %5516 = vmatprep.subr.mxu0 0.0
    %5517 = vmatpush1.msra.mxu0 0.0
    %5518 = vmatprep.subr.mxu0 0.0
    %5519 = vmatpush1.msra.mxu0 0.0
    %5520 = vmatprep.subr.mxu0 0.0
    %5521 = vmatpush1.msra.mxu0 0.0
    %5522 = vmatprep.subr.mxu0 0.0
    %5523 = vmatpush1.msra.mxu0 0.0
    %5524 = vmatprep.subr.mxu0 0.0
    %5525 = vmatpush1.msra.mxu0 0.0
    %5526 = vmatprep.subr.mxu0 0.0
    %5527 = vmatpush1.msra.mxu0 0.0
    %5528 = vmatprep.subr.mxu0 0.0
    %5529 = vmatpush1.msra.mxu0 0.0
    %5530 = vmatprep.subr.mxu0 0.0
    %5531 = vmatpush1.msra.mxu0 0.0
    %5532 = vmatprep.subr.mxu0 0.0
    %5533 = vmatpush1.msra.mxu0 0.0
    %5534 = vmatprep.subr.mxu0 0.0
    %5535 = vmatpush1.msra.mxu0 0.0
    %5536 = vmatprep.subr.mxu0 0.0
    %5537 = vmatpush1.msra.mxu0 0.0
    %5538 = vmatprep.subr.mxu0 0.0
    %5539 = vmatpush1.msra.mxu0 0.0
    %5540 = vmatprep.mubr.f32.mxu0 0.0
    %5541 = vmatmul.mubr.f32.gmra.mrb[0].mxu0 %v5450
    %v5542 = vpop.f32.mrb[0].mxu0
    %v5543 = vadd.f32 0.0, %v5542
    %v5544 = vpop.f32.mrb[0].mxu0
    %5545 = vmatprep.mubr.f32.mxu0 0.0
    %5546 = vmatmul.mubr.f32.gmra.mrb[0].mxu0 %v5453
    %v5547 = vpop.f32.mrb[0].mxu0
    %v5548 = vadd.f32 0.0, %v5547
    %v5549 = vpop.f32.mrb[0].mxu0
    %5550 = vmatprep.mubr.f32.mxu0 0.0
    %5551 = vmatmul.mubr.f32.gmra.mrb[0].mxu0 %v5456
    %v5552 = vpop.f32.mrb[0].mxu0
    %v5553 = vadd.f32 0.0, %v5552
    %v5554 = vpop.f32.mrb[0].mxu0
    %5555 = vmatprep.mubr.f32.mxu0 0.0
    %5556 = vmatmul.mubr.f32.gmra.mrb[0].mxu0 %v5459
    %v5557 = vpop.f32.mrb[0].mxu0
    %v5558 = vadd.f32 0.0, %v5557
    %v5559 = vpop.f32.mrb[0].mxu0
    %5560 = vmatprep.mubr.f32.mxu0 0.0
    %5561 = vmatmul.mubr.f32.gmra.mrb[0].mxu0 %v5462
    %v5562 = vpop.f32.mrb[0].mxu0
    %v5563 = vadd.f32 0.0, %v5562
    %v5564 = vpop.f32.mrb[0].mxu0
    %5565 = vmatprep.mubr.f32.mxu0 0.0
    %5566 = vmatmul.mubr.f32.gmra.mrb[0].mxu0 %v5465
    %v5567 = vpop.f32.mrb[0].mxu0
    %v5568 = vadd.f32 0.0, %v5567
    %v5569 = vpop.f32.mrb[0].mxu0
    %5570 = vmatprep.mubr.f32.mxu0 0.0
    %5571 = vmatmul.mubr.f32.gmra.mrb[0].mxu0 %v5468
    %v5572 = vpop.f32.mrb[0].mxu0
    %v5573 = vadd.f32 0.0, %v5572
    %v5574 = vpop.f32.mrb[0].mxu0
    %5575 = vmatprep.mubr.f32.mxu0 0.0
    %5576 = vmatmul.mubr.f32.gmra.mrb[0].mxu0 %v5471
    %v5577 = vpop.f32.mrb[0].mxu0
    %v5578 = vadd.f32 0.0, %v5577
    %v5579 = vpop.f32.mrb[0].mxu0
    %5580 = vmatprep.mubr.f32.mxu0 0.0
    %5581 = vmatmul.mubr.f32.gmra.mrb[0].mxu0 %v5474
    %v5582 = vpop.f32.mrb[0].mxu0
    %v5583 = vadd.f32 0.0, %v5582
    %v5584 = vpop.f32.mrb[0].mxu0
    %5585 = vdwg.mxu0
    %v5586 = vld [vmem:[#allocation15] sm:$0xff]
    %v5587 = vld [vmem:[#allocation15 + $0x8] sm:$0xff]
    %v5588 = vld [vmem:[#allocation15 + $0x10] sm:$0xff]
    %v5589 = vld [vmem:[#allocation15 + $0x18] sm:$0xff]
    %v5590 = vld [vmem:[#allocation15 + $0x20] sm:$0xff]
    %v5591 = vld [vmem:[#allocation15 + $0x28] sm:$0xff]
    %v5592 = vld [vmem:[#allocation15 + $0x30] sm:$0xff]
    %v5593 = vld [vmem:[#allocation15 + $0x38] sm:$0xff]
    %v5594 = vld [vmem:[#allocation15 + $0x40] sm:$0xff]
    %v5595 = vld [vmem:[#allocation15 + $0x48] sm:$0xff]
    %v5596 = vld [vmem:[#allocation15 + $0x50] sm:$0xff]
    %v5597 = vld [vmem:[#allocation15 + $0x58] sm:$0xff]
    %v5598 = vld [vmem:[#allocation15 + $0x60] sm:$0xff]
    %v5599 = vld [vmem:[#allocation15 + $0x68] sm:$0xff]
    %v5600 = vld [vmem:[#allocation15 + $0x70] sm:$0xff]
    %v5601 = vld [vmem:[#allocation15 + $0x78] sm:$0xff]
    %s5602 = scalar_lea.vmem [#allocation15], 128
    %v5603 = vld [vmem:[%s5602] sm:$0xff]
    %v5604 = vld [vmem:[%s5602 + $0x8] sm:$0xff]
    %v5605 = vld [vmem:[%s5602 + $0x10] sm:$0xff]
    %v5606 = vld [vmem:[%s5602 + $0x18] sm:$0xff]
    %v5607 = vld [vmem:[%s5602 + $0x20] sm:$0xff]
    %v5608 = vld [vmem:[%s5602 + $0x28] sm:$0xff]
    %v5609 = vld [vmem:[%s5602 + $0x30] sm:$0xff]
    %v5610 = vld [vmem:[%s5602 + $0x38] sm:$0xff]
    %v5611 = vld [vmem:[%s5602 + $0x40] sm:$0xff]
    %v5612 = vld [vmem:[%s5602 + $0x48] sm:$0xff]
    %v5613 = vld [vmem:[%s5602 + $0x50] sm:$0xff]
    %v5614 = vld [vmem:[%s5602 + $0x58] sm:$0xff]
    %v5615 = vld [vmem:[%s5602 + $0x60] sm:$0xff]
    %v5616 = vld [vmem:[%s5602 + $0x68] sm:$0xff]
    %v5617 = vld [vmem:[%s5602 + $0x70] sm:$0xff]
    %v5618 = vld [vmem:[%s5602 + $0x78] sm:$0xff]
    %5619 = vmatprep.subr.mxu0 0.0
    %5620 = vmatpush1.msra.mxu0 %v5603
    %5621 = vmatprep.subr.mxu0 0.0
    %5622 = vmatpush1.msra.mxu0 %v5604
    %5623 = vmatprep.subr.mxu0 0.0
    %5624 = vmatpush1.msra.mxu0 %v5605
    %5625 = vmatprep.subr.mxu0 0.0
    %5626 = vmatpush1.msra.mxu0 %v5606
    %5627 = vmatprep.subr.mxu0 0.0
    %5628 = vmatpush1.msra.mxu0 %v5607
    %5629 = vmatprep.subr.mxu0 0.0
    %5630 = vmatpush1.msra.mxu0 %v5608
    %5631 = vmatprep.subr.mxu0 0.0
    %5632 = vmatpush1.msra.mxu0 %v5609
    %5633 = vmatprep.subr.mxu0 0.0
    %5634 = vmatpush1.msra.mxu0 %v5610
    %5635 = vmatprep.subr.mxu0 0.0
    %5636 = vmatpush1.msra.mxu0 %v5611
    %5637 = vmatprep.subr.mxu0 0.0
    %5638 = vmatpush1.msra.mxu0 %v5612
    %5639 = vmatprep.subr.mxu0 0.0
    %5640 = vmatpush1.msra.mxu0 %v5613
    %5641 = vmatprep.subr.mxu0 0.0
    %5642 = vmatpush1.msra.mxu0 %v5614
    %5643 = vmatprep.subr.mxu0 0.0
    %5644 = vmatpush1.msra.mxu0 %v5615
    %5645 = vmatprep.subr.mxu0 0.0
    %5646 = vmatpush1.msra.mxu0 %v5616
    %5647 = vmatprep.subr.mxu0 0.0
    %5648 = vmatpush1.msra.mxu0 %v5617
    %5649 = vmatprep.subr.mxu0 0.0
    %5650 = vmatpush1.msra.mxu0 %v5618
    %5651 = vmatprep.subr.mxu0 0.0
    %5652 = vmatpush1.msra.mxu0 0.0
    %5653 = vmatprep.subr.mxu0 0.0
    %5654 = vmatpush1.msra.mxu0 0.0
    %5655 = vmatprep.subr.mxu0 0.0
    %5656 = vmatpush1.msra.mxu0 0.0
    %5657 = vmatprep.subr.mxu0 0.0
    %5658 = vmatpush1.msra.mxu0 0.0
    %5659 = vmatprep.subr.mxu0 0.0
    %5660 = vmatpush1.msra.mxu0 0.0
    %5661 = vmatprep.subr.mxu0 0.0
    %5662 = vmatpush1.msra.mxu0 0.0
    %5663 = vmatprep.subr.mxu0 0.0
    %5664 = vmatpush1.msra.mxu0 0.0
    %5665 = vmatprep.subr.mxu0 0.0
    %5666 = vmatpush1.msra.mxu0 0.0
    %5667 = vmatprep.subr.mxu0 0.0
    %5668 = vmatpush1.msra.mxu0 0.0
    %5669 = vmatprep.subr.mxu0 0.0
    %5670 = vmatpush1.msra.mxu0 0.0
    %5671 = vmatprep.subr.mxu0 0.0
    %5672 = vmatpush1.msra.mxu0 0.0
    %5673 = vmatprep.subr.mxu0 0.0
    %5674 = vmatpush1.msra.mxu0 0.0
    %5675 = vmatprep.subr.mxu0 0.0
    %5676 = vmatpush1.msra.mxu0 0.0
    %5677 = vmatprep.subr.mxu0 0.0
    %5678 = vmatpush1.msra.mxu0 0.0
    %5679 = vmatprep.subr.mxu0 0.0
    %5680 = vmatpush1.msra.mxu0 0.0
    %5681 = vmatprep.subr.mxu0 0.0
    %5682 = vmatpush1.msra.mxu0 0.0
    %5683 = vmatprep.mubr.f32.mxu0 0.0
    %5684 = vmatmul.mubr.f32.gmra.mrb[0].mxu0 %v5548
    %v5685 = vpop.f32.mrb[0].mxu0
    %v5686 = vadd.f32 0.0, %v5685
    %v5687 = vpop.f32.mrb[0].mxu0
    %5688 = vdwg.mxu0
    %5689 = vmatprep.subr.mxu0 0.0
    %5690 = vmatpush1.msra.mxu0 %v5586
    %5691 = vmatprep.subr.mxu0 0.0
    %5692 = vmatpush1.msra.mxu0 %v5587
    %5693 = vmatprep.subr.mxu0 0.0
    %5694 = vmatpush1.msra.mxu0 %v5588
    %5695 = vmatprep.subr.mxu0 0.0
    %5696 = vmatpush1.msra.mxu0 %v5589
    %5697 = vmatprep.subr.mxu0 0.0
    %5698 = vmatpush1.msra.mxu0 %v5590
    %5699 = vmatprep.subr.mxu0 0.0
    %5700 = vmatpush1.msra.mxu0 %v5591
    %5701 = vmatprep.subr.mxu0 0.0
    %5702 = vmatpush1.msra.mxu0 %v5592
    %5703 = vmatprep.subr.mxu0 0.0
    %5704 = vmatpush1.msra.mxu0 %v5593
    %5705 = vmatprep.subr.mxu0 0.0
    %5706 = vmatpush1.msra.mxu0 %v5594
    %5707 = vmatprep.subr.mxu0 0.0
    %5708 = vmatpush1.msra.mxu0 %v5595
    %5709 = vmatprep.subr.mxu0 0.0
    %5710 = vmatpush1.msra.mxu0 %v5596
    %5711 = vmatprep.subr.mxu0 0.0
    %5712 = vmatpush1.msra.mxu0 %v5597
    %5713 = vmatprep.subr.mxu0 0.0
    %5714 = vmatpush1.msra.mxu0 %v5598
    %5715 = vmatprep.subr.mxu0 0.0
    %5716 = vmatpush1.msra.mxu0 %v5599
    %5717 = vmatprep.subr.mxu0 0.0
    %5718 = vmatpush1.msra.mxu0 %v5600
    %5719 = vmatprep.subr.mxu0 0.0
    %5720 = vmatpush1.msra.mxu0 %v5601
    %5721 = vmatprep.subr.mxu0 0.0
    %5722 = vmatpush1.msra.mxu0 0.0
    %5723 = vmatprep.subr.mxu0 0.0
    %5724 = vmatpush1.msra.mxu0 0.0
    %5725 = vmatprep.subr.mxu0 0.0
    %5726 = vmatpush1.msra.mxu0 0.0
    %5727 = vmatprep.subr.mxu0 0.0
    %5728 = vmatpush1.msra.mxu0 0.0
    %5729 = vmatprep.subr.mxu0 0.0
    %5730 = vmatpush1.msra.mxu0 0.0
    %5731 = vmatprep.subr.mxu0 0.0
    %5732 = vmatpush1.msra.mxu0 0.0
    %5733 = vmatprep.subr.mxu0 0.0
    %5734 = vmatpush1.msra.mxu0 0.0
    %5735 = vmatprep.subr.mxu0 0.0
    %5736 = vmatpush1.msra.mxu0 0.0
    %5737 = vmatprep.subr.mxu0 0.0
    %5738 = vmatpush1.msra.mxu0 0.0
    %5739 = vmatprep.subr.mxu0 0.0
    %5740 = vmatpush1.msra.mxu0 0.0
    %5741 = vmatprep.subr.mxu0 0.0
    %5742 = vmatpush1.msra.mxu0 0.0
    %5743 = vmatprep.subr.mxu0 0.0
    %5744 = vmatpush1.msra.mxu0 0.0
    %5745 = vmatprep.subr.mxu0 0.0
    %5746 = vmatpush1.msra.mxu0 0.0
    %5747 = vmatprep.subr.mxu0 0.0
    %5748 = vmatpush1.msra.mxu0 0.0
    %5749 = vmatprep.subr.mxu0 0.0
    %5750 = vmatpush1.msra.mxu0 0.0
    %5751 = vmatprep.subr.mxu0 0.0
    %5752 = vmatpush1.msra.mxu0 0.0
    %5753 = vmatprep.mubr.f32.mxu0 0.0
    %5754 = vmatmul.mubr.f32.gmra.mrb[0].mxu0 %v5543
    %v5755 = vpop.f32.mrb[0].mxu0
    %v5756 = vadd.f32 %v5686, %v5755
    %v5757 = vpop.f32.mrb[0].mxu0
    %5758 = vdwg.mxu0
    %s5759 = scalar_lea.vmem [#allocation15], 256
    %v5760 = vld [vmem:[%s5759] sm:$0xff]
    %v5761 = vld [vmem:[%s5759 + $0x8] sm:$0xff]
    %v5762 = vld [vmem:[%s5759 + $0x10] sm:$0xff]
    %v5763 = vld [vmem:[%s5759 + $0x18] sm:$0xff]
    %v5764 = vld [vmem:[%s5759 + $0x20] sm:$0xff]
    %v5765 = vld [vmem:[%s5759 + $0x28] sm:$0xff]
    %v5766 = vld [vmem:[%s5759 + $0x30] sm:$0xff]
    %v5767 = vld [vmem:[%s5759 + $0x38] sm:$0xff]
    %v5768 = vld [vmem:[%s5759 + $0x40] sm:$0xff]
    %v5769 = vld [vmem:[%s5759 + $0x48] sm:$0xff]
    %v5770 = vld [vmem:[%s5759 + $0x50] sm:$0xff]
    %v5771 = vld [vmem:[%s5759 + $0x58] sm:$0xff]
    %v5772 = vld [vmem:[%s5759 + $0x60] sm:$0xff]
    %v5773 = vld [vmem:[%s5759 + $0x68] sm:$0xff]
    %v5774 = vld [vmem:[%s5759 + $0x70] sm:$0xff]
    %v5775 = vld [vmem:[%s5759 + $0x78] sm:$0xff]
    %5776 = vmatprep.subr.mxu0 0.0
    %5777 = vmatpush1.msra.mxu0 %v5760
    %5778 = vmatprep.subr.mxu0 0.0
    %5779 = vmatpush1.msra.mxu0 %v5761
    %5780 = vmatprep.subr.mxu0 0.0
    %5781 = vmatpush1.msra.mxu0 %v5762
    %5782 = vmatprep.subr.mxu0 0.0
    %5783 = vmatpush1.msra.mxu0 %v5763
    %5784 = vmatprep.subr.mxu0 0.0
    %5785 = vmatpush1.msra.mxu0 %v5764
    %5786 = vmatprep.subr.mxu0 0.0
    %5787 = vmatpush1.msra.mxu0 %v5765
    %5788 = vmatprep.subr.mxu0 0.0
    %5789 = vmatpush1.msra.mxu0 %v5766
    %5790 = vmatprep.subr.mxu0 0.0
    %5791 = vmatpush1.msra.mxu0 %v5767
    %5792 = vmatprep.subr.mxu0 0.0
    %5793 = vmatpush1.msra.mxu0 %v5768
    %5794 = vmatprep.subr.mxu0 0.0
    %5795 = vmatpush1.msra.mxu0 %v5769
    %5796 = vmatprep.subr.mxu0 0.0
    %5797 = vmatpush1.msra.mxu0 %v5770
    %5798 = vmatprep.subr.mxu0 0.0
    %5799 = vmatpush1.msra.mxu0 %v5771
    %5800 = vmatprep.subr.mxu0 0.0
    %5801 = vmatpush1.msra.mxu0 %v5772
    %5802 = vmatprep.subr.mxu0 0.0
    %5803 = vmatpush1.msra.mxu0 %v5773
    %5804 = vmatprep.subr.mxu0 0.0
    %5805 = vmatpush1.msra.mxu0 %v5774
    %5806 = vmatprep.subr.mxu0 0.0
    %5807 = vmatpush1.msra.mxu0 %v5775
    %5808 = vmatprep.subr.mxu0 0.0
    %5809 = vmatpush1.msra.mxu0 0.0
    %5810 = vmatprep.subr.mxu0 0.0
    %5811 = vmatpush1.msra.mxu0 0.0
    %5812 = vmatprep.subr.mxu0 0.0
    %5813 = vmatpush1.msra.mxu0 0.0
    %5814 = vmatprep.subr.mxu0 0.0
    %5815 = vmatpush1.msra.mxu0 0.0
    %5816 = vmatprep.subr.mxu0 0.0
    %5817 = vmatpush1.msra.mxu0 0.0
    %5818 = vmatprep.subr.mxu0 0.0
    %5819 = vmatpush1.msra.mxu0 0.0
    %5820 = vmatprep.subr.mxu0 0.0
    %5821 = vmatpush1.msra.mxu0 0.0
    %5822 = vmatprep.subr.mxu0 0.0
    %5823 = vmatpush1.msra.mxu0 0.0
    %5824 = vmatprep.subr.mxu0 0.0
    %5825 = vmatpush1.msra.mxu0 0.0
    %5826 = vmatprep.subr.mxu0 0.0
    %5827 = vmatpush1.msra.mxu0 0.0
    %5828 = vmatprep.subr.mxu0 0.0
    %5829 = vmatpush1.msra.mxu0 0.0
    %5830 = vmatprep.subr.mxu0 0.0
    %5831 = vmatpush1.msra.mxu0 0.0
    %5832 = vmatprep.subr.mxu0 0.0
    %5833 = vmatpush1.msra.mxu0 0.0
    %5834 = vmatprep.subr.mxu0 0.0
    %5835 = vmatpush1.msra.mxu0 0.0
    %5836 = vmatprep.subr.mxu0 0.0
    %5837 = vmatpush1.msra.mxu0 0.0
    %5838 = vmatprep.subr.mxu0 0.0
    %5839 = vmatpush1.msra.mxu0 0.0
    %5840 = vmatprep.mubr.f32.mxu0 0.0
    %5841 = vmatmul.mubr.f32.gmra.mrb[0].mxu0 %v5553
    %v5842 = vpop.f32.mrb[0].mxu0
    %v5843 = vadd.f32 0.0, %v5842
    %v5844 = vpop.f32.mrb[0].mxu0
    %5845 = vdwg.mxu0
    %v5846 = vadd.f32 %v5756, %v5843
    %s5847 = scalar_lea.vmem [#allocation15], 384
    %v5848 = vld [vmem:[%s5847] sm:$0xff]
    %v5849 = vld [vmem:[%s5847 + $0x8] sm:$0xff]
    %v5850 = vld [vmem:[%s5847 + $0x10] sm:$0xff]
    %v5851 = vld [vmem:[%s5847 + $0x18] sm:$0xff]
    %v5852 = vld [vmem:[%s5847 + $0x20] sm:$0xff]
    %v5853 = vld [vmem:[%s5847 + $0x28] sm:$0xff]
    %v5854 = vld [vmem:[%s5847 + $0x30] sm:$0xff]
    %v5855 = vld [vmem:[%s5847 + $0x38] sm:$0xff]
    %v5856 = vld [vmem:[%s5847 + $0x40] sm:$0xff]
    %v5857 = vld [vmem:[%s5847 + $0x48] sm:$0xff]
    %v5858 = vld [vmem:[%s5847 + $0x50] sm:$0xff]
    %v5859 = vld [vmem:[%s5847 + $0x58] sm:$0xff]
    %v5860 = vld [vmem:[%s5847 + $0x60] sm:$0xff]
    %v5861 = vld [vmem:[%s5847 + $0x68] sm:$0xff]
    %v5862 = vld [vmem:[%s5847 + $0x70] sm:$0xff]
    %v5863 = vld [vmem:[%s5847 + $0x78] sm:$0xff]
    %5864 = vmatprep.subr.mxu0 0.0
    %5865 = vmatpush1.msra.mxu0 %v5848
    %5866 = vmatprep.subr.mxu0 0.0
    %5867 = vmatpush1.msra.mxu0 %v5849
    %5868 = vmatprep.subr.mxu0 0.0
    %5869 = vmatpush1.msra.mxu0 %v5850
    %5870 = vmatprep.subr.mxu0 0.0
    %5871 = vmatpush1.msra.mxu0 %v5851
    %5872 = vmatprep.subr.mxu0 0.0
    %5873 = vmatpush1.msra.mxu0 %v5852
    %5874 = vmatprep.subr.mxu0 0.0
    %5875 = vmatpush1.msra.mxu0 %v5853
    %5876 = vmatprep.subr.mxu0 0.0
    %5877 = vmatpush1.msra.mxu0 %v5854
    %5878 = vmatprep.subr.mxu0 0.0
    %5879 = vmatpush1.msra.mxu0 %v5855
    %5880 = vmatprep.subr.mxu0 0.0
    %5881 = vmatpush1.msra.mxu0 %v5856
    %5882 = vmatprep.subr.mxu0 0.0
    %5883 = vmatpush1.msra.mxu0 %v5857
    %5884 = vmatprep.subr.mxu0 0.0
    %5885 = vmatpush1.msra.mxu0 %v5858
    %5886 = vmatprep.subr.mxu0 0.0
    %5887 = vmatpush1.msra.mxu0 %v5859
    %5888 = vmatprep.subr.mxu0 0.0
    %5889 = vmatpush1.msra.mxu0 %v5860
    %5890 = vmatprep.subr.mxu0 0.0
    %5891 = vmatpush1.msra.mxu0 %v5861
    %5892 = vmatprep.subr.mxu0 0.0
    %5893 = vmatpush1.msra.mxu0 %v5862
    %5894 = vmatprep.subr.mxu0 0.0
    %5895 = vmatpush1.msra.mxu0 %v5863
    %5896 = vmatprep.subr.mxu0 0.0
    %5897 = vmatpush1.msra.mxu0 0.0
    %5898 = vmatprep.subr.mxu0 0.0
    %5899 = vmatpush1.msra.mxu0 0.0
    %5900 = vmatprep.subr.mxu0 0.0
    %5901 = vmatpush1.msra.mxu0 0.0
    %5902 = vmatprep.subr.mxu0 0.0
    %5903 = vmatpush1.msra.mxu0 0.0
    %5904 = vmatprep.subr.mxu0 0.0
    %5905 = vmatpush1.msra.mxu0 0.0
    %5906 = vmatprep.subr.mxu0 0.0
    %5907 = vmatpush1.msra.mxu0 0.0
    %5908 = vmatprep.subr.mxu0 0.0
    %5909 = vmatpush1.msra.mxu0 0.0
    %5910 = vmatprep.subr.mxu0 0.0
    %5911 = vmatpush1.msra.mxu0 0.0
    %5912 = vmatprep.subr.mxu0 0.0
    %5913 = vmatpush1.msra.mxu0 0.0
    %5914 = vmatprep.subr.mxu0 0.0
    %5915 = vmatpush1.msra.mxu0 0.0
    %5916 = vmatprep.subr.mxu0 0.0
    %5917 = vmatpush1.msra.mxu0 0.0
    %5918 = vmatprep.subr.mxu0 0.0
    %5919 = vmatpush1.msra.mxu0 0.0
    %5920 = vmatprep.subr.mxu0 0.0
    %5921 = vmatpush1.msra.mxu0 0.0
    %5922 = vmatprep.subr.mxu0 0.0
    %5923 = vmatpush1.msra.mxu0 0.0
    %5924 = vmatprep.subr.mxu0 0.0
    %5925 = vmatpush1.msra.mxu0 0.0
    %5926 = vmatprep.subr.mxu0 0.0
    %5927 = vmatpush1.msra.mxu0 0.0
    %5928 = vmatprep.mubr.f32.mxu0 0.0
    %5929 = vmatmul.mubr.f32.gmra.mrb[0].mxu0 %v5558
    %v5930 = vpop.f32.mrb[0].mxu0
    %v5931 = vadd.f32 0.0, %v5930
    %v5932 = vpop.f32.mrb[0].mxu0
    %5933 = vdwg.mxu0
    %v5934 = vadd.f32 %v5846, %v5931
    %s5935 = scalar_lea.vmem [#allocation15], 512
    %v5936 = vld [vmem:[%s5935] sm:$0xff]
    %v5937 = vld [vmem:[%s5935 + $0x8] sm:$0xff]
    %v5938 = vld [vmem:[%s5935 + $0x10] sm:$0xff]
    %v5939 = vld [vmem:[%s5935 + $0x18] sm:$0xff]
    %v5940 = vld [vmem:[%s5935 + $0x20] sm:$0xff]
    %v5941 = vld [vmem:[%s5935 + $0x28] sm:$0xff]
    %v5942 = vld [vmem:[%s5935 + $0x30] sm:$0xff]
    %v5943 = vld [vmem:[%s5935 + $0x38] sm:$0xff]
    %v5944 = vld [vmem:[%s5935 + $0x40] sm:$0xff]
    %v5945 = vld [vmem:[%s5935 + $0x48] sm:$0xff]
    %v5946 = vld [vmem:[%s5935 + $0x50] sm:$0xff]
    %v5947 = vld [vmem:[%s5935 + $0x58] sm:$0xff]
    %v5948 = vld [vmem:[%s5935 + $0x60] sm:$0xff]
    %v5949 = vld [vmem:[%s5935 + $0x68] sm:$0xff]
    %v5950 = vld [vmem:[%s5935 + $0x70] sm:$0xff]
    %v5951 = vld [vmem:[%s5935 + $0x78] sm:$0xff]
    %5952 = vmatprep.subr.mxu0 0.0
    %5953 = vmatpush1.msra.mxu0 %v5936
    %5954 = vmatprep.subr.mxu0 0.0
    %5955 = vmatpush1.msra.mxu0 %v5937
    %5956 = vmatprep.subr.mxu0 0.0
    %5957 = vmatpush1.msra.mxu0 %v5938
    %5958 = vmatprep.subr.mxu0 0.0
    %5959 = vmatpush1.msra.mxu0 %v5939
    %5960 = vmatprep.subr.mxu0 0.0
    %5961 = vmatpush1.msra.mxu0 %v5940
    %5962 = vmatprep.subr.mxu0 0.0
    %5963 = vmatpush1.msra.mxu0 %v5941
    %5964 = vmatprep.subr.mxu0 0.0
    %5965 = vmatpush1.msra.mxu0 %v5942
    %5966 = vmatprep.subr.mxu0 0.0
    %5967 = vmatpush1.msra.mxu0 %v5943
    %5968 = vmatprep.subr.mxu0 0.0
    %5969 = vmatpush1.msra.mxu0 %v5944
    %5970 = vmatprep.subr.mxu0 0.0
    %5971 = vmatpush1.msra.mxu0 %v5945
    %5972 = vmatprep.subr.mxu0 0.0
    %5973 = vmatpush1.msra.mxu0 %v5946
    %5974 = vmatprep.subr.mxu0 0.0
    %5975 = vmatpush1.msra.mxu0 %v5947
    %5976 = vmatprep.subr.mxu0 0.0
    %5977 = vmatpush1.msra.mxu0 %v5948
    %5978 = vmatprep.subr.mxu0 0.0
    %5979 = vmatpush1.msra.mxu0 %v5949
    %5980 = vmatprep.subr.mxu0 0.0
    %5981 = vmatpush1.msra.mxu0 %v5950
    %5982 = vmatprep.subr.mxu0 0.0
    %5983 = vmatpush1.msra.mxu0 %v5951
    %5984 = vmatprep.subr.mxu0 0.0
    %5985 = vmatpush1.msra.mxu0 0.0
    %5986 = vmatprep.subr.mxu0 0.0
    %5987 = vmatpush1.msra.mxu0 0.0
    %5988 = vmatprep.subr.mxu0 0.0
    %5989 = vmatpush1.msra.mxu0 0.0
    %5990 = vmatprep.subr.mxu0 0.0
    %5991 = vmatpush1.msra.mxu0 0.0
    %5992 = vmatprep.subr.mxu0 0.0
    %5993 = vmatpush1.msra.mxu0 0.0
    %5994 = vmatprep.subr.mxu0 0.0
    %5995 = vmatpush1.msra.mxu0 0.0
    %5996 = vmatprep.subr.mxu0 0.0
    %5997 = vmatpush1.msra.mxu0 0.0
    %5998 = vmatprep.subr.mxu0 0.0
    %5999 = vmatpush1.msra.mxu0 0.0
    %6000 = vmatprep.subr.mxu0 0.0
    %6001 = vmatpush1.msra.mxu0 0.0
    %6002 = vmatprep.subr.mxu0 0.0
    %6003 = vmatpush1.msra.mxu0 0.0
    %6004 = vmatprep.subr.mxu0 0.0
    %6005 = vmatpush1.msra.mxu0 0.0
    %6006 = vmatprep.subr.mxu0 0.0
    %6007 = vmatpush1.msra.mxu0 0.0
    %6008 = vmatprep.subr.mxu0 0.0
    %6009 = vmatpush1.msra.mxu0 0.0
    %6010 = vmatprep.subr.mxu0 0.0
    %6011 = vmatpush1.msra.mxu0 0.0
    %6012 = vmatprep.subr.mxu0 0.0
    %6013 = vmatpush1.msra.mxu0 0.0
    %6014 = vmatprep.subr.mxu0 0.0
    %6015 = vmatpush1.msra.mxu0 0.0
    %6016 = vmatprep.mubr.f32.mxu0 0.0
    %6017 = vmatmul.mubr.f32.gmra.mrb[0].mxu0 %v5563
    %v6018 = vpop.f32.mrb[0].mxu0
    %v6019 = vadd.f32 0.0, %v6018
    %v6020 = vpop.f32.mrb[0].mxu0
    %6021 = vdwg.mxu0
    %v6022 = vadd.f32 %v5934, %v6019
    %s6023 = scalar_lea.vmem [#allocation15], 640
    %v6024 = vld [vmem:[%s6023] sm:$0xff]
    %v6025 = vld [vmem:[%s6023 + $0x8] sm:$0xff]
    %v6026 = vld [vmem:[%s6023 + $0x10] sm:$0xff]
    %v6027 = vld [vmem:[%s6023 + $0x18] sm:$0xff]
    %v6028 = vld [vmem:[%s6023 + $0x20] sm:$0xff]
    %v6029 = vld [vmem:[%s6023 + $0x28] sm:$0xff]
    %v6030 = vld [vmem:[%s6023 + $0x30] sm:$0xff]
    %v6031 = vld [vmem:[%s6023 + $0x38] sm:$0xff]
    %v6032 = vld [vmem:[%s6023 + $0x40] sm:$0xff]
    %v6033 = vld [vmem:[%s6023 + $0x48] sm:$0xff]
    %v6034 = vld [vmem:[%s6023 + $0x50] sm:$0xff]
    %v6035 = vld [vmem:[%s6023 + $0x58] sm:$0xff]
    %v6036 = vld [vmem:[%s6023 + $0x60] sm:$0xff]
    %v6037 = vld [vmem:[%s6023 + $0x68] sm:$0xff]
    %v6038 = vld [vmem:[%s6023 + $0x70] sm:$0xff]
    %v6039 = vld [vmem:[%s6023 + $0x78] sm:$0xff]
    %6040 = vmatprep.subr.mxu0 0.0
    %6041 = vmatpush1.msra.mxu0 %v6024
    %6042 = vmatprep.subr.mxu0 0.0
    %6043 = vmatpush1.msra.mxu0 %v6025
    %6044 = vmatprep.subr.mxu0 0.0
    %6045 = vmatpush1.msra.mxu0 %v6026
    %6046 = vmatprep.subr.mxu0 0.0
    %6047 = vmatpush1.msra.mxu0 %v6027
    %6048 = vmatprep.subr.mxu0 0.0
    %6049 = vmatpush1.msra.mxu0 %v6028
    %6050 = vmatprep.subr.mxu0 0.0
    %6051 = vmatpush1.msra.mxu0 %v6029
    %6052 = vmatprep.subr.mxu0 0.0
    %6053 = vmatpush1.msra.mxu0 %v6030
    %6054 = vmatprep.subr.mxu0 0.0
    %6055 = vmatpush1.msra.mxu0 %v6031
    %6056 = vmatprep.subr.mxu0 0.0
    %6057 = vmatpush1.msra.mxu0 %v6032
    %6058 = vmatprep.subr.mxu0 0.0
    %6059 = vmatpush1.msra.mxu0 %v6033
    %6060 = vmatprep.subr.mxu0 0.0
    %6061 = vmatpush1.msra.mxu0 %v6034
    %6062 = vmatprep.subr.mxu0 0.0
    %6063 = vmatpush1.msra.mxu0 %v6035
    %6064 = vmatprep.subr.mxu0 0.0
    %6065 = vmatpush1.msra.mxu0 %v6036
    %6066 = vmatprep.subr.mxu0 0.0
    %6067 = vmatpush1.msra.mxu0 %v6037
    %6068 = vmatprep.subr.mxu0 0.0
    %6069 = vmatpush1.msra.mxu0 %v6038
    %6070 = vmatprep.subr.mxu0 0.0
    %6071 = vmatpush1.msra.mxu0 %v6039
    %6072 = vmatprep.subr.mxu0 0.0
    %6073 = vmatpush1.msra.mxu0 0.0
    %6074 = vmatprep.subr.mxu0 0.0
    %6075 = vmatpush1.msra.mxu0 0.0
    %6076 = vmatprep.subr.mxu0 0.0
    %6077 = vmatpush1.msra.mxu0 0.0
    %6078 = vmatprep.subr.mxu0 0.0
    %6079 = vmatpush1.msra.mxu0 0.0
    %6080 = vmatprep.subr.mxu0 0.0
    %6081 = vmatpush1.msra.mxu0 0.0
    %6082 = vmatprep.subr.mxu0 0.0
    %6083 = vmatpush1.msra.mxu0 0.0
    %6084 = vmatprep.subr.mxu0 0.0
    %6085 = vmatpush1.msra.mxu0 0.0
    %6086 = vmatprep.subr.mxu0 0.0
    %6087 = vmatpush1.msra.mxu0 0.0
    %6088 = vmatprep.subr.mxu0 0.0
    %6089 = vmatpush1.msra.mxu0 0.0
    %6090 = vmatprep.subr.mxu0 0.0
    %6091 = vmatpush1.msra.mxu0 0.0
    %6092 = vmatprep.subr.mxu0 0.0
    %6093 = vmatpush1.msra.mxu0 0.0
    %6094 = vmatprep.subr.mxu0 0.0
    %6095 = vmatpush1.msra.mxu0 0.0
    %6096 = vmatprep.subr.mxu0 0.0
    %6097 = vmatpush1.msra.mxu0 0.0
    %6098 = vmatprep.subr.mxu0 0.0
    %6099 = vmatpush1.msra.mxu0 0.0
    %6100 = vmatprep.subr.mxu0 0.0
    %6101 = vmatpush1.msra.mxu0 0.0
    %6102 = vmatprep.subr.mxu0 0.0
    %6103 = vmatpush1.msra.mxu0 0.0
    %6104 = vmatprep.mubr.f32.mxu0 0.0
    %6105 = vmatmul.mubr.f32.gmra.mrb[0].mxu0 %v5568
    %v6106 = vpop.f32.mrb[0].mxu0
    %v6107 = vadd.f32 0.0, %v6106
    %v6108 = vpop.f32.mrb[0].mxu0
    %6109 = vdwg.mxu0
    %v6110 = vadd.f32 %v6022, %v6107
    %s6111 = scalar_lea.vmem [#allocation15], 768
    %v6112 = vld [vmem:[%s6111] sm:$0xff]
    %v6113 = vld [vmem:[%s6111 + $0x8] sm:$0xff]
    %v6114 = vld [vmem:[%s6111 + $0x10] sm:$0xff]
    %v6115 = vld [vmem:[%s6111 + $0x18] sm:$0xff]
    %v6116 = vld [vmem:[%s6111 + $0x20] sm:$0xff]
    %v6117 = vld [vmem:[%s6111 + $0x28] sm:$0xff]
    %v6118 = vld [vmem:[%s6111 + $0x30] sm:$0xff]
    %v6119 = vld [vmem:[%s6111 + $0x38] sm:$0xff]
    %v6120 = vld [vmem:[%s6111 + $0x40] sm:$0xff]
    %v6121 = vld [vmem:[%s6111 + $0x48] sm:$0xff]
    %v6122 = vld [vmem:[%s6111 + $0x50] sm:$0xff]
    %v6123 = vld [vmem:[%s6111 + $0x58] sm:$0xff]
    %v6124 = vld [vmem:[%s6111 + $0x60] sm:$0xff]
    %v6125 = vld [vmem:[%s6111 + $0x68] sm:$0xff]
    %v6126 = vld [vmem:[%s6111 + $0x70] sm:$0xff]
    %v6127 = vld [vmem:[%s6111 + $0x78] sm:$0xff]
    %6128 = vmatprep.subr.mxu0 0.0
    %6129 = vmatpush1.msra.mxu0 %v6112
    %6130 = vmatprep.subr.mxu0 0.0
    %6131 = vmatpush1.msra.mxu0 %v6113
    %6132 = vmatprep.subr.mxu0 0.0
    %6133 = vmatpush1.msra.mxu0 %v6114
    %6134 = vmatprep.subr.mxu0 0.0
    %6135 = vmatpush1.msra.mxu0 %v6115
    %6136 = vmatprep.subr.mxu0 0.0
    %6137 = vmatpush1.msra.mxu0 %v6116
    %6138 = vmatprep.subr.mxu0 0.0
    %6139 = vmatpush1.msra.mxu0 %v6117
    %6140 = vmatprep.subr.mxu0 0.0
    %6141 = vmatpush1.msra.mxu0 %v6118
    %6142 = vmatprep.subr.mxu0 0.0
    %6143 = vmatpush1.msra.mxu0 %v6119
    %6144 = vmatprep.subr.mxu0 0.0
    %6145 = vmatpush1.msra.mxu0 %v6120
    %6146 = vmatprep.subr.mxu0 0.0
    %6147 = vmatpush1.msra.mxu0 %v6121
    %6148 = vmatprep.subr.mxu0 0.0
    %6149 = vmatpush1.msra.mxu0 %v6122
    %6150 = vmatprep.subr.mxu0 0.0
    %6151 = vmatpush1.msra.mxu0 %v6123
    %6152 = vmatprep.subr.mxu0 0.0
    %6153 = vmatpush1.msra.mxu0 %v6124
    %6154 = vmatprep.subr.mxu0 0.0
    %6155 = vmatpush1.msra.mxu0 %v6125
    %6156 = vmatprep.subr.mxu0 0.0
    %6157 = vmatpush1.msra.mxu0 %v6126
    %6158 = vmatprep.subr.mxu0 0.0
    %6159 = vmatpush1.msra.mxu0 %v6127
    %6160 = vmatprep.subr.mxu0 0.0
    %6161 = vmatpush1.msra.mxu0 0.0
    %6162 = vmatprep.subr.mxu0 0.0
    %6163 = vmatpush1.msra.mxu0 0.0
    %6164 = vmatprep.subr.mxu0 0.0
    %6165 = vmatpush1.msra.mxu0 0.0
    %6166 = vmatprep.subr.mxu0 0.0
    %6167 = vmatpush1.msra.mxu0 0.0
    %6168 = vmatprep.subr.mxu0 0.0
    %6169 = vmatpush1.msra.mxu0 0.0
    %6170 = vmatprep.subr.mxu0 0.0
    %6171 = vmatpush1.msra.mxu0 0.0
    %6172 = vmatprep.subr.mxu0 0.0
    %6173 = vmatpush1.msra.mxu0 0.0
    %6174 = vmatprep.subr.mxu0 0.0
    %6175 = vmatpush1.msra.mxu0 0.0
    %6176 = vmatprep.subr.mxu0 0.0
    %6177 = vmatpush1.msra.mxu0 0.0
    %6178 = vmatprep.subr.mxu0 0.0
    %6179 = vmatpush1.msra.mxu0 0.0
    %6180 = vmatprep.subr.mxu0 0.0
    %6181 = vmatpush1.msra.mxu0 0.0
    %6182 = vmatprep.subr.mxu0 0.0
    %6183 = vmatpush1.msra.mxu0 0.0
    %6184 = vmatprep.subr.mxu0 0.0
    %6185 = vmatpush1.msra.mxu0 0.0
    %6186 = vmatprep.subr.mxu0 0.0
    %6187 = vmatpush1.msra.mxu0 0.0
    %6188 = vmatprep.subr.mxu0 0.0
    %6189 = vmatpush1.msra.mxu0 0.0
    %6190 = vmatprep.subr.mxu0 0.0
    %6191 = vmatpush1.msra.mxu0 0.0
    %6192 = vmatprep.mubr.f32.mxu0 0.0
    %6193 = vmatmul.mubr.f32.gmra.mrb[0].mxu0 %v5573
    %v6194 = vpop.f32.mrb[0].mxu0
    %v6195 = vadd.f32 0.0, %v6194
    %v6196 = vpop.f32.mrb[0].mxu0
    %6197 = vdwg.mxu0
    %v6198 = vadd.f32 %v6110, %v6195
    %s6199 = scalar_lea.vmem [#allocation15], 896
    %v6200 = vld [vmem:[%s6199] sm:$0xff]
    %v6201 = vld [vmem:[%s6199 + $0x8] sm:$0xff]
    %v6202 = vld [vmem:[%s6199 + $0x10] sm:$0xff]
    %v6203 = vld [vmem:[%s6199 + $0x18] sm:$0xff]
    %v6204 = vld [vmem:[%s6199 + $0x20] sm:$0xff]
    %v6205 = vld [vmem:[%s6199 + $0x28] sm:$0xff]
    %v6206 = vld [vmem:[%s6199 + $0x30] sm:$0xff]
    %v6207 = vld [vmem:[%s6199 + $0x38] sm:$0xff]
    %v6208 = vld [vmem:[%s6199 + $0x40] sm:$0xff]
    %v6209 = vld [vmem:[%s6199 + $0x48] sm:$0xff]
    %v6210 = vld [vmem:[%s6199 + $0x50] sm:$0xff]
    %v6211 = vld [vmem:[%s6199 + $0x58] sm:$0xff]
    %v6212 = vld [vmem:[%s6199 + $0x60] sm:$0xff]
    %v6213 = vld [vmem:[%s6199 + $0x68] sm:$0xff]
    %v6214 = vld [vmem:[%s6199 + $0x70] sm:$0xff]
    %v6215 = vld [vmem:[%s6199 + $0x78] sm:$0xff]
    %6216 = vmatprep.subr.mxu0 0.0
    %6217 = vmatpush1.msra.mxu0 %v6200
    %6218 = vmatprep.subr.mxu0 0.0
    %6219 = vmatpush1.msra.mxu0 %v6201
    %6220 = vmatprep.subr.mxu0 0.0
    %6221 = vmatpush1.msra.mxu0 %v6202
    %6222 = vmatprep.subr.mxu0 0.0
    %6223 = vmatpush1.msra.mxu0 %v6203
    %6224 = vmatprep.subr.mxu0 0.0
    %6225 = vmatpush1.msra.mxu0 %v6204
    %6226 = vmatprep.subr.mxu0 0.0
    %6227 = vmatpush1.msra.mxu0 %v6205
    %6228 = vmatprep.subr.mxu0 0.0
    %6229 = vmatpush1.msra.mxu0 %v6206
    %6230 = vmatprep.subr.mxu0 0.0
    %6231 = vmatpush1.msra.mxu0 %v6207
    %6232 = vmatprep.subr.mxu0 0.0
    %6233 = vmatpush1.msra.mxu0 %v6208
    %6234 = vmatprep.subr.mxu0 0.0
    %6235 = vmatpush1.msra.mxu0 %v6209
    %6236 = vmatprep.subr.mxu0 0.0
    %6237 = vmatpush1.msra.mxu0 %v6210
    %6238 = vmatprep.subr.mxu0 0.0
    %6239 = vmatpush1.msra.mxu0 %v6211
    %6240 = vmatprep.subr.mxu0 0.0
    %6241 = vmatpush1.msra.mxu0 %v6212
    %6242 = vmatprep.subr.mxu0 0.0
    %6243 = vmatpush1.msra.mxu0 %v6213
    %6244 = vmatprep.subr.mxu0 0.0
    %6245 = vmatpush1.msra.mxu0 %v6214
    %6246 = vmatprep.subr.mxu0 0.0
    %6247 = vmatpush1.msra.mxu0 %v6215
    %6248 = vmatprep.subr.mxu0 0.0
    %6249 = vmatpush1.msra.mxu0 0.0
    %6250 = vmatprep.subr.mxu0 0.0
    %6251 = vmatpush1.msra.mxu0 0.0
    %6252 = vmatprep.subr.mxu0 0.0
    %6253 = vmatpush1.msra.mxu0 0.0
    %6254 = vmatprep.subr.mxu0 0.0
    %6255 = vmatpush1.msra.mxu0 0.0
    %6256 = vmatprep.subr.mxu0 0.0
    %6257 = vmatpush1.msra.mxu0 0.0
    %6258 = vmatprep.subr.mxu0 0.0
    %6259 = vmatpush1.msra.mxu0 0.0
    %6260 = vmatprep.subr.mxu0 0.0
    %6261 = vmatpush1.msra.mxu0 0.0
    %6262 = vmatprep.subr.mxu0 0.0
    %6263 = vmatpush1.msra.mxu0 0.0
    %6264 = vmatprep.subr.mxu0 0.0
    %6265 = vmatpush1.msra.mxu0 0.0
    %6266 = vmatprep.subr.mxu0 0.0
    %6267 = vmatpush1.msra.mxu0 0.0
    %6268 = vmatprep.subr.mxu0 0.0
    %6269 = vmatpush1.msra.mxu0 0.0
    %6270 = vmatprep.subr.mxu0 0.0
    %6271 = vmatpush1.msra.mxu0 0.0
    %6272 = vmatprep.subr.mxu0 0.0
    %6273 = vmatpush1.msra.mxu0 0.0
    %6274 = vmatprep.subr.mxu0 0.0
    %6275 = vmatpush1.msra.mxu0 0.0
    %6276 = vmatprep.subr.mxu0 0.0
    %6277 = vmatpush1.msra.mxu0 0.0
    %6278 = vmatprep.subr.mxu0 0.0
    %6279 = vmatpush1.msra.mxu0 0.0
    %6280 = vmatprep.mubr.f32.mxu0 0.0
    %6281 = vmatmul.mubr.f32.gmra.mrb[0].mxu0 %v5578
    %v6282 = vpop.f32.mrb[0].mxu0
    %v6283 = vadd.f32 0.0, %v6282
    %v6284 = vpop.f32.mrb[0].mxu0
    %6285 = vdwg.mxu0
    %v6286 = vadd.f32 %v6198, %v6283
    %s6287 = scalar_lea.vmem [#allocation15], 1024
    %v6288 = vld [vmem:[%s6287] sm:$0xff]
    %v6289 = vld [vmem:[%s6287 + $0x8] sm:$0xff]
    %v6290 = vld [vmem:[%s6287 + $0x10] sm:$0xff]
    %v6291 = vld [vmem:[%s6287 + $0x18] sm:$0xff]
    %v6292 = vld [vmem:[%s6287 + $0x20] sm:$0xff]
    %v6293 = vld [vmem:[%s6287 + $0x28] sm:$0xff]
    %v6294 = vld [vmem:[%s6287 + $0x30] sm:$0xff]
    %v6295 = vld [vmem:[%s6287 + $0x38] sm:$0xff]
    %v6296 = vld [vmem:[%s6287 + $0x40] sm:$0xff]
    %v6297 = vld [vmem:[%s6287 + $0x48] sm:$0xff]
    %v6298 = vld [vmem:[%s6287 + $0x50] sm:$0xff]
    %v6299 = vld [vmem:[%s6287 + $0x58] sm:$0xff]
    %v6300 = vld [vmem:[%s6287 + $0x60] sm:$0xff]
    %v6301 = vld [vmem:[%s6287 + $0x68] sm:$0xff]
    %v6302 = vld [vmem:[%s6287 + $0x70] sm:$0xff]
    %v6303 = vld [vmem:[%s6287 + $0x78] sm:$0xff]
    %6304 = vmatprep.subr.mxu0 0.0
    %6305 = vmatpush1.msra.mxu0 %v6288
    %6306 = vmatprep.subr.mxu0 0.0
    %6307 = vmatpush1.msra.mxu0 %v6289
    %6308 = vmatprep.subr.mxu0 0.0
    %6309 = vmatpush1.msra.mxu0 %v6290
    %6310 = vmatprep.subr.mxu0 0.0
    %6311 = vmatpush1.msra.mxu0 %v6291
    %6312 = vmatprep.subr.mxu0 0.0
    %6313 = vmatpush1.msra.mxu0 %v6292
    %6314 = vmatprep.subr.mxu0 0.0
    %6315 = vmatpush1.msra.mxu0 %v6293
    %6316 = vmatprep.subr.mxu0 0.0
    %6317 = vmatpush1.msra.mxu0 %v6294
    %6318 = vmatprep.subr.mxu0 0.0
    %6319 = vmatpush1.msra.mxu0 %v6295
    %6320 = vmatprep.subr.mxu0 0.0
    %6321 = vmatpush1.msra.mxu0 %v6296
    %6322 = vmatprep.subr.mxu0 0.0
    %6323 = vmatpush1.msra.mxu0 %v6297
    %6324 = vmatprep.subr.mxu0 0.0
    %6325 = vmatpush1.msra.mxu0 %v6298
    %6326 = vmatprep.subr.mxu0 0.0
    %6327 = vmatpush1.msra.mxu0 %v6299
    %6328 = vmatprep.subr.mxu0 0.0
    %6329 = vmatpush1.msra.mxu0 %v6300
    %6330 = vmatprep.subr.mxu0 0.0
    %6331 = vmatpush1.msra.mxu0 %v6301
    %6332 = vmatprep.subr.mxu0 0.0
    %6333 = vmatpush1.msra.mxu0 %v6302
    %6334 = vmatprep.subr.mxu0 0.0
    %6335 = vmatpush1.msra.mxu0 %v6303
    %6336 = vmatprep.subr.mxu0 0.0
    %6337 = vmatpush1.msra.mxu0 0.0
    %6338 = vmatprep.subr.mxu0 0.0
    %6339 = vmatpush1.msra.mxu0 0.0
    %6340 = vmatprep.subr.mxu0 0.0
    %6341 = vmatpush1.msra.mxu0 0.0
    %6342 = vmatprep.subr.mxu0 0.0
    %6343 = vmatpush1.msra.mxu0 0.0
    %6344 = vmatprep.subr.mxu0 0.0
    %6345 = vmatpush1.msra.mxu0 0.0
    %6346 = vmatprep.subr.mxu0 0.0
    %6347 = vmatpush1.msra.mxu0 0.0
    %6348 = vmatprep.subr.mxu0 0.0
    %6349 = vmatpush1.msra.mxu0 0.0
    %6350 = vmatprep.subr.mxu0 0.0
    %6351 = vmatpush1.msra.mxu0 0.0
    %6352 = vmatprep.subr.mxu0 0.0
    %6353 = vmatpush1.msra.mxu0 0.0
    %6354 = vmatprep.subr.mxu0 0.0
    %6355 = vmatpush1.msra.mxu0 0.0
    %6356 = vmatprep.subr.mxu0 0.0
    %6357 = vmatpush1.msra.mxu0 0.0
    %6358 = vmatprep.subr.mxu0 0.0
    %6359 = vmatpush1.msra.mxu0 0.0
    %6360 = vmatprep.subr.mxu0 0.0
    %6361 = vmatpush1.msra.mxu0 0.0
    %6362 = vmatprep.subr.mxu0 0.0
    %6363 = vmatpush1.msra.mxu0 0.0
    %6364 = vmatprep.subr.mxu0 0.0
    %6365 = vmatpush1.msra.mxu0 0.0
    %6366 = vmatprep.subr.mxu0 0.0
    %6367 = vmatpush1.msra.mxu0 0.0
    %6368 = vmatprep.mubr.f32.mxu0 0.0
    %6369 = vmatmul.mubr.f32.gmra.mrb[0].mxu0 %v5583
    %v6370 = vpop.f32.mrb[0].mxu0
    %v6371 = vadd.f32 0.0, %v6370
    %v6372 = vpop.f32.mrb[0].mxu0
    %6373 = vdwg.mxu0
    %v6374 = vadd.f32 %v6286, %v6371
    %v6375 = vrot.slane %v6374, 4
    %v6376 = vadd.f32 %v6374, %v6375
    %v6377 = vrot.slane %v6376, 2
    %v6378 = vadd.f32 %v6376, %v6377
    %v6379 = vrot.slane %v6378, 1
    %v6380 = vadd.f32 %v6378, %v6379
    %v6381 = vrcp.pop 8.0
    %v6382 = vmul.f32 %v6380, %v6381
    %v6383 = vmul.f32 %v6374, %v6374
    %v6384 = vrot.slane %v6383, 4
    %v6385 = vadd.f32 %v6383, %v6384
    %v6386 = vrot.slane %v6385, 2
    %v6387 = vadd.f32 %v6385, %v6386
    %v6388 = vrot.slane %v6387, 1
    %v6389 = vadd.f32 %v6387, %v6388
    %v6390 = vmul.f32 %v6389, %v6381
    %v6391 = vmul.f32 %v6382, %v6382
    %v6392 = vsub.f32 %v6390, %v6391
    %v6393 = vsub.f32 %v6374, %v6382
    %v6394 = vadd.f32 %v6392, 1e-05
    %v6395 = vrsqrt.pop %v6394
    %v6396 = vmul.f32 %v6393, %v6395
    %v6397 = vld [vmem:[#allocation16] sm:$0x1]
    %v6399 = vlaneseq
    %v6400 = vshrl.u32 %v6399, 7
    %v6401 = vsub.s32 0, %v6400
    %v6402 = vrot.slane %v6397, %v6401
    %v6404 = vmul.f32 %v6396, %v6402
    %v6405 = vld [vmem:[#allocation18] sm:$0x1]
    %v6407 = vlaneseq
    %v6408 = vshrl.u32 %v6407, 7
    %v6409 = vsub.s32 0, %v6408
    %v6410 = vrot.slane %v6405, %v6409
    %v6412 = vadd.f32 %v6404, %v6410
    %v6413 = vmax.f32 %v6412, 0.0
    %v6414 = vld [vmem:[#allocation21] sm:$0x1]
    %v6415 = vld [vmem:[#allocation19] sm:$0xff]
    %v6416 = vld [vmem:[#allocation19 + $0x8] sm:$0xff]
    %v6417 = vld [vmem:[#allocation19 + $0x10] sm:$0xff]
    %v6418 = vld [vmem:[#allocation19 + $0x18] sm:$0xff]
    %v6419 = vld [vmem:[#allocation19 + $0x20] sm:$0xff]
    %v6420 = vld [vmem:[#allocation19 + $0x28] sm:$0xff]
    %v6421 = vld [vmem:[#allocation19 + $0x30] sm:$0xff]
    %v6422 = vld [vmem:[#allocation19 + $0x38] sm:$0xff]
    %v6423 = vld [vmem:[#allocation19 + $0x40] sm:$0xff]
    %v6424 = vld [vmem:[#allocation19 + $0x48] sm:$0xff]
    %v6425 = vld [vmem:[#allocation19 + $0x50] sm:$0xff]
    %v6426 = vld [vmem:[#allocation19 + $0x58] sm:$0xff]
    %v6427 = vld [vmem:[#allocation19 + $0x60] sm:$0xff]
    %v6428 = vld [vmem:[#allocation19 + $0x68] sm:$0xff]
    %v6429 = vld [vmem:[#allocation19 + $0x70] sm:$0xff]
    %v6430 = vld [vmem:[#allocation19 + $0x78] sm:$0xff]
    %6431 = vmatprep.subr.mxu0 0.0
    %6432 = vmatpush1.msra.mxu0 %v6415
    %6433 = vmatprep.subr.mxu0 0.0
    %6434 = vmatpush1.msra.mxu0 %v6416
    %6435 = vmatprep.subr.mxu0 0.0
    %6436 = vmatpush1.msra.mxu0 %v6417
    %6437 = vmatprep.subr.mxu0 0.0
    %6438 = vmatpush1.msra.mxu0 %v6418
    %6439 = vmatprep.subr.mxu0 0.0
    %6440 = vmatpush1.msra.mxu0 %v6419
    %6441 = vmatprep.subr.mxu0 0.0
    %6442 = vmatpush1.msra.mxu0 %v6420
    %6443 = vmatprep.subr.mxu0 0.0
    %6444 = vmatpush1.msra.mxu0 %v6421
    %6445 = vmatprep.subr.mxu0 0.0
    %6446 = vmatpush1.msra.mxu0 %v6422
    %6447 = vmatprep.subr.mxu0 0.0
    %6448 = vmatpush1.msra.mxu0 %v6423
    %6449 = vmatprep.subr.mxu0 0.0
    %6450 = vmatpush1.msra.mxu0 %v6424
    %6451 = vmatprep.subr.mxu0 0.0
    %6452 = vmatpush1.msra.mxu0 %v6425
    %6453 = vmatprep.subr.mxu0 0.0
    %6454 = vmatpush1.msra.mxu0 %v6426
    %6455 = vmatprep.subr.mxu0 0.0
    %6456 = vmatpush1.msra.mxu0 %v6427
    %6457 = vmatprep.subr.mxu0 0.0
    %6458 = vmatpush1.msra.mxu0 %v6428
    %6459 = vmatprep.subr.mxu0 0.0
    %6460 = vmatpush1.msra.mxu0 %v6429
    %6461 = vmatprep.subr.mxu0 0.0
    %6462 = vmatpush1.msra.mxu0 %v6430
    %6463 = vmatprep.subr.mxu0 0.0
    %6464 = vmatpush1.msra.mxu0 0.0
    %6465 = vmatprep.subr.mxu0 0.0
    %6466 = vmatpush1.msra.mxu0 0.0
    %6467 = vmatprep.subr.mxu0 0.0
    %6468 = vmatpush1.msra.mxu0 0.0
    %6469 = vmatprep.subr.mxu0 0.0
    %6470 = vmatpush1.msra.mxu0 0.0
    %6471 = vmatprep.subr.mxu0 0.0
    %6472 = vmatpush1.msra.mxu0 0.0
    %6473 = vmatprep.subr.mxu0 0.0
    %6474 = vmatpush1.msra.mxu0 0.0
    %6475 = vmatprep.subr.mxu0 0.0
    %6476 = vmatpush1.msra.mxu0 0.0
    %6477 = vmatprep.subr.mxu0 0.0
    %6478 = vmatpush1.msra.mxu0 0.0
    %6479 = vmatprep.subr.mxu0 0.0
    %6480 = vmatpush1.msra.mxu0 0.0
    %6481 = vmatprep.subr.mxu0 0.0
    %6482 = vmatpush1.msra.mxu0 0.0
    %6483 = vmatprep.subr.mxu0 0.0
    %6484 = vmatpush1.msra.mxu0 0.0
    %6485 = vmatprep.subr.mxu0 0.0
    %6486 = vmatpush1.msra.mxu0 0.0
    %6487 = vmatprep.subr.mxu0 0.0
    %6488 = vmatpush1.msra.mxu0 0.0
    %6489 = vmatprep.subr.mxu0 0.0
    %6490 = vmatpush1.msra.mxu0 0.0
    %6491 = vmatprep.subr.mxu0 0.0
    %6492 = vmatpush1.msra.mxu0 0.0
    %6493 = vmatprep.subr.mxu0 0.0
    %6494 = vmatpush1.msra.mxu0 0.0
    %6495 = vmatprep.mubr.f32.mxu0 0.0
    %6496 = vmatmul.mubr.f32.gmra.mrb[0].mxu0 %v6413
    %v6497 = vpop.f32.mrb[0].mxu0
    %v6498 = vadd.f32 0.0, %v6497
    %v6499 = vpop.f32.mrb[0].mxu0
    %6500 = vdwg.mxu0
    %v6502 = vlaneseq
    %v6503 = vshrl.u32 %v6502, 7
    %v6504 = vsub.s32 0, %v6503
    %v6505 = vrot.slane %v6414, %v6504
    %v6507 = vadd.f32 %v6505, %v6498
    %s6508 = scalar_lea.vmem [#allocation19], 128
    %v6509 = vld [vmem:[%s6508] sm:$0xff]
    %v6510 = vld [vmem:[%s6508 + $0x8] sm:$0xff]
    %v6511 = vld [vmem:[%s6508 + $0x10] sm:$0xff]
    %v6512 = vld [vmem:[%s6508 + $0x18] sm:$0xff]
    %v6513 = vld [vmem:[%s6508 + $0x20] sm:$0xff]
    %v6514 = vld [vmem:[%s6508 + $0x28] sm:$0xff]
    %v6515 = vld [vmem:[%s6508 + $0x30] sm:$0xff]
    %v6516 = vld [vmem:[%s6508 + $0x38] sm:$0xff]
    %v6517 = vld [vmem:[%s6508 + $0x40] sm:$0xff]
    %v6518 = vld [vmem:[%s6508 + $0x48] sm:$0xff]
    %v6519 = vld [vmem:[%s6508 + $0x50] sm:$0xff]
    %v6520 = vld [vmem:[%s6508 + $0x58] sm:$0xff]
    %v6521 = vld [vmem:[%s6508 + $0x60] sm:$0xff]
    %v6522 = vld [vmem:[%s6508 + $0x68] sm:$0xff]
    %v6523 = vld [vmem:[%s6508 + $0x70] sm:$0xff]
    %v6524 = vld [vmem:[%s6508 + $0x78] sm:$0xff]
    %v6526 = vrot.slane %v6413, 2
    %6528 = vmatprep.subr.mxu0 0.0
    %6529 = vmatpush1.msra.mxu0 %v6509
    %6530 = vmatprep.subr.mxu0 0.0
    %6531 = vmatpush1.msra.mxu0 %v6510
    %6532 = vmatprep.subr.mxu0 0.0
    %6533 = vmatpush1.msra.mxu0 %v6511
    %6534 = vmatprep.subr.mxu0 0.0
    %6535 = vmatpush1.msra.mxu0 %v6512
    %6536 = vmatprep.subr.mxu0 0.0
    %6537 = vmatpush1.msra.mxu0 %v6513
    %6538 = vmatprep.subr.mxu0 0.0
    %6539 = vmatpush1.msra.mxu0 %v6514
    %6540 = vmatprep.subr.mxu0 0.0
    %6541 = vmatpush1.msra.mxu0 %v6515
    %6542 = vmatprep.subr.mxu0 0.0
    %6543 = vmatpush1.msra.mxu0 %v6516
    %6544 = vmatprep.subr.mxu0 0.0
    %6545 = vmatpush1.msra.mxu0 %v6517
    %6546 = vmatprep.subr.mxu0 0.0
    %6547 = vmatpush1.msra.mxu0 %v6518
    %6548 = vmatprep.subr.mxu0 0.0
    %6549 = vmatpush1.msra.mxu0 %v6519
    %6550 = vmatprep.subr.mxu0 0.0
    %6551 = vmatpush1.msra.mxu0 %v6520
    %6552 = vmatprep.subr.mxu0 0.0
    %6553 = vmatpush1.msra.mxu0 %v6521
    %6554 = vmatprep.subr.mxu0 0.0
    %6555 = vmatpush1.msra.mxu0 %v6522
    %6556 = vmatprep.subr.mxu0 0.0
    %6557 = vmatpush1.msra.mxu0 %v6523
    %6558 = vmatprep.subr.mxu0 0.0
    %6559 = vmatpush1.msra.mxu0 %v6524
    %6560 = vmatprep.subr.mxu0 0.0
    %6561 = vmatpush1.msra.mxu0 0.0
    %6562 = vmatprep.subr.mxu0 0.0
    %6563 = vmatpush1.msra.mxu0 0.0
    %6564 = vmatprep.subr.mxu0 0.0
    %6565 = vmatpush1.msra.mxu0 0.0
    %6566 = vmatprep.subr.mxu0 0.0
    %6567 = vmatpush1.msra.mxu0 0.0
    %6568 = vmatprep.subr.mxu0 0.0
    %6569 = vmatpush1.msra.mxu0 0.0
    %6570 = vmatprep.subr.mxu0 0.0
    %6571 = vmatpush1.msra.mxu0 0.0
    %6572 = vmatprep.subr.mxu0 0.0
    %6573 = vmatpush1.msra.mxu0 0.0
    %6574 = vmatprep.subr.mxu0 0.0
    %6575 = vmatpush1.msra.mxu0 0.0
    %6576 = vmatprep.subr.mxu0 0.0
    %6577 = vmatpush1.msra.mxu0 0.0
    %6578 = vmatprep.subr.mxu0 0.0
    %6579 = vmatpush1.msra.mxu0 0.0
    %6580 = vmatprep.subr.mxu0 0.0
    %6581 = vmatpush1.msra.mxu0 0.0
    %6582 = vmatprep.subr.mxu0 0.0
    %6583 = vmatpush1.msra.mxu0 0.0
    %6584 = vmatprep.subr.mxu0 0.0
    %6585 = vmatpush1.msra.mxu0 0.0
    %6586 = vmatprep.subr.mxu0 0.0
    %6587 = vmatpush1.msra.mxu0 0.0
    %6588 = vmatprep.subr.mxu0 0.0
    %6589 = vmatpush1.msra.mxu0 0.0
    %6590 = vmatprep.subr.mxu0 0.0
    %6591 = vmatpush1.msra.mxu0 0.0
    %6592 = vmatprep.mubr.f32.mxu0 0.0
    %6593 = vmatmul.mubr.f32.gmra.mrb[0].mxu0 %v6526
    %v6594 = vpop.f32.mrb[0].mxu0
    %v6595 = vadd.f32 0.0, %v6594
    %v6596 = vpop.f32.mrb[0].mxu0
    %6597 = vdwg.mxu0
    %v6598 = vadd.f32 %v6507, %v6595
    %s6599 = scalar_lea.vmem [#allocation19], 256
    %v6600 = vld [vmem:[%s6599] sm:$0xff]
    %v6601 = vld [vmem:[%s6599 + $0x8] sm:$0xff]
    %v6602 = vld [vmem:[%s6599 + $0x10] sm:$0xff]
    %v6603 = vld [vmem:[%s6599 + $0x18] sm:$0xff]
    %v6604 = vld [vmem:[%s6599 + $0x20] sm:$0xff]
    %v6605 = vld [vmem:[%s6599 + $0x28] sm:$0xff]
    %v6606 = vld [vmem:[%s6599 + $0x30] sm:$0xff]
    %v6607 = vld [vmem:[%s6599 + $0x38] sm:$0xff]
    %v6608 = vld [vmem:[%s6599 + $0x40] sm:$0xff]
    %v6609 = vld [vmem:[%s6599 + $0x48] sm:$0xff]
    %v6610 = vld [vmem:[%s6599 + $0x50] sm:$0xff]
    %v6611 = vld [vmem:[%s6599 + $0x58] sm:$0xff]
    %v6612 = vld [vmem:[%s6599 + $0x60] sm:$0xff]
    %v6613 = vld [vmem:[%s6599 + $0x68] sm:$0xff]
    %v6614 = vld [vmem:[%s6599 + $0x70] sm:$0xff]
    %v6615 = vld [vmem:[%s6599 + $0x78] sm:$0xff]
    %v6616 = vrot.slane %v6413, 4
    %6618 = vmatprep.subr.mxu0 0.0
    %6619 = vmatpush1.msra.mxu0 %v6600
    %6620 = vmatprep.subr.mxu0 0.0
    %6621 = vmatpush1.msra.mxu0 %v6601
    %6622 = vmatprep.subr.mxu0 0.0
    %6623 = vmatpush1.msra.mxu0 %v6602
    %6624 = vmatprep.subr.mxu0 0.0
    %6625 = vmatpush1.msra.mxu0 %v6603
    %6626 = vmatprep.subr.mxu0 0.0
    %6627 = vmatpush1.msra.mxu0 %v6604
    %6628 = vmatprep.subr.mxu0 0.0
    %6629 = vmatpush1.msra.mxu0 %v6605
    %6630 = vmatprep.subr.mxu0 0.0
    %6631 = vmatpush1.msra.mxu0 %v6606
    %6632 = vmatprep.subr.mxu0 0.0
    %6633 = vmatpush1.msra.mxu0 %v6607
    %6634 = vmatprep.subr.mxu0 0.0
    %6635 = vmatpush1.msra.mxu0 %v6608
    %6636 = vmatprep.subr.mxu0 0.0
    %6637 = vmatpush1.msra.mxu0 %v6609
    %6638 = vmatprep.subr.mxu0 0.0
    %6639 = vmatpush1.msra.mxu0 %v6610
    %6640 = vmatprep.subr.mxu0 0.0
    %6641 = vmatpush1.msra.mxu0 %v6611
    %6642 = vmatprep.subr.mxu0 0.0
    %6643 = vmatpush1.msra.mxu0 %v6612
    %6644 = vmatprep.subr.mxu0 0.0
    %6645 = vmatpush1.msra.mxu0 %v6613
    %6646 = vmatprep.subr.mxu0 0.0
    %6647 = vmatpush1.msra.mxu0 %v6614
    %6648 = vmatprep.subr.mxu0 0.0
    %6649 = vmatpush1.msra.mxu0 %v6615
    %6650 = vmatprep.subr.mxu0 0.0
    %6651 = vmatpush1.msra.mxu0 0.0
    %6652 = vmatprep.subr.mxu0 0.0
    %6653 = vmatpush1.msra.mxu0 0.0
    %6654 = vmatprep.subr.mxu0 0.0
    %6655 = vmatpush1.msra.mxu0 0.0
    %6656 = vmatprep.subr.mxu0 0.0
    %6657 = vmatpush1.msra.mxu0 0.0
    %6658 = vmatprep.subr.mxu0 0.0
    %6659 = vmatpush1.msra.mxu0 0.0
    %6660 = vmatprep.subr.mxu0 0.0
    %6661 = vmatpush1.msra.mxu0 0.0
    %6662 = vmatprep.subr.mxu0 0.0
    %6663 = vmatpush1.msra.mxu0 0.0
    %6664 = vmatprep.subr.mxu0 0.0
    %6665 = vmatpush1.msra.mxu0 0.0
    %6666 = vmatprep.subr.mxu0 0.0
    %6667 = vmatpush1.msra.mxu0 0.0
    %6668 = vmatprep.subr.mxu0 0.0
    %6669 = vmatpush1.msra.mxu0 0.0
    %6670 = vmatprep.subr.mxu0 0.0
    %6671 = vmatpush1.msra.mxu0 0.0
    %6672 = vmatprep.subr.mxu0 0.0
    %6673 = vmatpush1.msra.mxu0 0.0
    %6674 = vmatprep.subr.mxu0 0.0
    %6675 = vmatpush1.msra.mxu0 0.0
    %6676 = vmatprep.subr.mxu0 0.0
    %6677 = vmatpush1.msra.mxu0 0.0
    %6678 = vmatprep.subr.mxu0 0.0
    %6679 = vmatpush1.msra.mxu0 0.0
    %6680 = vmatprep.subr.mxu0 0.0
    %6681 = vmatpush1.msra.mxu0 0.0
    %6682 = vmatprep.mubr.f32.mxu0 0.0
    %6683 = vmatmul.mubr.f32.gmra.mrb[0].mxu0 %v6616
    %v6684 = vpop.f32.mrb[0].mxu0
    %v6685 = vadd.f32 0.0, %v6684
    %v6686 = vpop.f32.mrb[0].mxu0
    %6687 = vdwg.mxu0
    %v6688 = vadd.f32 %v6598, %v6685
    %s6689 = scalar_lea.vmem [#allocation19], 384
    %v6690 = vld [vmem:[%s6689] sm:$0xff]
    %v6691 = vld [vmem:[%s6689 + $0x8] sm:$0xff]
    %v6692 = vld [vmem:[%s6689 + $0x10] sm:$0xff]
    %v6693 = vld [vmem:[%s6689 + $0x18] sm:$0xff]
    %v6694 = vld [vmem:[%s6689 + $0x20] sm:$0xff]
    %v6695 = vld [vmem:[%s6689 + $0x28] sm:$0xff]
    %v6696 = vld [vmem:[%s6689 + $0x30] sm:$0xff]
    %v6697 = vld [vmem:[%s6689 + $0x38] sm:$0xff]
    %v6698 = vld [vmem:[%s6689 + $0x40] sm:$0xff]
    %v6699 = vld [vmem:[%s6689 + $0x48] sm:$0xff]
    %v6700 = vld [vmem:[%s6689 + $0x50] sm:$0xff]
    %v6701 = vld [vmem:[%s6689 + $0x58] sm:$0xff]
    %v6702 = vld [vmem:[%s6689 + $0x60] sm:$0xff]
    %v6703 = vld [vmem:[%s6689 + $0x68] sm:$0xff]
    %v6704 = vld [vmem:[%s6689 + $0x70] sm:$0xff]
    %v6705 = vld [vmem:[%s6689 + $0x78] sm:$0xff]
    %v6706 = vrot.slane %v6413, 6
    %6708 = vmatprep.subr.mxu0 0.0
    %6709 = vmatpush1.msra.mxu0 %v6690
    %6710 = vmatprep.subr.mxu0 0.0
    %6711 = vmatpush1.msra.mxu0 %v6691
    %6712 = vmatprep.subr.mxu0 0.0
    %6713 = vmatpush1.msra.mxu0 %v6692
    %6714 = vmatprep.subr.mxu0 0.0
    %6715 = vmatpush1.msra.mxu0 %v6693
    %6716 = vmatprep.subr.mxu0 0.0
    %6717 = vmatpush1.msra.mxu0 %v6694
    %6718 = vmatprep.subr.mxu0 0.0
    %6719 = vmatpush1.msra.mxu0 %v6695
    %6720 = vmatprep.subr.mxu0 0.0
    %6721 = vmatpush1.msra.mxu0 %v6696
    %6722 = vmatprep.subr.mxu0 0.0
    %6723 = vmatpush1.msra.mxu0 %v6697
    %6724 = vmatprep.subr.mxu0 0.0
    %6725 = vmatpush1.msra.mxu0 %v6698
    %6726 = vmatprep.subr.mxu0 0.0
    %6727 = vmatpush1.msra.mxu0 %v6699
    %6728 = vmatprep.subr.mxu0 0.0
    %6729 = vmatpush1.msra.mxu0 %v6700
    %6730 = vmatprep.subr.mxu0 0.0
    %6731 = vmatpush1.msra.mxu0 %v6701
    %6732 = vmatprep.subr.mxu0 0.0
    %6733 = vmatpush1.msra.mxu0 %v6702
    %6734 = vmatprep.subr.mxu0 0.0
    %6735 = vmatpush1.msra.mxu0 %v6703
    %6736 = vmatprep.subr.mxu0 0.0
    %6737 = vmatpush1.msra.mxu0 %v6704
    %6738 = vmatprep.subr.mxu0 0.0
    %6739 = vmatpush1.msra.mxu0 %v6705
    %6740 = vmatprep.subr.mxu0 0.0
    %6741 = vmatpush1.msra.mxu0 0.0
    %6742 = vmatprep.subr.mxu0 0.0
    %6743 = vmatpush1.msra.mxu0 0.0
    %6744 = vmatprep.subr.mxu0 0.0
    %6745 = vmatpush1.msra.mxu0 0.0
    %6746 = vmatprep.subr.mxu0 0.0
    %6747 = vmatpush1.msra.mxu0 0.0
    %6748 = vmatprep.subr.mxu0 0.0
    %6749 = vmatpush1.msra.mxu0 0.0
    %6750 = vmatprep.subr.mxu0 0.0
    %6751 = vmatpush1.msra.mxu0 0.0
    %6752 = vmatprep.subr.mxu0 0.0
    %6753 = vmatpush1.msra.mxu0 0.0
    %6754 = vmatprep.subr.mxu0 0.0
    %6755 = vmatpush1.msra.mxu0 0.0
    %6756 = vmatprep.subr.mxu0 0.0
    %6757 = vmatpush1.msra.mxu0 0.0
    %6758 = vmatprep.subr.mxu0 0.0
    %6759 = vmatpush1.msra.mxu0 0.0
    %6760 = vmatprep.subr.mxu0 0.0
    %6761 = vmatpush1.msra.mxu0 0.0
    %6762 = vmatprep.subr.mxu0 0.0
    %6763 = vmatpush1.msra.mxu0 0.0
    %6764 = vmatprep.subr.mxu0 0.0
    %6765 = vmatpush1.msra.mxu0 0.0
    %6766 = vmatprep.subr.mxu0 0.0
    %6767 = vmatpush1.msra.mxu0 0.0
    %6768 = vmatprep.subr.mxu0 0.0
    %6769 = vmatpush1.msra.mxu0 0.0
    %6770 = vmatprep.subr.mxu0 0.0
    %6771 = vmatpush1.msra.mxu0 0.0
    %6772 = vmatprep.mubr.f32.mxu0 0.0
    %6773 = vmatmul.mubr.f32.gmra.mrb[0].mxu0 %v6706
    %v6774 = vpop.f32.mrb[0].mxu0
    %v6775 = vadd.f32 0.0, %v6774
    %v6776 = vpop.f32.mrb[0].mxu0
    %6777 = vdwg.mxu0
    %v6778 = vadd.f32 %v6688, %v6775
    %6779 = vst [vmem:[%s15] sm:$0x3] %v6778
    // Predicated region
    $region114: #{_fused_forward.1} parent=1 // pred_check
      _
    $region115: #{_fused_forward.1} parent=1 // pred_check_branch
      %6781 = sbr.rel (0) target = $region117
    $region116: #{_fused_forward.1} parent=1 // pred_region
      _
    $region117: #{_fused_forward.1} parent=1 // pred_fallthru
      _
    // Predicated region
    $region118: #{_fused_forward.1} parent=1 // pred_check
      _
    $region119: #{_fused_forward.1} parent=1 // pred_check_branch
      %6783 = sbr.rel (0) target = $region121
    $region120: #{_fused_forward.1} parent=1 // pred_region
      _
    $region121: #{_fused_forward.1} parent=1 // pred_fallthru
      _
    %6784 = vsyncpa [#allocation3], 1
    %6785 = vsyncpa [#allocation5], 1
    %6786 = vsyncpa [#allocation8], 1
    %6787 = vsyncpa [#allocation11], 1
    %6788 = vsyncpa [#allocation14], 1
    %6789 = vsyncpa [#allocation17], 1
    %6790 = vsyncpa [#allocation20], 1

</llo_original>
